<compile_context>
chip_gen: v5e
topology: v5e:2x2
jax: 0.10.0
libtpu: 0.0.40
codegen_flags: <defaults>
</compile_context>

<pallas_src>
import jax
import jax.numpy as jnp
from jax import lax
from jax.experimental import pallas as pl
from jax.experimental.pallas import tpu as pltpu

C = 256
GROUPS = 32
CPG = C // GROUPS            # 8 channels per group
KH = KW = 3
NTAPS = KH * KW
EPS = 1e-5
TC = 128                     # channels per grid step (16 whole groups, lane-dense)


def _round_up(x, m):
    return (x + m - 1) // m * m


def _relu_gconv_bn_relu_kernel(x_ref, w_ref, gamma_ref, beta_ref, o_ref,
                               xp_ref, col_ref, acc_ref):
    # x_ref:     (N, H, W, TC)        f32  pre-ReLU input channel tile
    # w_ref:     (NTAPS, TC, TC)      bf16 block-diagonal per-tap weights of this tile
    # gamma_ref: (1, TC)              f32
    # beta_ref:  (1, TC)              f32
    # o_ref:     (N, H, W, TC)        f32
    # xp_ref:    (N, H+2, WPI, TC)    f32  zero-padded, ReLU'd input scratch
    # col_ref:   (M, NTAPS*TC)        bf16 im2col scratch, M = N*H*WB
    # acc_ref:   (M, TC)              f32  conv result
    N, H, W, _ = x_ref.shape
    M = col_ref.shape[0]
    WB = M // (N * H)                       # W rounded up to a sublane multiple

    # ReLU #1 + zero padding folded into the kernel (relu(0) == 0, so padding
    # with zeros before/after the ReLU is equivalent).
    xp_ref[...] = jnp.zeros_like(xp_ref)
    xp_ref[:, 1:H + 1, 1:W + 1, :] = jnp.maximum(x_ref[...], 0.0)

    # im2col: one lane-aligned 128-wide column block per tap, cast to bf16.
    # WB % 8 == 0 so the (N, H, WB, TC) -> (M, TC) reshape is layout-free.
    for kh in range(KH):
        for kw in range(KW):
            t = kh * KW + kw
            patch = xp_ref[:, kh:kh + H, kw:kw + WB, :]
            col_ref[:, t * TC:(t + 1) * TC] = (
                patch.reshape(M, TC).astype(jnp.bfloat16))

    # Single long-K MXU matmul (bf16 operands, f32 accumulation).
    w2 = w_ref[...].reshape(NTAPS * TC, TC)
    acc_ref[...] = jnp.dot(col_ref[...], w2, preferred_element_type=jnp.float32)

    # BatchNorm2d (training-mode batch stats).  Stats are per-channel, and this
    # tile holds the full (N, H, W) extent for its channels, so they are exact.
    acc = acc_ref[...]
    if WB != W:
        # Mask out the WB-W padded garbage columns from the statistics.
        w_idx = lax.broadcasted_iota(jnp.int32, (M, 1), 0) % WB
        acc_valid = jnp.where(w_idx < W, acc, 0.0)
    else:
        acc_valid = acc
    count = float(N * H * W)
    s1 = jnp.sum(acc_valid, axis=0, keepdims=True)
    s2 = jnp.sum(acc_valid * acc_valid, axis=0, keepdims=True)
    mean = s1 / count
    var = s2 / count - mean * mean

    # Fused BN affine + ReLU #2: one FMA pass.
    scale = gamma_ref[...] * lax.rsqrt(var + EPS)
    shift = beta_ref[...] - mean * scale
    y = jnp.maximum(acc_ref[...] * scale + shift, 0.0)

    y = y.reshape(N, H, WB, TC)
    if WB != W:
        y = y[:, :, :W, :]
    o_ref[...] = y.astype(o_ref.dtype)


def _build_blockdiag_weights(w_grouped):
    # w_grouped: (C_out, CPG, KH, KW) torch grouped OIHW (I = C/groups)
    # returns:   (NTAPS, C_in, C_out) block-diagonal per-tap matrices, bf16.
    wr = w_grouped.astype(jnp.float32).reshape(GROUPS, CPG, CPG, KH, KW)  # (g, co, ci, kh, kw)
    wg = jnp.transpose(wr, (3, 4, 0, 2, 1))                               # (kh, kw, g, ci, co)
    eye = jnp.eye(GROUPS, dtype=jnp.float32)
    w_full = (wg[:, :, :, :, None, :] *
              eye[None, None, :, None, :, None])                          # (kh, kw, g, ci, g2, co)
    w_full = w_full.reshape(KH, KW, C, C).reshape(NTAPS, C, C)
    return w_full.astype(jnp.bfloat16)


def relu_gconv_bn_relu(x_nchw, w_grouped, gamma, beta):
    N, Cin, H, W = x_nchw.shape
    assert Cin == C and C % TC == 0 and TC % CPG == 0

    x = jnp.transpose(x_nchw, (0, 2, 3, 1)).astype(jnp.float32)   # NCHW -> NHWC
    w_full = _build_blockdiag_weights(w_grouped)
    gamma2 = gamma.reshape(1, C).astype(jnp.float32)
    beta2 = beta.reshape(1, C).astype(jnp.float32)

    WB = _round_up(W, 8)          # output width padded to a sublane multiple
    WPI = WB + 8                  # padded-input width in the VMEM scratch
    M = N * H * WB
    n_tiles = C // TC

    out_nhwc = pl.pallas_call(
        _relu_gconv_bn_relu_kernel,
        out_shape=jax.ShapeDtypeStruct((N, H, W, C), jnp.float32),
        grid=(n_tiles,),
        in_specs=[
            pl.BlockSpec((N, H, W, TC), lambda c: (0, 0, 0, c)),
            pl.BlockSpec((NTAPS, TC, TC), lambda c: (0, c, c)),   # diagonal block only
            pl.BlockSpec((1, TC), lambda c: (0, c)),
            pl.BlockSpec((1, TC), lambda c: (0, c)),
        ],
        out_specs=pl.BlockSpec((N, H, W, TC), lambda c: (0, 0, 0, c)),
        scratch_shapes=[
            pltpu.VMEM((N, H + 2, WPI, TC), jnp.float32),          # padded + ReLU'd input
            pltpu.VMEM((M, NTAPS * TC), jnp.bfloat16),             # im2col
            pltpu.VMEM((M, TC), jnp.float32),                      # conv accumulator
        ],
        compiler_params=pltpu.CompilerParams(
            dimension_semantics=("parallel",),                     # independent channel tiles
            vmem_limit_bytes=32 * 1024 * 1024,
        ),
    )(x, w_full, gamma2, beta2)

    return jnp.transpose(out_nhwc, (0, 3, 1, 2))                   # NHWC -> NCHW


def _reference(x_nchw, w_grouped, gamma, beta):
    # Pure-JAX f32 reference matching PyTorch train-mode forward semantics.
    xr = jnp.maximum(x_nchw, 0.0)
    y = lax.conv_general_dilated(
        xr, w_grouped, window_strides=(1, 1), padding=((1, 1), (1, 1)),
        dimension_numbers=("NCHW", "OIHW", "NCHW"),
        feature_group_count=GROUPS)
    mean = jnp.mean(y, axis=(0, 2, 3), keepdims=True)
    var = jnp.mean((y - mean) ** 2, axis=(0, 2, 3), keepdims=True)
    y = (y - mean) * lax.rsqrt(var + EPS)
    y = y * gamma.reshape(1, C, 1, 1) + beta.reshape(1, C, 1, 1)
    return jnp.maximum(y, 0.0)


if __name__ == "__main__":
    key = jax.random.PRNGKey(0)
    k_x, k_w = jax.random.split(key)

    # Small shapes consistent with the module (channels must be 256 for groups=32).
    N, H, W = 2, 14, 14
    x = jax.random.normal(k_x, (N, C, H, W), dtype=jnp.float32)
    w_grouped = 0.1 * jax.random.normal(k_w, (C, CPG, KH, KW), dtype=jnp.float32)
    gamma = jnp.ones((C,), jnp.float32)    # BatchNorm2d default affine init
    beta = jnp.zeros((C,), jnp.float32)

    out = jax.block_until_ready(relu_gconv_bn_relu(x, w_grouped, gamma, beta))
    ref = jax.block_until_ready(_reference(x, w_grouped, gamma, beta))

    assert out.shape == (N, C, H, W)
    err = float(jnp.max(jnp.abs(out - ref)))
    assert err < 5e-2, f"mismatch vs reference: max abs err = {err}"

    print("KERNEL_OK")
</pallas_src>

<mosaic_0001>
module attributes {stable_mosaic.version = 11 : i64} {
  func.func @_relu_gconv_bn_relu_kernel(%arg0: i32, %arg1: memref<2x14x14x128xf32, #tpu.memory_space<vmem>>, %arg2: memref<9x128x128xbf16, #tpu.memory_space<vmem>>, %arg3: memref<1x128xf32, #tpu.memory_space<vmem>>, %arg4: memref<1x128xf32, #tpu.memory_space<vmem>>, %arg5: memref<2x14x14x128xf32, #tpu.memory_space<vmem>>, %arg6: memref<2x16x24x128xf32, #tpu.memory_space<vmem>>, %arg7: memref<448x1152xbf16, #tpu.memory_space<vmem>>, %arg8: memref<448x128xf32, #tpu.memory_space<vmem>>) attributes {dimension_semantics = [#tpu.dimension_semantics<parallel>], iteration_bounds = array<i64: 2>, scalar_prefetch = 0 : i64, scratch_operands = 3 : i64, tpu.core_type = #tpu.core_type<tc>, window_params = [{transform_indices = @transform_0, window_bounds = array<i64: 2, 14, 14, 128>}, {transform_indices = @transform_1, window_bounds = array<i64: 9, 128, 128>}, {transform_indices = @transform_2, window_bounds = array<i64: 1, 128>}, {transform_indices = @transform_3, window_bounds = array<i64: 1, 128>}, {transform_indices = @transform_4, window_bounds = array<i64: 2, 14, 14, 128>}]} {
    %cst = arith.constant 0.000000e+00 : f32
    %0 = vector.broadcast %cst : f32 to vector<2x16x24x128xf32>
    %c0 = arith.constant 0 : index
    %c0_0 = arith.constant 0 : index
    %c0_1 = arith.constant 0 : index
    %c0_2 = arith.constant 0 : index
    %1 = vector.load %arg6[%c0, %c0_0, %c0_1, %c0_2] : memref<2x16x24x128xf32, #tpu.memory_space<vmem>>, vector<2x16x24x128xf32>
    tpu.vector_store %arg6[%c0, %c0_0, %c0_1, %c0_2], %0 {strides = array<i32>} : memref<2x16x24x128xf32, #tpu.memory_space<vmem>>, vector<2x16x24x128xf32>,
    %c0_3 = arith.constant 0 : index
    %c0_4 = arith.constant 0 : index
    %c0_5 = arith.constant 0 : index
    %c0_6 = arith.constant 0 : index
    %2 = vector.load %arg1[%c0_3, %c0_4, %c0_5, %c0_6] : memref<2x14x14x128xf32, #tpu.memory_space<vmem>>, vector<2x14x14x128xf32>
    %cst_7 = arith.constant 0.000000e+00 : f32
    %3 = vector.broadcast %cst_7 : f32 to vector<2x14x14x128xf32>
    %4 = arith.maximumf %2, %3 : vector<2x14x14x128xf32>
    %c0_8 = arith.constant 0 : index
    %c1 = arith.constant 1 : index
    %c1_9 = arith.constant 1 : index
    %c0_10 = arith.constant 0 : index
    %5 = vector.load %arg6[%c0_8, %c1, %c1_9, %c0_10] : memref<2x16x24x128xf32, #tpu.memory_space<vmem>>, vector<2x14x14x128xf32>
    tpu.vector_store %arg6[%c0_8, %c1, %c1_9, %c0_10], %4 {strides = array<i32>} : memref<2x16x24x128xf32, #tpu.memory_space<vmem>>, vector<2x14x14x128xf32>,
    %c0_11 = arith.constant 0 : index
    %c0_12 = arith.constant 0 : index
    %c0_13 = arith.constant 0 : index
    %c0_14 = arith.constant 0 : index
    %6 = vector.load %arg6[%c0_11, %c0_12, %c0_13, %c0_14] : memref<2x16x24x128xf32, #tpu.memory_space<vmem>>, vector<2x14x16x128xf32>
    %7 = vector.shape_cast %6 : vector<2x14x16x128xf32> to vector<448x128xf32>
    %8 = arith.truncf %7 : vector<448x128xf32> to vector<448x128xbf16>
    %c0_15 = arith.constant 0 : index
    %c0_16 = arith.constant 0 : index
    %9 = vector.load %arg7[%c0_15, %c0_16] : memref<448x1152xbf16, #tpu.memory_space<vmem>>, vector<448x128xbf16>
    tpu.vector_store %arg7[%c0_15, %c0_16], %8 {strides = array<i32>} : memref<448x1152xbf16, #tpu.memory_space<vmem>>, vector<448x128xbf16>,
    %c0_17 = arith.constant 0 : index
    %c0_18 = arith.constant 0 : index
    %c1_19 = arith.constant 1 : index
    %c0_20 = arith.constant 0 : index
    %10 = vector.load %arg6[%c0_17, %c0_18, %c1_19, %c0_20] : memref<2x16x24x128xf32, #tpu.memory_space<vmem>>, vector<2x14x16x128xf32>
    %11 = vector.shape_cast %10 : vector<2x14x16x128xf32> to vector<448x128xf32>
    %12 = arith.truncf %11 : vector<448x128xf32> to vector<448x128xbf16>
    %c0_21 = arith.constant 0 : index
    %c128 = arith.constant 128 : index
    %13 = vector.load %arg7[%c0_21, %c128] : memref<448x1152xbf16, #tpu.memory_space<vmem>>, vector<448x128xbf16>
    tpu.vector_store %arg7[%c0_21, %c128], %12 {strides = array<i32>} : memref<448x1152xbf16, #tpu.memory_space<vmem>>, vector<448x128xbf16>,
    %c0_22 = arith.constant 0 : index
    %c0_23 = arith.constant 0 : index
    %c2 = arith.constant 2 : index
    %c0_24 = arith.constant 0 : index
    %14 = vector.load %arg6[%c0_22, %c0_23, %c2, %c0_24] : memref<2x16x24x128xf32, #tpu.memory_space<vmem>>, vector<2x14x16x128xf32>
    %15 = vector.shape_cast %14 : vector<2x14x16x128xf32> to vector<448x128xf32>
    %16 = arith.truncf %15 : vector<448x128xf32> to vector<448x128xbf16>
    %c0_25 = arith.constant 0 : index
    %c256 = arith.constant 256 : index
    %17 = vector.load %arg7[%c0_25, %c256] : memref<448x1152xbf16, #tpu.memory_space<vmem>>, vector<448x128xbf16>
    tpu.vector_store %arg7[%c0_25, %c256], %16 {strides = array<i32>} : memref<448x1152xbf16, #tpu.memory_space<vmem>>, vector<448x128xbf16>,
    %c0_26 = arith.constant 0 : index
    %c1_27 = arith.constant 1 : index
    %c0_28 = arith.constant 0 : index
    %c0_29 = arith.constant 0 : index
    %18 = vector.load %arg6[%c0_26, %c1_27, %c0_28, %c0_29] : memref<2x16x24x128xf32, #tpu.memory_space<vmem>>, vector<2x14x16x128xf32>
    %19 = vector.shape_cast %18 : vector<2x14x16x128xf32> to vector<448x128xf32>
    %20 = arith.truncf %19 : vector<448x128xf32> to vector<448x128xbf16>
    %c0_30 = arith.constant 0 : index
    %c384 = arith.constant 384 : index
    %21 = vector.load %arg7[%c0_30, %c384] : memref<448x1152xbf16, #tpu.memory_space<vmem>>, vector<448x128xbf16>
    tpu.vector_store %arg7[%c0_30, %c384], %20 {strides = array<i32>} : memref<448x1152xbf16, #tpu.memory_space<vmem>>, vector<448x128xbf16>,
    %c0_31 = arith.constant 0 : index
    %c1_32 = arith.constant 1 : index
    %c1_33 = arith.constant 1 : index
    %c0_34 = arith.constant 0 : index
    %22 = vector.load %arg6[%c0_31, %c1_32, %c1_33, %c0_34] : memref<2x16x24x128xf32, #tpu.memory_space<vmem>>, vector<2x14x16x128xf32>
    %23 = vector.shape_cast %22 : vector<2x14x16x128xf32> to vector<448x128xf32>
    %24 = arith.truncf %23 : vector<448x128xf32> to vector<448x128xbf16>
    %c0_35 = arith.constant 0 : index
    %c512 = arith.constant 512 : index
    %25 = vector.load %arg7[%c0_35, %c512] : memref<448x1152xbf16, #tpu.memory_space<vmem>>, vector<448x128xbf16>
    tpu.vector_store %arg7[%c0_35, %c512], %24 {strides = array<i32>} : memref<448x1152xbf16, #tpu.memory_space<vmem>>, vector<448x128xbf16>,
    %c0_36 = arith.constant 0 : index
    %c1_37 = arith.constant 1 : index
    %c2_38 = arith.constant 2 : index
    %c0_39 = arith.constant 0 : index
    %26 = vector.load %arg6[%c0_36, %c1_37, %c2_38, %c0_39] : memref<2x16x24x128xf32, #tpu.memory_space<vmem>>, vector<2x14x16x128xf32>
    %27 = vector.shape_cast %26 : vector<2x14x16x128xf32> to vector<448x128xf32>
    %28 = arith.truncf %27 : vector<448x128xf32> to vector<448x128xbf16>
    %c0_40 = arith.constant 0 : index
    %c640 = arith.constant 640 : index
    %29 = vector.load %arg7[%c0_40, %c640] : memref<448x1152xbf16, #tpu.memory_space<vmem>>, vector<448x128xbf16>
    tpu.vector_store %arg7[%c0_40, %c640], %28 {strides = array<i32>} : memref<448x1152xbf16, #tpu.memory_space<vmem>>, vector<448x128xbf16>,
    %c0_41 = arith.constant 0 : index
    %c2_42 = arith.constant 2 : index
    %c0_43 = arith.constant 0 : index
    %c0_44 = arith.constant 0 : index
    %30 = vector.load %arg6[%c0_41, %c2_42, %c0_43, %c0_44] : memref<2x16x24x128xf32, #tpu.memory_space<vmem>>, vector<2x14x16x128xf32>
    %31 = vector.shape_cast %30 : vector<2x14x16x128xf32> to vector<448x128xf32>
    %32 = arith.truncf %31 : vector<448x128xf32> to vector<448x128xbf16>
    %c0_45 = arith.constant 0 : index
    %c768 = arith.constant 768 : index
    %33 = vector.load %arg7[%c0_45, %c768] : memref<448x1152xbf16, #tpu.memory_space<vmem>>, vector<448x128xbf16>
    tpu.vector_store %arg7[%c0_45, %c768], %32 {strides = array<i32>} : memref<448x1152xbf16, #tpu.memory_space<vmem>>, vector<448x128xbf16>,
    %c0_46 = arith.constant 0 : index
    %c2_47 = arith.constant 2 : index
    %c1_48 = arith.constant 1 : index
    %c0_49 = arith.constant 0 : index
    %34 = vector.load %arg6[%c0_46, %c2_47, %c1_48, %c0_49] : memref<2x16x24x128xf32, #tpu.memory_space<vmem>>, vector<2x14x16x128xf32>
    %35 = vector.shape_cast %34 : vector<2x14x16x128xf32> to vector<448x128xf32>
    %36 = arith.truncf %35 : vector<448x128xf32> to vector<448x128xbf16>
    %c0_50 = arith.constant 0 : index
    %c896 = arith.constant 896 : index
    %37 = vector.load %arg7[%c0_50, %c896] : memref<448x1152xbf16, #tpu.memory_space<vmem>>, vector<448x128xbf16>
    tpu.vector_store %arg7[%c0_50, %c896], %36 {strides = array<i32>} : memref<448x1152xbf16, #tpu.memory_space<vmem>>, vector<448x128xbf16>,
    %c0_51 = arith.constant 0 : index
    %c2_52 = arith.constant 2 : index
    %c2_53 = arith.constant 2 : index
    %c0_54 = arith.constant 0 : index
    %38 = vector.load %arg6[%c0_51, %c2_52, %c2_53, %c0_54] : memref<2x16x24x128xf32, #tpu.memory_space<vmem>>, vector<2x14x16x128xf32>
    %39 = vector.shape_cast %38 : vector<2x14x16x128xf32> to vector<448x128xf32>
    %40 = arith.truncf %39 : vector<448x128xf32> to vector<448x128xbf16>
    %c0_55 = arith.constant 0 : index
    %c1024 = arith.constant 1024 : index
    %41 = vector.load %arg7[%c0_55, %c1024] : memref<448x1152xbf16, #tpu.memory_space<vmem>>, vector<448x128xbf16>
    tpu.vector_store %arg7[%c0_55, %c1024], %40 {strides = array<i32>} : memref<448x1152xbf16, #tpu.memory_space<vmem>>, vector<448x128xbf16>,
    %c0_56 = arith.constant 0 : index
    %c0_57 = arith.constant 0 : index
    %c0_58 = arith.constant 0 : index
    %42 = vector.load %arg2[%c0_56, %c0_57, %c0_58] : memref<9x128x128xbf16, #tpu.memory_space<vmem>>, vector<9x128x128xbf16>
    %43 = vector.shape_cast %42 : vector<9x128x128xbf16> to vector<1152x128xbf16>
    %c0_59 = arith.constant 0 : index
    %c0_60 = arith.constant 0 : index
    %44 = vector.load %arg7[%c0_59, %c0_60] : memref<448x1152xbf16, #tpu.memory_space<vmem>>, vector<448x1152xbf16>
    %cst_61 = arith.constant dense<0.000000e+00> : vector<448x128xf32>
    %45 = tpu.matmul %44, %43, %cst_61 {dimension_numbers = #tpu.dot_dimension_numbers<[1], [0], [0], [1], [0, 0, 1, 1], [], []>} : vector<448x1152xbf16>, vector<1152x128xbf16>, vector<448x128xf32> -> vector<448x128xf32>
    %c0_62 = arith.constant 0 : index
    %c0_63 = arith.constant 0 : index
    %46 = vector.load %arg8[%c0_62, %c0_63] : memref<448x128xf32, #tpu.memory_space<vmem>>, vector<448x128xf32>
    tpu.vector_store %arg8[%c0_62, %c0_63], %45 {strides = array<i32>} : memref<448x128xf32, #tpu.memory_space<vmem>>, vector<448x128xf32>,
    %c0_64 = arith.constant 0 : index
    %c0_65 = arith.constant 0 : index
    %47 = vector.load %arg8[%c0_64, %c0_65] : memref<448x128xf32, #tpu.memory_space<vmem>>, vector<448x128xf32>
    %48 = tpu.iota {dimensions = array<i32: 0>} : vector<448x1xi32>
    %c16_i32 = arith.constant 16 : i32
    %c0_i32 = arith.constant 0 : i32
    %49 = arith.cmpi eq, %c16_i32, %c0_i32 : i32
    %c1_i32 = arith.constant 1 : i32
    %50 = arith.select %49, %c1_i32, %c16_i32 : i32
    %51 = vector.broadcast %50 : i32 to vector<448x1xi32>
    %52 = arith.remsi %48, %51 : vector<448x1xi32>
    %c0_i32_66 = arith.constant 0 : i32
    %53 = vector.broadcast %c0_i32_66 : i32 to vector<448x1xi32>
    %54 = arith.cmpi ne, %52, %53 : vector<448x1xi32>
    %c0_i32_67 = arith.constant 0 : i32
    %55 = vector.broadcast %c0_i32_67 : i32 to vector<448x1xi32>
    %56 = arith.cmpi slt, %52, %55 : vector<448x1xi32>
    %c0_i32_68 = arith.constant 0 : i32
    %57 = arith.cmpi slt, %50, %c0_i32_68 : i32
    %58 = vector.broadcast %57 : i1 to vector<448x1xi1>
    %59 = vector.broadcast %58 : vector<448x1xi1> to vector<448x1xi1>
    %60 = arith.xori %56, %59 : vector<448x1xi1>
    %61 = arith.andi %60, %54 : vector<448x1xi1>
    %62 = vector.broadcast %50 : i32 to vector<448x1xi32>
    %63 = arith.addi %52, %62 : vector<448x1xi32>
    %64 = arith.select %61, %63, %52 : vector<448x1xi1>, vector<448x1xi32>
    %c14_i32 = arith.constant 14 : i32
    %65 = vector.broadcast %c14_i32 : i32 to vector<448x1xi32>
    %66 = arith.cmpi slt, %64, %65 : vector<448x1xi32>
    %cst_69 = arith.constant 0.000000e+00 : f32
    %67 = vector.shape_cast %66 : vector<448x1xi1> to vector<448x1xi1>
    %68 = vector.broadcast %67 : vector<448x1xi1> to vector<448x128xi1>
    %69 = vector.broadcast %cst_69 : f32 to vector<448x128xf32>
    %70 = arith.select %68, %47, %69 : vector<448x128xi1>, vector<448x128xf32>
    %cst_70 = arith.constant dense<0.000000e+00> : vector<128xf32>
    %71 = vector.multi_reduction <add>, %70, %cst_70 [0] : vector<448x128xf32> to vector<128xf32>
    %72 = vector.shape_cast %71 : vector<128xf32> to vector<1x128xf32>
    %73 = arith.mulf %70, %70 : vector<448x128xf32>
    %cst_71 = arith.constant dense<0.000000e+00> : vector<128xf32>
    %74 = vector.multi_reduction <add>, %73, %cst_71 [0] : vector<448x128xf32> to vector<128xf32>
    %75 = vector.shape_cast %74 : vector<128xf32> to vector<1x128xf32>
    %cst_72 = arith.constant 3.920000e+02 : f32
    %76 = vector.broadcast %cst_72 : f32 to vector<1x128xf32>
    %77 = arith.divf %72, %76 : vector<1x128xf32>
    %cst_73 = arith.constant 3.920000e+02 : f32
    %78 = vector.broadcast %cst_73 : f32 to vector<1x128xf32>
    %79 = arith.divf %75, %78 : vector<1x128xf32>
    %80 = arith.mulf %77, %77 : vector<1x128xf32>
    %81 = arith.subf %79, %80 : vector<1x128xf32>
    %c0_74 = arith.constant 0 : index
    %c0_75 = arith.constant 0 : index
    %82 = vector.load %arg3[%c0_74, %c0_75] : memref<1x128xf32, #tpu.memory_space<vmem>>, vector<1x128xf32>
    %cst_76 = arith.constant 9.99999974E-6 : f32
    %83 = vector.broadcast %cst_76 : f32 to vector<1x128xf32>
    %84 = arith.addf %81, %83 : vector<1x128xf32>
    %85 = math.rsqrt %84 : vector<1x128xf32>
    %86 = arith.mulf %82, %85 : vector<1x128xf32>
    %c0_77 = arith.constant 0 : index
    %c0_78 = arith.constant 0 : index
    %87 = vector.load %arg4[%c0_77, %c0_78] : memref<1x128xf32, #tpu.memory_space<vmem>>, vector<1x128xf32>
    %88 = arith.mulf %77, %86 : vector<1x128xf32>
    %89 = arith.subf %87, %88 : vector<1x128xf32>
    %c0_79 = arith.constant 0 : index
    %c0_80 = arith.constant 0 : index
    %90 = vector.load %arg8[%c0_79, %c0_80] : memref<448x128xf32, #tpu.memory_space<vmem>>, vector<448x128xf32>
    %91 = vector.broadcast %86 : vector<1x128xf32> to vector<448x128xf32>
    %92 = arith.mulf %90, %91 : vector<448x128xf32>
    %93 = vector.broadcast %89 : vector<1x128xf32> to vector<448x128xf32>
    %94 = arith.addf %92, %93 : vector<448x128xf32>
    %cst_81 = arith.constant 0.000000e+00 : f32
    %95 = vector.broadcast %cst_81 : f32 to vector<448x128xf32>
    %96 = arith.maximumf %94, %95 : vector<448x128xf32>
    %97 = vector.shape_cast %96 : vector<448x128xf32> to vector<2x14x16x128xf32>
    %98 = vector.extract_strided_slice %97 {offsets = [0, 0, 0, 0], sizes = [2, 14, 14, 128], strides = [1, 1, 1, 1]} : vector<2x14x16x128xf32> to vector<2x14x14x128xf32>
    %c0_82 = arith.constant 0 : index
    %c0_83 = arith.constant 0 : index
    %c0_84 = arith.constant 0 : index
    %c0_85 = arith.constant 0 : index
    %99 = vector.load %arg5[%c0_82, %c0_83, %c0_84, %c0_85] : memref<2x14x14x128xf32, #tpu.memory_space<vmem>>, vector<2x14x14x128xf32>
    tpu.vector_store %arg5[%c0_82, %c0_83, %c0_84, %c0_85], %98 {strides = array<i32>} : memref<2x14x14x128xf32, #tpu.memory_space<vmem>>, vector<2x14x14x128xf32>,
    return
  }
  func.func @transform_0(%arg0: i32) -> (i32, i32, i32, i32) {
    %c0_i32 = arith.constant 0 : i32
    %c0_i32_0 = arith.constant 0 : i32
    %c0_i32_1 = arith.constant 0 : i32
    %c0_i32_2 = arith.constant 0 : i32
    return %c0_i32, %c0_i32_0, %c0_i32_1, %arg0 : i32, i32, i32, i32
  }
  func.func @transform_1(%arg0: i32) -> (i32, i32, i32) {
    %c0_i32 = arith.constant 0 : i32
    %c0_i32_0 = arith.constant 0 : i32
    return %c0_i32, %arg0, %arg0 : i32, i32, i32
  }
  func.func @transform_2(%arg0: i32) -> (i32, i32) {
    %c0_i32 = arith.constant 0 : i32
    %c0_i32_0 = arith.constant 0 : i32
    return %c0_i32, %arg0 : i32, i32
  }
  func.func @transform_3(%arg0: i32) -> (i32, i32) {
    %c0_i32 = arith.constant 0 : i32
    %c0_i32_0 = arith.constant 0 : i32
    return %c0_i32, %arg0 : i32, i32
  }
  func.func @transform_4(%arg0: i32) -> (i32, i32, i32, i32) {
    %c0_i32 = arith.constant 0 : i32
    %c0_i32_0 = arith.constant 0 : i32
    %c0_i32_1 = arith.constant 0 : i32
    %c0_i32_2 = arith.constant 0 : i32
    return %c0_i32, %c0_i32_0, %c0_i32_1, %arg0 : i32, i32, i32, i32
  }
}

</mosaic_0001>

<llo_original>
// kernel: tpu_custom_call.1
$region0: #{tpu_custom_call.1}
  #allocation0 [shape = 'u32[]', space=smem, size = 0x4, offset = 0x4, fixed_abs, tag = 'smem constant byte address 0x4 - core index']
  #allocation1 [shape = 'u32[72,128]{1,0:T(1,128)}', space=vmem, size = 0x9000, scoped, tag = 'internal scratch']
  #allocation2 [shape = 'f32[2,16,24,128]{3,2,1,0:T(8,128)}', space=vmem, size = 0x60000, scoped, tag = 'scratch operand']
  #allocation3 [shape = 'bf16[448,1152]{1,0:T(8,128)(2,1)}', space=vmem, size = 0xfc000, scoped, tag = 'scratch operand']
  #allocation4 [shape = 'f32[448,128]{1,0:T(8,128)}', space=vmem, size = 0x38000, scoped, tag = 'scratch operand']
  #allocation12 [shape = 's32[]', space=sflag, size = 0x4, offset = 0, fixed_abs, tag = 'sflag constant byte address 0x0 - dummy sync flag']
  %s0 = inlined_call_operand.vmem [shape: f32[2,14,14,256], index: 0, kind: input, shape index: {}]
  %s1 = inlined_call_operand.hbm [shape: bf16[9,256,256], index: 1, kind: input, shape index: {}]
  %s2 = inlined_call_operand.hbm [shape: f32[1,256], index: 2, kind: input, shape index: {}]
  %s3 = inlined_call_operand.hbm [shape: f32[1,256], index: 3, kind: input, shape index: {}]
  %s4 = inlined_call_operand.vmem [shape: f32[2,14,14,256], index: 4, kind: output, shape index: {}]
  %s5 = sld [smem:[#allocation0]]
  $region133: #{tpu_custom_call.1} parent=0
    _
  %s7 = ssub.s32 1, %s5
  %s8 = scalar_select 0, %s7, %s5
  $region1: #{tpu_custom_call.1} parent=0
    #allocation5 [shape = 'u8[458752]{0}', space=vmem, size = 0x70000, scoped, tag = 'input window, operand 0']
    #allocation6 [shape = 'u8[589824]{0}', space=vmem, size = 0x90000, scoped, tag = 'input window, operand 1']
    #allocation7 [shape = 's32[2]{0}', space=sflag, size = 0x8, scoped, tag = 'scoped memory for tpu_custom_call.1']
    #allocation8 [shape = 'u8[1024]{0}', space=vmem, size = 0x400, scoped, tag = 'input window, operand 2']
    #allocation9 [shape = 's32[2]{0}', space=sflag, size = 0x8, scoped, tag = 'scoped memory for tpu_custom_call.1']
    #allocation10 [shape = 'u8[1024]{0}', space=vmem, size = 0x400, scoped, tag = 'input window, operand 3']
    #allocation11 [shape = 'u8[458752]{0}', space=vmem, size = 0x70000, scoped, tag = 'output window, operand 0']
    %9 = vsyncpa [#allocation7], 0
    %s10 = scalar_lea.sflag [#allocation7], 1
    %11 = vsyncpa %s10, 0
    %12 = vsyncpa [#allocation9], 0
    %s13 = scalar_lea.sflag [#allocation9], 1
    %14 = vsyncpa %s13, 0
    loop: start=0, step=1, limit=4
    $region2: #{tpu_custom_call.1} parent=1 // loop_pre_header
      _
    $region3: #{tpu_custom_call.1} parent=1 // loop_header
      %s16 = sphi 0, %s20
      %p17 = scmp.ge.s32.totalorder %s16, 4
      %s26 = sphi 0, %s28
      %s29 = sphi 0, %s26
      %s30 = sphi 0, %s29
      %s46 = sphi 0, %s30
      %s54 = sphi 0, %s56
      %s57 = sphi 0, %s54
      %s58 = sphi 0, %s57
      %s74 = sphi 0, %s58
      %s80 = sphi 0, %s82
      %s83 = sphi 0, %s80
      %s84 = sphi 0, %s83
      %s100 = sphi 0, %s84
      %s106 = sphi 0, %s108
      %s109 = sphi 0, %s106
      %s110 = sphi 0, %s109
      %s126 = sphi 0, %s110
      %s132 = sphi 0, %s134
      %s135 = sphi 0, %s132
      %s136 = sphi 0, %s135
      %s152 = sphi 0, %s136
    $region4: #{tpu_custom_call.1} parent=1 // loop_header_branch
      %19 = sbr.rel (%p17) target = $region8
    $region5: #{tpu_custom_call.1} parent=1 // loop_body
      %s21 = ssub.s32 %s16, 1
      %s22 = ssub.s32 %s16, 2
      %s23 = sadd.s32 %s16, 1
      %s24 = ssub.s32 %s16, %s23
      %p25 = scmp.eq.s32.totalorder %s24, 0
      %s27 = sadd.s32 %s26, 1
      %s28 = scalar_select %p25, %s26, %s27
      %p31 = pneg %p25
      %p32 = scmp.eq.s32.totalorder %s16, 1
      %p33 = por %p31, %p32
      %p34 = scmp.ne.s32.totalorder %s26, %s29
      %p35 = scmp.eq.s32.totalorder %s16, 0
      %p36 = por %p34, %p35
      %p37 = scmp.ne.s32.totalorder %s26, %s29
      %p38 = scmp.eq.s32.totalorder %s21, 1
      %p39 = por %p37, %p38
      %p40 = scmp.ne.s32.totalorder %s29, %s30
      %p41 = scmp.eq.s32.totalorder %s21, 0
      %p42 = por %p40, %p41
      %p43 = scmp.ne.s32.totalorder %s29, %s30
      %p44 = scmp.eq.s32.totalorder %s22, 1
      %p45 = por %p43, %p44
      %p47 = scmp.ne.s32.totalorder %s30, %s46
      %p48 = scmp.eq.s32.totalorder %s22, 0
      %p49 = por %p47, %p48
      %s50 = ssub.s32 %s16, %s23
      %s51 = ssub.s32 %s16, %s23
      %s52 = sor.u32 %s50, %s51
      %p53 = scmp.eq.s32.totalorder %s52, 0
      %s55 = sadd.s32 %s54, 1
      %s56 = scalar_select %p53, %s54, %s55
      %p59 = pneg %p53
      %p60 = scmp.eq.s32.totalorder %s16, 1
      %p61 = por %p59, %p60
      %p62 = scmp.ne.s32.totalorder %s54, %s57
      %p63 = scmp.eq.s32.totalorder %s16, 0
      %p64 = por %p62, %p63
      %p65 = scmp.ne.s32.totalorder %s54, %s57
      %p66 = scmp.eq.s32.totalorder %s21, 1
      %p67 = por %p65, %p66
      %p68 = scmp.ne.s32.totalorder %s57, %s58
      %p69 = scmp.eq.s32.totalorder %s21, 0
      %p70 = por %p68, %p69
      %p71 = scmp.ne.s32.totalorder %s57, %s58
      %p72 = scmp.eq.s32.totalorder %s22, 1
      %p73 = por %p71, %p72
      %p75 = scmp.ne.s32.totalorder %s58, %s74
      %p76 = scmp.eq.s32.totalorder %s22, 0
      %p77 = por %p75, %p76
      %s78 = ssub.s32 %s16, %s23
      %p79 = scmp.eq.s32.totalorder %s78, 0
      %s81 = sadd.s32 %s80, 1
      %s82 = scalar_select %p79, %s80, %s81
      %p85 = pneg %p79
      %p86 = scmp.eq.s32.totalorder %s16, 1
      %p87 = por %p85, %p86
      %p88 = scmp.ne.s32.totalorder %s80, %s83
      %p89 = scmp.eq.s32.totalorder %s16, 0
      %p90 = por %p88, %p89
      %p91 = scmp.ne.s32.totalorder %s80, %s83
      %p92 = scmp.eq.s32.totalorder %s21, 1
      %p93 = por %p91, %p92
      %p94 = scmp.ne.s32.totalorder %s83, %s84
      %p95 = scmp.eq.s32.totalorder %s21, 0
      %p96 = por %p94, %p95
      %p97 = scmp.ne.s32.totalorder %s83, %s84
      %p98 = scmp.eq.s32.totalorder %s22, 1
      %p99 = por %p97, %p98
      %p101 = scmp.ne.s32.totalorder %s84, %s100
      %p102 = scmp.eq.s32.totalorder %s22, 0
      %p103 = por %p101, %p102
      %s104 = ssub.s32 %s16, %s23
      %p105 = scmp.eq.s32.totalorder %s104, 0
      %s107 = sadd.s32 %s106, 1
      %s108 = scalar_select %p105, %s106, %s107
      %p111 = pneg %p105
      %p112 = scmp.eq.s32.totalorder %s16, 1
      %p113 = por %p111, %p112
      %p114 = scmp.ne.s32.totalorder %s106, %s109
      %p115 = scmp.eq.s32.totalorder %s16, 0
      %p116 = por %p114, %p115
      %p117 = scmp.ne.s32.totalorder %s106, %s109
      %p118 = scmp.eq.s32.totalorder %s21, 1
      %p119 = por %p117, %p118
      %p120 = scmp.ne.s32.totalorder %s109, %s110
      %p121 = scmp.eq.s32.totalorder %s21, 0
      %p122 = por %p120, %p121
      %p123 = scmp.ne.s32.totalorder %s109, %s110
      %p124 = scmp.eq.s32.totalorder %s22, 1
      %p125 = por %p123, %p124
      %p127 = scmp.ne.s32.totalorder %s110, %s126
      %p128 = scmp.eq.s32.totalorder %s22, 0
      %p129 = por %p127, %p128
      %s130 = ssub.s32 %s16, %s23
      %p131 = scmp.eq.s32.totalorder %s130, 0
      %s133 = sadd.s32 %s132, 1
      %s134 = scalar_select %p131, %s132, %s133
      %p137 = pneg %p131
      %p138 = scmp.eq.s32.totalorder %s16, 1
      %p139 = por %p137, %p138
      %p140 = scmp.ne.s32.totalorder %s132, %s135
      %p141 = scmp.eq.s32.totalorder %s16, 0
      %p142 = por %p140, %p141
      %p143 = scmp.ne.s32.totalorder %s132, %s135
      %p144 = scmp.eq.s32.totalorder %s21, 1
      %p145 = por %p143, %p144
      %p146 = scmp.ne.s32.totalorder %s135, %s136
      %p147 = scmp.eq.s32.totalorder %s21, 0
      %p148 = por %p146, %p147
      %p149 = scmp.ne.s32.totalorder %s135, %s136
      %p150 = scmp.eq.s32.totalorder %s22, 1
      %p151 = por %p149, %p150
      %p153 = scmp.ne.s32.totalorder %s136, %s152
      %p154 = scmp.eq.s32.totalorder %s22, 0
      %p155 = por %p153, %p154
      %p156 = scmp.le.s32.totalorder 1, %s16
      %p157 = scmp.lt.s32.totalorder %s16, 3
      %p158 = pnand %p156, %p157
      %p159 = pneg %p158
      // Predicated region
      $region9: #{tpu_custom_call.1} parent=5 // pred_check
        _
      $region10: #{tpu_custom_call.1} parent=5 // pred_check_branch
        %161 = sbr.rel (%p158) target = $region12
      $region11: #{tpu_custom_call.1} parent=5 // pred_region
        %s162 = ssub.s32 %s16, 1
      $region12: #{tpu_custom_call.1} parent=5 // pred_fallthru
        _
      %p163 = scmp.lt.s32.totalorder %s16, 2
      // Predicated region
      $region13: #{tpu_custom_call.1} parent=5 // pred_check
        %p164 = pneg %p163
      $region14: #{tpu_custom_call.1} parent=5 // pred_check_branch
        %166 = sbr.rel (%p164) target = $region16
      $region15: #{tpu_custom_call.1} parent=5 // pred_region
        // Predicated region
        $region17: #{tpu_custom_call.1} parent=15 // pred_check
          %p167 = pneg %p36
        $region18: #{tpu_custom_call.1} parent=15 // pred_check_branch
          %169 = sbr.rel (%p167) target = $region20
        $region19: #{tpu_custom_call.1} parent=15 // pred_region
          %s170 = sand.u32 %s26, 1
          %s171 = sand.u32 %s26, 1
          %s172 = smul.addr %s171, 448
          %s173 = scalar_lea.vmem [#allocation5], %s172
          %s174 = smul.addr %s16, 8
          %s175 = scalar_lea.vmem %s0, %s174
          // Predicated region
          $region21: #{tpu_custom_call.1} parent=19 // pred_check
            _
          $region22: #{tpu_custom_call.1} parent=19 // pred_check_branch
            %177 = sbr.rel (0) target = $region24
          $region23: #{tpu_custom_call.1} parent=19 // pred_region
            // Predicated region
            $region25: #{tpu_custom_call.1} parent=23 // pred_check
              _
            $region26: #{tpu_custom_call.1} parent=23 // pred_check_branch
              %179 = sbr.rel (0) target = $region28
            $region27: #{tpu_custom_call.1} parent=23 // pred_region
              // Predicated region
              $region40: #{tpu_custom_call.1} parent=27 // pred_check
                _
              $region41: #{tpu_custom_call.1} parent=27 // pred_check_branch
                %305 = sbr.rel (0) target = $region43
              $region42: #{tpu_custom_call.1} parent=27 // pred_region
                loop: start=0, step=1, limit=1
                $region44: #{tpu_custom_call.1} parent=42 // loop_pre_header
                  _
                $region45: #{tpu_custom_call.1} parent=42 // loop_header
                  %s307 = sphi 0, %s311
                  %p308 = scmp.ge.s32.totalorder %s307, 1
                  %s312 = sphi %s175, %s175
                  %s313 = sphi %s173, %s173
                $region46: #{tpu_custom_call.1} parent=42 // loop_header_branch
                  %310 = sbr.rel (%p308) target = $region50
                $region47: #{tpu_custom_call.1} parent=42 // loop_body
                  %v314 = vld [vmem:[%s312] sm:$0xff]
                  %315 = vst [vmem:[%s313] sm:$0xff] %v314
                  %v316 = vld [vmem:[%s312 + $0x10] sm:$0xff]
                  %317 = vst [vmem:[%s313 + $0x8] sm:$0xff] %v316
                  %v318 = vld [vmem:[%s312 + $0x20] sm:$0xff]
                  %319 = vst [vmem:[%s313 + $0x10] sm:$0xff] %v318
                  %v320 = vld [vmem:[%s312 + $0x30] sm:$0xff]
                  %321 = vst [vmem:[%s313 + $0x18] sm:$0xff] %v320
                  %v322 = vld [vmem:[%s312 + $0x40] sm:$0xff]
                  %323 = vst [vmem:[%s313 + $0x20] sm:$0xff] %v322
                  %v324 = vld [vmem:[%s312 + $0x50] sm:$0xff]
                  %325 = vst [vmem:[%s313 + $0x28] sm:$0xff] %v324
                  %v326 = vld [vmem:[%s312 + $0x60] sm:$0xff]
                  %327 = vst [vmem:[%s313 + $0x30] sm:$0xff] %v326
                  %v328 = vld [vmem:[%s312 + $0x70] sm:$0xff]
                  %329 = vst [vmem:[%s313 + $0x38] sm:$0xff] %v328
                  %v330 = vld [vmem:[%s312 + $0x80] sm:$0xff]
                  %331 = vst [vmem:[%s313 + $0x40] sm:$0xff] %v330
                  %v332 = vld [vmem:[%s312 + $0x90] sm:$0xff]
                  %333 = vst [vmem:[%s313 + $0x48] sm:$0xff] %v332
                  %v334 = vld [vmem:[%s312 + $0xa0] sm:$0xff]
                  %335 = vst [vmem:[%s313 + $0x50] sm:$0xff] %v334
                  %v336 = vld [vmem:[%s312 + $0xb0] sm:$0xff]
                  %337 = vst [vmem:[%s313 + $0x58] sm:$0xff] %v336
                  %v338 = vld [vmem:[%s312 + $0xc0] sm:$0xff]
                  %339 = vst [vmem:[%s313 + $0x60] sm:$0xff] %v338
                  %v340 = vld [vmem:[%s312 + $0xd0] sm:$0xff]
                  %341 = vst [vmem:[%s313 + $0x68] sm:$0xff] %v340
                  %v342 = vld [vmem:[%s312 + $0xe0] sm:$0xff]
                  %343 = vst [vmem:[%s313 + $0x70] sm:$0xff] %v342
                  %v344 = vld [vmem:[%s312 + $0xf0] sm:$0xff]
                  %345 = vst [vmem:[%s313 + $0x78] sm:$0xff] %v344
                  %v346 = vld [vmem:[%s312 + $0x100] sm:$0xff]
                  %347 = vst [vmem:[%s313 + $0x80] sm:$0xff] %v346
                  %v348 = vld [vmem:[%s312 + $0x110] sm:$0xff]
                  %349 = vst [vmem:[%s313 + $0x88] sm:$0xff] %v348
                  %v350 = vld [vmem:[%s312 + $0x120] sm:$0xff]
                  %351 = vst [vmem:[%s313 + $0x90] sm:$0xff] %v350
                  %v352 = vld [vmem:[%s312 + $0x130] sm:$0xff]
                  %353 = vst [vmem:[%s313 + $0x98] sm:$0xff] %v352
                  %v354 = vld [vmem:[%s312 + $0x140] sm:$0xff]
                  %355 = vst [vmem:[%s313 + $0xa0] sm:$0xff] %v354
                  %v356 = vld [vmem:[%s312 + $0x150] sm:$0xff]
                  %357 = vst [vmem:[%s313 + $0xa8] sm:$0xff] %v356
                  %v358 = vld [vmem:[%s312 + $0x160] sm:$0xff]
                  %359 = vst [vmem:[%s313 + $0xb0] sm:$0xff] %v358
                  %v360 = vld [vmem:[%s312 + $0x170] sm:$0xff]
                  %361 = vst [vmem:[%s313 + $0xb8] sm:$0xff] %v360
                  %v362 = vld [vmem:[%s312 + $0x180] sm:$0xff]
                  %363 = vst [vmem:[%s313 + $0xc0] sm:$0xff] %v362
                  %v364 = vld [vmem:[%s312 + $0x190] sm:$0xff]
                  %365 = vst [vmem:[%s313 + $0xc8] sm:$0xff] %v364
                  %v366 = vld [vmem:[%s312 + $0x1a0] sm:$0xff]
                  %367 = vst [vmem:[%s313 + $0xd0] sm:$0xff] %v366
                  %v368 = vld [vmem:[%s312 + $0x1b0] sm:$0xff]
                  %369 = vst [vmem:[%s313 + $0xd8] sm:$0xff] %v368
                  %v370 = vld [vmem:[%s312 + $0x1c0] sm:$0xff]
                  %371 = vst [vmem:[%s313 + $0xe0] sm:$0xff] %v370
                  %v372 = vld [vmem:[%s312 + $0x1d0] sm:$0xff]
                  %373 = vst [vmem:[%s313 + $0xe8] sm:$0xff] %v372
                  %v374 = vld [vmem:[%s312 + $0x1e0] sm:$0xff]
                  %375 = vst [vmem:[%s313 + $0xf0] sm:$0xff] %v374
                  %v376 = vld [vmem:[%s312 + $0x1f0] sm:$0xff]
                  %377 = vst [vmem:[%s313 + $0xf8] sm:$0xff] %v376
                  %v378 = vld [vmem:[%s312 + $0x200] sm:$0xff]
                  %379 = vst [vmem:[%s313 + $0x100] sm:$0xff] %v378
                  %v380 = vld [vmem:[%s312 + $0x210] sm:$0xff]
                  %381 = vst [vmem:[%s313 + $0x108] sm:$0xff] %v380
                  %v382 = vld [vmem:[%s312 + $0x220] sm:$0xff]
                  %383 = vst [vmem:[%s313 + $0x110] sm:$0xff] %v382
                  %v384 = vld [vmem:[%s312 + $0x230] sm:$0xff]
                  %385 = vst [vmem:[%s313 + $0x118] sm:$0xff] %v384
                  %v386 = vld [vmem:[%s312 + $0x240] sm:$0xff]
                  %387 = vst [vmem:[%s313 + $0x120] sm:$0xff] %v386
                  %v388 = vld [vmem:[%s312 + $0x250] sm:$0xff]
                  %389 = vst [vmem:[%s313 + $0x128] sm:$0xff] %v388
                  %v390 = vld [vmem:[%s312 + $0x260] sm:$0xff]
                  %391 = vst [vmem:[%s313 + $0x130] sm:$0xff] %v390
                  %v392 = vld [vmem:[%s312 + $0x270] sm:$0xff]
                  %393 = vst [vmem:[%s313 + $0x138] sm:$0xff] %v392
                  %v394 = vld [vmem:[%s312 + $0x280] sm:$0xff]
                  %395 = vst [vmem:[%s313 + $0x140] sm:$0xff] %v394
                  %v396 = vld [vmem:[%s312 + $0x290] sm:$0xff]
                  %397 = vst [vmem:[%s313 + $0x148] sm:$0xff] %v396
                  %v398 = vld [vmem:[%s312 + $0x2a0] sm:$0xff]
                  %399 = vst [vmem:[%s313 + $0x150] sm:$0xff] %v398
                  %v400 = vld [vmem:[%s312 + $0x2b0] sm:$0xff]
                  %401 = vst [vmem:[%s313 + $0x158] sm:$0xff] %v400
                  %v402 = vld [vmem:[%s312 + $0x2c0] sm:$0xff]
                  %403 = vst [vmem:[%s313 + $0x160] sm:$0xff] %v402
                  %v404 = vld [vmem:[%s312 + $0x2d0] sm:$0xff]
                  %405 = vst [vmem:[%s313 + $0x168] sm:$0xff] %v404
                  %v406 = vld [vmem:[%s312 + $0x2e0] sm:$0xff]
                  %407 = vst [vmem:[%s313 + $0x170] sm:$0xff] %v406
                  %v408 = vld [vmem:[%s312 + $0x2f0] sm:$0xff]
                  %409 = vst [vmem:[%s313 + $0x178] sm:$0xff] %v408
                  %v410 = vld [vmem:[%s312 + $0x300] sm:$0xff]
                  %411 = vst [vmem:[%s313 + $0x180] sm:$0xff] %v410
                  %v412 = vld [vmem:[%s312 + $0x310] sm:$0xff]
                  %413 = vst [vmem:[%s313 + $0x188] sm:$0xff] %v412
                  %v414 = vld [vmem:[%s312 + $0x320] sm:$0xff]
                  %415 = vst [vmem:[%s313 + $0x190] sm:$0xff] %v414
                  %v416 = vld [vmem:[%s312 + $0x330] sm:$0xff]
                  %417 = vst [vmem:[%s313 + $0x198] sm:$0xff] %v416
                  %v418 = vld [vmem:[%s312 + $0x340] sm:$0xff]
                  %419 = vst [vmem:[%s313 + $0x1a0] sm:$0xff] %v418
                  %v420 = vld [vmem:[%s312 + $0x350] sm:$0xff]
                  %421 = vst [vmem:[%s313 + $0x1a8] sm:$0xff] %v420
                  %v422 = vld [vmem:[%s312 + $0x360] sm:$0xff]
                  %423 = vst [vmem:[%s313 + $0x1b0] sm:$0xff] %v422
                  %v424 = vld [vmem:[%s312 + $0x370] sm:$0xff]
                  %425 = vst [vmem:[%s313 + $0x1b8] sm:$0xff] %v424
                $region48: #{tpu_custom_call.1} parent=42 // loop_footer
                  %s311 = sadd.s32 1, %s307
                $region49: #{tpu_custom_call.1} parent=42 // loop_footer_branch
                  %306 = sbr.rel target = $region45
                $region50: #{tpu_custom_call.1} parent=42 // loop_exit
                  _
              $region43: #{tpu_custom_call.1} parent=27 // pred_fallthru
                _
              // Predicated region
              $region51: #{tpu_custom_call.1} parent=27 // pred_check
                _
              $region52: #{tpu_custom_call.1} parent=27 // pred_check_branch
                %427 = sbr.rel target = $region54
              $region53: #{tpu_custom_call.1} parent=27 // pred_region
                _
              $region54: #{tpu_custom_call.1} parent=27 // pred_fallthru
                _
            $region28: #{tpu_custom_call.1} parent=23 // pred_fallthru
              _
            // Predicated region
            $region29: #{tpu_custom_call.1} parent=23 // pred_check
              _
            $region30: #{tpu_custom_call.1} parent=23 // pred_check_branch
              %181 = sbr.rel target = $region32
            $region31: #{tpu_custom_call.1} parent=23 // pred_region
              %s183 = ssub.s32 256, 1
              loop: start=0, step=1, limit=1
              $region33: #{tpu_custom_call.1} parent=31 // loop_pre_header
                _
              $region34: #{tpu_custom_call.1} parent=31 // loop_header
                %s185 = sphi 0, %s189
                %p186 = scmp.ge.s32.totalorder %s185, 1
                %s190 = sphi %s175, %s175
                %s191 = sphi %s173, %s173
              $region35: #{tpu_custom_call.1} parent=31 // loop_header_branch
                %188 = sbr.rel (%p186) target = $region39
              $region36: #{tpu_custom_call.1} parent=31 // loop_body
                %v192 = vld [vmem:[%s190] sm:%s183]
                %193 = vst [vmem:[%s191] sm:%s183] %v192
                %v194 = vld [vmem:[%s190 + $0x10] sm:%s183]
                %195 = vst [vmem:[%s191 + $0x8] sm:%s183] %v194
                %v196 = vld [vmem:[%s190 + $0x20] sm:%s183]
                %197 = vst [vmem:[%s191 + $0x10] sm:%s183] %v196
                %v198 = vld [vmem:[%s190 + $0x30] sm:%s183]
                %199 = vst [vmem:[%s191 + $0x18] sm:%s183] %v198
                %v200 = vld [vmem:[%s190 + $0x40] sm:%s183]
                %201 = vst [vmem:[%s191 + $0x20] sm:%s183] %v200
                %v202 = vld [vmem:[%s190 + $0x50] sm:%s183]
                %203 = vst [vmem:[%s191 + $0x28] sm:%s183] %v202
                %v204 = vld [vmem:[%s190 + $0x60] sm:%s183]
                %205 = vst [vmem:[%s191 + $0x30] sm:%s183] %v204
                %v206 = vld [vmem:[%s190 + $0x70] sm:%s183]
                %207 = vst [vmem:[%s191 + $0x38] sm:%s183] %v206
                %v208 = vld [vmem:[%s190 + $0x80] sm:%s183]
                %209 = vst [vmem:[%s191 + $0x40] sm:%s183] %v208
                %v210 = vld [vmem:[%s190 + $0x90] sm:%s183]
                %211 = vst [vmem:[%s191 + $0x48] sm:%s183] %v210
                %v212 = vld [vmem:[%s190 + $0xa0] sm:%s183]
                %213 = vst [vmem:[%s191 + $0x50] sm:%s183] %v212
                %v214 = vld [vmem:[%s190 + $0xb0] sm:%s183]
                %215 = vst [vmem:[%s191 + $0x58] sm:%s183] %v214
                %v216 = vld [vmem:[%s190 + $0xc0] sm:%s183]
                %217 = vst [vmem:[%s191 + $0x60] sm:%s183] %v216
                %v218 = vld [vmem:[%s190 + $0xd0] sm:%s183]
                %219 = vst [vmem:[%s191 + $0x68] sm:%s183] %v218
                %v220 = vld [vmem:[%s190 + $0xe0] sm:%s183]
                %221 = vst [vmem:[%s191 + $0x70] sm:%s183] %v220
                %v222 = vld [vmem:[%s190 + $0xf0] sm:%s183]
                %223 = vst [vmem:[%s191 + $0x78] sm:%s183] %v222
                %v224 = vld [vmem:[%s190 + $0x100] sm:%s183]
                %225 = vst [vmem:[%s191 + $0x80] sm:%s183] %v224
                %v226 = vld [vmem:[%s190 + $0x110] sm:%s183]
                %227 = vst [vmem:[%s191 + $0x88] sm:%s183] %v226
                %v228 = vld [vmem:[%s190 + $0x120] sm:%s183]
                %229 = vst [vmem:[%s191 + $0x90] sm:%s183] %v228
                %v230 = vld [vmem:[%s190 + $0x130] sm:%s183]
                %231 = vst [vmem:[%s191 + $0x98] sm:%s183] %v230
                %v232 = vld [vmem:[%s190 + $0x140] sm:%s183]
                %233 = vst [vmem:[%s191 + $0xa0] sm:%s183] %v232
                %v234 = vld [vmem:[%s190 + $0x150] sm:%s183]
                %235 = vst [vmem:[%s191 + $0xa8] sm:%s183] %v234
                %v236 = vld [vmem:[%s190 + $0x160] sm:%s183]
                %237 = vst [vmem:[%s191 + $0xb0] sm:%s183] %v236
                %v238 = vld [vmem:[%s190 + $0x170] sm:%s183]
                %239 = vst [vmem:[%s191 + $0xb8] sm:%s183] %v238
                %v240 = vld [vmem:[%s190 + $0x180] sm:%s183]
                %241 = vst [vmem:[%s191 + $0xc0] sm:%s183] %v240
                %v242 = vld [vmem:[%s190 + $0x190] sm:%s183]
                %243 = vst [vmem:[%s191 + $0xc8] sm:%s183] %v242
                %v244 = vld [vmem:[%s190 + $0x1a0] sm:%s183]
                %245 = vst [vmem:[%s191 + $0xd0] sm:%s183] %v244
                %v246 = vld [vmem:[%s190 + $0x1b0] sm:%s183]
                %247 = vst [vmem:[%s191 + $0xd8] sm:%s183] %v246
                %v248 = vld [vmem:[%s190 + $0x1c0] sm:%s183]
                %249 = vst [vmem:[%s191 + $0xe0] sm:%s183] %v248
                %v250 = vld [vmem:[%s190 + $0x1d0] sm:%s183]
                %251 = vst [vmem:[%s191 + $0xe8] sm:%s183] %v250
                %v252 = vld [vmem:[%s190 + $0x1e0] sm:%s183]
                %253 = vst [vmem:[%s191 + $0xf0] sm:%s183] %v252
                %v254 = vld [vmem:[%s190 + $0x1f0] sm:%s183]
                %255 = vst [vmem:[%s191 + $0xf8] sm:%s183] %v254
                %v256 = vld [vmem:[%s190 + $0x200] sm:%s183]
                %257 = vst [vmem:[%s191 + $0x100] sm:%s183] %v256
                %v258 = vld [vmem:[%s190 + $0x210] sm:%s183]
                %259 = vst [vmem:[%s191 + $0x108] sm:%s183] %v258
                %v260 = vld [vmem:[%s190 + $0x220] sm:%s183]
                %261 = vst [vmem:[%s191 + $0x110] sm:%s183] %v260
                %v262 = vld [vmem:[%s190 + $0x230] sm:%s183]
                %263 = vst [vmem:[%s191 + $0x118] sm:%s183] %v262
                %v264 = vld [vmem:[%s190 + $0x240] sm:%s183]
                %265 = vst [vmem:[%s191 + $0x120] sm:%s183] %v264
                %v266 = vld [vmem:[%s190 + $0x250] sm:%s183]
                %267 = vst [vmem:[%s191 + $0x128] sm:%s183] %v266
                %v268 = vld [vmem:[%s190 + $0x260] sm:%s183]
                %269 = vst [vmem:[%s191 + $0x130] sm:%s183] %v268
                %v270 = vld [vmem:[%s190 + $0x270] sm:%s183]
                %271 = vst [vmem:[%s191 + $0x138] sm:%s183] %v270
                %v272 = vld [vmem:[%s190 + $0x280] sm:%s183]
                %273 = vst [vmem:[%s191 + $0x140] sm:%s183] %v272
                %v274 = vld [vmem:[%s190 + $0x290] sm:%s183]
                %275 = vst [vmem:[%s191 + $0x148] sm:%s183] %v274
                %v276 = vld [vmem:[%s190 + $0x2a0] sm:%s183]
                %277 = vst [vmem:[%s191 + $0x150] sm:%s183] %v276
                %v278 = vld [vmem:[%s190 + $0x2b0] sm:%s183]
                %279 = vst [vmem:[%s191 + $0x158] sm:%s183] %v278
                %v280 = vld [vmem:[%s190 + $0x2c0] sm:%s183]
                %281 = vst [vmem:[%s191 + $0x160] sm:%s183] %v280
                %v282 = vld [vmem:[%s190 + $0x2d0] sm:%s183]
                %283 = vst [vmem:[%s191 + $0x168] sm:%s183] %v282
                %v284 = vld [vmem:[%s190 + $0x2e0] sm:%s183]
                %285 = vst [vmem:[%s191 + $0x170] sm:%s183] %v284
                %v286 = vld [vmem:[%s190 + $0x2f0] sm:%s183]
                %287 = vst [vmem:[%s191 + $0x178] sm:%s183] %v286
                %v288 = vld [vmem:[%s190 + $0x300] sm:%s183]
                %289 = vst [vmem:[%s191 + $0x180] sm:%s183] %v288
                %v290 = vld [vmem:[%s190 + $0x310] sm:%s183]
                %291 = vst [vmem:[%s191 + $0x188] sm:%s183] %v290
                %v292 = vld [vmem:[%s190 + $0x320] sm:%s183]
                %293 = vst [vmem:[%s191 + $0x190] sm:%s183] %v292
                %v294 = vld [vmem:[%s190 + $0x330] sm:%s183]
                %295 = vst [vmem:[%s191 + $0x198] sm:%s183] %v294
                %v296 = vld [vmem:[%s190 + $0x340] sm:%s183]
                %297 = vst [vmem:[%s191 + $0x1a0] sm:%s183] %v296
                %v298 = vld [vmem:[%s190 + $0x350] sm:%s183]
                %299 = vst [vmem:[%s191 + $0x1a8] sm:%s183] %v298
                %v300 = vld [vmem:[%s190 + $0x360] sm:%s183]
                %301 = vst [vmem:[%s191 + $0x1b0] sm:%s183] %v300
                %v302 = vld [vmem:[%s190 + $0x370] sm:%s183]
                %303 = vst [vmem:[%s191 + $0x1b8] sm:%s183] %v302
              $region37: #{tpu_custom_call.1} parent=31 // loop_footer
                %s189 = sadd.s32 1, %s185
              $region38: #{tpu_custom_call.1} parent=31 // loop_footer_branch
                %184 = sbr.rel target = $region34
              $region39: #{tpu_custom_call.1} parent=31 // loop_exit
                _
            $region32: #{tpu_custom_call.1} parent=23 // pred_fallthru
              _
          $region24: #{tpu_custom_call.1} parent=19 // pred_fallthru
            _
          %428 = vnop
        $region20: #{tpu_custom_call.1} parent=15 // pred_fallthru
          _
        // Predicated region
        $region55: #{tpu_custom_call.1} parent=15 // pred_check
          %p429 = pneg %p64
        $region56: #{tpu_custom_call.1} parent=15 // pred_check_branch
          %431 = sbr.rel (%p429) target = $region58
        $region57: #{tpu_custom_call.1} parent=15 // pred_region
          #allocation13 [shape = 'u32[6]{0}', space=smem, size = 0x18, scoped, tag = 'DMA stride descriptor']
          %s432 = sand.u32 %s54, 1
          %s433 = scalar_lea.sflag [#allocation7], %s432
          %s434 = sand.u32 %s54, 1
          %s435 = smul.addr %s434, 576
          %s436 = scalar_lea.vmem [#allocation6], %s435
          %s437 = smul.u32 16, %s16
          %439 = vsyncadd %s433, 0
          %s440 = smul.addr %s437, 2
          %s441 = sadd.s32 %s16, %s440
          %s442 = smul.addr %s441, 4
          %s443 = scalar_lea.hbm %s1, %s442
          %s445 = sshll.u32 1, 14
          %s446 = sxor.u32 4294967295, %s445
          %s448 = sld [smem:[#allocation0]]
          %s449 = sadd.s32 2, %s448
          %s451 = sshll.u32 7, 26
          %s452 = sxor.u32 4294967295, %s451
          %s453 = sand.u32 0, %s452
          %s454 = sshll.u32 %s449, 26
          %s455 = sor.u32 %s453, %s454
          %s456 = sshll.u32 %s443, 4
          %s457 = int_to_ptr.hbm [resolvable:$true] %s456
          %s458 = sshll.u32 %s436, 4
          %s459 = int_to_ptr.vmem [resolvable:$true] %s458
          %465 = sst [smem:[#allocation13]] 4096
          %s466 = scalar_lea.smem [#allocation13], 1
          %467 = sst [smem:[%s466]] 1024
          %s468 = scalar_lea.smem [#allocation13], 2
          %469 = sst [smem:[%s468]] 16
          %s470 = scalar_lea.smem [#allocation13], 3
          %471 = sst [smem:[%s470]] 128
          %s472 = scalar_lea.smem [#allocation13], 4
          %473 = sst [smem:[%s472]] 64
          %s474 = scalar_lea.smem [#allocation13], 5
          %475 = sst [smem:[%s474]] 4
          %477 = dma.general %s457, 9216, %s459, %s433, [#allocation12], [#allocation13], %s455, 0
        $region58: #{tpu_custom_call.1} parent=15 // pred_fallthru
          _
        // Predicated region
        $region59: #{tpu_custom_call.1} parent=15 // pred_check
          %p478 = pneg %p90
        $region60: #{tpu_custom_call.1} parent=15 // pred_check_branch
          %480 = sbr.rel (%p478) target = $region62
        $region61: #{tpu_custom_call.1} parent=15 // pred_region
          %s481 = sand.u32 %s16, 1
          %s482 = scalar_lea.sflag [#allocation9], %s481
          %s483 = sand.u32 %s80, 1
          %s484 = scalar_lea.vmem [#allocation8], %s483
          %486 = vsyncadd %s482, 0
          %s487 = scalar_lea.hbm %s2, %s16
          %s489 = sshll.u32 %s487, 4
          %s490 = int_to_ptr.hbm [resolvable:$true] %s489
          %s491 = sshll.u32 %s484, 4
          %s492 = int_to_ptr.vmem [resolvable:$true] %s491
          %494 = dma.hbm_to_vmem [thread:$0]  %s490, 16, %s492, %s482
        $region62: #{tpu_custom_call.1} parent=15 // pred_fallthru
          _
        // Predicated region
        $region63: #{tpu_custom_call.1} parent=15 // pred_check
          %p495 = pneg %p116
        $region64: #{tpu_custom_call.1} parent=15 // pred_check_branch
          %497 = sbr.rel (%p495) target = $region66
        $region65: #{tpu_custom_call.1} parent=15 // pred_region
          %s498 = sand.u32 %s16, 1
          %s499 = scalar_lea.sflag [#allocation9], %s498
          %s500 = sand.u32 %s106, 1
          %s501 = scalar_lea.vmem [#allocation10], %s500
          %503 = vsyncadd %s499, 0
          %s504 = scalar_lea.hbm %s3, %s16
          %s506 = sshll.u32 %s504, 4
          %s507 = int_to_ptr.hbm [resolvable:$true] %s506
          %s508 = sshll.u32 %s501, 4
          %s509 = int_to_ptr.vmem [resolvable:$true] %s508
          %511 = dma.hbm_to_vmem [thread:$0]  %s507, 16, %s509, %s499
        $region66: #{tpu_custom_call.1} parent=15 // pred_fallthru
          _
      $region16: #{tpu_custom_call.1} parent=5 // pred_fallthru
        _
      %p512 = scmp.le.s32.totalorder 1, %s16
      %p513 = scmp.lt.s32.totalorder %s16, 3
      %p514 = pnand %p512, %p513
      %p515 = pneg %p514
      // Predicated region
      $region67: #{tpu_custom_call.1} parent=5 // pred_check
        _
      $region68: #{tpu_custom_call.1} parent=5 // pred_check_branch
        %517 = sbr.rel (%p514) target = $region70
      $region69: #{tpu_custom_call.1} parent=5 // pred_region
        %s518 = ssub.s32 %s16, 1
        %s519 = sand.u32 %s29, 1
        %s520 = sand.u32 %s29, 1
        %s521 = smul.addr %s520, 448
        %s522 = scalar_lea.vmem [#allocation5], %s521
        // Predicated region
        $region71: #{tpu_custom_call.1} parent=69 // pred_check
          %p523 = pneg %p42
        $region72: #{tpu_custom_call.1} parent=69 // pred_check_branch
          %525 = sbr.rel (%p523) target = $region74
        $region73: #{tpu_custom_call.1} parent=69 // pred_region
          _
        $region74: #{tpu_custom_call.1} parent=69 // pred_fallthru
          _
        %s526 = sand.u32 %s57, 1
        %s527 = scalar_lea.sflag [#allocation7], %s526
        %s528 = sand.u32 %s57, 1
        %s529 = smul.addr %s528, 576
        %s530 = scalar_lea.vmem [#allocation6], %s529
        // Predicated region
        $region75: #{tpu_custom_call.1} parent=69 // pred_check
          %p531 = pneg %p70
        $region76: #{tpu_custom_call.1} parent=69 // pred_check_branch
          %533 = sbr.rel (%p531) target = $region78
        $region77: #{tpu_custom_call.1} parent=69 // pred_region
          %535 = dma.done %s527, 9216
        $region78: #{tpu_custom_call.1} parent=69 // pred_fallthru
          _
        %s536 = sand.u32 %s21, 1
        %s537 = scalar_lea.sflag [#allocation9], %s536
        %s538 = sand.u32 %s83, 1
        %s539 = scalar_lea.vmem [#allocation8], %s538
        // Predicated region
        $region79: #{tpu_custom_call.1} parent=69 // pred_check
          %p540 = pneg %p96
        $region80: #{tpu_custom_call.1} parent=69 // pred_check_branch
          %542 = sbr.rel (%p540) target = $region82
        $region81: #{tpu_custom_call.1} parent=69 // pred_region
          %544 = dma.done %s537, 16
        $region82: #{tpu_custom_call.1} parent=69 // pred_fallthru
          _
        %s545 = sand.u32 %s21, 1
        %s546 = scalar_lea.sflag [#allocation9], %s545
        %s547 = sand.u32 %s109, 1
        %s548 = scalar_lea.vmem [#allocation10], %s547
        // Predicated region
        $region83: #{tpu_custom_call.1} parent=69 // pred_check
          %p549 = pneg %p122
        $region84: #{tpu_custom_call.1} parent=69 // pred_check_branch
          %551 = sbr.rel (%p549) target = $region86
        $region85: #{tpu_custom_call.1} parent=69 // pred_region
          %553 = dma.done %s546, 16
        $region86: #{tpu_custom_call.1} parent=69 // pred_fallthru
          _
        %s554 = sand.u32 %s29, 1
        %s555 = sand.u32 %s29, 1
        %s556 = smul.addr %s555, 448
        %s557 = scalar_lea.vmem [#allocation5], %s556
        %p558 = pneg %p42
        %p559 = pneg %p39
        %s560 = sand.u32 %s57, 1
        %s561 = scalar_lea.sflag [#allocation7], %s560
        %s562 = sand.u32 %s57, 1
        %s563 = smul.addr %s562, 576
        %s564 = scalar_lea.vmem [#allocation6], %s563
        %p565 = pneg %p70
        %p566 = pneg %p67
        %s567 = sand.u32 %s21, 1
        %s568 = scalar_lea.sflag [#allocation9], %s567
        %s569 = sand.u32 %s83, 1
        %s570 = scalar_lea.vmem [#allocation8], %s569
        %p571 = pneg %p96
        %p572 = pneg %p93
        %s573 = sand.u32 %s21, 1
        %s574 = scalar_lea.sflag [#allocation9], %s573
        %s575 = sand.u32 %s109, 1
        %s576 = scalar_lea.vmem [#allocation10], %s575
        %p577 = pneg %p122
        %p578 = pneg %p119
        %p579 = pneg %p148
        %p580 = pneg %p145
        %s581 = sand.u32 %s135, 1
        %s582 = sand.u32 %s135, 1
        %s583 = smul.addr %s582, 448
        %s584 = scalar_lea.vmem [#allocation11], %s583
        %s585 = smul.u32 16, %s21
        %586 = vst [vmem:[#allocation2] sm:$0xff] 0.0
        %587 = vst [vmem:[#allocation2 + $0x8] sm:$0xff] 0.0
        %588 = vst [vmem:[#allocation2 + $0x10] sm:$0xff] 0.0
        %589 = vst [vmem:[#allocation2 + $0x18] sm:$0xff] 0.0
        %590 = vst [vmem:[#allocation2 + $0x20] sm:$0xff] 0.0
        %591 = vst [vmem:[#allocation2 + $0x28] sm:$0xff] 0.0
        %592 = vst [vmem:[#allocation2 + $0x30] sm:$0xff] 0.0
        %593 = vst [vmem:[#allocation2 + $0x38] sm:$0xff] 0.0
        %594 = vst [vmem:[#allocation2 + $0x40] sm:$0xff] 0.0
        %595 = vst [vmem:[#allocation2 + $0x48] sm:$0xff] 0.0
        %596 = vst [vmem:[#allocation2 + $0x50] sm:$0xff] 0.0
        %597 = vst [vmem:[#allocation2 + $0x58] sm:$0xff] 0.0
        %598 = vst [vmem:[#allocation2 + $0x60] sm:$0xff] 0.0
        %599 = vst [vmem:[#allocation2 + $0x68] sm:$0xff] 0.0
        %600 = vst [vmem:[#allocation2 + $0x70] sm:$0xff] 0.0
        %601 = vst [vmem:[#allocation2 + $0x78] sm:$0xff] 0.0
        %602 = vst [vmem:[#allocation2 + $0x80] sm:$0xff] 0.0
        %603 = vst [vmem:[#allocation2 + $0x88] sm:$0xff] 0.0
        %604 = vst [vmem:[#allocation2 + $0x90] sm:$0xff] 0.0
        %605 = vst [vmem:[#allocation2 + $0x98] sm:$0xff] 0.0
        %606 = vst [vmem:[#allocation2 + $0xa0] sm:$0xff] 0.0
        %607 = vst [vmem:[#allocation2 + $0xa8] sm:$0xff] 0.0
        %608 = vst [vmem:[#allocation2 + $0xb0] sm:$0xff] 0.0
        %609 = vst [vmem:[#allocation2 + $0xb8] sm:$0xff] 0.0
        %610 = vst [vmem:[#allocation2 + $0xc0] sm:$0xff] 0.0
        %611 = vst [vmem:[#allocation2 + $0xc8] sm:$0xff] 0.0
        %612 = vst [vmem:[#allocation2 + $0xd0] sm:$0xff] 0.0
        %613 = vst [vmem:[#allocation2 + $0xd8] sm:$0xff] 0.0
        %614 = vst [vmem:[#allocation2 + $0xe0] sm:$0xff] 0.0
        %615 = vst [vmem:[#allocation2 + $0xe8] sm:$0xff] 0.0
        %616 = vst [vmem:[#allocation2 + $0xf0] sm:$0xff] 0.0
        %617 = vst [vmem:[#allocation2 + $0xf8] sm:$0xff] 0.0
        %618 = vst [vmem:[#allocation2 + $0x100] sm:$0xff] 0.0
        %619 = vst [vmem:[#allocation2 + $0x108] sm:$0xff] 0.0
        %620 = vst [vmem:[#allocation2 + $0x110] sm:$0xff] 0.0
        %621 = vst [vmem:[#allocation2 + $0x118] sm:$0xff] 0.0
        %622 = vst [vmem:[#allocation2 + $0x120] sm:$0xff] 0.0
        %623 = vst [vmem:[#allocation2 + $0x128] sm:$0xff] 0.0
        %624 = vst [vmem:[#allocation2 + $0x130] sm:$0xff] 0.0
        %625 = vst [vmem:[#allocation2 + $0x138] sm:$0xff] 0.0
        %626 = vst [vmem:[#allocation2 + $0x140] sm:$0xff] 0.0
        %627 = vst [vmem:[#allocation2 + $0x148] sm:$0xff] 0.0
        %628 = vst [vmem:[#allocation2 + $0x150] sm:$0xff] 0.0
        %629 = vst [vmem:[#allocation2 + $0x158] sm:$0xff] 0.0
        %630 = vst [vmem:[#allocation2 + $0x160] sm:$0xff] 0.0
        %631 = vst [vmem:[#allocation2 + $0x168] sm:$0xff] 0.0
        %632 = vst [vmem:[#allocation2 + $0x170] sm:$0xff] 0.0
        %633 = vst [vmem:[#allocation2 + $0x178] sm:$0xff] 0.0
        %634 = vst [vmem:[#allocation2 + $0x180] sm:$0xff] 0.0
        %635 = vst [vmem:[#allocation2 + $0x188] sm:$0xff] 0.0
        %636 = vst [vmem:[#allocation2 + $0x190] sm:$0xff] 0.0
        %637 = vst [vmem:[#allocation2 + $0x198] sm:$0xff] 0.0
        %638 = vst [vmem:[#allocation2 + $0x1a0] sm:$0xff] 0.0
        %639 = vst [vmem:[#allocation2 + $0x1a8] sm:$0xff] 0.0
        %640 = vst [vmem:[#allocation2 + $0x1b0] sm:$0xff] 0.0
        %641 = vst [vmem:[#allocation2 + $0x1b8] sm:$0xff] 0.0
        %642 = vst [vmem:[#allocation2 + $0x1c0] sm:$0xff] 0.0
        %643 = vst [vmem:[#allocation2 + $0x1c8] sm:$0xff] 0.0
        %644 = vst [vmem:[#allocation2 + $0x1d0] sm:$0xff] 0.0
        %645 = vst [vmem:[#allocation2 + $0x1d8] sm:$0xff] 0.0
        %646 = vst [vmem:[#allocation2 + $0x1e0] sm:$0xff] 0.0
        %647 = vst [vmem:[#allocation2 + $0x1e8] sm:$0xff] 0.0
        %648 = vst [vmem:[#allocation2 + $0x1f0] sm:$0xff] 0.0
        %649 = vst [vmem:[#allocation2 + $0x1f8] sm:$0xff] 0.0
        %650 = vst [vmem:[#allocation2 + $0x200] sm:$0xff] 0.0
        %651 = vst [vmem:[#allocation2 + $0x208] sm:$0xff] 0.0
        %652 = vst [vmem:[#allocation2 + $0x210] sm:$0xff] 0.0
        %653 = vst [vmem:[#allocation2 + $0x218] sm:$0xff] 0.0
        %654 = vst [vmem:[#allocation2 + $0x220] sm:$0xff] 0.0
        %655 = vst [vmem:[#allocation2 + $0x228] sm:$0xff] 0.0
        %656 = vst [vmem:[#allocation2 + $0x230] sm:$0xff] 0.0
        %657 = vst [vmem:[#allocation2 + $0x238] sm:$0xff] 0.0
        %658 = vst [vmem:[#allocation2 + $0x240] sm:$0xff] 0.0
        %659 = vst [vmem:[#allocation2 + $0x248] sm:$0xff] 0.0
        %660 = vst [vmem:[#allocation2 + $0x250] sm:$0xff] 0.0
        %661 = vst [vmem:[#allocation2 + $0x258] sm:$0xff] 0.0
        %662 = vst [vmem:[#allocation2 + $0x260] sm:$0xff] 0.0
        %663 = vst [vmem:[#allocation2 + $0x268] sm:$0xff] 0.0
        %664 = vst [vmem:[#allocation2 + $0x270] sm:$0xff] 0.0
        %665 = vst [vmem:[#allocation2 + $0x278] sm:$0xff] 0.0
        %666 = vst [vmem:[#allocation2 + $0x280] sm:$0xff] 0.0
        %667 = vst [vmem:[#allocation2 + $0x288] sm:$0xff] 0.0
        %668 = vst [vmem:[#allocation2 + $0x290] sm:$0xff] 0.0
        %669 = vst [vmem:[#allocation2 + $0x298] sm:$0xff] 0.0
        %670 = vst [vmem:[#allocation2 + $0x2a0] sm:$0xff] 0.0
        %671 = vst [vmem:[#allocation2 + $0x2a8] sm:$0xff] 0.0
        %672 = vst [vmem:[#allocation2 + $0x2b0] sm:$0xff] 0.0
        %673 = vst [vmem:[#allocation2 + $0x2b8] sm:$0xff] 0.0
        %674 = vst [vmem:[#allocation2 + $0x2c0] sm:$0xff] 0.0
        %675 = vst [vmem:[#allocation2 + $0x2c8] sm:$0xff] 0.0
        %676 = vst [vmem:[#allocation2 + $0x2d0] sm:$0xff] 0.0
        %677 = vst [vmem:[#allocation2 + $0x2d8] sm:$0xff] 0.0
        %678 = vst [vmem:[#allocation2 + $0x2e0] sm:$0xff] 0.0
        %679 = vst [vmem:[#allocation2 + $0x2e8] sm:$0xff] 0.0
        %680 = vst [vmem:[#allocation2 + $0x2f0] sm:$0xff] 0.0
        %681 = vst [vmem:[#allocation2 + $0x2f8] sm:$0xff] 0.0
        %v682 = vld [vmem:[%s522] sm:$0xff]
        %v683 = vld [vmem:[%s522 + $0x8] sm:$0x3f]
        %v684 = vld [vmem:[%s522 + $0x10] sm:$0xff]
        %v685 = vld [vmem:[%s522 + $0x18] sm:$0x3f]
        %v686 = vld [vmem:[%s522 + $0x20] sm:$0xff]
        %v687 = vld [vmem:[%s522 + $0x28] sm:$0x3f]
        %v688 = vld [vmem:[%s522 + $0x30] sm:$0xff]
        %v689 = vld [vmem:[%s522 + $0x38] sm:$0x3f]
        %v690 = vld [vmem:[%s522 + $0x40] sm:$0xff]
        %v691 = vld [vmem:[%s522 + $0x48] sm:$0x3f]
        %v692 = vld [vmem:[%s522 + $0x50] sm:$0xff]
        %v693 = vld [vmem:[%s522 + $0x58] sm:$0x3f]
        %v694 = vld [vmem:[%s522 + $0x60] sm:$0xff]
        %v695 = vld [vmem:[%s522 + $0x68] sm:$0x3f]
        %v696 = vld [vmem:[%s522 + $0x70] sm:$0xff]
        %v697 = vld [vmem:[%s522 + $0x78] sm:$0x3f]
        %v698 = vld [vmem:[%s522 + $0x80] sm:$0xff]
        %v699 = vld [vmem:[%s522 + $0x88] sm:$0x3f]
        %v700 = vld [vmem:[%s522 + $0x90] sm:$0xff]
        %v701 = vld [vmem:[%s522 + $0x98] sm:$0x3f]
        %v702 = vld [vmem:[%s522 + $0xa0] sm:$0xff]
        %v703 = vld [vmem:[%s522 + $0xa8] sm:$0x3f]
        %v704 = vld [vmem:[%s522 + $0xb0] sm:$0xff]
        %v705 = vld [vmem:[%s522 + $0xb8] sm:$0x3f]
        %v706 = vld [vmem:[%s522 + $0xc0] sm:$0xff]
        %v707 = vld [vmem:[%s522 + $0xc8] sm:$0x3f]
        %v708 = vld [vmem:[%s522 + $0xd0] sm:$0xff]
        %v709 = vld [vmem:[%s522 + $0xd8] sm:$0x3f]
        %v710 = vld [vmem:[%s522 + $0xe0] sm:$0xff]
        %v711 = vld [vmem:[%s522 + $0xe8] sm:$0x3f]
        %v712 = vld [vmem:[%s522 + $0xf0] sm:$0xff]
        %v713 = vld [vmem:[%s522 + $0xf8] sm:$0x3f]
        %v714 = vld [vmem:[%s522 + $0x100] sm:$0xff]
        %v715 = vld [vmem:[%s522 + $0x108] sm:$0x3f]
        %v716 = vld [vmem:[%s522 + $0x110] sm:$0xff]
        %v717 = vld [vmem:[%s522 + $0x118] sm:$0x3f]
        %v718 = vld [vmem:[%s522 + $0x120] sm:$0xff]
        %v719 = vld [vmem:[%s522 + $0x128] sm:$0x3f]
        %v720 = vld [vmem:[%s522 + $0x130] sm:$0xff]
        %v721 = vld [vmem:[%s522 + $0x138] sm:$0x3f]
        %v722 = vld [vmem:[%s522 + $0x140] sm:$0xff]
        %v723 = vld [vmem:[%s522 + $0x148] sm:$0x3f]
        %v724 = vld [vmem:[%s522 + $0x150] sm:$0xff]
        %v725 = vld [vmem:[%s522 + $0x158] sm:$0x3f]
        %v726 = vld [vmem:[%s522 + $0x160] sm:$0xff]
        %v727 = vld [vmem:[%s522 + $0x168] sm:$0x3f]
        %v728 = vld [vmem:[%s522 + $0x170] sm:$0xff]
        %v729 = vld [vmem:[%s522 + $0x178] sm:$0x3f]
        %v730 = vld [vmem:[%s522 + $0x180] sm:$0xff]
        %v731 = vld [vmem:[%s522 + $0x188] sm:$0x3f]
        %v732 = vld [vmem:[%s522 + $0x190] sm:$0xff]
        %v733 = vld [vmem:[%s522 + $0x198] sm:$0x3f]
        %v734 = vld [vmem:[%s522 + $0x1a0] sm:$0xff]
        %v735 = vld [vmem:[%s522 + $0x1a8] sm:$0x3f]
        %v736 = vld [vmem:[%s522 + $0x1b0] sm:$0xff]
        %v737 = vld [vmem:[%s522 + $0x1b8] sm:$0x3f]
        %v738 = vmax.f32 %v682, 0.0
        %v739 = vmax.f32 %v683, 0.0
        %v740 = vmax.f32 %v684, 0.0
        %v741 = vmax.f32 %v685, 0.0
        %v742 = vmax.f32 %v686, 0.0
        %v743 = vmax.f32 %v687, 0.0
        %v744 = vmax.f32 %v688, 0.0
        %v745 = vmax.f32 %v689, 0.0
        %v746 = vmax.f32 %v690, 0.0
        %v747 = vmax.f32 %v691, 0.0
        %v748 = vmax.f32 %v692, 0.0
        %v749 = vmax.f32 %v693, 0.0
        %v750 = vmax.f32 %v694, 0.0
        %v751 = vmax.f32 %v695, 0.0
        %v752 = vmax.f32 %v696, 0.0
        %v753 = vmax.f32 %v697, 0.0
        %v754 = vmax.f32 %v698, 0.0
        %v755 = vmax.f32 %v699, 0.0
        %v756 = vmax.f32 %v700, 0.0
        %v757 = vmax.f32 %v701, 0.0
        %v758 = vmax.f32 %v702, 0.0
        %v759 = vmax.f32 %v703, 0.0
        %v760 = vmax.f32 %v704, 0.0
        %v761 = vmax.f32 %v705, 0.0
        %v762 = vmax.f32 %v706, 0.0
        %v763 = vmax.f32 %v707, 0.0
        %v764 = vmax.f32 %v708, 0.0
        %v765 = vmax.f32 %v709, 0.0
        %v766 = vmax.f32 %v710, 0.0
        %v767 = vmax.f32 %v711, 0.0
        %v768 = vmax.f32 %v712, 0.0
        %v769 = vmax.f32 %v713, 0.0
        %v770 = vmax.f32 %v714, 0.0
        %v771 = vmax.f32 %v715, 0.0
        %v772 = vmax.f32 %v716, 0.0
        %v773 = vmax.f32 %v717, 0.0
        %v774 = vmax.f32 %v718, 0.0
        %v775 = vmax.f32 %v719, 0.0
        %v776 = vmax.f32 %v720, 0.0
        %v777 = vmax.f32 %v721, 0.0
        %v778 = vmax.f32 %v722, 0.0
        %v779 = vmax.f32 %v723, 0.0
        %v780 = vmax.f32 %v724, 0.0
        %v781 = vmax.f32 %v725, 0.0
        %v782 = vmax.f32 %v726, 0.0
        %v783 = vmax.f32 %v727, 0.0
        %v784 = vmax.f32 %v728, 0.0
        %v785 = vmax.f32 %v729, 0.0
        %v786 = vmax.f32 %v730, 0.0
        %v787 = vmax.f32 %v731, 0.0
        %v788 = vmax.f32 %v732, 0.0
        %v789 = vmax.f32 %v733, 0.0
        %v790 = vmax.f32 %v734, 0.0
        %v791 = vmax.f32 %v735, 0.0
        %v792 = vmax.f32 %v736, 0.0
        %v793 = vmax.f32 %v737, 0.0
        %s794 = scalar_lea.vmem [#allocation2], 24
        %795 = vst [vmem:[%s794 + $0x1] sm:$0xff] %v738
        %796 = vst [vmem:[%s794 + $0x9] sm:$0x3f] %v739
        %797 = vst [vmem:[%s794 + $0x19] sm:$0xff] %v740
        %798 = vst [vmem:[%s794 + $0x21] sm:$0x3f] %v741
        %799 = vst [vmem:[%s794 + $0x31] sm:$0xff] %v742
        %800 = vst [vmem:[%s794 + $0x39] sm:$0x3f] %v743
        %801 = vst [vmem:[%s794 + $0x49] sm:$0xff] %v744
        %802 = vst [vmem:[%s794 + $0x51] sm:$0x3f] %v745
        %803 = vst [vmem:[%s794 + $0x61] sm:$0xff] %v746
        %804 = vst [vmem:[%s794 + $0x69] sm:$0x3f] %v747
        %805 = vst [vmem:[%s794 + $0x79] sm:$0xff] %v748
        %806 = vst [vmem:[%s794 + $0x81] sm:$0x3f] %v749
        %807 = vst [vmem:[%s794 + $0x91] sm:$0xff] %v750
        %808 = vst [vmem:[%s794 + $0x99] sm:$0x3f] %v751
        %809 = vst [vmem:[%s794 + $0xa9] sm:$0xff] %v752
        %810 = vst [vmem:[%s794 + $0xb1] sm:$0x3f] %v753
        %811 = vst [vmem:[%s794 + $0xc1] sm:$0xff] %v754
        %812 = vst [vmem:[%s794 + $0xc9] sm:$0x3f] %v755
        %813 = vst [vmem:[%s794 + $0xd9] sm:$0xff] %v756
        %814 = vst [vmem:[%s794 + $0xe1] sm:$0x3f] %v757
        %815 = vst [vmem:[%s794 + $0xf1] sm:$0xff] %v758
        %816 = vst [vmem:[%s794 + $0xf9] sm:$0x3f] %v759
        %817 = vst [vmem:[%s794 + $0x109] sm:$0xff] %v760
        %818 = vst [vmem:[%s794 + $0x111] sm:$0x3f] %v761
        %819 = vst [vmem:[%s794 + $0x121] sm:$0xff] %v762
        %820 = vst [vmem:[%s794 + $0x129] sm:$0x3f] %v763
        %821 = vst [vmem:[%s794 + $0x139] sm:$0xff] %v764
        %822 = vst [vmem:[%s794 + $0x141] sm:$0x3f] %v765
        %823 = vst [vmem:[%s794 + $0x181] sm:$0xff] %v766
        %824 = vst [vmem:[%s794 + $0x189] sm:$0x3f] %v767
        %825 = vst [vmem:[%s794 + $0x199] sm:$0xff] %v768
        %826 = vst [vmem:[%s794 + $0x1a1] sm:$0x3f] %v769
        %827 = vst [vmem:[%s794 + $0x1b1] sm:$0xff] %v770
        %828 = vst [vmem:[%s794 + $0x1b9] sm:$0x3f] %v771
        %829 = vst [vmem:[%s794 + $0x1c9] sm:$0xff] %v772
        %830 = vst [vmem:[%s794 + $0x1d1] sm:$0x3f] %v773
        %831 = vst [vmem:[%s794 + $0x1e1] sm:$0xff] %v774
        %832 = vst [vmem:[%s794 + $0x1e9] sm:$0x3f] %v775
        %833 = vst [vmem:[%s794 + $0x1f9] sm:$0xff] %v776
        %834 = vst [vmem:[%s794 + $0x201] sm:$0x3f] %v777
        %835 = vst [vmem:[%s794 + $0x211] sm:$0xff] %v778
        %836 = vst [vmem:[%s794 + $0x219] sm:$0x3f] %v779
        %837 = vst [vmem:[%s794 + $0x229] sm:$0xff] %v780
        %838 = vst [vmem:[%s794 + $0x231] sm:$0x3f] %v781
        %839 = vst [vmem:[%s794 + $0x241] sm:$0xff] %v782
        %840 = vst [vmem:[%s794 + $0x249] sm:$0x3f] %v783
        %841 = vst [vmem:[%s794 + $0x259] sm:$0xff] %v784
        %842 = vst [vmem:[%s794 + $0x261] sm:$0x3f] %v785
        %843 = vst [vmem:[%s794 + $0x271] sm:$0xff] %v786
        %844 = vst [vmem:[%s794 + $0x279] sm:$0x3f] %v787
        %845 = vst [vmem:[%s794 + $0x289] sm:$0xff] %v788
        %846 = vst [vmem:[%s794 + $0x291] sm:$0x3f] %v789
        %847 = vst [vmem:[%s794 + $0x2a1] sm:$0xff] %v790
        %848 = vst [vmem:[%s794 + $0x2a9] sm:$0x3f] %v791
        %849 = vst [vmem:[%s794 + $0x2b9] sm:$0xff] %v792
        %850 = vst [vmem:[%s794 + $0x2c1] sm:$0x3f] %v793
        %v851 = vld [vmem:[#allocation2] sm:$0xff]
        %v852 = vld [vmem:[#allocation2 + $0x8] sm:$0xff]
        %v853 = vld [vmem:[#allocation2 + $0x18] sm:$0xff]
        %v854 = vld [vmem:[#allocation2 + $0x20] sm:$0xff]
        %v855 = vld [vmem:[#allocation2 + $0x30] sm:$0xff]
        %v856 = vld [vmem:[#allocation2 + $0x38] sm:$0xff]
        %v857 = vld [vmem:[#allocation2 + $0x48] sm:$0xff]
        %v858 = vld [vmem:[#allocation2 + $0x50] sm:$0xff]
        %v859 = vld [vmem:[#allocation2 + $0x60] sm:$0xff]
        %v860 = vld [vmem:[#allocation2 + $0x68] sm:$0xff]
        %v861 = vld [vmem:[#allocation2 + $0x78] sm:$0xff]
        %v862 = vld [vmem:[#allocation2 + $0x80] sm:$0xff]
        %v863 = vld [vmem:[#allocation2 + $0x90] sm:$0xff]
        %v864 = vld [vmem:[#allocation2 + $0x98] sm:$0xff]
        %v865 = vld [vmem:[#allocation2 + $0xa8] sm:$0xff]
        %v866 = vld [vmem:[#allocation2 + $0xb0] sm:$0xff]
        %v867 = vld [vmem:[#allocation2 + $0xc0] sm:$0xff]
        %v868 = vld [vmem:[#allocation2 + $0xc8] sm:$0xff]
        %v869 = vld [vmem:[#allocation2 + $0xd8] sm:$0xff]
        %v870 = vld [vmem:[#allocation2 + $0xe0] sm:$0xff]
        %v871 = vld [vmem:[#allocation2 + $0xf0] sm:$0xff]
        %v872 = vld [vmem:[#allocation2 + $0xf8] sm:$0xff]
        %v873 = vld [vmem:[#allocation2 + $0x108] sm:$0xff]
        %v874 = vld [vmem:[#allocation2 + $0x110] sm:$0xff]
        %v875 = vld [vmem:[#allocation2 + $0x120] sm:$0xff]
        %v876 = vld [vmem:[#allocation2 + $0x128] sm:$0xff]
        %v877 = vld [vmem:[#allocation2 + $0x138] sm:$0xff]
        %v878 = vld [vmem:[#allocation2 + $0x140] sm:$0xff]
        %v879 = vld [vmem:[#allocation2 + $0x180] sm:$0xff]
        %v880 = vld [vmem:[#allocation2 + $0x188] sm:$0xff]
        %v881 = vld [vmem:[#allocation2 + $0x198] sm:$0xff]
        %v882 = vld [vmem:[#allocation2 + $0x1a0] sm:$0xff]
        %v883 = vld [vmem:[#allocation2 + $0x1b0] sm:$0xff]
        %v884 = vld [vmem:[#allocation2 + $0x1b8] sm:$0xff]
        %v885 = vld [vmem:[#allocation2 + $0x1c8] sm:$0xff]
        %v886 = vld [vmem:[#allocation2 + $0x1d0] sm:$0xff]
        %v887 = vld [vmem:[#allocation2 + $0x1e0] sm:$0xff]
        %v888 = vld [vmem:[#allocation2 + $0x1e8] sm:$0xff]
        %v889 = vld [vmem:[#allocation2 + $0x1f8] sm:$0xff]
        %v890 = vld [vmem:[#allocation2 + $0x200] sm:$0xff]
        %v891 = vld [vmem:[#allocation2 + $0x210] sm:$0xff]
        %v892 = vld [vmem:[#allocation2 + $0x218] sm:$0xff]
        %v893 = vld [vmem:[#allocation2 + $0x228] sm:$0xff]
        %v894 = vld [vmem:[#allocation2 + $0x230] sm:$0xff]
        %v895 = vld [vmem:[#allocation2 + $0x240] sm:$0xff]
        %v896 = vld [vmem:[#allocation2 + $0x248] sm:$0xff]
        %v897 = vld [vmem:[#allocation2 + $0x258] sm:$0xff]
        %v898 = vld [vmem:[#allocation2 + $0x260] sm:$0xff]
        %v899 = vld [vmem:[#allocation2 + $0x270] sm:$0xff]
        %v900 = vld [vmem:[#allocation2 + $0x278] sm:$0xff]
        %v901 = vld [vmem:[#allocation2 + $0x288] sm:$0xff]
        %v902 = vld [vmem:[#allocation2 + $0x290] sm:$0xff]
        %v903 = vld [vmem:[#allocation2 + $0x2a0] sm:$0xff]
        %v904 = vld [vmem:[#allocation2 + $0x2a8] sm:$0xff]
        %v905 = vld [vmem:[#allocation2 + $0x2b8] sm:$0xff]
        %v906 = vld [vmem:[#allocation2 + $0x2c0] sm:$0xff]
        %v907 = vpack.c.bf16 %v851, %v851
        %v908 = vpack.c.bf16 %v852, %v852
        %v909 = vpack.c.bf16 %v853, %v853
        %v910 = vpack.c.bf16 %v854, %v854
        %v911 = vpack.c.bf16 %v855, %v855
        %v912 = vpack.c.bf16 %v856, %v856
        %v913 = vpack.c.bf16 %v857, %v857
        %v914 = vpack.c.bf16 %v858, %v858
        %v915 = vpack.c.bf16 %v859, %v859
        %v916 = vpack.c.bf16 %v860, %v860
        %v917 = vpack.c.bf16 %v861, %v861
        %v918 = vpack.c.bf16 %v862, %v862
        %v919 = vpack.c.bf16 %v863, %v863
        %v920 = vpack.c.bf16 %v864, %v864
        %v921 = vpack.c.bf16 %v865, %v865
        %v922 = vpack.c.bf16 %v866, %v866
        %v923 = vpack.c.bf16 %v867, %v867
        %v924 = vpack.c.bf16 %v868, %v868
        %v925 = vpack.c.bf16 %v869, %v869
        %v926 = vpack.c.bf16 %v870, %v870
        %v927 = vpack.c.bf16 %v871, %v871
        %v928 = vpack.c.bf16 %v872, %v872
        %v929 = vpack.c.bf16 %v873, %v873
        %v930 = vpack.c.bf16 %v874, %v874
        %v931 = vpack.c.bf16 %v875, %v875
        %v932 = vpack.c.bf16 %v876, %v876
        %v933 = vpack.c.bf16 %v877, %v877
        %v934 = vpack.c.bf16 %v878, %v878
        %v935 = vpack.c.bf16 %v879, %v879
        %v936 = vpack.c.bf16 %v880, %v880
        %v937 = vpack.c.bf16 %v881, %v881
        %v938 = vpack.c.bf16 %v882, %v882
        %v939 = vpack.c.bf16 %v883, %v883
        %v940 = vpack.c.bf16 %v884, %v884
        %v941 = vpack.c.bf16 %v885, %v885
        %v942 = vpack.c.bf16 %v886, %v886
        %v943 = vpack.c.bf16 %v887, %v887
        %v944 = vpack.c.bf16 %v888, %v888
        %v945 = vpack.c.bf16 %v889, %v889
        %v946 = vpack.c.bf16 %v890, %v890
        %v947 = vpack.c.bf16 %v891, %v891
        %v948 = vpack.c.bf16 %v892, %v892
        %v949 = vpack.c.bf16 %v893, %v893
        %v950 = vpack.c.bf16 %v894, %v894
        %v951 = vpack.c.bf16 %v895, %v895
        %v952 = vpack.c.bf16 %v896, %v896
        %v953 = vpack.c.bf16 %v897, %v897
        %v954 = vpack.c.bf16 %v898, %v898
        %v955 = vpack.c.bf16 %v899, %v899
        %v956 = vpack.c.bf16 %v900, %v900
        %v957 = vpack.c.bf16 %v901, %v901
        %v958 = vpack.c.bf16 %v902, %v902
        %v959 = vpack.c.bf16 %v903, %v903
        %v960 = vpack.c.bf16 %v904, %v904
        %v961 = vpack.c.bf16 %v905, %v905
        %v962 = vpack.c.bf16 %v906, %v906
        %963 = vst [vmem:[#allocation3] sm:$0xf] %v907
        %964 = vst [vmem:[#allocation3 + $0x24] sm:$0xf] %v908
        %965 = vst [vmem:[#allocation3 + $0x48] sm:$0xf] %v909
        %966 = vst [vmem:[#allocation3 + $0x6c] sm:$0xf] %v910
        %967 = vst [vmem:[#allocation3 + $0x90] sm:$0xf] %v911
        %968 = vst [vmem:[#allocation3 + $0xb4] sm:$0xf] %v912
        %969 = vst [vmem:[#allocation3 + $0xd8] sm:$0xf] %v913
        %970 = vst [vmem:[#allocation3 + $0xfc] sm:$0xf] %v914
        %971 = vst [vmem:[#allocation3 + $0x120] sm:$0xf] %v915
        %972 = vst [vmem:[#allocation3 + $0x144] sm:$0xf] %v916
        %973 = vst [vmem:[#allocation3 + $0x168] sm:$0xf] %v917
        %974 = vst [vmem:[#allocation3 + $0x18c] sm:$0xf] %v918
        %975 = vst [vmem:[#allocation3 + $0x1b0] sm:$0xf] %v919
        %976 = vst [vmem:[#allocation3 + $0x1d4] sm:$0xf] %v920
        %977 = vst [vmem:[#allocation3 + $0x1f8] sm:$0xf] %v921
        %978 = vst [vmem:[#allocation3 + $0x21c] sm:$0xf] %v922
        %979 = vst [vmem:[#allocation3 + $0x240] sm:$0xf] %v923
        %980 = vst [vmem:[#allocation3 + $0x264] sm:$0xf] %v924
        %981 = vst [vmem:[#allocation3 + $0x288] sm:$0xf] %v925
        %982 = vst [vmem:[#allocation3 + $0x2ac] sm:$0xf] %v926
        %983 = vst [vmem:[#allocation3 + $0x2d0] sm:$0xf] %v927
        %984 = vst [vmem:[#allocation3 + $0x2f4] sm:$0xf] %v928
        %985 = vst [vmem:[#allocation3 + $0x318] sm:$0xf] %v929
        %986 = vst [vmem:[#allocation3 + $0x33c] sm:$0xf] %v930
        %987 = vst [vmem:[#allocation3 + $0x360] sm:$0xf] %v931
        %988 = vst [vmem:[#allocation3 + $0x384] sm:$0xf] %v932
        %989 = vst [vmem:[#allocation3 + $0x3a8] sm:$0xf] %v933
        %990 = vst [vmem:[#allocation3 + $0x3cc] sm:$0xf] %v934
        %991 = vst [vmem:[#allocation3 + $0x3f0] sm:$0xf] %v935
        %992 = vst [vmem:[#allocation3 + $0x414] sm:$0xf] %v936
        %993 = vst [vmem:[#allocation3 + $0x438] sm:$0xf] %v937
        %994 = vst [vmem:[#allocation3 + $0x45c] sm:$0xf] %v938
        %995 = vst [vmem:[#allocation3 + $0x480] sm:$0xf] %v939
        %996 = vst [vmem:[#allocation3 + $0x4a4] sm:$0xf] %v940
        %997 = vst [vmem:[#allocation3 + $0x4c8] sm:$0xf] %v941
        %998 = vst [vmem:[#allocation3 + $0x4ec] sm:$0xf] %v942
        %999 = vst [vmem:[#allocation3 + $0x510] sm:$0xf] %v943
        %1000 = vst [vmem:[#allocation3 + $0x534] sm:$0xf] %v944
        %1001 = vst [vmem:[#allocation3 + $0x558] sm:$0xf] %v945
        %1002 = vst [vmem:[#allocation3 + $0x57c] sm:$0xf] %v946
        %1003 = vst [vmem:[#allocation3 + $0x5a0] sm:$0xf] %v947
        %1004 = vst [vmem:[#allocation3 + $0x5c4] sm:$0xf] %v948
        %1005 = vst [vmem:[#allocation3 + $0x5e8] sm:$0xf] %v949
        %1006 = vst [vmem:[#allocation3 + $0x60c] sm:$0xf] %v950
        %1007 = vst [vmem:[#allocation3 + $0x630] sm:$0xf] %v951
        %1008 = vst [vmem:[#allocation3 + $0x654] sm:$0xf] %v952
        %1009 = vst [vmem:[#allocation3 + $0x678] sm:$0xf] %v953
        %1010 = vst [vmem:[#allocation3 + $0x69c] sm:$0xf] %v954
        %1011 = vst [vmem:[#allocation3 + $0x6c0] sm:$0xf] %v955
        %1012 = vst [vmem:[#allocation3 + $0x6e4] sm:$0xf] %v956
        %1013 = vst [vmem:[#allocation3 + $0x708] sm:$0xf] %v957
        %1014 = vst [vmem:[#allocation3 + $0x72c] sm:$0xf] %v958
        %1015 = vst [vmem:[#allocation3 + $0x750] sm:$0xf] %v959
        %1016 = vst [vmem:[#allocation3 + $0x774] sm:$0xf] %v960
        %1017 = vst [vmem:[#allocation3 + $0x798] sm:$0xf] %v961
        %1018 = vst [vmem:[#allocation3 + $0x7bc] sm:$0xf] %v962
        %v1019 = vld [vmem:[#allocation2 + $0x1] sm:$0xff]
        %v1020 = vld [vmem:[#allocation2 + $0x9] sm:$0xff]
        %v1021 = vld [vmem:[#allocation2 + $0x19] sm:$0xff]
        %v1022 = vld [vmem:[#allocation2 + $0x21] sm:$0xff]
        %v1023 = vld [vmem:[#allocation2 + $0x31] sm:$0xff]
        %v1024 = vld [vmem:[#allocation2 + $0x39] sm:$0xff]
        %v1025 = vld [vmem:[#allocation2 + $0x49] sm:$0xff]
        %v1026 = vld [vmem:[#allocation2 + $0x51] sm:$0xff]
        %v1027 = vld [vmem:[#allocation2 + $0x61] sm:$0xff]
        %v1028 = vld [vmem:[#allocation2 + $0x69] sm:$0xff]
        %v1029 = vld [vmem:[#allocation2 + $0x79] sm:$0xff]
        %v1030 = vld [vmem:[#allocation2 + $0x81] sm:$0xff]
        %v1031 = vld [vmem:[#allocation2 + $0x91] sm:$0xff]
        %v1032 = vld [vmem:[#allocation2 + $0x99] sm:$0xff]
        %v1033 = vld [vmem:[#allocation2 + $0xa9] sm:$0xff]
        %v1034 = vld [vmem:[#allocation2 + $0xb1] sm:$0xff]
        %v1035 = vld [vmem:[#allocation2 + $0xc1] sm:$0xff]
        %v1036 = vld [vmem:[#allocation2 + $0xc9] sm:$0xff]
        %v1037 = vld [vmem:[#allocation2 + $0xd9] sm:$0xff]
        %v1038 = vld [vmem:[#allocation2 + $0xe1] sm:$0xff]
        %v1039 = vld [vmem:[#allocation2 + $0xf1] sm:$0xff]
        %v1040 = vld [vmem:[#allocation2 + $0xf9] sm:$0xff]
        %v1041 = vld [vmem:[#allocation2 + $0x109] sm:$0xff]
        %v1042 = vld [vmem:[#allocation2 + $0x111] sm:$0xff]
        %v1043 = vld [vmem:[#allocation2 + $0x121] sm:$0xff]
        %v1044 = vld [vmem:[#allocation2 + $0x129] sm:$0xff]
        %v1045 = vld [vmem:[#allocation2 + $0x139] sm:$0xff]
        %v1046 = vld [vmem:[#allocation2 + $0x141] sm:$0xff]
        %v1047 = vld [vmem:[#allocation2 + $0x181] sm:$0xff]
        %v1048 = vld [vmem:[#allocation2 + $0x189] sm:$0xff]
        %v1049 = vld [vmem:[#allocation2 + $0x199] sm:$0xff]
        %v1050 = vld [vmem:[#allocation2 + $0x1a1] sm:$0xff]
        %v1051 = vld [vmem:[#allocation2 + $0x1b1] sm:$0xff]
        %v1052 = vld [vmem:[#allocation2 + $0x1b9] sm:$0xff]
        %v1053 = vld [vmem:[#allocation2 + $0x1c9] sm:$0xff]
        %v1054 = vld [vmem:[#allocation2 + $0x1d1] sm:$0xff]
        %v1055 = vld [vmem:[#allocation2 + $0x1e1] sm:$0xff]
        %v1056 = vld [vmem:[#allocation2 + $0x1e9] sm:$0xff]
        %v1057 = vld [vmem:[#allocation2 + $0x1f9] sm:$0xff]
        %v1058 = vld [vmem:[#allocation2 + $0x201] sm:$0xff]
        %v1059 = vld [vmem:[#allocation2 + $0x211] sm:$0xff]
        %v1060 = vld [vmem:[#allocation2 + $0x219] sm:$0xff]
        %v1061 = vld [vmem:[#allocation2 + $0x229] sm:$0xff]
        %v1062 = vld [vmem:[#allocation2 + $0x231] sm:$0xff]
        %v1063 = vld [vmem:[#allocation2 + $0x241] sm:$0xff]
        %v1064 = vld [vmem:[#allocation2 + $0x249] sm:$0xff]
        %v1065 = vld [vmem:[#allocation2 + $0x259] sm:$0xff]
        %v1066 = vld [vmem:[#allocation2 + $0x261] sm:$0xff]
        %v1067 = vld [vmem:[#allocation2 + $0x271] sm:$0xff]
        %v1068 = vld [vmem:[#allocation2 + $0x279] sm:$0xff]
        %v1069 = vld [vmem:[#allocation2 + $0x289] sm:$0xff]
        %v1070 = vld [vmem:[#allocation2 + $0x291] sm:$0xff]
        %v1071 = vld [vmem:[#allocation2 + $0x2a1] sm:$0xff]
        %v1072 = vld [vmem:[#allocation2 + $0x2a9] sm:$0xff]
        %v1073 = vld [vmem:[#allocation2 + $0x2b9] sm:$0xff]
        %v1074 = vld [vmem:[#allocation2 + $0x2c1] sm:$0xff]
        %v1075 = vpack.c.bf16 %v1019, %v1019
        %v1076 = vpack.c.bf16 %v1020, %v1020
        %v1077 = vpack.c.bf16 %v1021, %v1021
        %v1078 = vpack.c.bf16 %v1022, %v1022
        %v1079 = vpack.c.bf16 %v1023, %v1023
        %v1080 = vpack.c.bf16 %v1024, %v1024
        %v1081 = vpack.c.bf16 %v1025, %v1025
        %v1082 = vpack.c.bf16 %v1026, %v1026
        %v1083 = vpack.c.bf16 %v1027, %v1027
        %v1084 = vpack.c.bf16 %v1028, %v1028
        %v1085 = vpack.c.bf16 %v1029, %v1029
        %v1086 = vpack.c.bf16 %v1030, %v1030
        %v1087 = vpack.c.bf16 %v1031, %v1031
        %v1088 = vpack.c.bf16 %v1032, %v1032
        %v1089 = vpack.c.bf16 %v1033, %v1033
        %v1090 = vpack.c.bf16 %v1034, %v1034
        %v1091 = vpack.c.bf16 %v1035, %v1035
        %v1092 = vpack.c.bf16 %v1036, %v1036
        %v1093 = vpack.c.bf16 %v1037, %v1037
        %v1094 = vpack.c.bf16 %v1038, %v1038
        %v1095 = vpack.c.bf16 %v1039, %v1039
        %v1096 = vpack.c.bf16 %v1040, %v1040
        %v1097 = vpack.c.bf16 %v1041, %v1041
        %v1098 = vpack.c.bf16 %v1042, %v1042
        %v1099 = vpack.c.bf16 %v1043, %v1043
        %v1100 = vpack.c.bf16 %v1044, %v1044
        %v1101 = vpack.c.bf16 %v1045, %v1045
        %v1102 = vpack.c.bf16 %v1046, %v1046
        %v1103 = vpack.c.bf16 %v1047, %v1047
        %v1104 = vpack.c.bf16 %v1048, %v1048
        %v1105 = vpack.c.bf16 %v1049, %v1049
        %v1106 = vpack.c.bf16 %v1050, %v1050
        %v1107 = vpack.c.bf16 %v1051, %v1051
        %v1108 = vpack.c.bf16 %v1052, %v1052
        %v1109 = vpack.c.bf16 %v1053, %v1053
        %v1110 = vpack.c.bf16 %v1054, %v1054
        %v1111 = vpack.c.bf16 %v1055, %v1055
        %v1112 = vpack.c.bf16 %v1056, %v1056
        %v1113 = vpack.c.bf16 %v1057, %v1057
        %v1114 = vpack.c.bf16 %v1058, %v1058
        %v1115 = vpack.c.bf16 %v1059, %v1059
        %v1116 = vpack.c.bf16 %v1060, %v1060
        %v1117 = vpack.c.bf16 %v1061, %v1061
        %v1118 = vpack.c.bf16 %v1062, %v1062
        %v1119 = vpack.c.bf16 %v1063, %v1063
        %v1120 = vpack.c.bf16 %v1064, %v1064
        %v1121 = vpack.c.bf16 %v1065, %v1065
        %v1122 = vpack.c.bf16 %v1066, %v1066
        %v1123 = vpack.c.bf16 %v1067, %v1067
        %v1124 = vpack.c.bf16 %v1068, %v1068
        %v1125 = vpack.c.bf16 %v1069, %v1069
        %v1126 = vpack.c.bf16 %v1070, %v1070
        %v1127 = vpack.c.bf16 %v1071, %v1071
        %v1128 = vpack.c.bf16 %v1072, %v1072
        %v1129 = vpack.c.bf16 %v1073, %v1073
        %v1130 = vpack.c.bf16 %v1074, %v1074
        %1131 = vst [vmem:[#allocation3 + $0x4] sm:$0xf] %v1075
        %1132 = vst [vmem:[#allocation3 + $0x28] sm:$0xf] %v1076
        %1133 = vst [vmem:[#allocation3 + $0x4c] sm:$0xf] %v1077
        %1134 = vst [vmem:[#allocation3 + $0x70] sm:$0xf] %v1078
        %1135 = vst [vmem:[#allocation3 + $0x94] sm:$0xf] %v1079
        %1136 = vst [vmem:[#allocation3 + $0xb8] sm:$0xf] %v1080
        %1137 = vst [vmem:[#allocation3 + $0xdc] sm:$0xf] %v1081
        %1138 = vst [vmem:[#allocation3 + $0x100] sm:$0xf] %v1082
        %1139 = vst [vmem:[#allocation3 + $0x124] sm:$0xf] %v1083
        %1140 = vst [vmem:[#allocation3 + $0x148] sm:$0xf] %v1084
        %1141 = vst [vmem:[#allocation3 + $0x16c] sm:$0xf] %v1085
        %1142 = vst [vmem:[#allocation3 + $0x190] sm:$0xf] %v1086
        %1143 = vst [vmem:[#allocation3 + $0x1b4] sm:$0xf] %v1087
        %1144 = vst [vmem:[#allocation3 + $0x1d8] sm:$0xf] %v1088
        %1145 = vst [vmem:[#allocation3 + $0x1fc] sm:$0xf] %v1089
        %1146 = vst [vmem:[#allocation3 + $0x220] sm:$0xf] %v1090
        %1147 = vst [vmem:[#allocation3 + $0x244] sm:$0xf] %v1091
        %1148 = vst [vmem:[#allocation3 + $0x268] sm:$0xf] %v1092
        %1149 = vst [vmem:[#allocation3 + $0x28c] sm:$0xf] %v1093
        %1150 = vst [vmem:[#allocation3 + $0x2b0] sm:$0xf] %v1094
        %1151 = vst [vmem:[#allocation3 + $0x2d4] sm:$0xf] %v1095
        %1152 = vst [vmem:[#allocation3 + $0x2f8] sm:$0xf] %v1096
        %1153 = vst [vmem:[#allocation3 + $0x31c] sm:$0xf] %v1097
        %1154 = vst [vmem:[#allocation3 + $0x340] sm:$0xf] %v1098
        %1155 = vst [vmem:[#allocation3 + $0x364] sm:$0xf] %v1099
        %1156 = vst [vmem:[#allocation3 + $0x388] sm:$0xf] %v1100
        %1157 = vst [vmem:[#allocation3 + $0x3ac] sm:$0xf] %v1101
        %1158 = vst [vmem:[#allocation3 + $0x3d0] sm:$0xf] %v1102
        %1159 = vst [vmem:[#allocation3 + $0x3f4] sm:$0xf] %v1103
        %1160 = vst [vmem:[#allocation3 + $0x418] sm:$0xf] %v1104
        %1161 = vst [vmem:[#allocation3 + $0x43c] sm:$0xf] %v1105
        %1162 = vst [vmem:[#allocation3 + $0x460] sm:$0xf] %v1106
        %1163 = vst [vmem:[#allocation3 + $0x484] sm:$0xf] %v1107
        %1164 = vst [vmem:[#allocation3 + $0x4a8] sm:$0xf] %v1108
        %1165 = vst [vmem:[#allocation3 + $0x4cc] sm:$0xf] %v1109
        %1166 = vst [vmem:[#allocation3 + $0x4f0] sm:$0xf] %v1110
        %1167 = vst [vmem:[#allocation3 + $0x514] sm:$0xf] %v1111
        %1168 = vst [vmem:[#allocation3 + $0x538] sm:$0xf] %v1112
        %1169 = vst [vmem:[#allocation3 + $0x55c] sm:$0xf] %v1113
        %1170 = vst [vmem:[#allocation3 + $0x580] sm:$0xf] %v1114
        %1171 = vst [vmem:[#allocation3 + $0x5a4] sm:$0xf] %v1115
        %1172 = vst [vmem:[#allocation3 + $0x5c8] sm:$0xf] %v1116
        %1173 = vst [vmem:[#allocation3 + $0x5ec] sm:$0xf] %v1117
        %1174 = vst [vmem:[#allocation3 + $0x610] sm:$0xf] %v1118
        %1175 = vst [vmem:[#allocation3 + $0x634] sm:$0xf] %v1119
        %1176 = vst [vmem:[#allocation3 + $0x658] sm:$0xf] %v1120
        %1177 = vst [vmem:[#allocation3 + $0x67c] sm:$0xf] %v1121
        %1178 = vst [vmem:[#allocation3 + $0x6a0] sm:$0xf] %v1122
        %1179 = vst [vmem:[#allocation3 + $0x6c4] sm:$0xf] %v1123
        %1180 = vst [vmem:[#allocation3 + $0x6e8] sm:$0xf] %v1124
        %1181 = vst [vmem:[#allocation3 + $0x70c] sm:$0xf] %v1125
        %1182 = vst [vmem:[#allocation3 + $0x730] sm:$0xf] %v1126
        %1183 = vst [vmem:[#allocation3 + $0x754] sm:$0xf] %v1127
        %1184 = vst [vmem:[#allocation3 + $0x778] sm:$0xf] %v1128
        %1185 = vst [vmem:[#allocation3 + $0x79c] sm:$0xf] %v1129
        %1186 = vst [vmem:[#allocation3 + $0x7c0] sm:$0xf] %v1130
        %v1187 = vld [vmem:[#allocation2 + $0x2] sm:$0xff]
        %v1188 = vld [vmem:[#allocation2 + $0xa] sm:$0xff]
        %v1189 = vld [vmem:[#allocation2 + $0x1a] sm:$0xff]
        %v1190 = vld [vmem:[#allocation2 + $0x22] sm:$0xff]
        %v1191 = vld [vmem:[#allocation2 + $0x32] sm:$0xff]
        %v1192 = vld [vmem:[#allocation2 + $0x3a] sm:$0xff]
        %v1193 = vld [vmem:[#allocation2 + $0x4a] sm:$0xff]
        %v1194 = vld [vmem:[#allocation2 + $0x52] sm:$0xff]
        %v1195 = vld [vmem:[#allocation2 + $0x62] sm:$0xff]
        %v1196 = vld [vmem:[#allocation2 + $0x6a] sm:$0xff]
        %v1197 = vld [vmem:[#allocation2 + $0x7a] sm:$0xff]
        %v1198 = vld [vmem:[#allocation2 + $0x82] sm:$0xff]
        %v1199 = vld [vmem:[#allocation2 + $0x92] sm:$0xff]
        %v1200 = vld [vmem:[#allocation2 + $0x9a] sm:$0xff]
        %v1201 = vld [vmem:[#allocation2 + $0xaa] sm:$0xff]
        %v1202 = vld [vmem:[#allocation2 + $0xb2] sm:$0xff]
        %v1203 = vld [vmem:[#allocation2 + $0xc2] sm:$0xff]
        %v1204 = vld [vmem:[#allocation2 + $0xca] sm:$0xff]
        %v1205 = vld [vmem:[#allocation2 + $0xda] sm:$0xff]
        %v1206 = vld [vmem:[#allocation2 + $0xe2] sm:$0xff]
        %v1207 = vld [vmem:[#allocation2 + $0xf2] sm:$0xff]
        %v1208 = vld [vmem:[#allocation2 + $0xfa] sm:$0xff]
        %v1209 = vld [vmem:[#allocation2 + $0x10a] sm:$0xff]
        %v1210 = vld [vmem:[#allocation2 + $0x112] sm:$0xff]
        %v1211 = vld [vmem:[#allocation2 + $0x122] sm:$0xff]
        %v1212 = vld [vmem:[#allocation2 + $0x12a] sm:$0xff]
        %v1213 = vld [vmem:[#allocation2 + $0x13a] sm:$0xff]
        %v1214 = vld [vmem:[#allocation2 + $0x142] sm:$0xff]
        %v1215 = vld [vmem:[#allocation2 + $0x182] sm:$0xff]
        %v1216 = vld [vmem:[#allocation2 + $0x18a] sm:$0xff]
        %v1217 = vld [vmem:[#allocation2 + $0x19a] sm:$0xff]
        %v1218 = vld [vmem:[#allocation2 + $0x1a2] sm:$0xff]
        %v1219 = vld [vmem:[#allocation2 + $0x1b2] sm:$0xff]
        %v1220 = vld [vmem:[#allocation2 + $0x1ba] sm:$0xff]
        %v1221 = vld [vmem:[#allocation2 + $0x1ca] sm:$0xff]
        %v1222 = vld [vmem:[#allocation2 + $0x1d2] sm:$0xff]
        %v1223 = vld [vmem:[#allocation2 + $0x1e2] sm:$0xff]
        %v1224 = vld [vmem:[#allocation2 + $0x1ea] sm:$0xff]
        %v1225 = vld [vmem:[#allocation2 + $0x1fa] sm:$0xff]
        %v1226 = vld [vmem:[#allocation2 + $0x202] sm:$0xff]
        %v1227 = vld [vmem:[#allocation2 + $0x212] sm:$0xff]
        %v1228 = vld [vmem:[#allocation2 + $0x21a] sm:$0xff]
        %v1229 = vld [vmem:[#allocation2 + $0x22a] sm:$0xff]
        %v1230 = vld [vmem:[#allocation2 + $0x232] sm:$0xff]
        %v1231 = vld [vmem:[#allocation2 + $0x242] sm:$0xff]
        %v1232 = vld [vmem:[#allocation2 + $0x24a] sm:$0xff]
        %v1233 = vld [vmem:[#allocation2 + $0x25a] sm:$0xff]
        %v1234 = vld [vmem:[#allocation2 + $0x262] sm:$0xff]
        %v1235 = vld [vmem:[#allocation2 + $0x272] sm:$0xff]
        %v1236 = vld [vmem:[#allocation2 + $0x27a] sm:$0xff]
        %v1237 = vld [vmem:[#allocation2 + $0x28a] sm:$0xff]
        %v1238 = vld [vmem:[#allocation2 + $0x292] sm:$0xff]
        %v1239 = vld [vmem:[#allocation2 + $0x2a2] sm:$0xff]
        %v1240 = vld [vmem:[#allocation2 + $0x2aa] sm:$0xff]
        %v1241 = vld [vmem:[#allocation2 + $0x2ba] sm:$0xff]
        %v1242 = vld [vmem:[#allocation2 + $0x2c2] sm:$0xff]
        %v1243 = vpack.c.bf16 %v1187, %v1187
        %v1244 = vpack.c.bf16 %v1188, %v1188
        %v1245 = vpack.c.bf16 %v1189, %v1189
        %v1246 = vpack.c.bf16 %v1190, %v1190
        %v1247 = vpack.c.bf16 %v1191, %v1191
        %v1248 = vpack.c.bf16 %v1192, %v1192
        %v1249 = vpack.c.bf16 %v1193, %v1193
        %v1250 = vpack.c.bf16 %v1194, %v1194
        %v1251 = vpack.c.bf16 %v1195, %v1195
        %v1252 = vpack.c.bf16 %v1196, %v1196
        %v1253 = vpack.c.bf16 %v1197, %v1197
        %v1254 = vpack.c.bf16 %v1198, %v1198
        %v1255 = vpack.c.bf16 %v1199, %v1199
        %v1256 = vpack.c.bf16 %v1200, %v1200
        %v1257 = vpack.c.bf16 %v1201, %v1201
        %v1258 = vpack.c.bf16 %v1202, %v1202
        %v1259 = vpack.c.bf16 %v1203, %v1203
        %v1260 = vpack.c.bf16 %v1204, %v1204
        %v1261 = vpack.c.bf16 %v1205, %v1205
        %v1262 = vpack.c.bf16 %v1206, %v1206
        %v1263 = vpack.c.bf16 %v1207, %v1207
        %v1264 = vpack.c.bf16 %v1208, %v1208
        %v1265 = vpack.c.bf16 %v1209, %v1209
        %v1266 = vpack.c.bf16 %v1210, %v1210
        %v1267 = vpack.c.bf16 %v1211, %v1211
        %v1268 = vpack.c.bf16 %v1212, %v1212
        %v1269 = vpack.c.bf16 %v1213, %v1213
        %v1270 = vpack.c.bf16 %v1214, %v1214
        %v1271 = vpack.c.bf16 %v1215, %v1215
        %v1272 = vpack.c.bf16 %v1216, %v1216
        %v1273 = vpack.c.bf16 %v1217, %v1217
        %v1274 = vpack.c.bf16 %v1218, %v1218
        %v1275 = vpack.c.bf16 %v1219, %v1219
        %v1276 = vpack.c.bf16 %v1220, %v1220
        %v1277 = vpack.c.bf16 %v1221, %v1221
        %v1278 = vpack.c.bf16 %v1222, %v1222
        %v1279 = vpack.c.bf16 %v1223, %v1223
        %v1280 = vpack.c.bf16 %v1224, %v1224
        %v1281 = vpack.c.bf16 %v1225, %v1225
        %v1282 = vpack.c.bf16 %v1226, %v1226
        %v1283 = vpack.c.bf16 %v1227, %v1227
        %v1284 = vpack.c.bf16 %v1228, %v1228
        %v1285 = vpack.c.bf16 %v1229, %v1229
        %v1286 = vpack.c.bf16 %v1230, %v1230
        %v1287 = vpack.c.bf16 %v1231, %v1231
        %v1288 = vpack.c.bf16 %v1232, %v1232
        %v1289 = vpack.c.bf16 %v1233, %v1233
        %v1290 = vpack.c.bf16 %v1234, %v1234
        %v1291 = vpack.c.bf16 %v1235, %v1235
        %v1292 = vpack.c.bf16 %v1236, %v1236
        %v1293 = vpack.c.bf16 %v1237, %v1237
        %v1294 = vpack.c.bf16 %v1238, %v1238
        %v1295 = vpack.c.bf16 %v1239, %v1239
        %v1296 = vpack.c.bf16 %v1240, %v1240
        %v1297 = vpack.c.bf16 %v1241, %v1241
        %v1298 = vpack.c.bf16 %v1242, %v1242
        %1299 = vst [vmem:[#allocation3 + $0x8] sm:$0xf] %v1243
        %1300 = vst [vmem:[#allocation3 + $0x2c] sm:$0xf] %v1244
        %1301 = vst [vmem:[#allocation3 + $0x50] sm:$0xf] %v1245
        %1302 = vst [vmem:[#allocation3 + $0x74] sm:$0xf] %v1246
        %1303 = vst [vmem:[#allocation3 + $0x98] sm:$0xf] %v1247
        %1304 = vst [vmem:[#allocation3 + $0xbc] sm:$0xf] %v1248
        %1305 = vst [vmem:[#allocation3 + $0xe0] sm:$0xf] %v1249
        %1306 = vst [vmem:[#allocation3 + $0x104] sm:$0xf] %v1250
        %1307 = vst [vmem:[#allocation3 + $0x128] sm:$0xf] %v1251
        %1308 = vst [vmem:[#allocation3 + $0x14c] sm:$0xf] %v1252
        %1309 = vst [vmem:[#allocation3 + $0x170] sm:$0xf] %v1253
        %1310 = vst [vmem:[#allocation3 + $0x194] sm:$0xf] %v1254
        %1311 = vst [vmem:[#allocation3 + $0x1b8] sm:$0xf] %v1255
        %1312 = vst [vmem:[#allocation3 + $0x1dc] sm:$0xf] %v1256
        %1313 = vst [vmem:[#allocation3 + $0x200] sm:$0xf] %v1257
        %1314 = vst [vmem:[#allocation3 + $0x224] sm:$0xf] %v1258
        %1315 = vst [vmem:[#allocation3 + $0x248] sm:$0xf] %v1259
        %1316 = vst [vmem:[#allocation3 + $0x26c] sm:$0xf] %v1260
        %1317 = vst [vmem:[#allocation3 + $0x290] sm:$0xf] %v1261
        %1318 = vst [vmem:[#allocation3 + $0x2b4] sm:$0xf] %v1262
        %1319 = vst [vmem:[#allocation3 + $0x2d8] sm:$0xf] %v1263
        %1320 = vst [vmem:[#allocation3 + $0x2fc] sm:$0xf] %v1264
        %1321 = vst [vmem:[#allocation3 + $0x320] sm:$0xf] %v1265
        %1322 = vst [vmem:[#allocation3 + $0x344] sm:$0xf] %v1266
        %1323 = vst [vmem:[#allocation3 + $0x368] sm:$0xf] %v1267
        %1324 = vst [vmem:[#allocation3 + $0x38c] sm:$0xf] %v1268
        %1325 = vst [vmem:[#allocation3 + $0x3b0] sm:$0xf] %v1269
        %1326 = vst [vmem:[#allocation3 + $0x3d4] sm:$0xf] %v1270
        %1327 = vst [vmem:[#allocation3 + $0x3f8] sm:$0xf] %v1271
        %1328 = vst [vmem:[#allocation3 + $0x41c] sm:$0xf] %v1272
        %1329 = vst [vmem:[#allocation3 + $0x440] sm:$0xf] %v1273
        %1330 = vst [vmem:[#allocation3 + $0x464] sm:$0xf] %v1274
        %1331 = vst [vmem:[#allocation3 + $0x488] sm:$0xf] %v1275
        %1332 = vst [vmem:[#allocation3 + $0x4ac] sm:$0xf] %v1276
        %1333 = vst [vmem:[#allocation3 + $0x4d0] sm:$0xf] %v1277
        %1334 = vst [vmem:[#allocation3 + $0x4f4] sm:$0xf] %v1278
        %1335 = vst [vmem:[#allocation3 + $0x518] sm:$0xf] %v1279
        %1336 = vst [vmem:[#allocation3 + $0x53c] sm:$0xf] %v1280
        %1337 = vst [vmem:[#allocation3 + $0x560] sm:$0xf] %v1281
        %1338 = vst [vmem:[#allocation3 + $0x584] sm:$0xf] %v1282
        %1339 = vst [vmem:[#allocation3 + $0x5a8] sm:$0xf] %v1283
        %1340 = vst [vmem:[#allocation3 + $0x5cc] sm:$0xf] %v1284
        %1341 = vst [vmem:[#allocation3 + $0x5f0] sm:$0xf] %v1285
        %1342 = vst [vmem:[#allocation3 + $0x614] sm:$0xf] %v1286
        %1343 = vst [vmem:[#allocation3 + $0x638] sm:$0xf] %v1287
        %1344 = vst [vmem:[#allocation3 + $0x65c] sm:$0xf] %v1288
        %1345 = vst [vmem:[#allocation3 + $0x680] sm:$0xf] %v1289
        %1346 = vst [vmem:[#allocation3 + $0x6a4] sm:$0xf] %v1290
        %1347 = vst [vmem:[#allocation3 + $0x6c8] sm:$0xf] %v1291
        %1348 = vst [vmem:[#allocation3 + $0x6ec] sm:$0xf] %v1292
        %1349 = vst [vmem:[#allocation3 + $0x710] sm:$0xf] %v1293
        %1350 = vst [vmem:[#allocation3 + $0x734] sm:$0xf] %v1294
        %1351 = vst [vmem:[#allocation3 + $0x758] sm:$0xf] %v1295
        %1352 = vst [vmem:[#allocation3 + $0x77c] sm:$0xf] %v1296
        %1353 = vst [vmem:[#allocation3 + $0x7a0] sm:$0xf] %v1297
        %1354 = vst [vmem:[#allocation3 + $0x7c4] sm:$0xf] %v1298
        %v1355 = vld [vmem:[%s794] sm:$0xff]
        %v1356 = vld [vmem:[%s794 + $0x8] sm:$0xff]
        %v1357 = vld [vmem:[%s794 + $0x18] sm:$0xff]
        %v1358 = vld [vmem:[%s794 + $0x20] sm:$0xff]
        %v1359 = vld [vmem:[%s794 + $0x30] sm:$0xff]
        %v1360 = vld [vmem:[%s794 + $0x38] sm:$0xff]
        %v1361 = vld [vmem:[%s794 + $0x48] sm:$0xff]
        %v1362 = vld [vmem:[%s794 + $0x50] sm:$0xff]
        %v1363 = vld [vmem:[%s794 + $0x60] sm:$0xff]
        %v1364 = vld [vmem:[%s794 + $0x68] sm:$0xff]
        %v1365 = vld [vmem:[%s794 + $0x78] sm:$0xff]
        %v1366 = vld [vmem:[%s794 + $0x80] sm:$0xff]
        %v1367 = vld [vmem:[%s794 + $0x90] sm:$0xff]
        %v1368 = vld [vmem:[%s794 + $0x98] sm:$0xff]
        %v1369 = vld [vmem:[%s794 + $0xa8] sm:$0xff]
        %v1370 = vld [vmem:[%s794 + $0xb0] sm:$0xff]
        %v1371 = vld [vmem:[%s794 + $0xc0] sm:$0xff]
        %v1372 = vld [vmem:[%s794 + $0xc8] sm:$0xff]
        %v1373 = vld [vmem:[%s794 + $0xd8] sm:$0xff]
        %v1374 = vld [vmem:[%s794 + $0xe0] sm:$0xff]
        %v1375 = vld [vmem:[%s794 + $0xf0] sm:$0xff]
        %v1376 = vld [vmem:[%s794 + $0xf8] sm:$0xff]
        %v1377 = vld [vmem:[%s794 + $0x108] sm:$0xff]
        %v1378 = vld [vmem:[%s794 + $0x110] sm:$0xff]
        %v1379 = vld [vmem:[%s794 + $0x120] sm:$0xff]
        %v1380 = vld [vmem:[%s794 + $0x128] sm:$0xff]
        %v1381 = vld [vmem:[%s794 + $0x138] sm:$0xff]
        %v1382 = vld [vmem:[%s794 + $0x140] sm:$0xff]
        %v1383 = vld [vmem:[%s794 + $0x180] sm:$0xff]
        %v1384 = vld [vmem:[%s794 + $0x188] sm:$0xff]
        %v1385 = vld [vmem:[%s794 + $0x198] sm:$0xff]
        %v1386 = vld [vmem:[%s794 + $0x1a0] sm:$0xff]
        %v1387 = vld [vmem:[%s794 + $0x1b0] sm:$0xff]
        %v1388 = vld [vmem:[%s794 + $0x1b8] sm:$0xff]
        %v1389 = vld [vmem:[%s794 + $0x1c8] sm:$0xff]
        %v1390 = vld [vmem:[%s794 + $0x1d0] sm:$0xff]
        %v1391 = vld [vmem:[%s794 + $0x1e0] sm:$0xff]
        %v1392 = vld [vmem:[%s794 + $0x1e8] sm:$0xff]
        %v1393 = vld [vmem:[%s794 + $0x1f8] sm:$0xff]
        %v1394 = vld [vmem:[%s794 + $0x200] sm:$0xff]
        %v1395 = vld [vmem:[%s794 + $0x210] sm:$0xff]
        %v1396 = vld [vmem:[%s794 + $0x218] sm:$0xff]
        %v1397 = vld [vmem:[%s794 + $0x228] sm:$0xff]
        %v1398 = vld [vmem:[%s794 + $0x230] sm:$0xff]
        %v1399 = vld [vmem:[%s794 + $0x240] sm:$0xff]
        %v1400 = vld [vmem:[%s794 + $0x248] sm:$0xff]
        %v1401 = vld [vmem:[%s794 + $0x258] sm:$0xff]
        %v1402 = vld [vmem:[%s794 + $0x260] sm:$0xff]
        %v1403 = vld [vmem:[%s794 + $0x270] sm:$0xff]
        %v1404 = vld [vmem:[%s794 + $0x278] sm:$0xff]
        %v1405 = vld [vmem:[%s794 + $0x288] sm:$0xff]
        %v1406 = vld [vmem:[%s794 + $0x290] sm:$0xff]
        %v1407 = vld [vmem:[%s794 + $0x2a0] sm:$0xff]
        %v1408 = vld [vmem:[%s794 + $0x2a8] sm:$0xff]
        %v1409 = vld [vmem:[%s794 + $0x2b8] sm:$0xff]
        %v1410 = vld [vmem:[%s794 + $0x2c0] sm:$0xff]
        %v1411 = vpack.c.bf16 %v1355, %v1355
        %v1412 = vpack.c.bf16 %v1356, %v1356
        %v1413 = vpack.c.bf16 %v1357, %v1357
        %v1414 = vpack.c.bf16 %v1358, %v1358
        %v1415 = vpack.c.bf16 %v1359, %v1359
        %v1416 = vpack.c.bf16 %v1360, %v1360
        %v1417 = vpack.c.bf16 %v1361, %v1361
        %v1418 = vpack.c.bf16 %v1362, %v1362
        %v1419 = vpack.c.bf16 %v1363, %v1363
        %v1420 = vpack.c.bf16 %v1364, %v1364
        %v1421 = vpack.c.bf16 %v1365, %v1365
        %v1422 = vpack.c.bf16 %v1366, %v1366
        %v1423 = vpack.c.bf16 %v1367, %v1367
        %v1424 = vpack.c.bf16 %v1368, %v1368
        %v1425 = vpack.c.bf16 %v1369, %v1369
        %v1426 = vpack.c.bf16 %v1370, %v1370
        %v1427 = vpack.c.bf16 %v1371, %v1371
        %v1428 = vpack.c.bf16 %v1372, %v1372
        %v1429 = vpack.c.bf16 %v1373, %v1373
        %v1430 = vpack.c.bf16 %v1374, %v1374
        %v1431 = vpack.c.bf16 %v1375, %v1375
        %v1432 = vpack.c.bf16 %v1376, %v1376
        %v1433 = vpack.c.bf16 %v1377, %v1377
        %v1434 = vpack.c.bf16 %v1378, %v1378
        %v1435 = vpack.c.bf16 %v1379, %v1379
        %v1436 = vpack.c.bf16 %v1380, %v1380
        %v1437 = vpack.c.bf16 %v1381, %v1381
        %v1438 = vpack.c.bf16 %v1382, %v1382
        %v1439 = vpack.c.bf16 %v1383, %v1383
        %v1440 = vpack.c.bf16 %v1384, %v1384
        %v1441 = vpack.c.bf16 %v1385, %v1385
        %v1442 = vpack.c.bf16 %v1386, %v1386
        %v1443 = vpack.c.bf16 %v1387, %v1387
        %v1444 = vpack.c.bf16 %v1388, %v1388
        %v1445 = vpack.c.bf16 %v1389, %v1389
        %v1446 = vpack.c.bf16 %v1390, %v1390
        %v1447 = vpack.c.bf16 %v1391, %v1391
        %v1448 = vpack.c.bf16 %v1392, %v1392
        %v1449 = vpack.c.bf16 %v1393, %v1393
        %v1450 = vpack.c.bf16 %v1394, %v1394
        %v1451 = vpack.c.bf16 %v1395, %v1395
        %v1452 = vpack.c.bf16 %v1396, %v1396
        %v1453 = vpack.c.bf16 %v1397, %v1397
        %v1454 = vpack.c.bf16 %v1398, %v1398
        %v1455 = vpack.c.bf16 %v1399, %v1399
        %v1456 = vpack.c.bf16 %v1400, %v1400
        %v1457 = vpack.c.bf16 %v1401, %v1401
        %v1458 = vpack.c.bf16 %v1402, %v1402
        %v1459 = vpack.c.bf16 %v1403, %v1403
        %v1460 = vpack.c.bf16 %v1404, %v1404
        %v1461 = vpack.c.bf16 %v1405, %v1405
        %v1462 = vpack.c.bf16 %v1406, %v1406
        %v1463 = vpack.c.bf16 %v1407, %v1407
        %v1464 = vpack.c.bf16 %v1408, %v1408
        %v1465 = vpack.c.bf16 %v1409, %v1409
        %v1466 = vpack.c.bf16 %v1410, %v1410
        %1467 = vst [vmem:[#allocation3 + $0xc] sm:$0xf] %v1411
        %1468 = vst [vmem:[#allocation3 + $0x30] sm:$0xf] %v1412
        %1469 = vst [vmem:[#allocation3 + $0x54] sm:$0xf] %v1413
        %1470 = vst [vmem:[#allocation3 + $0x78] sm:$0xf] %v1414
        %1471 = vst [vmem:[#allocation3 + $0x9c] sm:$0xf] %v1415
        %1472 = vst [vmem:[#allocation3 + $0xc0] sm:$0xf] %v1416
        %1473 = vst [vmem:[#allocation3 + $0xe4] sm:$0xf] %v1417
        %1474 = vst [vmem:[#allocation3 + $0x108] sm:$0xf] %v1418
        %1475 = vst [vmem:[#allocation3 + $0x12c] sm:$0xf] %v1419
        %1476 = vst [vmem:[#allocation3 + $0x150] sm:$0xf] %v1420
        %1477 = vst [vmem:[#allocation3 + $0x174] sm:$0xf] %v1421
        %1478 = vst [vmem:[#allocation3 + $0x198] sm:$0xf] %v1422
        %1479 = vst [vmem:[#allocation3 + $0x1bc] sm:$0xf] %v1423
        %1480 = vst [vmem:[#allocation3 + $0x1e0] sm:$0xf] %v1424
        %1481 = vst [vmem:[#allocation3 + $0x204] sm:$0xf] %v1425
        %1482 = vst [vmem:[#allocation3 + $0x228] sm:$0xf] %v1426
        %1483 = vst [vmem:[#allocation3 + $0x24c] sm:$0xf] %v1427
        %1484 = vst [vmem:[#allocation3 + $0x270] sm:$0xf] %v1428
        %1485 = vst [vmem:[#allocation3 + $0x294] sm:$0xf] %v1429
        %1486 = vst [vmem:[#allocation3 + $0x2b8] sm:$0xf] %v1430
        %1487 = vst [vmem:[#allocation3 + $0x2dc] sm:$0xf] %v1431
        %1488 = vst [vmem:[#allocation3 + $0x300] sm:$0xf] %v1432
        %1489 = vst [vmem:[#allocation3 + $0x324] sm:$0xf] %v1433
        %1490 = vst [vmem:[#allocation3 + $0x348] sm:$0xf] %v1434
        %1491 = vst [vmem:[#allocation3 + $0x36c] sm:$0xf] %v1435
        %1492 = vst [vmem:[#allocation3 + $0x390] sm:$0xf] %v1436
        %1493 = vst [vmem:[#allocation3 + $0x3b4] sm:$0xf] %v1437
        %1494 = vst [vmem:[#allocation3 + $0x3d8] sm:$0xf] %v1438
        %1495 = vst [vmem:[#allocation3 + $0x3fc] sm:$0xf] %v1439
        %1496 = vst [vmem:[#allocation3 + $0x420] sm:$0xf] %v1440
        %1497 = vst [vmem:[#allocation3 + $0x444] sm:$0xf] %v1441
        %1498 = vst [vmem:[#allocation3 + $0x468] sm:$0xf] %v1442
        %1499 = vst [vmem:[#allocation3 + $0x48c] sm:$0xf] %v1443
        %1500 = vst [vmem:[#allocation3 + $0x4b0] sm:$0xf] %v1444
        %1501 = vst [vmem:[#allocation3 + $0x4d4] sm:$0xf] %v1445
        %1502 = vst [vmem:[#allocation3 + $0x4f8] sm:$0xf] %v1446
        %1503 = vst [vmem:[#allocation3 + $0x51c] sm:$0xf] %v1447
        %1504 = vst [vmem:[#allocation3 + $0x540] sm:$0xf] %v1448
        %1505 = vst [vmem:[#allocation3 + $0x564] sm:$0xf] %v1449
        %1506 = vst [vmem:[#allocation3 + $0x588] sm:$0xf] %v1450
        %1507 = vst [vmem:[#allocation3 + $0x5ac] sm:$0xf] %v1451
        %1508 = vst [vmem:[#allocation3 + $0x5d0] sm:$0xf] %v1452
        %1509 = vst [vmem:[#allocation3 + $0x5f4] sm:$0xf] %v1453
        %1510 = vst [vmem:[#allocation3 + $0x618] sm:$0xf] %v1454
        %1511 = vst [vmem:[#allocation3 + $0x63c] sm:$0xf] %v1455
        %1512 = vst [vmem:[#allocation3 + $0x660] sm:$0xf] %v1456
        %1513 = vst [vmem:[#allocation3 + $0x684] sm:$0xf] %v1457
        %1514 = vst [vmem:[#allocation3 + $0x6a8] sm:$0xf] %v1458
        %1515 = vst [vmem:[#allocation3 + $0x6cc] sm:$0xf] %v1459
        %1516 = vst [vmem:[#allocation3 + $0x6f0] sm:$0xf] %v1460
        %1517 = vst [vmem:[#allocation3 + $0x714] sm:$0xf] %v1461
        %1518 = vst [vmem:[#allocation3 + $0x738] sm:$0xf] %v1462
        %1519 = vst [vmem:[#allocation3 + $0x75c] sm:$0xf] %v1463
        %1520 = vst [vmem:[#allocation3 + $0x780] sm:$0xf] %v1464
        %1521 = vst [vmem:[#allocation3 + $0x7a4] sm:$0xf] %v1465
        %1522 = vst [vmem:[#allocation3 + $0x7c8] sm:$0xf] %v1466
        %v1523 = vld [vmem:[%s794 + $0x1] sm:$0xff]
        %v1524 = vld [vmem:[%s794 + $0x9] sm:$0xff]
        %v1525 = vld [vmem:[%s794 + $0x19] sm:$0xff]
        %v1526 = vld [vmem:[%s794 + $0x21] sm:$0xff]
        %v1527 = vld [vmem:[%s794 + $0x31] sm:$0xff]
        %v1528 = vld [vmem:[%s794 + $0x39] sm:$0xff]
        %v1529 = vld [vmem:[%s794 + $0x49] sm:$0xff]
        %v1530 = vld [vmem:[%s794 + $0x51] sm:$0xff]
        %v1531 = vld [vmem:[%s794 + $0x61] sm:$0xff]
        %v1532 = vld [vmem:[%s794 + $0x69] sm:$0xff]
        %v1533 = vld [vmem:[%s794 + $0x79] sm:$0xff]
        %v1534 = vld [vmem:[%s794 + $0x81] sm:$0xff]
        %v1535 = vld [vmem:[%s794 + $0x91] sm:$0xff]
        %v1536 = vld [vmem:[%s794 + $0x99] sm:$0xff]
        %v1537 = vld [vmem:[%s794 + $0xa9] sm:$0xff]
        %v1538 = vld [vmem:[%s794 + $0xb1] sm:$0xff]
        %v1539 = vld [vmem:[%s794 + $0xc1] sm:$0xff]
        %v1540 = vld [vmem:[%s794 + $0xc9] sm:$0xff]
        %v1541 = vld [vmem:[%s794 + $0xd9] sm:$0xff]
        %v1542 = vld [vmem:[%s794 + $0xe1] sm:$0xff]
        %v1543 = vld [vmem:[%s794 + $0xf1] sm:$0xff]
        %v1544 = vld [vmem:[%s794 + $0xf9] sm:$0xff]
        %v1545 = vld [vmem:[%s794 + $0x109] sm:$0xff]
        %v1546 = vld [vmem:[%s794 + $0x111] sm:$0xff]
        %v1547 = vld [vmem:[%s794 + $0x121] sm:$0xff]
        %v1548 = vld [vmem:[%s794 + $0x129] sm:$0xff]
        %v1549 = vld [vmem:[%s794 + $0x139] sm:$0xff]
        %v1550 = vld [vmem:[%s794 + $0x141] sm:$0xff]
        %v1551 = vld [vmem:[%s794 + $0x181] sm:$0xff]
        %v1552 = vld [vmem:[%s794 + $0x189] sm:$0xff]
        %v1553 = vld [vmem:[%s794 + $0x199] sm:$0xff]
        %v1554 = vld [vmem:[%s794 + $0x1a1] sm:$0xff]
        %v1555 = vld [vmem:[%s794 + $0x1b1] sm:$0xff]
        %v1556 = vld [vmem:[%s794 + $0x1b9] sm:$0xff]
        %v1557 = vld [vmem:[%s794 + $0x1c9] sm:$0xff]
        %v1558 = vld [vmem:[%s794 + $0x1d1] sm:$0xff]
        %v1559 = vld [vmem:[%s794 + $0x1e1] sm:$0xff]
        %v1560 = vld [vmem:[%s794 + $0x1e9] sm:$0xff]
        %v1561 = vld [vmem:[%s794 + $0x1f9] sm:$0xff]
        %v1562 = vld [vmem:[%s794 + $0x201] sm:$0xff]
        %v1563 = vld [vmem:[%s794 + $0x211] sm:$0xff]
        %v1564 = vld [vmem:[%s794 + $0x219] sm:$0xff]
        %v1565 = vld [vmem:[%s794 + $0x229] sm:$0xff]
        %v1566 = vld [vmem:[%s794 + $0x231] sm:$0xff]
        %v1567 = vld [vmem:[%s794 + $0x241] sm:$0xff]
        %v1568 = vld [vmem:[%s794 + $0x249] sm:$0xff]
        %v1569 = vld [vmem:[%s794 + $0x259] sm:$0xff]
        %v1570 = vld [vmem:[%s794 + $0x261] sm:$0xff]
        %v1571 = vld [vmem:[%s794 + $0x271] sm:$0xff]
        %v1572 = vld [vmem:[%s794 + $0x279] sm:$0xff]
        %v1573 = vld [vmem:[%s794 + $0x289] sm:$0xff]
        %v1574 = vld [vmem:[%s794 + $0x291] sm:$0xff]
        %v1575 = vld [vmem:[%s794 + $0x2a1] sm:$0xff]
        %v1576 = vld [vmem:[%s794 + $0x2a9] sm:$0xff]
        %v1577 = vld [vmem:[%s794 + $0x2b9] sm:$0xff]
        %v1578 = vld [vmem:[%s794 + $0x2c1] sm:$0xff]
        %v1579 = vpack.c.bf16 %v1523, %v1523
        %v1580 = vpack.c.bf16 %v1524, %v1524
        %v1581 = vpack.c.bf16 %v1525, %v1525
        %v1582 = vpack.c.bf16 %v1526, %v1526
        %v1583 = vpack.c.bf16 %v1527, %v1527
        %v1584 = vpack.c.bf16 %v1528, %v1528
        %v1585 = vpack.c.bf16 %v1529, %v1529
        %v1586 = vpack.c.bf16 %v1530, %v1530
        %v1587 = vpack.c.bf16 %v1531, %v1531
        %v1588 = vpack.c.bf16 %v1532, %v1532
        %v1589 = vpack.c.bf16 %v1533, %v1533
        %v1590 = vpack.c.bf16 %v1534, %v1534
        %v1591 = vpack.c.bf16 %v1535, %v1535
        %v1592 = vpack.c.bf16 %v1536, %v1536
        %v1593 = vpack.c.bf16 %v1537, %v1537
        %v1594 = vpack.c.bf16 %v1538, %v1538
        %v1595 = vpack.c.bf16 %v1539, %v1539
        %v1596 = vpack.c.bf16 %v1540, %v1540
        %v1597 = vpack.c.bf16 %v1541, %v1541
        %v1598 = vpack.c.bf16 %v1542, %v1542
        %v1599 = vpack.c.bf16 %v1543, %v1543
        %v1600 = vpack.c.bf16 %v1544, %v1544
        %v1601 = vpack.c.bf16 %v1545, %v1545
        %v1602 = vpack.c.bf16 %v1546, %v1546
        %v1603 = vpack.c.bf16 %v1547, %v1547
        %v1604 = vpack.c.bf16 %v1548, %v1548
        %v1605 = vpack.c.bf16 %v1549, %v1549
        %v1606 = vpack.c.bf16 %v1550, %v1550
        %v1607 = vpack.c.bf16 %v1551, %v1551
        %v1608 = vpack.c.bf16 %v1552, %v1552
        %v1609 = vpack.c.bf16 %v1553, %v1553
        %v1610 = vpack.c.bf16 %v1554, %v1554
        %v1611 = vpack.c.bf16 %v1555, %v1555
        %v1612 = vpack.c.bf16 %v1556, %v1556
        %v1613 = vpack.c.bf16 %v1557, %v1557
        %v1614 = vpack.c.bf16 %v1558, %v1558
        %v1615 = vpack.c.bf16 %v1559, %v1559
        %v1616 = vpack.c.bf16 %v1560, %v1560
        %v1617 = vpack.c.bf16 %v1561, %v1561
        %v1618 = vpack.c.bf16 %v1562, %v1562
        %v1619 = vpack.c.bf16 %v1563, %v1563
        %v1620 = vpack.c.bf16 %v1564, %v1564
        %v1621 = vpack.c.bf16 %v1565, %v1565
        %v1622 = vpack.c.bf16 %v1566, %v1566
        %v1623 = vpack.c.bf16 %v1567, %v1567
        %v1624 = vpack.c.bf16 %v1568, %v1568
        %v1625 = vpack.c.bf16 %v1569, %v1569
        %v1626 = vpack.c.bf16 %v1570, %v1570
        %v1627 = vpack.c.bf16 %v1571, %v1571
        %v1628 = vpack.c.bf16 %v1572, %v1572
        %v1629 = vpack.c.bf16 %v1573, %v1573
        %v1630 = vpack.c.bf16 %v1574, %v1574
        %v1631 = vpack.c.bf16 %v1575, %v1575
        %v1632 = vpack.c.bf16 %v1576, %v1576
        %v1633 = vpack.c.bf16 %v1577, %v1577
        %v1634 = vpack.c.bf16 %v1578, %v1578
        %1635 = vst [vmem:[#allocation3 + $0x10] sm:$0xf] %v1579
        %1636 = vst [vmem:[#allocation3 + $0x34] sm:$0xf] %v1580
        %1637 = vst [vmem:[#allocation3 + $0x58] sm:$0xf] %v1581
        %1638 = vst [vmem:[#allocation3 + $0x7c] sm:$0xf] %v1582
        %1639 = vst [vmem:[#allocation3 + $0xa0] sm:$0xf] %v1583
        %1640 = vst [vmem:[#allocation3 + $0xc4] sm:$0xf] %v1584
        %1641 = vst [vmem:[#allocation3 + $0xe8] sm:$0xf] %v1585
        %1642 = vst [vmem:[#allocation3 + $0x10c] sm:$0xf] %v1586
        %1643 = vst [vmem:[#allocation3 + $0x130] sm:$0xf] %v1587
        %1644 = vst [vmem:[#allocation3 + $0x154] sm:$0xf] %v1588
        %1645 = vst [vmem:[#allocation3 + $0x178] sm:$0xf] %v1589
        %1646 = vst [vmem:[#allocation3 + $0x19c] sm:$0xf] %v1590
        %1647 = vst [vmem:[#allocation3 + $0x1c0] sm:$0xf] %v1591
        %1648 = vst [vmem:[#allocation3 + $0x1e4] sm:$0xf] %v1592
        %1649 = vst [vmem:[#allocation3 + $0x208] sm:$0xf] %v1593
        %1650 = vst [vmem:[#allocation3 + $0x22c] sm:$0xf] %v1594
        %1651 = vst [vmem:[#allocation3 + $0x250] sm:$0xf] %v1595
        %1652 = vst [vmem:[#allocation3 + $0x274] sm:$0xf] %v1596
        %1653 = vst [vmem:[#allocation3 + $0x298] sm:$0xf] %v1597
        %1654 = vst [vmem:[#allocation3 + $0x2bc] sm:$0xf] %v1598
        %1655 = vst [vmem:[#allocation3 + $0x2e0] sm:$0xf] %v1599
        %1656 = vst [vmem:[#allocation3 + $0x304] sm:$0xf] %v1600
        %1657 = vst [vmem:[#allocation3 + $0x328] sm:$0xf] %v1601
        %1658 = vst [vmem:[#allocation3 + $0x34c] sm:$0xf] %v1602
        %1659 = vst [vmem:[#allocation3 + $0x370] sm:$0xf] %v1603
        %1660 = vst [vmem:[#allocation3 + $0x394] sm:$0xf] %v1604
        %1661 = vst [vmem:[#allocation3 + $0x3b8] sm:$0xf] %v1605
        %1662 = vst [vmem:[#allocation3 + $0x3dc] sm:$0xf] %v1606
        %1663 = vst [vmem:[#allocation3 + $0x400] sm:$0xf] %v1607
        %1664 = vst [vmem:[#allocation3 + $0x424] sm:$0xf] %v1608
        %1665 = vst [vmem:[#allocation3 + $0x448] sm:$0xf] %v1609
        %1666 = vst [vmem:[#allocation3 + $0x46c] sm:$0xf] %v1610
        %1667 = vst [vmem:[#allocation3 + $0x490] sm:$0xf] %v1611
        %1668 = vst [vmem:[#allocation3 + $0x4b4] sm:$0xf] %v1612
        %1669 = vst [vmem:[#allocation3 + $0x4d8] sm:$0xf] %v1613
        %1670 = vst [vmem:[#allocation3 + $0x4fc] sm:$0xf] %v1614
        %1671 = vst [vmem:[#allocation3 + $0x520] sm:$0xf] %v1615
        %1672 = vst [vmem:[#allocation3 + $0x544] sm:$0xf] %v1616
        %1673 = vst [vmem:[#allocation3 + $0x568] sm:$0xf] %v1617
        %1674 = vst [vmem:[#allocation3 + $0x58c] sm:$0xf] %v1618
        %1675 = vst [vmem:[#allocation3 + $0x5b0] sm:$0xf] %v1619
        %1676 = vst [vmem:[#allocation3 + $0x5d4] sm:$0xf] %v1620
        %1677 = vst [vmem:[#allocation3 + $0x5f8] sm:$0xf] %v1621
        %1678 = vst [vmem:[#allocation3 + $0x61c] sm:$0xf] %v1622
        %1679 = vst [vmem:[#allocation3 + $0x640] sm:$0xf] %v1623
        %1680 = vst [vmem:[#allocation3 + $0x664] sm:$0xf] %v1624
        %1681 = vst [vmem:[#allocation3 + $0x688] sm:$0xf] %v1625
        %1682 = vst [vmem:[#allocation3 + $0x6ac] sm:$0xf] %v1626
        %1683 = vst [vmem:[#allocation3 + $0x6d0] sm:$0xf] %v1627
        %1684 = vst [vmem:[#allocation3 + $0x6f4] sm:$0xf] %v1628
        %1685 = vst [vmem:[#allocation3 + $0x718] sm:$0xf] %v1629
        %1686 = vst [vmem:[#allocation3 + $0x73c] sm:$0xf] %v1630
        %1687 = vst [vmem:[#allocation3 + $0x760] sm:$0xf] %v1631
        %1688 = vst [vmem:[#allocation3 + $0x784] sm:$0xf] %v1632
        %1689 = vst [vmem:[#allocation3 + $0x7a8] sm:$0xf] %v1633
        %1690 = vst [vmem:[#allocation3 + $0x7cc] sm:$0xf] %v1634
        %v1691 = vld [vmem:[%s794 + $0x2] sm:$0xff]
        %v1692 = vld [vmem:[%s794 + $0xa] sm:$0xff]
        %v1693 = vld [vmem:[%s794 + $0x1a] sm:$0xff]
        %v1694 = vld [vmem:[%s794 + $0x22] sm:$0xff]
        %v1695 = vld [vmem:[%s794 + $0x32] sm:$0xff]
        %v1696 = vld [vmem:[%s794 + $0x3a] sm:$0xff]
        %v1697 = vld [vmem:[%s794 + $0x4a] sm:$0xff]
        %v1698 = vld [vmem:[%s794 + $0x52] sm:$0xff]
        %v1699 = vld [vmem:[%s794 + $0x62] sm:$0xff]
        %v1700 = vld [vmem:[%s794 + $0x6a] sm:$0xff]
        %v1701 = vld [vmem:[%s794 + $0x7a] sm:$0xff]
        %v1702 = vld [vmem:[%s794 + $0x82] sm:$0xff]
        %v1703 = vld [vmem:[%s794 + $0x92] sm:$0xff]
        %v1704 = vld [vmem:[%s794 + $0x9a] sm:$0xff]
        %v1705 = vld [vmem:[%s794 + $0xaa] sm:$0xff]
        %v1706 = vld [vmem:[%s794 + $0xb2] sm:$0xff]
        %v1707 = vld [vmem:[%s794 + $0xc2] sm:$0xff]
        %v1708 = vld [vmem:[%s794 + $0xca] sm:$0xff]
        %v1709 = vld [vmem:[%s794 + $0xda] sm:$0xff]
        %v1710 = vld [vmem:[%s794 + $0xe2] sm:$0xff]
        %v1711 = vld [vmem:[%s794 + $0xf2] sm:$0xff]
        %v1712 = vld [vmem:[%s794 + $0xfa] sm:$0xff]
        %v1713 = vld [vmem:[%s794 + $0x10a] sm:$0xff]
        %v1714 = vld [vmem:[%s794 + $0x112] sm:$0xff]
        %v1715 = vld [vmem:[%s794 + $0x122] sm:$0xff]
        %v1716 = vld [vmem:[%s794 + $0x12a] sm:$0xff]
        %v1717 = vld [vmem:[%s794 + $0x13a] sm:$0xff]
        %v1718 = vld [vmem:[%s794 + $0x142] sm:$0xff]
        %v1719 = vld [vmem:[%s794 + $0x182] sm:$0xff]
        %v1720 = vld [vmem:[%s794 + $0x18a] sm:$0xff]
        %v1721 = vld [vmem:[%s794 + $0x19a] sm:$0xff]
        %v1722 = vld [vmem:[%s794 + $0x1a2] sm:$0xff]
        %v1723 = vld [vmem:[%s794 + $0x1b2] sm:$0xff]
        %v1724 = vld [vmem:[%s794 + $0x1ba] sm:$0xff]
        %v1725 = vld [vmem:[%s794 + $0x1ca] sm:$0xff]
        %v1726 = vld [vmem:[%s794 + $0x1d2] sm:$0xff]
        %v1727 = vld [vmem:[%s794 + $0x1e2] sm:$0xff]
        %v1728 = vld [vmem:[%s794 + $0x1ea] sm:$0xff]
        %v1729 = vld [vmem:[%s794 + $0x1fa] sm:$0xff]
        %v1730 = vld [vmem:[%s794 + $0x202] sm:$0xff]
        %v1731 = vld [vmem:[%s794 + $0x212] sm:$0xff]
        %v1732 = vld [vmem:[%s794 + $0x21a] sm:$0xff]
        %v1733 = vld [vmem:[%s794 + $0x22a] sm:$0xff]
        %v1734 = vld [vmem:[%s794 + $0x232] sm:$0xff]
        %v1735 = vld [vmem:[%s794 + $0x242] sm:$0xff]
        %v1736 = vld [vmem:[%s794 + $0x24a] sm:$0xff]
        %v1737 = vld [vmem:[%s794 + $0x25a] sm:$0xff]
        %v1738 = vld [vmem:[%s794 + $0x262] sm:$0xff]
        %v1739 = vld [vmem:[%s794 + $0x272] sm:$0xff]
        %v1740 = vld [vmem:[%s794 + $0x27a] sm:$0xff]
        %v1741 = vld [vmem:[%s794 + $0x28a] sm:$0xff]
        %v1742 = vld [vmem:[%s794 + $0x292] sm:$0xff]
        %v1743 = vld [vmem:[%s794 + $0x2a2] sm:$0xff]
        %v1744 = vld [vmem:[%s794 + $0x2aa] sm:$0xff]
        %v1745 = vld [vmem:[%s794 + $0x2ba] sm:$0xff]
        %v1746 = vld [vmem:[%s794 + $0x2c2] sm:$0xff]
        %v1747 = vpack.c.bf16 %v1691, %v1691
        %v1748 = vpack.c.bf16 %v1692, %v1692
        %v1749 = vpack.c.bf16 %v1693, %v1693
        %v1750 = vpack.c.bf16 %v1694, %v1694
        %v1751 = vpack.c.bf16 %v1695, %v1695
        %v1752 = vpack.c.bf16 %v1696, %v1696
        %v1753 = vpack.c.bf16 %v1697, %v1697
        %v1754 = vpack.c.bf16 %v1698, %v1698
        %v1755 = vpack.c.bf16 %v1699, %v1699
        %v1756 = vpack.c.bf16 %v1700, %v1700
        %v1757 = vpack.c.bf16 %v1701, %v1701
        %v1758 = vpack.c.bf16 %v1702, %v1702
        %v1759 = vpack.c.bf16 %v1703, %v1703
        %v1760 = vpack.c.bf16 %v1704, %v1704
        %v1761 = vpack.c.bf16 %v1705, %v1705
        %v1762 = vpack.c.bf16 %v1706, %v1706
        %v1763 = vpack.c.bf16 %v1707, %v1707
        %v1764 = vpack.c.bf16 %v1708, %v1708
        %v1765 = vpack.c.bf16 %v1709, %v1709
        %v1766 = vpack.c.bf16 %v1710, %v1710
        %v1767 = vpack.c.bf16 %v1711, %v1711
        %v1768 = vpack.c.bf16 %v1712, %v1712
        %v1769 = vpack.c.bf16 %v1713, %v1713
        %v1770 = vpack.c.bf16 %v1714, %v1714
        %v1771 = vpack.c.bf16 %v1715, %v1715
        %v1772 = vpack.c.bf16 %v1716, %v1716
        %v1773 = vpack.c.bf16 %v1717, %v1717
        %v1774 = vpack.c.bf16 %v1718, %v1718
        %v1775 = vpack.c.bf16 %v1719, %v1719
        %v1776 = vpack.c.bf16 %v1720, %v1720
        %v1777 = vpack.c.bf16 %v1721, %v1721
        %v1778 = vpack.c.bf16 %v1722, %v1722
        %v1779 = vpack.c.bf16 %v1723, %v1723
        %v1780 = vpack.c.bf16 %v1724, %v1724
        %v1781 = vpack.c.bf16 %v1725, %v1725
        %v1782 = vpack.c.bf16 %v1726, %v1726
        %v1783 = vpack.c.bf16 %v1727, %v1727
        %v1784 = vpack.c.bf16 %v1728, %v1728
        %v1785 = vpack.c.bf16 %v1729, %v1729
        %v1786 = vpack.c.bf16 %v1730, %v1730
        %v1787 = vpack.c.bf16 %v1731, %v1731
        %v1788 = vpack.c.bf16 %v1732, %v1732
        %v1789 = vpack.c.bf16 %v1733, %v1733
        %v1790 = vpack.c.bf16 %v1734, %v1734
        %v1791 = vpack.c.bf16 %v1735, %v1735
        %v1792 = vpack.c.bf16 %v1736, %v1736
        %v1793 = vpack.c.bf16 %v1737, %v1737
        %v1794 = vpack.c.bf16 %v1738, %v1738
        %v1795 = vpack.c.bf16 %v1739, %v1739
        %v1796 = vpack.c.bf16 %v1740, %v1740
        %v1797 = vpack.c.bf16 %v1741, %v1741
        %v1798 = vpack.c.bf16 %v1742, %v1742
        %v1799 = vpack.c.bf16 %v1743, %v1743
        %v1800 = vpack.c.bf16 %v1744, %v1744
        %v1801 = vpack.c.bf16 %v1745, %v1745
        %v1802 = vpack.c.bf16 %v1746, %v1746
        %1803 = vst [vmem:[#allocation3 + $0x14] sm:$0xf] %v1747
        %1804 = vst [vmem:[#allocation3 + $0x38] sm:$0xf] %v1748
        %1805 = vst [vmem:[#allocation3 + $0x5c] sm:$0xf] %v1749
        %1806 = vst [vmem:[#allocation3 + $0x80] sm:$0xf] %v1750
        %1807 = vst [vmem:[#allocation3 + $0xa4] sm:$0xf] %v1751
        %1808 = vst [vmem:[#allocation3 + $0xc8] sm:$0xf] %v1752
        %1809 = vst [vmem:[#allocation3 + $0xec] sm:$0xf] %v1753
        %1810 = vst [vmem:[#allocation3 + $0x110] sm:$0xf] %v1754
        %1811 = vst [vmem:[#allocation3 + $0x134] sm:$0xf] %v1755
        %1812 = vst [vmem:[#allocation3 + $0x158] sm:$0xf] %v1756
        %1813 = vst [vmem:[#allocation3 + $0x17c] sm:$0xf] %v1757
        %1814 = vst [vmem:[#allocation3 + $0x1a0] sm:$0xf] %v1758
        %1815 = vst [vmem:[#allocation3 + $0x1c4] sm:$0xf] %v1759
        %1816 = vst [vmem:[#allocation3 + $0x1e8] sm:$0xf] %v1760
        %1817 = vst [vmem:[#allocation3 + $0x20c] sm:$0xf] %v1761
        %1818 = vst [vmem:[#allocation3 + $0x230] sm:$0xf] %v1762
        %1819 = vst [vmem:[#allocation3 + $0x254] sm:$0xf] %v1763
        %1820 = vst [vmem:[#allocation3 + $0x278] sm:$0xf] %v1764
        %1821 = vst [vmem:[#allocation3 + $0x29c] sm:$0xf] %v1765
        %1822 = vst [vmem:[#allocation3 + $0x2c0] sm:$0xf] %v1766
        %1823 = vst [vmem:[#allocation3 + $0x2e4] sm:$0xf] %v1767
        %1824 = vst [vmem:[#allocation3 + $0x308] sm:$0xf] %v1768
        %1825 = vst [vmem:[#allocation3 + $0x32c] sm:$0xf] %v1769
        %1826 = vst [vmem:[#allocation3 + $0x350] sm:$0xf] %v1770
        %1827 = vst [vmem:[#allocation3 + $0x374] sm:$0xf] %v1771
        %1828 = vst [vmem:[#allocation3 + $0x398] sm:$0xf] %v1772
        %1829 = vst [vmem:[#allocation3 + $0x3bc] sm:$0xf] %v1773
        %1830 = vst [vmem:[#allocation3 + $0x3e0] sm:$0xf] %v1774
        %1831 = vst [vmem:[#allocation3 + $0x404] sm:$0xf] %v1775
        %1832 = vst [vmem:[#allocation3 + $0x428] sm:$0xf] %v1776
        %1833 = vst [vmem:[#allocation3 + $0x44c] sm:$0xf] %v1777
        %1834 = vst [vmem:[#allocation3 + $0x470] sm:$0xf] %v1778
        %1835 = vst [vmem:[#allocation3 + $0x494] sm:$0xf] %v1779
        %1836 = vst [vmem:[#allocation3 + $0x4b8] sm:$0xf] %v1780
        %1837 = vst [vmem:[#allocation3 + $0x4dc] sm:$0xf] %v1781
        %1838 = vst [vmem:[#allocation3 + $0x500] sm:$0xf] %v1782
        %1839 = vst [vmem:[#allocation3 + $0x524] sm:$0xf] %v1783
        %1840 = vst [vmem:[#allocation3 + $0x548] sm:$0xf] %v1784
        %1841 = vst [vmem:[#allocation3 + $0x56c] sm:$0xf] %v1785
        %1842 = vst [vmem:[#allocation3 + $0x590] sm:$0xf] %v1786
        %1843 = vst [vmem:[#allocation3 + $0x5b4] sm:$0xf] %v1787
        %1844 = vst [vmem:[#allocation3 + $0x5d8] sm:$0xf] %v1788
        %1845 = vst [vmem:[#allocation3 + $0x5fc] sm:$0xf] %v1789
        %1846 = vst [vmem:[#allocation3 + $0x620] sm:$0xf] %v1790
        %1847 = vst [vmem:[#allocation3 + $0x644] sm:$0xf] %v1791
        %1848 = vst [vmem:[#allocation3 + $0x668] sm:$0xf] %v1792
        %1849 = vst [vmem:[#allocation3 + $0x68c] sm:$0xf] %v1793
        %1850 = vst [vmem:[#allocation3 + $0x6b0] sm:$0xf] %v1794
        %1851 = vst [vmem:[#allocation3 + $0x6d4] sm:$0xf] %v1795
        %1852 = vst [vmem:[#allocation3 + $0x6f8] sm:$0xf] %v1796
        %1853 = vst [vmem:[#allocation3 + $0x71c] sm:$0xf] %v1797
        %1854 = vst [vmem:[#allocation3 + $0x740] sm:$0xf] %v1798
        %1855 = vst [vmem:[#allocation3 + $0x764] sm:$0xf] %v1799
        %1856 = vst [vmem:[#allocation3 + $0x788] sm:$0xf] %v1800
        %1857 = vst [vmem:[#allocation3 + $0x7ac] sm:$0xf] %v1801
        %1858 = vst [vmem:[#allocation3 + $0x7d0] sm:$0xf] %v1802
        %s1859 = scalar_lea.vmem [#allocation2], 48
        %v1860 = vld [vmem:[%s1859] sm:$0xff]
        %v1861 = vld [vmem:[%s1859 + $0x8] sm:$0xff]
        %v1862 = vld [vmem:[%s1859 + $0x18] sm:$0xff]
        %v1863 = vld [vmem:[%s1859 + $0x20] sm:$0xff]
        %v1864 = vld [vmem:[%s1859 + $0x30] sm:$0xff]
        %v1865 = vld [vmem:[%s1859 + $0x38] sm:$0xff]
        %v1866 = vld [vmem:[%s1859 + $0x48] sm:$0xff]
        %v1867 = vld [vmem:[%s1859 + $0x50] sm:$0xff]
        %v1868 = vld [vmem:[%s1859 + $0x60] sm:$0xff]
        %v1869 = vld [vmem:[%s1859 + $0x68] sm:$0xff]
        %v1870 = vld [vmem:[%s1859 + $0x78] sm:$0xff]
        %v1871 = vld [vmem:[%s1859 + $0x80] sm:$0xff]
        %v1872 = vld [vmem:[%s1859 + $0x90] sm:$0xff]
        %v1873 = vld [vmem:[%s1859 + $0x98] sm:$0xff]
        %v1874 = vld [vmem:[%s1859 + $0xa8] sm:$0xff]
        %v1875 = vld [vmem:[%s1859 + $0xb0] sm:$0xff]
        %v1876 = vld [vmem:[%s1859 + $0xc0] sm:$0xff]
        %v1877 = vld [vmem:[%s1859 + $0xc8] sm:$0xff]
        %v1878 = vld [vmem:[%s1859 + $0xd8] sm:$0xff]
        %v1879 = vld [vmem:[%s1859 + $0xe0] sm:$0xff]
        %v1880 = vld [vmem:[%s1859 + $0xf0] sm:$0xff]
        %v1881 = vld [vmem:[%s1859 + $0xf8] sm:$0xff]
        %v1882 = vld [vmem:[%s1859 + $0x108] sm:$0xff]
        %v1883 = vld [vmem:[%s1859 + $0x110] sm:$0xff]
        %v1884 = vld [vmem:[%s1859 + $0x120] sm:$0xff]
        %v1885 = vld [vmem:[%s1859 + $0x128] sm:$0xff]
        %v1886 = vld [vmem:[%s1859 + $0x138] sm:$0xff]
        %v1887 = vld [vmem:[%s1859 + $0x140] sm:$0xff]
        %v1888 = vld [vmem:[%s1859 + $0x180] sm:$0xff]
        %v1889 = vld [vmem:[%s1859 + $0x188] sm:$0xff]
        %v1890 = vld [vmem:[%s1859 + $0x198] sm:$0xff]
        %v1891 = vld [vmem:[%s1859 + $0x1a0] sm:$0xff]
        %v1892 = vld [vmem:[%s1859 + $0x1b0] sm:$0xff]
        %v1893 = vld [vmem:[%s1859 + $0x1b8] sm:$0xff]
        %v1894 = vld [vmem:[%s1859 + $0x1c8] sm:$0xff]
        %v1895 = vld [vmem:[%s1859 + $0x1d0] sm:$0xff]
        %v1896 = vld [vmem:[%s1859 + $0x1e0] sm:$0xff]
        %v1897 = vld [vmem:[%s1859 + $0x1e8] sm:$0xff]
        %v1898 = vld [vmem:[%s1859 + $0x1f8] sm:$0xff]
        %v1899 = vld [vmem:[%s1859 + $0x200] sm:$0xff]
        %v1900 = vld [vmem:[%s1859 + $0x210] sm:$0xff]
        %v1901 = vld [vmem:[%s1859 + $0x218] sm:$0xff]
        %v1902 = vld [vmem:[%s1859 + $0x228] sm:$0xff]
        %v1903 = vld [vmem:[%s1859 + $0x230] sm:$0xff]
        %v1904 = vld [vmem:[%s1859 + $0x240] sm:$0xff]
        %v1905 = vld [vmem:[%s1859 + $0x248] sm:$0xff]
        %v1906 = vld [vmem:[%s1859 + $0x258] sm:$0xff]
        %v1907 = vld [vmem:[%s1859 + $0x260] sm:$0xff]
        %v1908 = vld [vmem:[%s1859 + $0x270] sm:$0xff]
        %v1909 = vld [vmem:[%s1859 + $0x278] sm:$0xff]
        %v1910 = vld [vmem:[%s1859 + $0x288] sm:$0xff]
        %v1911 = vld [vmem:[%s1859 + $0x290] sm:$0xff]
        %v1912 = vld [vmem:[%s1859 + $0x2a0] sm:$0xff]
        %v1913 = vld [vmem:[%s1859 + $0x2a8] sm:$0xff]
        %v1914 = vld [vmem:[%s1859 + $0x2b8] sm:$0xff]
        %v1915 = vld [vmem:[%s1859 + $0x2c0] sm:$0xff]
        %v1916 = vpack.c.bf16 %v1860, %v1860
        %v1917 = vpack.c.bf16 %v1861, %v1861
        %v1918 = vpack.c.bf16 %v1862, %v1862
        %v1919 = vpack.c.bf16 %v1863, %v1863
        %v1920 = vpack.c.bf16 %v1864, %v1864
        %v1921 = vpack.c.bf16 %v1865, %v1865
        %v1922 = vpack.c.bf16 %v1866, %v1866
        %v1923 = vpack.c.bf16 %v1867, %v1867
        %v1924 = vpack.c.bf16 %v1868, %v1868
        %v1925 = vpack.c.bf16 %v1869, %v1869
        %v1926 = vpack.c.bf16 %v1870, %v1870
        %v1927 = vpack.c.bf16 %v1871, %v1871
        %v1928 = vpack.c.bf16 %v1872, %v1872
        %v1929 = vpack.c.bf16 %v1873, %v1873
        %v1930 = vpack.c.bf16 %v1874, %v1874
        %v1931 = vpack.c.bf16 %v1875, %v1875
        %v1932 = vpack.c.bf16 %v1876, %v1876
        %v1933 = vpack.c.bf16 %v1877, %v1877
        %v1934 = vpack.c.bf16 %v1878, %v1878
        %v1935 = vpack.c.bf16 %v1879, %v1879
        %v1936 = vpack.c.bf16 %v1880, %v1880
        %v1937 = vpack.c.bf16 %v1881, %v1881
        %v1938 = vpack.c.bf16 %v1882, %v1882
        %v1939 = vpack.c.bf16 %v1883, %v1883
        %v1940 = vpack.c.bf16 %v1884, %v1884
        %v1941 = vpack.c.bf16 %v1885, %v1885
        %v1942 = vpack.c.bf16 %v1886, %v1886
        %v1943 = vpack.c.bf16 %v1887, %v1887
        %v1944 = vpack.c.bf16 %v1888, %v1888
        %v1945 = vpack.c.bf16 %v1889, %v1889
        %v1946 = vpack.c.bf16 %v1890, %v1890
        %v1947 = vpack.c.bf16 %v1891, %v1891
        %v1948 = vpack.c.bf16 %v1892, %v1892
        %v1949 = vpack.c.bf16 %v1893, %v1893
        %v1950 = vpack.c.bf16 %v1894, %v1894
        %v1951 = vpack.c.bf16 %v1895, %v1895
        %v1952 = vpack.c.bf16 %v1896, %v1896
        %v1953 = vpack.c.bf16 %v1897, %v1897
        %v1954 = vpack.c.bf16 %v1898, %v1898
        %v1955 = vpack.c.bf16 %v1899, %v1899
        %v1956 = vpack.c.bf16 %v1900, %v1900
        %v1957 = vpack.c.bf16 %v1901, %v1901
        %v1958 = vpack.c.bf16 %v1902, %v1902
        %v1959 = vpack.c.bf16 %v1903, %v1903
        %v1960 = vpack.c.bf16 %v1904, %v1904
        %v1961 = vpack.c.bf16 %v1905, %v1905
        %v1962 = vpack.c.bf16 %v1906, %v1906
        %v1963 = vpack.c.bf16 %v1907, %v1907
        %v1964 = vpack.c.bf16 %v1908, %v1908
        %v1965 = vpack.c.bf16 %v1909, %v1909
        %v1966 = vpack.c.bf16 %v1910, %v1910
        %v1967 = vpack.c.bf16 %v1911, %v1911
        %v1968 = vpack.c.bf16 %v1912, %v1912
        %v1969 = vpack.c.bf16 %v1913, %v1913
        %v1970 = vpack.c.bf16 %v1914, %v1914
        %v1971 = vpack.c.bf16 %v1915, %v1915
        %1972 = vst [vmem:[#allocation3 + $0x18] sm:$0xf] %v1916
        %1973 = vst [vmem:[#allocation3 + $0x3c] sm:$0xf] %v1917
        %1974 = vst [vmem:[#allocation3 + $0x60] sm:$0xf] %v1918
        %1975 = vst [vmem:[#allocation3 + $0x84] sm:$0xf] %v1919
        %1976 = vst [vmem:[#allocation3 + $0xa8] sm:$0xf] %v1920
        %1977 = vst [vmem:[#allocation3 + $0xcc] sm:$0xf] %v1921
        %1978 = vst [vmem:[#allocation3 + $0xf0] sm:$0xf] %v1922
        %1979 = vst [vmem:[#allocation3 + $0x114] sm:$0xf] %v1923
        %1980 = vst [vmem:[#allocation3 + $0x138] sm:$0xf] %v1924
        %1981 = vst [vmem:[#allocation3 + $0x15c] sm:$0xf] %v1925
        %1982 = vst [vmem:[#allocation3 + $0x180] sm:$0xf] %v1926
        %1983 = vst [vmem:[#allocation3 + $0x1a4] sm:$0xf] %v1927
        %1984 = vst [vmem:[#allocation3 + $0x1c8] sm:$0xf] %v1928
        %1985 = vst [vmem:[#allocation3 + $0x1ec] sm:$0xf] %v1929
        %1986 = vst [vmem:[#allocation3 + $0x210] sm:$0xf] %v1930
        %1987 = vst [vmem:[#allocation3 + $0x234] sm:$0xf] %v1931
        %1988 = vst [vmem:[#allocation3 + $0x258] sm:$0xf] %v1932
        %1989 = vst [vmem:[#allocation3 + $0x27c] sm:$0xf] %v1933
        %1990 = vst [vmem:[#allocation3 + $0x2a0] sm:$0xf] %v1934
        %1991 = vst [vmem:[#allocation3 + $0x2c4] sm:$0xf] %v1935
        %1992 = vst [vmem:[#allocation3 + $0x2e8] sm:$0xf] %v1936
        %1993 = vst [vmem:[#allocation3 + $0x30c] sm:$0xf] %v1937
        %1994 = vst [vmem:[#allocation3 + $0x330] sm:$0xf] %v1938
        %1995 = vst [vmem:[#allocation3 + $0x354] sm:$0xf] %v1939
        %1996 = vst [vmem:[#allocation3 + $0x378] sm:$0xf] %v1940
        %1997 = vst [vmem:[#allocation3 + $0x39c] sm:$0xf] %v1941
        %1998 = vst [vmem:[#allocation3 + $0x3c0] sm:$0xf] %v1942
        %1999 = vst [vmem:[#allocation3 + $0x3e4] sm:$0xf] %v1943
        %2000 = vst [vmem:[#allocation3 + $0x408] sm:$0xf] %v1944
        %2001 = vst [vmem:[#allocation3 + $0x42c] sm:$0xf] %v1945
        %2002 = vst [vmem:[#allocation3 + $0x450] sm:$0xf] %v1946
        %2003 = vst [vmem:[#allocation3 + $0x474] sm:$0xf] %v1947
        %2004 = vst [vmem:[#allocation3 + $0x498] sm:$0xf] %v1948
        %2005 = vst [vmem:[#allocation3 + $0x4bc] sm:$0xf] %v1949
        %2006 = vst [vmem:[#allocation3 + $0x4e0] sm:$0xf] %v1950
        %2007 = vst [vmem:[#allocation3 + $0x504] sm:$0xf] %v1951
        %2008 = vst [vmem:[#allocation3 + $0x528] sm:$0xf] %v1952
        %2009 = vst [vmem:[#allocation3 + $0x54c] sm:$0xf] %v1953
        %2010 = vst [vmem:[#allocation3 + $0x570] sm:$0xf] %v1954
        %2011 = vst [vmem:[#allocation3 + $0x594] sm:$0xf] %v1955
        %2012 = vst [vmem:[#allocation3 + $0x5b8] sm:$0xf] %v1956
        %2013 = vst [vmem:[#allocation3 + $0x5dc] sm:$0xf] %v1957
        %2014 = vst [vmem:[#allocation3 + $0x600] sm:$0xf] %v1958
        %2015 = vst [vmem:[#allocation3 + $0x624] sm:$0xf] %v1959
        %2016 = vst [vmem:[#allocation3 + $0x648] sm:$0xf] %v1960
        %2017 = vst [vmem:[#allocation3 + $0x66c] sm:$0xf] %v1961
        %2018 = vst [vmem:[#allocation3 + $0x690] sm:$0xf] %v1962
        %2019 = vst [vmem:[#allocation3 + $0x6b4] sm:$0xf] %v1963
        %2020 = vst [vmem:[#allocation3 + $0x6d8] sm:$0xf] %v1964
        %2021 = vst [vmem:[#allocation3 + $0x6fc] sm:$0xf] %v1965
        %2022 = vst [vmem:[#allocation3 + $0x720] sm:$0xf] %v1966
        %2023 = vst [vmem:[#allocation3 + $0x744] sm:$0xf] %v1967
        %2024 = vst [vmem:[#allocation3 + $0x768] sm:$0xf] %v1968
        %2025 = vst [vmem:[#allocation3 + $0x78c] sm:$0xf] %v1969
        %2026 = vst [vmem:[#allocation3 + $0x7b0] sm:$0xf] %v1970
        %2027 = vst [vmem:[#allocation3 + $0x7d4] sm:$0xf] %v1971
        %v2028 = vld [vmem:[%s1859 + $0x1] sm:$0xff]
        %v2029 = vld [vmem:[%s1859 + $0x9] sm:$0xff]
        %v2030 = vld [vmem:[%s1859 + $0x19] sm:$0xff]
        %v2031 = vld [vmem:[%s1859 + $0x21] sm:$0xff]
        %v2032 = vld [vmem:[%s1859 + $0x31] sm:$0xff]
        %v2033 = vld [vmem:[%s1859 + $0x39] sm:$0xff]
        %v2034 = vld [vmem:[%s1859 + $0x49] sm:$0xff]
        %v2035 = vld [vmem:[%s1859 + $0x51] sm:$0xff]
        %v2036 = vld [vmem:[%s1859 + $0x61] sm:$0xff]
        %v2037 = vld [vmem:[%s1859 + $0x69] sm:$0xff]
        %v2038 = vld [vmem:[%s1859 + $0x79] sm:$0xff]
        %v2039 = vld [vmem:[%s1859 + $0x81] sm:$0xff]
        %v2040 = vld [vmem:[%s1859 + $0x91] sm:$0xff]
        %v2041 = vld [vmem:[%s1859 + $0x99] sm:$0xff]
        %v2042 = vld [vmem:[%s1859 + $0xa9] sm:$0xff]
        %v2043 = vld [vmem:[%s1859 + $0xb1] sm:$0xff]
        %v2044 = vld [vmem:[%s1859 + $0xc1] sm:$0xff]
        %v2045 = vld [vmem:[%s1859 + $0xc9] sm:$0xff]
        %v2046 = vld [vmem:[%s1859 + $0xd9] sm:$0xff]
        %v2047 = vld [vmem:[%s1859 + $0xe1] sm:$0xff]
        %v2048 = vld [vmem:[%s1859 + $0xf1] sm:$0xff]
        %v2049 = vld [vmem:[%s1859 + $0xf9] sm:$0xff]
        %v2050 = vld [vmem:[%s1859 + $0x109] sm:$0xff]
        %v2051 = vld [vmem:[%s1859 + $0x111] sm:$0xff]
        %v2052 = vld [vmem:[%s1859 + $0x121] sm:$0xff]
        %v2053 = vld [vmem:[%s1859 + $0x129] sm:$0xff]
        %v2054 = vld [vmem:[%s1859 + $0x139] sm:$0xff]
        %v2055 = vld [vmem:[%s1859 + $0x141] sm:$0xff]
        %v2056 = vld [vmem:[%s1859 + $0x181] sm:$0xff]
        %v2057 = vld [vmem:[%s1859 + $0x189] sm:$0xff]
        %v2058 = vld [vmem:[%s1859 + $0x199] sm:$0xff]
        %v2059 = vld [vmem:[%s1859 + $0x1a1] sm:$0xff]
        %v2060 = vld [vmem:[%s1859 + $0x1b1] sm:$0xff]
        %v2061 = vld [vmem:[%s1859 + $0x1b9] sm:$0xff]
        %v2062 = vld [vmem:[%s1859 + $0x1c9] sm:$0xff]
        %v2063 = vld [vmem:[%s1859 + $0x1d1] sm:$0xff]
        %v2064 = vld [vmem:[%s1859 + $0x1e1] sm:$0xff]
        %v2065 = vld [vmem:[%s1859 + $0x1e9] sm:$0xff]
        %v2066 = vld [vmem:[%s1859 + $0x1f9] sm:$0xff]
        %v2067 = vld [vmem:[%s1859 + $0x201] sm:$0xff]
        %v2068 = vld [vmem:[%s1859 + $0x211] sm:$0xff]
        %v2069 = vld [vmem:[%s1859 + $0x219] sm:$0xff]
        %v2070 = vld [vmem:[%s1859 + $0x229] sm:$0xff]
        %v2071 = vld [vmem:[%s1859 + $0x231] sm:$0xff]
        %v2072 = vld [vmem:[%s1859 + $0x241] sm:$0xff]
        %v2073 = vld [vmem:[%s1859 + $0x249] sm:$0xff]
        %v2074 = vld [vmem:[%s1859 + $0x259] sm:$0xff]
        %v2075 = vld [vmem:[%s1859 + $0x261] sm:$0xff]
        %v2076 = vld [vmem:[%s1859 + $0x271] sm:$0xff]
        %v2077 = vld [vmem:[%s1859 + $0x279] sm:$0xff]
        %v2078 = vld [vmem:[%s1859 + $0x289] sm:$0xff]
        %v2079 = vld [vmem:[%s1859 + $0x291] sm:$0xff]
        %v2080 = vld [vmem:[%s1859 + $0x2a1] sm:$0xff]
        %v2081 = vld [vmem:[%s1859 + $0x2a9] sm:$0xff]
        %v2082 = vld [vmem:[%s1859 + $0x2b9] sm:$0xff]
        %v2083 = vld [vmem:[%s1859 + $0x2c1] sm:$0xff]
        %v2084 = vpack.c.bf16 %v2028, %v2028
        %v2085 = vpack.c.bf16 %v2029, %v2029
        %v2086 = vpack.c.bf16 %v2030, %v2030
        %v2087 = vpack.c.bf16 %v2031, %v2031
        %v2088 = vpack.c.bf16 %v2032, %v2032
        %v2089 = vpack.c.bf16 %v2033, %v2033
        %v2090 = vpack.c.bf16 %v2034, %v2034
        %v2091 = vpack.c.bf16 %v2035, %v2035
        %v2092 = vpack.c.bf16 %v2036, %v2036
        %v2093 = vpack.c.bf16 %v2037, %v2037
        %v2094 = vpack.c.bf16 %v2038, %v2038
        %v2095 = vpack.c.bf16 %v2039, %v2039
        %v2096 = vpack.c.bf16 %v2040, %v2040
        %v2097 = vpack.c.bf16 %v2041, %v2041
        %v2098 = vpack.c.bf16 %v2042, %v2042
        %v2099 = vpack.c.bf16 %v2043, %v2043
        %v2100 = vpack.c.bf16 %v2044, %v2044
        %v2101 = vpack.c.bf16 %v2045, %v2045
        %v2102 = vpack.c.bf16 %v2046, %v2046
        %v2103 = vpack.c.bf16 %v2047, %v2047
        %v2104 = vpack.c.bf16 %v2048, %v2048
        %v2105 = vpack.c.bf16 %v2049, %v2049
        %v2106 = vpack.c.bf16 %v2050, %v2050
        %v2107 = vpack.c.bf16 %v2051, %v2051
        %v2108 = vpack.c.bf16 %v2052, %v2052
        %v2109 = vpack.c.bf16 %v2053, %v2053
        %v2110 = vpack.c.bf16 %v2054, %v2054
        %v2111 = vpack.c.bf16 %v2055, %v2055
        %v2112 = vpack.c.bf16 %v2056, %v2056
        %v2113 = vpack.c.bf16 %v2057, %v2057
        %v2114 = vpack.c.bf16 %v2058, %v2058
        %v2115 = vpack.c.bf16 %v2059, %v2059
        %v2116 = vpack.c.bf16 %v2060, %v2060
        %v2117 = vpack.c.bf16 %v2061, %v2061
        %v2118 = vpack.c.bf16 %v2062, %v2062
        %v2119 = vpack.c.bf16 %v2063, %v2063
        %v2120 = vpack.c.bf16 %v2064, %v2064
        %v2121 = vpack.c.bf16 %v2065, %v2065
        %v2122 = vpack.c.bf16 %v2066, %v2066
        %v2123 = vpack.c.bf16 %v2067, %v2067
        %v2124 = vpack.c.bf16 %v2068, %v2068
        %v2125 = vpack.c.bf16 %v2069, %v2069
        %v2126 = vpack.c.bf16 %v2070, %v2070
        %v2127 = vpack.c.bf16 %v2071, %v2071
        %v2128 = vpack.c.bf16 %v2072, %v2072
        %v2129 = vpack.c.bf16 %v2073, %v2073
        %v2130 = vpack.c.bf16 %v2074, %v2074
        %v2131 = vpack.c.bf16 %v2075, %v2075
        %v2132 = vpack.c.bf16 %v2076, %v2076
        %v2133 = vpack.c.bf16 %v2077, %v2077
        %v2134 = vpack.c.bf16 %v2078, %v2078
        %v2135 = vpack.c.bf16 %v2079, %v2079
        %v2136 = vpack.c.bf16 %v2080, %v2080
        %v2137 = vpack.c.bf16 %v2081, %v2081
        %v2138 = vpack.c.bf16 %v2082, %v2082
        %v2139 = vpack.c.bf16 %v2083, %v2083
        %2140 = vst [vmem:[#allocation3 + $0x1c] sm:$0xf] %v2084
        %2141 = vst [vmem:[#allocation3 + $0x40] sm:$0xf] %v2085
        %2142 = vst [vmem:[#allocation3 + $0x64] sm:$0xf] %v2086
        %2143 = vst [vmem:[#allocation3 + $0x88] sm:$0xf] %v2087
        %2144 = vst [vmem:[#allocation3 + $0xac] sm:$0xf] %v2088
        %2145 = vst [vmem:[#allocation3 + $0xd0] sm:$0xf] %v2089
        %2146 = vst [vmem:[#allocation3 + $0xf4] sm:$0xf] %v2090
        %2147 = vst [vmem:[#allocation3 + $0x118] sm:$0xf] %v2091
        %2148 = vst [vmem:[#allocation3 + $0x13c] sm:$0xf] %v2092
        %2149 = vst [vmem:[#allocation3 + $0x160] sm:$0xf] %v2093
        %2150 = vst [vmem:[#allocation3 + $0x184] sm:$0xf] %v2094
        %2151 = vst [vmem:[#allocation3 + $0x1a8] sm:$0xf] %v2095
        %2152 = vst [vmem:[#allocation3 + $0x1cc] sm:$0xf] %v2096
        %2153 = vst [vmem:[#allocation3 + $0x1f0] sm:$0xf] %v2097
        %2154 = vst [vmem:[#allocation3 + $0x214] sm:$0xf] %v2098
        %2155 = vst [vmem:[#allocation3 + $0x238] sm:$0xf] %v2099
        %2156 = vst [vmem:[#allocation3 + $0x25c] sm:$0xf] %v2100
        %2157 = vst [vmem:[#allocation3 + $0x280] sm:$0xf] %v2101
        %2158 = vst [vmem:[#allocation3 + $0x2a4] sm:$0xf] %v2102
        %2159 = vst [vmem:[#allocation3 + $0x2c8] sm:$0xf] %v2103
        %2160 = vst [vmem:[#allocation3 + $0x2ec] sm:$0xf] %v2104
        %2161 = vst [vmem:[#allocation3 + $0x310] sm:$0xf] %v2105
        %2162 = vst [vmem:[#allocation3 + $0x334] sm:$0xf] %v2106
        %2163 = vst [vmem:[#allocation3 + $0x358] sm:$0xf] %v2107
        %2164 = vst [vmem:[#allocation3 + $0x37c] sm:$0xf] %v2108
        %2165 = vst [vmem:[#allocation3 + $0x3a0] sm:$0xf] %v2109
        %2166 = vst [vmem:[#allocation3 + $0x3c4] sm:$0xf] %v2110
        %2167 = vst [vmem:[#allocation3 + $0x3e8] sm:$0xf] %v2111
        %2168 = vst [vmem:[#allocation3 + $0x40c] sm:$0xf] %v2112
        %2169 = vst [vmem:[#allocation3 + $0x430] sm:$0xf] %v2113
        %2170 = vst [vmem:[#allocation3 + $0x454] sm:$0xf] %v2114
        %2171 = vst [vmem:[#allocation3 + $0x478] sm:$0xf] %v2115
        %2172 = vst [vmem:[#allocation3 + $0x49c] sm:$0xf] %v2116
        %2173 = vst [vmem:[#allocation3 + $0x4c0] sm:$0xf] %v2117
        %2174 = vst [vmem:[#allocation3 + $0x4e4] sm:$0xf] %v2118
        %2175 = vst [vmem:[#allocation3 + $0x508] sm:$0xf] %v2119
        %2176 = vst [vmem:[#allocation3 + $0x52c] sm:$0xf] %v2120
        %2177 = vst [vmem:[#allocation3 + $0x550] sm:$0xf] %v2121
        %2178 = vst [vmem:[#allocation3 + $0x574] sm:$0xf] %v2122
        %2179 = vst [vmem:[#allocation3 + $0x598] sm:$0xf] %v2123
        %2180 = vst [vmem:[#allocation3 + $0x5bc] sm:$0xf] %v2124
        %2181 = vst [vmem:[#allocation3 + $0x5e0] sm:$0xf] %v2125
        %2182 = vst [vmem:[#allocation3 + $0x604] sm:$0xf] %v2126
        %2183 = vst [vmem:[#allocation3 + $0x628] sm:$0xf] %v2127
        %2184 = vst [vmem:[#allocation3 + $0x64c] sm:$0xf] %v2128
        %2185 = vst [vmem:[#allocation3 + $0x670] sm:$0xf] %v2129
        %2186 = vst [vmem:[#allocation3 + $0x694] sm:$0xf] %v2130
        %2187 = vst [vmem:[#allocation3 + $0x6b8] sm:$0xf] %v2131
        %2188 = vst [vmem:[#allocation3 + $0x6dc] sm:$0xf] %v2132
        %2189 = vst [vmem:[#allocation3 + $0x700] sm:$0xf] %v2133
        %2190 = vst [vmem:[#allocation3 + $0x724] sm:$0xf] %v2134
        %2191 = vst [vmem:[#allocation3 + $0x748] sm:$0xf] %v2135
        %2192 = vst [vmem:[#allocation3 + $0x76c] sm:$0xf] %v2136
        %2193 = vst [vmem:[#allocation3 + $0x790] sm:$0xf] %v2137
        %2194 = vst [vmem:[#allocation3 + $0x7b4] sm:$0xf] %v2138
        %2195 = vst [vmem:[#allocation3 + $0x7d8] sm:$0xf] %v2139
        %v2196 = vld [vmem:[%s1859 + $0x2] sm:$0xff]
        %v2197 = vld [vmem:[%s1859 + $0xa] sm:$0xff]
        %v2198 = vld [vmem:[%s1859 + $0x1a] sm:$0xff]
        %v2199 = vld [vmem:[%s1859 + $0x22] sm:$0xff]
        %v2200 = vld [vmem:[%s1859 + $0x32] sm:$0xff]
        %v2201 = vld [vmem:[%s1859 + $0x3a] sm:$0xff]
        %v2202 = vld [vmem:[%s1859 + $0x4a] sm:$0xff]
        %v2203 = vld [vmem:[%s1859 + $0x52] sm:$0xff]
        %v2204 = vld [vmem:[%s1859 + $0x62] sm:$0xff]
        %v2205 = vld [vmem:[%s1859 + $0x6a] sm:$0xff]
        %v2206 = vld [vmem:[%s1859 + $0x7a] sm:$0xff]
        %v2207 = vld [vmem:[%s1859 + $0x82] sm:$0xff]
        %v2208 = vld [vmem:[%s1859 + $0x92] sm:$0xff]
        %v2209 = vld [vmem:[%s1859 + $0x9a] sm:$0xff]
        %v2210 = vld [vmem:[%s1859 + $0xaa] sm:$0xff]
        %v2211 = vld [vmem:[%s1859 + $0xb2] sm:$0xff]
        %v2212 = vld [vmem:[%s1859 + $0xc2] sm:$0xff]
        %v2213 = vld [vmem:[%s1859 + $0xca] sm:$0xff]
        %v2214 = vld [vmem:[%s1859 + $0xda] sm:$0xff]
        %v2215 = vld [vmem:[%s1859 + $0xe2] sm:$0xff]
        %v2216 = vld [vmem:[%s1859 + $0xf2] sm:$0xff]
        %v2217 = vld [vmem:[%s1859 + $0xfa] sm:$0xff]
        %v2218 = vld [vmem:[%s1859 + $0x10a] sm:$0xff]
        %v2219 = vld [vmem:[%s1859 + $0x112] sm:$0xff]
        %v2220 = vld [vmem:[%s1859 + $0x122] sm:$0xff]
        %v2221 = vld [vmem:[%s1859 + $0x12a] sm:$0xff]
        %v2222 = vld [vmem:[%s1859 + $0x13a] sm:$0xff]
        %v2223 = vld [vmem:[%s1859 + $0x142] sm:$0xff]
        %v2224 = vld [vmem:[%s1859 + $0x182] sm:$0xff]
        %v2225 = vld [vmem:[%s1859 + $0x18a] sm:$0xff]
        %v2226 = vld [vmem:[%s1859 + $0x19a] sm:$0xff]
        %v2227 = vld [vmem:[%s1859 + $0x1a2] sm:$0xff]
        %v2228 = vld [vmem:[%s1859 + $0x1b2] sm:$0xff]
        %v2229 = vld [vmem:[%s1859 + $0x1ba] sm:$0xff]
        %v2230 = vld [vmem:[%s1859 + $0x1ca] sm:$0xff]
        %v2231 = vld [vmem:[%s1859 + $0x1d2] sm:$0xff]
        %v2232 = vld [vmem:[%s1859 + $0x1e2] sm:$0xff]
        %v2233 = vld [vmem:[%s1859 + $0x1ea] sm:$0xff]
        %v2234 = vld [vmem:[%s1859 + $0x1fa] sm:$0xff]
        %v2235 = vld [vmem:[%s1859 + $0x202] sm:$0xff]
        %v2236 = vld [vmem:[%s1859 + $0x212] sm:$0xff]
        %v2237 = vld [vmem:[%s1859 + $0x21a] sm:$0xff]
        %v2238 = vld [vmem:[%s1859 + $0x22a] sm:$0xff]
        %v2239 = vld [vmem:[%s1859 + $0x232] sm:$0xff]
        %v2240 = vld [vmem:[%s1859 + $0x242] sm:$0xff]
        %v2241 = vld [vmem:[%s1859 + $0x24a] sm:$0xff]
        %v2242 = vld [vmem:[%s1859 + $0x25a] sm:$0xff]
        %v2243 = vld [vmem:[%s1859 + $0x262] sm:$0xff]
        %v2244 = vld [vmem:[%s1859 + $0x272] sm:$0xff]
        %v2245 = vld [vmem:[%s1859 + $0x27a] sm:$0xff]
        %v2246 = vld [vmem:[%s1859 + $0x28a] sm:$0xff]
        %v2247 = vld [vmem:[%s1859 + $0x292] sm:$0xff]
        %v2248 = vld [vmem:[%s1859 + $0x2a2] sm:$0xff]
        %v2249 = vld [vmem:[%s1859 + $0x2aa] sm:$0xff]
        %v2250 = vld [vmem:[%s1859 + $0x2ba] sm:$0xff]
        %v2251 = vld [vmem:[%s1859 + $0x2c2] sm:$0xff]
        %v2252 = vpack.c.bf16 %v2196, %v2196
        %v2253 = vpack.c.bf16 %v2197, %v2197
        %v2254 = vpack.c.bf16 %v2198, %v2198
        %v2255 = vpack.c.bf16 %v2199, %v2199
        %v2256 = vpack.c.bf16 %v2200, %v2200
        %v2257 = vpack.c.bf16 %v2201, %v2201
        %v2258 = vpack.c.bf16 %v2202, %v2202
        %v2259 = vpack.c.bf16 %v2203, %v2203
        %v2260 = vpack.c.bf16 %v2204, %v2204
        %v2261 = vpack.c.bf16 %v2205, %v2205
        %v2262 = vpack.c.bf16 %v2206, %v2206
        %v2263 = vpack.c.bf16 %v2207, %v2207
        %v2264 = vpack.c.bf16 %v2208, %v2208
        %v2265 = vpack.c.bf16 %v2209, %v2209
        %v2266 = vpack.c.bf16 %v2210, %v2210
        %v2267 = vpack.c.bf16 %v2211, %v2211
        %v2268 = vpack.c.bf16 %v2212, %v2212
        %v2269 = vpack.c.bf16 %v2213, %v2213
        %v2270 = vpack.c.bf16 %v2214, %v2214
        %v2271 = vpack.c.bf16 %v2215, %v2215
        %v2272 = vpack.c.bf16 %v2216, %v2216
        %v2273 = vpack.c.bf16 %v2217, %v2217
        %v2274 = vpack.c.bf16 %v2218, %v2218
        %v2275 = vpack.c.bf16 %v2219, %v2219
        %v2276 = vpack.c.bf16 %v2220, %v2220
        %v2277 = vpack.c.bf16 %v2221, %v2221
        %v2278 = vpack.c.bf16 %v2222, %v2222
        %v2279 = vpack.c.bf16 %v2223, %v2223
        %v2280 = vpack.c.bf16 %v2224, %v2224
        %v2281 = vpack.c.bf16 %v2225, %v2225
        %v2282 = vpack.c.bf16 %v2226, %v2226
        %v2283 = vpack.c.bf16 %v2227, %v2227
        %v2284 = vpack.c.bf16 %v2228, %v2228
        %v2285 = vpack.c.bf16 %v2229, %v2229
        %v2286 = vpack.c.bf16 %v2230, %v2230
        %v2287 = vpack.c.bf16 %v2231, %v2231
        %v2288 = vpack.c.bf16 %v2232, %v2232
        %v2289 = vpack.c.bf16 %v2233, %v2233
        %v2290 = vpack.c.bf16 %v2234, %v2234
        %v2291 = vpack.c.bf16 %v2235, %v2235
        %v2292 = vpack.c.bf16 %v2236, %v2236
        %v2293 = vpack.c.bf16 %v2237, %v2237
        %v2294 = vpack.c.bf16 %v2238, %v2238
        %v2295 = vpack.c.bf16 %v2239, %v2239
        %v2296 = vpack.c.bf16 %v2240, %v2240
        %v2297 = vpack.c.bf16 %v2241, %v2241
        %v2298 = vpack.c.bf16 %v2242, %v2242
        %v2299 = vpack.c.bf16 %v2243, %v2243
        %v2300 = vpack.c.bf16 %v2244, %v2244
        %v2301 = vpack.c.bf16 %v2245, %v2245
        %v2302 = vpack.c.bf16 %v2246, %v2246
        %v2303 = vpack.c.bf16 %v2247, %v2247
        %v2304 = vpack.c.bf16 %v2248, %v2248
        %v2305 = vpack.c.bf16 %v2249, %v2249
        %v2306 = vpack.c.bf16 %v2250, %v2250
        %v2307 = vpack.c.bf16 %v2251, %v2251
        %2308 = vst [vmem:[#allocation3 + $0x20] sm:$0xf] %v2252
        %2309 = vst [vmem:[#allocation3 + $0x44] sm:$0xf] %v2253
        %2310 = vst [vmem:[#allocation3 + $0x68] sm:$0xf] %v2254
        %2311 = vst [vmem:[#allocation3 + $0x8c] sm:$0xf] %v2255
        %2312 = vst [vmem:[#allocation3 + $0xb0] sm:$0xf] %v2256
        %2313 = vst [vmem:[#allocation3 + $0xd4] sm:$0xf] %v2257
        %2314 = vst [vmem:[#allocation3 + $0xf8] sm:$0xf] %v2258
        %2315 = vst [vmem:[#allocation3 + $0x11c] sm:$0xf] %v2259
        %2316 = vst [vmem:[#allocation3 + $0x140] sm:$0xf] %v2260
        %2317 = vst [vmem:[#allocation3 + $0x164] sm:$0xf] %v2261
        %2318 = vst [vmem:[#allocation3 + $0x188] sm:$0xf] %v2262
        %2319 = vst [vmem:[#allocation3 + $0x1ac] sm:$0xf] %v2263
        %2320 = vst [vmem:[#allocation3 + $0x1d0] sm:$0xf] %v2264
        %2321 = vst [vmem:[#allocation3 + $0x1f4] sm:$0xf] %v2265
        %2322 = vst [vmem:[#allocation3 + $0x218] sm:$0xf] %v2266
        %2323 = vst [vmem:[#allocation3 + $0x23c] sm:$0xf] %v2267
        %2324 = vst [vmem:[#allocation3 + $0x260] sm:$0xf] %v2268
        %2325 = vst [vmem:[#allocation3 + $0x284] sm:$0xf] %v2269
        %2326 = vst [vmem:[#allocation3 + $0x2a8] sm:$0xf] %v2270
        %2327 = vst [vmem:[#allocation3 + $0x2cc] sm:$0xf] %v2271
        %2328 = vst [vmem:[#allocation3 + $0x2f0] sm:$0xf] %v2272
        %2329 = vst [vmem:[#allocation3 + $0x314] sm:$0xf] %v2273
        %2330 = vst [vmem:[#allocation3 + $0x338] sm:$0xf] %v2274
        %2331 = vst [vmem:[#allocation3 + $0x35c] sm:$0xf] %v2275
        %2332 = vst [vmem:[#allocation3 + $0x380] sm:$0xf] %v2276
        %2333 = vst [vmem:[#allocation3 + $0x3a4] sm:$0xf] %v2277
        %2334 = vst [vmem:[#allocation3 + $0x3c8] sm:$0xf] %v2278
        %2335 = vst [vmem:[#allocation3 + $0x3ec] sm:$0xf] %v2279
        %2336 = vst [vmem:[#allocation3 + $0x410] sm:$0xf] %v2280
        %2337 = vst [vmem:[#allocation3 + $0x434] sm:$0xf] %v2281
        %2338 = vst [vmem:[#allocation3 + $0x458] sm:$0xf] %v2282
        %2339 = vst [vmem:[#allocation3 + $0x47c] sm:$0xf] %v2283
        %2340 = vst [vmem:[#allocation3 + $0x4a0] sm:$0xf] %v2284
        %2341 = vst [vmem:[#allocation3 + $0x4c4] sm:$0xf] %v2285
        %2342 = vst [vmem:[#allocation3 + $0x4e8] sm:$0xf] %v2286
        %2343 = vst [vmem:[#allocation3 + $0x50c] sm:$0xf] %v2287
        %2344 = vst [vmem:[#allocation3 + $0x530] sm:$0xf] %v2288
        %2345 = vst [vmem:[#allocation3 + $0x554] sm:$0xf] %v2289
        %2346 = vst [vmem:[#allocation3 + $0x578] sm:$0xf] %v2290
        %2347 = vst [vmem:[#allocation3 + $0x59c] sm:$0xf] %v2291
        %2348 = vst [vmem:[#allocation3 + $0x5c0] sm:$0xf] %v2292
        %2349 = vst [vmem:[#allocation3 + $0x5e4] sm:$0xf] %v2293
        %2350 = vst [vmem:[#allocation3 + $0x608] sm:$0xf] %v2294
        %2351 = vst [vmem:[#allocation3 + $0x62c] sm:$0xf] %v2295
        %2352 = vst [vmem:[#allocation3 + $0x650] sm:$0xf] %v2296
        %2353 = vst [vmem:[#allocation3 + $0x674] sm:$0xf] %v2297
        %2354 = vst [vmem:[#allocation3 + $0x698] sm:$0xf] %v2298
        %2355 = vst [vmem:[#allocation3 + $0x6bc] sm:$0xf] %v2299
        %2356 = vst [vmem:[#allocation3 + $0x6e0] sm:$0xf] %v2300
        %2357 = vst [vmem:[#allocation3 + $0x704] sm:$0xf] %v2301
        %2358 = vst [vmem:[#allocation3 + $0x728] sm:$0xf] %v2302
        %2359 = vst [vmem:[#allocation3 + $0x74c] sm:$0xf] %v2303
        %2360 = vst [vmem:[#allocation3 + $0x770] sm:$0xf] %v2304
        %2361 = vst [vmem:[#allocation3 + $0x794] sm:$0xf] %v2305
        %2362 = vst [vmem:[#allocation3 + $0x7b8] sm:$0xf] %v2306
        %2363 = vst [vmem:[#allocation3 + $0x7dc] sm:$0xf] %v2307
        %v2364 = vld [vmem:[%s530] sm:$0xf]
        %v2365 = vld [vmem:[%s530 + $0x4] sm:$0xf]
        %v2366 = vld [vmem:[%s530 + $0x8] sm:$0xf]
        %v2367 = vld [vmem:[%s530 + $0xc] sm:$0xf]
        %v2368 = vld [vmem:[%s530 + $0x10] sm:$0xf]
        %v2369 = vld [vmem:[%s530 + $0x14] sm:$0xf]
        %v2370 = vld [vmem:[%s530 + $0x18] sm:$0xf]
        %v2371 = vld [vmem:[%s530 + $0x1c] sm:$0xf]
        %v2372 = vld [vmem:[%s530 + $0x20] sm:$0xf]
        %v2373 = vld [vmem:[%s530 + $0x24] sm:$0xf]
        %v2374 = vld [vmem:[%s530 + $0x28] sm:$0xf]
        %v2375 = vld [vmem:[%s530 + $0x2c] sm:$0xf]
        %v2376 = vld [vmem:[%s530 + $0x30] sm:$0xf]
        %v2377 = vld [vmem:[%s530 + $0x34] sm:$0xf]
        %v2378 = vld [vmem:[%s530 + $0x38] sm:$0xf]
        %v2379 = vld [vmem:[%s530 + $0x3c] sm:$0xf]
        %v2380 = vld [vmem:[%s530 + $0x40] sm:$0xf]
        %v2381 = vld [vmem:[%s530 + $0x44] sm:$0xf]
        %v2382 = vld [vmem:[%s530 + $0x48] sm:$0xf]
        %v2383 = vld [vmem:[%s530 + $0x4c] sm:$0xf]
        %v2384 = vld [vmem:[%s530 + $0x50] sm:$0xf]
        %v2385 = vld [vmem:[%s530 + $0x54] sm:$0xf]
        %v2386 = vld [vmem:[%s530 + $0x58] sm:$0xf]
        %v2387 = vld [vmem:[%s530 + $0x5c] sm:$0xf]
        %v2388 = vld [vmem:[%s530 + $0x60] sm:$0xf]
        %v2389 = vld [vmem:[%s530 + $0x64] sm:$0xf]
        %v2390 = vld [vmem:[%s530 + $0x68] sm:$0xf]
        %v2391 = vld [vmem:[%s530 + $0x6c] sm:$0xf]
        %v2392 = vld [vmem:[%s530 + $0x70] sm:$0xf]
        %v2393 = vld [vmem:[%s530 + $0x74] sm:$0xf]
        %v2394 = vld [vmem:[%s530 + $0x78] sm:$0xf]
        %v2395 = vld [vmem:[%s530 + $0x7c] sm:$0xf]
        %v2396 = vld [vmem:[%s530 + $0x80] sm:$0xf]
        %v2397 = vld [vmem:[%s530 + $0x84] sm:$0xf]
        %v2398 = vld [vmem:[%s530 + $0x88] sm:$0xf]
        %v2399 = vld [vmem:[%s530 + $0x8c] sm:$0xf]
        %v2400 = vld [vmem:[%s530 + $0x90] sm:$0xf]
        %v2401 = vld [vmem:[%s530 + $0x94] sm:$0xf]
        %v2402 = vld [vmem:[%s530 + $0x98] sm:$0xf]
        %v2403 = vld [vmem:[%s530 + $0x9c] sm:$0xf]
        %v2404 = vld [vmem:[%s530 + $0xa0] sm:$0xf]
        %v2405 = vld [vmem:[%s530 + $0xa4] sm:$0xf]
        %v2406 = vld [vmem:[%s530 + $0xa8] sm:$0xf]
        %v2407 = vld [vmem:[%s530 + $0xac] sm:$0xf]
        %v2408 = vld [vmem:[%s530 + $0xb0] sm:$0xf]
        %v2409 = vld [vmem:[%s530 + $0xb4] sm:$0xf]
        %v2410 = vld [vmem:[%s530 + $0xb8] sm:$0xf]
        %v2411 = vld [vmem:[%s530 + $0xbc] sm:$0xf]
        %v2412 = vld [vmem:[%s530 + $0xc0] sm:$0xf]
        %v2413 = vld [vmem:[%s530 + $0xc4] sm:$0xf]
        %v2414 = vld [vmem:[%s530 + $0xc8] sm:$0xf]
        %v2415 = vld [vmem:[%s530 + $0xcc] sm:$0xf]
        %v2416 = vld [vmem:[%s530 + $0xd0] sm:$0xf]
        %v2417 = vld [vmem:[%s530 + $0xd4] sm:$0xf]
        %v2418 = vld [vmem:[%s530 + $0xd8] sm:$0xf]
        %v2419 = vld [vmem:[%s530 + $0xdc] sm:$0xf]
        %v2420 = vld [vmem:[%s530 + $0xe0] sm:$0xf]
        %v2421 = vld [vmem:[%s530 + $0xe4] sm:$0xf]
        %v2422 = vld [vmem:[%s530 + $0xe8] sm:$0xf]
        %v2423 = vld [vmem:[%s530 + $0xec] sm:$0xf]
        %v2424 = vld [vmem:[%s530 + $0xf0] sm:$0xf]
        %v2425 = vld [vmem:[%s530 + $0xf4] sm:$0xf]
        %v2426 = vld [vmem:[%s530 + $0xf8] sm:$0xf]
        %v2427 = vld [vmem:[%s530 + $0xfc] sm:$0xf]
        %v2428 = vld [vmem:[%s530 + $0x100] sm:$0xf]
        %v2429 = vld [vmem:[%s530 + $0x104] sm:$0xf]
        %v2430 = vld [vmem:[%s530 + $0x108] sm:$0xf]
        %v2431 = vld [vmem:[%s530 + $0x10c] sm:$0xf]
        %v2432 = vld [vmem:[%s530 + $0x110] sm:$0xf]
        %v2433 = vld [vmem:[%s530 + $0x114] sm:$0xf]
        %v2434 = vld [vmem:[%s530 + $0x118] sm:$0xf]
        %v2435 = vld [vmem:[%s530 + $0x11c] sm:$0xf]
        %v2436 = vld [vmem:[%s530 + $0x120] sm:$0xf]
        %v2437 = vld [vmem:[%s530 + $0x124] sm:$0xf]
        %v2438 = vld [vmem:[%s530 + $0x128] sm:$0xf]
        %v2439 = vld [vmem:[%s530 + $0x12c] sm:$0xf]
        %v2440 = vld [vmem:[%s530 + $0x130] sm:$0xf]
        %v2441 = vld [vmem:[%s530 + $0x134] sm:$0xf]
        %v2442 = vld [vmem:[%s530 + $0x138] sm:$0xf]
        %v2443 = vld [vmem:[%s530 + $0x13c] sm:$0xf]
        %v2444 = vld [vmem:[%s530 + $0x140] sm:$0xf]
        %v2445 = vld [vmem:[%s530 + $0x144] sm:$0xf]
        %v2446 = vld [vmem:[%s530 + $0x148] sm:$0xf]
        %v2447 = vld [vmem:[%s530 + $0x14c] sm:$0xf]
        %v2448 = vld [vmem:[%s530 + $0x150] sm:$0xf]
        %v2449 = vld [vmem:[%s530 + $0x154] sm:$0xf]
        %v2450 = vld [vmem:[%s530 + $0x158] sm:$0xf]
        %v2451 = vld [vmem:[%s530 + $0x15c] sm:$0xf]
        %v2452 = vld [vmem:[%s530 + $0x160] sm:$0xf]
        %v2453 = vld [vmem:[%s530 + $0x164] sm:$0xf]
        %v2454 = vld [vmem:[%s530 + $0x168] sm:$0xf]
        %v2455 = vld [vmem:[%s530 + $0x16c] sm:$0xf]
        %v2456 = vld [vmem:[%s530 + $0x170] sm:$0xf]
        %v2457 = vld [vmem:[%s530 + $0x174] sm:$0xf]
        %v2458 = vld [vmem:[%s530 + $0x178] sm:$0xf]
        %v2459 = vld [vmem:[%s530 + $0x17c] sm:$0xf]
        %v2460 = vld [vmem:[%s530 + $0x180] sm:$0xf]
        %v2461 = vld [vmem:[%s530 + $0x184] sm:$0xf]
        %v2462 = vld [vmem:[%s530 + $0x188] sm:$0xf]
        %v2463 = vld [vmem:[%s530 + $0x18c] sm:$0xf]
        %v2464 = vld [vmem:[%s530 + $0x190] sm:$0xf]
        %v2465 = vld [vmem:[%s530 + $0x194] sm:$0xf]
        %v2466 = vld [vmem:[%s530 + $0x198] sm:$0xf]
        %v2467 = vld [vmem:[%s530 + $0x19c] sm:$0xf]
        %v2468 = vld [vmem:[%s530 + $0x1a0] sm:$0xf]
        %v2469 = vld [vmem:[%s530 + $0x1a4] sm:$0xf]
        %v2470 = vld [vmem:[%s530 + $0x1a8] sm:$0xf]
        %v2471 = vld [vmem:[%s530 + $0x1ac] sm:$0xf]
        %v2472 = vld [vmem:[%s530 + $0x1b0] sm:$0xf]
        %v2473 = vld [vmem:[%s530 + $0x1b4] sm:$0xf]
        %v2474 = vld [vmem:[%s530 + $0x1b8] sm:$0xf]
        %v2475 = vld [vmem:[%s530 + $0x1bc] sm:$0xf]
        %v2476 = vld [vmem:[%s530 + $0x1c0] sm:$0xf]
        %v2477 = vld [vmem:[%s530 + $0x1c4] sm:$0xf]
        %v2478 = vld [vmem:[%s530 + $0x1c8] sm:$0xf]
        %v2479 = vld [vmem:[%s530 + $0x1cc] sm:$0xf]
        %v2480 = vld [vmem:[%s530 + $0x1d0] sm:$0xf]
        %v2481 = vld [vmem:[%s530 + $0x1d4] sm:$0xf]
        %v2482 = vld [vmem:[%s530 + $0x1d8] sm:$0xf]
        %v2483 = vld [vmem:[%s530 + $0x1dc] sm:$0xf]
        %v2484 = vld [vmem:[%s530 + $0x1e0] sm:$0xf]
        %v2485 = vld [vmem:[%s530 + $0x1e4] sm:$0xf]
        %v2486 = vld [vmem:[%s530 + $0x1e8] sm:$0xf]
        %v2487 = vld [vmem:[%s530 + $0x1ec] sm:$0xf]
        %v2488 = vld [vmem:[%s530 + $0x1f0] sm:$0xf]
        %v2489 = vld [vmem:[%s530 + $0x1f4] sm:$0xf]
        %v2490 = vld [vmem:[%s530 + $0x1f8] sm:$0xf]
        %v2491 = vld [vmem:[%s530 + $0x1fc] sm:$0xf]
        %v2492 = vld [vmem:[%s530 + $0x200] sm:$0xf]
        %v2493 = vld [vmem:[%s530 + $0x204] sm:$0xf]
        %v2494 = vld [vmem:[%s530 + $0x208] sm:$0xf]
        %v2495 = vld [vmem:[%s530 + $0x20c] sm:$0xf]
        %v2496 = vld [vmem:[%s530 + $0x210] sm:$0xf]
        %v2497 = vld [vmem:[%s530 + $0x214] sm:$0xf]
        %v2498 = vld [vmem:[%s530 + $0x218] sm:$0xf]
        %v2499 = vld [vmem:[%s530 + $0x21c] sm:$0xf]
        %v2500 = vld [vmem:[%s530 + $0x220] sm:$0xf]
        %v2501 = vld [vmem:[%s530 + $0x224] sm:$0xf]
        %v2502 = vld [vmem:[%s530 + $0x228] sm:$0xf]
        %v2503 = vld [vmem:[%s530 + $0x22c] sm:$0xf]
        %v2504 = vld [vmem:[%s530 + $0x230] sm:$0xf]
        %v2505 = vld [vmem:[%s530 + $0x234] sm:$0xf]
        %v2506 = vld [vmem:[%s530 + $0x238] sm:$0xf]
        %v2507 = vld [vmem:[%s530 + $0x23c] sm:$0xf]
        %v2508 = vld [vmem:[#allocation3] sm:$0xff]
        %v2509 = vld [vmem:[#allocation3 + $0x8] sm:$0xff]
        %v2510 = vld [vmem:[#allocation3 + $0x10] sm:$0xff]
        %v2511 = vld [vmem:[#allocation3 + $0x18] sm:$0xff]
        %v2512 = vld [vmem:[#allocation3 + $0x20] sm:$0xf]
        %v2513 = vld [vmem:[#allocation3 + $0x24] sm:$0xff]
        %v2514 = vld [vmem:[#allocation3 + $0x2c] sm:$0xff]
        %v2515 = vld [vmem:[#allocation3 + $0x34] sm:$0xff]
        %v2516 = vld [vmem:[#allocation3 + $0x3c] sm:$0xff]
        %v2517 = vld [vmem:[#allocation3 + $0x44] sm:$0xf]
        %v2518 = vld [vmem:[#allocation3 + $0x48] sm:$0xff]
        %v2519 = vld [vmem:[#allocation3 + $0x50] sm:$0xff]
        %v2520 = vld [vmem:[#allocation3 + $0x58] sm:$0xff]
        %v2521 = vld [vmem:[#allocation3 + $0x60] sm:$0xff]
        %v2522 = vld [vmem:[#allocation3 + $0x68] sm:$0xf]
        %v2523 = vld [vmem:[#allocation3 + $0x6c] sm:$0xff]
        %v2524 = vld [vmem:[#allocation3 + $0x74] sm:$0xff]
        %v2525 = vld [vmem:[#allocation3 + $0x7c] sm:$0xff]
        %v2526 = vld [vmem:[#allocation3 + $0x84] sm:$0xff]
        %v2527 = vld [vmem:[#allocation3 + $0x8c] sm:$0xf]
        %v2528 = vld [vmem:[#allocation3 + $0x90] sm:$0xff]
        %v2529 = vld [vmem:[#allocation3 + $0x98] sm:$0xff]
        %v2530 = vld [vmem:[#allocation3 + $0xa0] sm:$0xff]
        %v2531 = vld [vmem:[#allocation3 + $0xa8] sm:$0xff]
        %v2532 = vld [vmem:[#allocation3 + $0xb0] sm:$0xf]
        %v2533 = vld [vmem:[#allocation3 + $0xb4] sm:$0xff]
        %v2534 = vld [vmem:[#allocation3 + $0xbc] sm:$0xff]
        %v2535 = vld [vmem:[#allocation3 + $0xc4] sm:$0xff]
        %v2536 = vld [vmem:[#allocation3 + $0xcc] sm:$0xff]
        %v2537 = vld [vmem:[#allocation3 + $0xd4] sm:$0xf]
        %v2538 = vld [vmem:[#allocation3 + $0xd8] sm:$0xff]
        %v2539 = vld [vmem:[#allocation3 + $0xe0] sm:$0xff]
        %v2540 = vld [vmem:[#allocation3 + $0xe8] sm:$0xff]
        %v2541 = vld [vmem:[#allocation3 + $0xf0] sm:$0xff]
        %v2542 = vld [vmem:[#allocation3 + $0xf8] sm:$0xf]
        %v2543 = vld [vmem:[#allocation3 + $0xfc] sm:$0xff]
        %v2544 = vld [vmem:[#allocation3 + $0x104] sm:$0xff]
        %v2545 = vld [vmem:[#allocation3 + $0x10c] sm:$0xff]
        %v2546 = vld [vmem:[#allocation3 + $0x114] sm:$0xff]
        %v2547 = vld [vmem:[#allocation3 + $0x11c] sm:$0xf]
        %v2548 = vld [vmem:[#allocation3 + $0x120] sm:$0xff]
        %v2549 = vld [vmem:[#allocation3 + $0x128] sm:$0xff]
        %v2550 = vld [vmem:[#allocation3 + $0x130] sm:$0xff]
        %v2551 = vld [vmem:[#allocation3 + $0x138] sm:$0xff]
        %v2552 = vld [vmem:[#allocation3 + $0x140] sm:$0xf]
        %v2553 = vld [vmem:[#allocation3 + $0x144] sm:$0xff]
        %v2554 = vld [vmem:[#allocation3 + $0x14c] sm:$0xff]
        %v2555 = vld [vmem:[#allocation3 + $0x154] sm:$0xff]
        %v2556 = vld [vmem:[#allocation3 + $0x15c] sm:$0xff]
        %v2557 = vld [vmem:[#allocation3 + $0x164] sm:$0xf]
        %v2558 = vld [vmem:[#allocation3 + $0x168] sm:$0xff]
        %v2559 = vld [vmem:[#allocation3 + $0x170] sm:$0xff]
        %v2560 = vld [vmem:[#allocation3 + $0x178] sm:$0xff]
        %v2561 = vld [vmem:[#allocation3 + $0x180] sm:$0xff]
        %v2562 = vld [vmem:[#allocation3 + $0x188] sm:$0xf]
        %v2563 = vld [vmem:[#allocation3 + $0x18c] sm:$0xff]
        %v2564 = vld [vmem:[#allocation3 + $0x194] sm:$0xff]
        %v2565 = vld [vmem:[#allocation3 + $0x19c] sm:$0xff]
        %v2566 = vld [vmem:[#allocation3 + $0x1a4] sm:$0xff]
        %v2567 = vld [vmem:[#allocation3 + $0x1ac] sm:$0xf]
        %v2568 = vld [vmem:[#allocation3 + $0x1b0] sm:$0xff]
        %v2569 = vld [vmem:[#allocation3 + $0x1b8] sm:$0xff]
        %v2570 = vld [vmem:[#allocation3 + $0x1c0] sm:$0xff]
        %v2571 = vld [vmem:[#allocation3 + $0x1c8] sm:$0xff]
        %v2572 = vld [vmem:[#allocation3 + $0x1d0] sm:$0xf]
        %v2573 = vld [vmem:[#allocation3 + $0x1d4] sm:$0xff]
        %v2574 = vld [vmem:[#allocation3 + $0x1dc] sm:$0xff]
        %v2575 = vld [vmem:[#allocation3 + $0x1e4] sm:$0xff]
        %v2576 = vld [vmem:[#allocation3 + $0x1ec] sm:$0xff]
        %v2577 = vld [vmem:[#allocation3 + $0x1f4] sm:$0xf]
        %v2578 = vld [vmem:[#allocation3 + $0x1f8] sm:$0xff]
        %v2579 = vld [vmem:[#allocation3 + $0x200] sm:$0xff]
        %v2580 = vld [vmem:[#allocation3 + $0x208] sm:$0xff]
        %v2581 = vld [vmem:[#allocation3 + $0x210] sm:$0xff]
        %v2582 = vld [vmem:[#allocation3 + $0x218] sm:$0xf]
        %v2583 = vld [vmem:[#allocation3 + $0x21c] sm:$0xff]
        %v2584 = vld [vmem:[#allocation3 + $0x224] sm:$0xff]
        %v2585 = vld [vmem:[#allocation3 + $0x22c] sm:$0xff]
        %v2586 = vld [vmem:[#allocation3 + $0x234] sm:$0xff]
        %v2587 = vld [vmem:[#allocation3 + $0x23c] sm:$0xf]
        %v2588 = vld [vmem:[#allocation3 + $0x240] sm:$0xff]
        %v2589 = vld [vmem:[#allocation3 + $0x248] sm:$0xff]
        %v2590 = vld [vmem:[#allocation3 + $0x250] sm:$0xff]
        %v2591 = vld [vmem:[#allocation3 + $0x258] sm:$0xff]
        %v2592 = vld [vmem:[#allocation3 + $0x260] sm:$0xf]
        %v2593 = vld [vmem:[#allocation3 + $0x264] sm:$0xff]
        %v2594 = vld [vmem:[#allocation3 + $0x26c] sm:$0xff]
        %v2595 = vld [vmem:[#allocation3 + $0x274] sm:$0xff]
        %v2596 = vld [vmem:[#allocation3 + $0x27c] sm:$0xff]
        %v2597 = vld [vmem:[#allocation3 + $0x284] sm:$0xf]
        %v2598 = vld [vmem:[#allocation3 + $0x288] sm:$0xff]
        %v2599 = vld [vmem:[#allocation3 + $0x290] sm:$0xff]
        %v2600 = vld [vmem:[#allocation3 + $0x298] sm:$0xff]
        %v2601 = vld [vmem:[#allocation3 + $0x2a0] sm:$0xff]
        %v2602 = vld [vmem:[#allocation3 + $0x2a8] sm:$0xf]
        %v2603 = vld [vmem:[#allocation3 + $0x2ac] sm:$0xff]
        %v2604 = vld [vmem:[#allocation3 + $0x2b4] sm:$0xff]
        %v2605 = vld [vmem:[#allocation3 + $0x2bc] sm:$0xff]
        %v2606 = vld [vmem:[#allocation3 + $0x2c4] sm:$0xff]
        %v2607 = vld [vmem:[#allocation3 + $0x2cc] sm:$0xf]
        %v2608 = vld [vmem:[#allocation3 + $0x2d0] sm:$0xff]
        %v2609 = vld [vmem:[#allocation3 + $0x2d8] sm:$0xff]
        %v2610 = vld [vmem:[#allocation3 + $0x2e0] sm:$0xff]
        %v2611 = vld [vmem:[#allocation3 + $0x2e8] sm:$0xff]
        %v2612 = vld [vmem:[#allocation3 + $0x2f0] sm:$0xf]
        %v2613 = vld [vmem:[#allocation3 + $0x2f4] sm:$0xff]
        %v2614 = vld [vmem:[#allocation3 + $0x2fc] sm:$0xff]
        %v2615 = vld [vmem:[#allocation3 + $0x304] sm:$0xff]
        %v2616 = vld [vmem:[#allocation3 + $0x30c] sm:$0xff]
        %v2617 = vld [vmem:[#allocation3 + $0x314] sm:$0xf]
        %v2618 = vld [vmem:[#allocation3 + $0x318] sm:$0xff]
        %v2619 = vld [vmem:[#allocation3 + $0x320] sm:$0xff]
        %v2620 = vld [vmem:[#allocation3 + $0x328] sm:$0xff]
        %v2621 = vld [vmem:[#allocation3 + $0x330] sm:$0xff]
        %v2622 = vld [vmem:[#allocation3 + $0x338] sm:$0xf]
        %v2623 = vld [vmem:[#allocation3 + $0x33c] sm:$0xff]
        %v2624 = vld [vmem:[#allocation3 + $0x344] sm:$0xff]
        %v2625 = vld [vmem:[#allocation3 + $0x34c] sm:$0xff]
        %v2626 = vld [vmem:[#allocation3 + $0x354] sm:$0xff]
        %v2627 = vld [vmem:[#allocation3 + $0x35c] sm:$0xf]
        %v2628 = vld [vmem:[#allocation3 + $0x360] sm:$0xff]
        %v2629 = vld [vmem:[#allocation3 + $0x368] sm:$0xff]
        %v2630 = vld [vmem:[#allocation3 + $0x370] sm:$0xff]
        %v2631 = vld [vmem:[#allocation3 + $0x378] sm:$0xff]
        %v2632 = vld [vmem:[#allocation3 + $0x380] sm:$0xf]
        %v2633 = vld [vmem:[#allocation3 + $0x384] sm:$0xff]
        %v2634 = vld [vmem:[#allocation3 + $0x38c] sm:$0xff]
        %v2635 = vld [vmem:[#allocation3 + $0x394] sm:$0xff]
        %v2636 = vld [vmem:[#allocation3 + $0x39c] sm:$0xff]
        %v2637 = vld [vmem:[#allocation3 + $0x3a4] sm:$0xf]
        %v2638 = vld [vmem:[#allocation3 + $0x3a8] sm:$0xff]
        %v2639 = vld [vmem:[#allocation3 + $0x3b0] sm:$0xff]
        %v2640 = vld [vmem:[#allocation3 + $0x3b8] sm:$0xff]
        %v2641 = vld [vmem:[#allocation3 + $0x3c0] sm:$0xff]
        %v2642 = vld [vmem:[#allocation3 + $0x3c8] sm:$0xf]
        %v2643 = vld [vmem:[#allocation3 + $0x3cc] sm:$0xff]
        %v2644 = vld [vmem:[#allocation3 + $0x3d4] sm:$0xff]
        %v2645 = vld [vmem:[#allocation3 + $0x3dc] sm:$0xff]
        %v2646 = vld [vmem:[#allocation3 + $0x3e4] sm:$0xff]
        %v2647 = vld [vmem:[#allocation3 + $0x3ec] sm:$0xf]
        %v2648 = vld [vmem:[#allocation3 + $0x3f0] sm:$0xff]
        %v2649 = vld [vmem:[#allocation3 + $0x3f8] sm:$0xff]
        %v2650 = vld [vmem:[#allocation3 + $0x400] sm:$0xff]
        %v2651 = vld [vmem:[#allocation3 + $0x408] sm:$0xff]
        %v2652 = vld [vmem:[#allocation3 + $0x410] sm:$0xf]
        %v2653 = vld [vmem:[#allocation3 + $0x414] sm:$0xff]
        %v2654 = vld [vmem:[#allocation3 + $0x41c] sm:$0xff]
        %v2655 = vld [vmem:[#allocation3 + $0x424] sm:$0xff]
        %v2656 = vld [vmem:[#allocation3 + $0x42c] sm:$0xff]
        %v2657 = vld [vmem:[#allocation3 + $0x434] sm:$0xf]
        %v2658 = vld [vmem:[#allocation3 + $0x438] sm:$0xff]
        %v2659 = vld [vmem:[#allocation3 + $0x440] sm:$0xff]
        %v2660 = vld [vmem:[#allocation3 + $0x448] sm:$0xff]
        %v2661 = vld [vmem:[#allocation3 + $0x450] sm:$0xff]
        %v2662 = vld [vmem:[#allocation3 + $0x458] sm:$0xf]
        %v2663 = vld [vmem:[#allocation3 + $0x45c] sm:$0xff]
        %v2664 = vld [vmem:[#allocation3 + $0x464] sm:$0xff]
        %v2665 = vld [vmem:[#allocation3 + $0x46c] sm:$0xff]
        %v2666 = vld [vmem:[#allocation3 + $0x474] sm:$0xff]
        %v2667 = vld [vmem:[#allocation3 + $0x47c] sm:$0xf]
        %v2668 = vld [vmem:[#allocation3 + $0x480] sm:$0xff]
        %v2669 = vld [vmem:[#allocation3 + $0x488] sm:$0xff]
        %v2670 = vld [vmem:[#allocation3 + $0x490] sm:$0xff]
        %v2671 = vld [vmem:[#allocation3 + $0x498] sm:$0xff]
        %v2672 = vld [vmem:[#allocation3 + $0x4a0] sm:$0xf]
        %v2673 = vld [vmem:[#allocation3 + $0x4a4] sm:$0xff]
        %v2674 = vld [vmem:[#allocation3 + $0x4ac] sm:$0xff]
        %v2675 = vld [vmem:[#allocation3 + $0x4b4] sm:$0xff]
        %v2676 = vld [vmem:[#allocation3 + $0x4bc] sm:$0xff]
        %v2677 = vld [vmem:[#allocation3 + $0x4c4] sm:$0xf]
        %v2678 = vld [vmem:[#allocation3 + $0x4c8] sm:$0xff]
        %v2679 = vld [vmem:[#allocation3 + $0x4d0] sm:$0xff]
        %v2680 = vld [vmem:[#allocation3 + $0x4d8] sm:$0xff]
        %v2681 = vld [vmem:[#allocation3 + $0x4e0] sm:$0xff]
        %v2682 = vld [vmem:[#allocation3 + $0x4e8] sm:$0xf]
        %v2683 = vld [vmem:[#allocation3 + $0x4ec] sm:$0xff]
        %v2684 = vld [vmem:[#allocation3 + $0x4f4] sm:$0xff]
        %v2685 = vld [vmem:[#allocation3 + $0x4fc] sm:$0xff]
        %v2686 = vld [vmem:[#allocation3 + $0x504] sm:$0xff]
        %v2687 = vld [vmem:[#allocation3 + $0x50c] sm:$0xf]
        %v2688 = vld [vmem:[#allocation3 + $0x510] sm:$0xff]
        %v2689 = vld [vmem:[#allocation3 + $0x518] sm:$0xff]
        %v2690 = vld [vmem:[#allocation3 + $0x520] sm:$0xff]
        %v2691 = vld [vmem:[#allocation3 + $0x528] sm:$0xff]
        %v2692 = vld [vmem:[#allocation3 + $0x530] sm:$0xf]
        %v2693 = vld [vmem:[#allocation3 + $0x534] sm:$0xff]
        %v2694 = vld [vmem:[#allocation3 + $0x53c] sm:$0xff]
        %v2695 = vld [vmem:[#allocation3 + $0x544] sm:$0xff]
        %v2696 = vld [vmem:[#allocation3 + $0x54c] sm:$0xff]
        %v2697 = vld [vmem:[#allocation3 + $0x554] sm:$0xf]
        %v2698 = vld [vmem:[#allocation3 + $0x558] sm:$0xff]
        %v2699 = vld [vmem:[#allocation3 + $0x560] sm:$0xff]
        %v2700 = vld [vmem:[#allocation3 + $0x568] sm:$0xff]
        %v2701 = vld [vmem:[#allocation3 + $0x570] sm:$0xff]
        %v2702 = vld [vmem:[#allocation3 + $0x578] sm:$0xf]
        %v2703 = vld [vmem:[#allocation3 + $0x57c] sm:$0xff]
        %v2704 = vld [vmem:[#allocation3 + $0x584] sm:$0xff]
        %v2705 = vld [vmem:[#allocation3 + $0x58c] sm:$0xff]
        %v2706 = vld [vmem:[#allocation3 + $0x594] sm:$0xff]
        %v2707 = vld [vmem:[#allocation3 + $0x59c] sm:$0xf]
        %v2708 = vld [vmem:[#allocation3 + $0x5a0] sm:$0xff]
        %v2709 = vld [vmem:[#allocation3 + $0x5a8] sm:$0xff]
        %v2710 = vld [vmem:[#allocation3 + $0x5b0] sm:$0xff]
        %v2711 = vld [vmem:[#allocation3 + $0x5b8] sm:$0xff]
        %v2712 = vld [vmem:[#allocation3 + $0x5c0] sm:$0xf]
        %v2713 = vld [vmem:[#allocation3 + $0x5c4] sm:$0xff]
        %v2714 = vld [vmem:[#allocation3 + $0x5cc] sm:$0xff]
        %v2715 = vld [vmem:[#allocation3 + $0x5d4] sm:$0xff]
        %v2716 = vld [vmem:[#allocation3 + $0x5dc] sm:$0xff]
        %v2717 = vld [vmem:[#allocation3 + $0x5e4] sm:$0xf]
        %v2718 = vld [vmem:[#allocation3 + $0x5e8] sm:$0xff]
        %v2719 = vld [vmem:[#allocation3 + $0x5f0] sm:$0xff]
        %v2720 = vld [vmem:[#allocation3 + $0x5f8] sm:$0xff]
        %v2721 = vld [vmem:[#allocation3 + $0x600] sm:$0xff]
        %v2722 = vld [vmem:[#allocation3 + $0x608] sm:$0xf]
        %v2723 = vld [vmem:[#allocation3 + $0x60c] sm:$0xff]
        %v2724 = vld [vmem:[#allocation3 + $0x614] sm:$0xff]
        %v2725 = vld [vmem:[#allocation3 + $0x61c] sm:$0xff]
        %v2726 = vld [vmem:[#allocation3 + $0x624] sm:$0xff]
        %v2727 = vld [vmem:[#allocation3 + $0x62c] sm:$0xf]
        %v2728 = vld [vmem:[#allocation3 + $0x630] sm:$0xff]
        %v2729 = vld [vmem:[#allocation3 + $0x638] sm:$0xff]
        %v2730 = vld [vmem:[#allocation3 + $0x640] sm:$0xff]
        %v2731 = vld [vmem:[#allocation3 + $0x648] sm:$0xff]
        %v2732 = vld [vmem:[#allocation3 + $0x650] sm:$0xf]
        %v2733 = vld [vmem:[#allocation3 + $0x654] sm:$0xff]
        %v2734 = vld [vmem:[#allocation3 + $0x65c] sm:$0xff]
        %v2735 = vld [vmem:[#allocation3 + $0x664] sm:$0xff]
        %v2736 = vld [vmem:[#allocation3 + $0x66c] sm:$0xff]
        %v2737 = vld [vmem:[#allocation3 + $0x674] sm:$0xf]
        %v2738 = vld [vmem:[#allocation3 + $0x678] sm:$0xff]
        %v2739 = vld [vmem:[#allocation3 + $0x680] sm:$0xff]
        %v2740 = vld [vmem:[#allocation3 + $0x688] sm:$0xff]
        %v2741 = vld [vmem:[#allocation3 + $0x690] sm:$0xff]
        %v2742 = vld [vmem:[#allocation3 + $0x698] sm:$0xf]
        %v2743 = vld [vmem:[#allocation3 + $0x69c] sm:$0xff]
        %v2744 = vld [vmem:[#allocation3 + $0x6a4] sm:$0xff]
        %v2745 = vld [vmem:[#allocation3 + $0x6ac] sm:$0xff]
        %v2746 = vld [vmem:[#allocation3 + $0x6b4] sm:$0xff]
        %v2747 = vld [vmem:[#allocation3 + $0x6bc] sm:$0xf]
        %v2748 = vld [vmem:[#allocation3 + $0x6c0] sm:$0xff]
        %v2749 = vld [vmem:[#allocation3 + $0x6c8] sm:$0xff]
        %v2750 = vld [vmem:[#allocation3 + $0x6d0] sm:$0xff]
        %v2751 = vld [vmem:[#allocation3 + $0x6d8] sm:$0xff]
        %v2752 = vld [vmem:[#allocation3 + $0x6e0] sm:$0xf]
        %v2753 = vld [vmem:[#allocation3 + $0x6e4] sm:$0xff]
        %v2754 = vld [vmem:[#allocation3 + $0x6ec] sm:$0xff]
        %v2755 = vld [vmem:[#allocation3 + $0x6f4] sm:$0xff]
        %v2756 = vld [vmem:[#allocation3 + $0x6fc] sm:$0xff]
        %v2757 = vld [vmem:[#allocation3 + $0x704] sm:$0xf]
        %v2758 = vld [vmem:[#allocation3 + $0x708] sm:$0xff]
        %v2759 = vld [vmem:[#allocation3 + $0x710] sm:$0xff]
        %v2760 = vld [vmem:[#allocation3 + $0x718] sm:$0xff]
        %v2761 = vld [vmem:[#allocation3 + $0x720] sm:$0xff]
        %v2762 = vld [vmem:[#allocation3 + $0x728] sm:$0xf]
        %v2763 = vld [vmem:[#allocation3 + $0x72c] sm:$0xff]
        %v2764 = vld [vmem:[#allocation3 + $0x734] sm:$0xff]
        %v2765 = vld [vmem:[#allocation3 + $0x73c] sm:$0xff]
        %v2766 = vld [vmem:[#allocation3 + $0x744] sm:$0xff]
        %v2767 = vld [vmem:[#allocation3 + $0x74c] sm:$0xf]
        %v2768 = vld [vmem:[#allocation3 + $0x750] sm:$0xff]
        %v2769 = vld [vmem:[#allocation3 + $0x758] sm:$0xff]
        %v2770 = vld [vmem:[#allocation3 + $0x760] sm:$0xff]
        %v2771 = vld [vmem:[#allocation3 + $0x768] sm:$0xff]
        %v2772 = vld [vmem:[#allocation3 + $0x770] sm:$0xf]
        %v2773 = vld [vmem:[#allocation3 + $0x774] sm:$0xff]
        %v2774 = vld [vmem:[#allocation3 + $0x77c] sm:$0xff]
        %v2775 = vld [vmem:[#allocation3 + $0x784] sm:$0xff]
        %v2776 = vld [vmem:[#allocation3 + $0x78c] sm:$0xff]
        %v2777 = vld [vmem:[#allocation3 + $0x794] sm:$0xf]
        %v2778 = vld [vmem:[#allocation3 + $0x798] sm:$0xff]
        %v2779 = vld [vmem:[#allocation3 + $0x7a0] sm:$0xff]
        %v2780 = vld [vmem:[#allocation3 + $0x7a8] sm:$0xff]
        %v2781 = vld [vmem:[#allocation3 + $0x7b0] sm:$0xff]
        %v2782 = vld [vmem:[#allocation3 + $0x7b8] sm:$0xf]
        %v2783 = vld [vmem:[#allocation3 + $0x7bc] sm:$0xff]
        %v2784 = vld [vmem:[#allocation3 + $0x7c4] sm:$0xff]
        %v2785 = vld [vmem:[#allocation3 + $0x7cc] sm:$0xff]
        %v2786 = vld [vmem:[#allocation3 + $0x7d4] sm:$0xff]
        %v2787 = vld [vmem:[#allocation3 + $0x7dc] sm:$0xf]
        %v3068 = vunpack.c.l.b16 %v2508
        %v3069 = vunpack.c.h.b16 %v2508
        %v3070 = vunpack.c.l.b16 %v2509
        %v3071 = vunpack.c.h.b16 %v2509
        %v3072 = vunpack.c.l.b16 %v2510
        %v3073 = vunpack.c.h.b16 %v2510
        %v3074 = vunpack.c.l.b16 %v2511
        %v3075 = vunpack.c.h.b16 %v2511
        %v3076 = vunpack.c.l.b16 %v2512
        %v3077 = vunpack.c.l.b16 %v2513
        %v3078 = vunpack.c.h.b16 %v2513
        %v3079 = vunpack.c.l.b16 %v2514
        %v3080 = vunpack.c.h.b16 %v2514
        %v3081 = vunpack.c.l.b16 %v2515
        %v3082 = vunpack.c.h.b16 %v2515
        %v3083 = vunpack.c.l.b16 %v2516
        %v3084 = vunpack.c.h.b16 %v2516
        %v3085 = vunpack.c.l.b16 %v2517
        %v3086 = vunpack.c.l.b16 %v2518
        %v3087 = vunpack.c.h.b16 %v2518
        %v3088 = vunpack.c.l.b16 %v2519
        %v3089 = vunpack.c.h.b16 %v2519
        %v3090 = vunpack.c.l.b16 %v2520
        %v3091 = vunpack.c.h.b16 %v2520
        %v3092 = vunpack.c.l.b16 %v2521
        %v3093 = vunpack.c.h.b16 %v2521
        %v3094 = vunpack.c.l.b16 %v2522
        %v3095 = vunpack.c.l.b16 %v2523
        %v3096 = vunpack.c.h.b16 %v2523
        %v3097 = vunpack.c.l.b16 %v2524
        %v3098 = vunpack.c.h.b16 %v2524
        %v3099 = vunpack.c.l.b16 %v2525
        %v3100 = vunpack.c.h.b16 %v2525
        %v3101 = vunpack.c.l.b16 %v2526
        %v3102 = vunpack.c.h.b16 %v2526
        %v3103 = vunpack.c.l.b16 %v2527
        %v3104 = vunpack.c.l.b16 %v2528
        %v3105 = vunpack.c.h.b16 %v2528
        %v3106 = vunpack.c.l.b16 %v2529
        %v3107 = vunpack.c.h.b16 %v2529
        %v3108 = vunpack.c.l.b16 %v2530
        %v3109 = vunpack.c.h.b16 %v2530
        %v3110 = vunpack.c.l.b16 %v2531
        %v3111 = vunpack.c.h.b16 %v2531
        %v3112 = vunpack.c.l.b16 %v2532
        %v3113 = vunpack.c.l.b16 %v2533
        %v3114 = vunpack.c.h.b16 %v2533
        %v3115 = vunpack.c.l.b16 %v2534
        %v3116 = vunpack.c.h.b16 %v2534
        %v3117 = vunpack.c.l.b16 %v2535
        %v3118 = vunpack.c.h.b16 %v2535
        %v3119 = vunpack.c.l.b16 %v2536
        %v3120 = vunpack.c.h.b16 %v2536
        %v3121 = vunpack.c.l.b16 %v2537
        %v3122 = vunpack.c.l.b16 %v2538
        %v3123 = vunpack.c.h.b16 %v2538
        %v3124 = vunpack.c.l.b16 %v2539
        %v3125 = vunpack.c.h.b16 %v2539
        %v3126 = vunpack.c.l.b16 %v2540
        %v3127 = vunpack.c.h.b16 %v2540
        %v3128 = vunpack.c.l.b16 %v2541
        %v3129 = vunpack.c.h.b16 %v2541
        %v3130 = vunpack.c.l.b16 %v2542
        %v3131 = vunpack.c.l.b16 %v2543
        %v3132 = vunpack.c.h.b16 %v2543
        %v3133 = vunpack.c.l.b16 %v2544
        %v3134 = vunpack.c.h.b16 %v2544
        %v3135 = vunpack.c.l.b16 %v2545
        %v3136 = vunpack.c.h.b16 %v2545
        %v3137 = vunpack.c.l.b16 %v2546
        %v3138 = vunpack.c.h.b16 %v2546
        %v3139 = vunpack.c.l.b16 %v2547
        %v3140 = vunpack.c.l.b16 %v2548
        %v3141 = vunpack.c.h.b16 %v2548
        %v3142 = vunpack.c.l.b16 %v2549
        %v3143 = vunpack.c.h.b16 %v2549
        %v3144 = vunpack.c.l.b16 %v2550
        %v3145 = vunpack.c.h.b16 %v2550
        %v3146 = vunpack.c.l.b16 %v2551
        %v3147 = vunpack.c.h.b16 %v2551
        %v3148 = vunpack.c.l.b16 %v2552
        %v3149 = vunpack.c.l.b16 %v2553
        %v3150 = vunpack.c.h.b16 %v2553
        %v3151 = vunpack.c.l.b16 %v2554
        %v3152 = vunpack.c.h.b16 %v2554
        %v3153 = vunpack.c.l.b16 %v2555
        %v3154 = vunpack.c.h.b16 %v2555
        %v3155 = vunpack.c.l.b16 %v2556
        %v3156 = vunpack.c.h.b16 %v2556
        %v3157 = vunpack.c.l.b16 %v2557
        %v3158 = vunpack.c.l.b16 %v2558
        %v3159 = vunpack.c.h.b16 %v2558
        %v3160 = vunpack.c.l.b16 %v2559
        %v3161 = vunpack.c.h.b16 %v2559
        %v3162 = vunpack.c.l.b16 %v2560
        %v3163 = vunpack.c.h.b16 %v2560
        %v3164 = vunpack.c.l.b16 %v2561
        %v3165 = vunpack.c.h.b16 %v2561
        %v3166 = vunpack.c.l.b16 %v2562
        %v3167 = vunpack.c.l.b16 %v2563
        %v3168 = vunpack.c.h.b16 %v2563
        %v3169 = vunpack.c.l.b16 %v2564
        %v3170 = vunpack.c.h.b16 %v2564
        %v3171 = vunpack.c.l.b16 %v2565
        %v3172 = vunpack.c.h.b16 %v2565
        %v3173 = vunpack.c.l.b16 %v2566
        %v3174 = vunpack.c.h.b16 %v2566
        %v3175 = vunpack.c.l.b16 %v2567
        %v3176 = vunpack.c.l.b16 %v2568
        %v3177 = vunpack.c.h.b16 %v2568
        %v3178 = vunpack.c.l.b16 %v2569
        %v3179 = vunpack.c.h.b16 %v2569
        %v3180 = vunpack.c.l.b16 %v2570
        %v3181 = vunpack.c.h.b16 %v2570
        %v3182 = vunpack.c.l.b16 %v2571
        %v3183 = vunpack.c.h.b16 %v2571
        %v3184 = vunpack.c.l.b16 %v2572
        %v3185 = vunpack.c.l.b16 %v2573
        %v3186 = vunpack.c.h.b16 %v2573
        %v3187 = vunpack.c.l.b16 %v2574
        %v3188 = vunpack.c.h.b16 %v2574
        %v3189 = vunpack.c.l.b16 %v2575
        %v3190 = vunpack.c.h.b16 %v2575
        %v3191 = vunpack.c.l.b16 %v2576
        %v3192 = vunpack.c.h.b16 %v2576
        %v3193 = vunpack.c.l.b16 %v2577
        %v3194 = vunpack.c.l.b16 %v2578
        %v3195 = vunpack.c.h.b16 %v2578
        %v3196 = vunpack.c.l.b16 %v2579
        %v3197 = vunpack.c.h.b16 %v2579
        %v3198 = vunpack.c.l.b16 %v2580
        %v3199 = vunpack.c.h.b16 %v2580
        %v3200 = vunpack.c.l.b16 %v2581
        %v3201 = vunpack.c.h.b16 %v2581
        %v3202 = vunpack.c.l.b16 %v2582
        %v3203 = vunpack.c.l.b16 %v2583
        %v3204 = vunpack.c.h.b16 %v2583
        %v3205 = vunpack.c.l.b16 %v2584
        %v3206 = vunpack.c.h.b16 %v2584
        %v3207 = vunpack.c.l.b16 %v2585
        %v3208 = vunpack.c.h.b16 %v2585
        %v3209 = vunpack.c.l.b16 %v2586
        %v3210 = vunpack.c.h.b16 %v2586
        %v3211 = vunpack.c.l.b16 %v2587
        %v3212 = vunpack.c.l.b16 %v2588
        %v3213 = vunpack.c.h.b16 %v2588
        %v3214 = vunpack.c.l.b16 %v2589
        %v3215 = vunpack.c.h.b16 %v2589
        %v3216 = vunpack.c.l.b16 %v2590
        %v3217 = vunpack.c.h.b16 %v2590
        %v3218 = vunpack.c.l.b16 %v2591
        %v3219 = vunpack.c.h.b16 %v2591
        %v3220 = vunpack.c.l.b16 %v2592
        %v3221 = vunpack.c.l.b16 %v2593
        %v3222 = vunpack.c.h.b16 %v2593
        %v3223 = vunpack.c.l.b16 %v2594
        %v3224 = vunpack.c.h.b16 %v2594
        %v3225 = vunpack.c.l.b16 %v2595
        %v3226 = vunpack.c.h.b16 %v2595
        %v3227 = vunpack.c.l.b16 %v2596
        %v3228 = vunpack.c.h.b16 %v2596
        %v3229 = vunpack.c.l.b16 %v2597
        %v3230 = vunpack.c.l.b16 %v2598
        %v3231 = vunpack.c.h.b16 %v2598
        %v3232 = vunpack.c.l.b16 %v2599
        %v3233 = vunpack.c.h.b16 %v2599
        %v3234 = vunpack.c.l.b16 %v2600
        %v3235 = vunpack.c.h.b16 %v2600
        %v3236 = vunpack.c.l.b16 %v2601
        %v3237 = vunpack.c.h.b16 %v2601
        %v3238 = vunpack.c.l.b16 %v2602
        %v3239 = vunpack.c.l.b16 %v2603
        %v3240 = vunpack.c.h.b16 %v2603
        %v3241 = vunpack.c.l.b16 %v2604
        %v3242 = vunpack.c.h.b16 %v2604
        %v3243 = vunpack.c.l.b16 %v2605
        %v3244 = vunpack.c.h.b16 %v2605
        %v3245 = vunpack.c.l.b16 %v2606
        %v3246 = vunpack.c.h.b16 %v2606
        %v3247 = vunpack.c.l.b16 %v2607
        %v3248 = vunpack.c.l.b16 %v2608
        %v3249 = vunpack.c.h.b16 %v2608
        %v3250 = vunpack.c.l.b16 %v2609
        %v3251 = vunpack.c.h.b16 %v2609
        %v3252 = vunpack.c.l.b16 %v2610
        %v3253 = vunpack.c.h.b16 %v2610
        %v3254 = vunpack.c.l.b16 %v2611
        %v3255 = vunpack.c.h.b16 %v2611
        %v3256 = vunpack.c.l.b16 %v2612
        %v3257 = vunpack.c.l.b16 %v2613
        %v3258 = vunpack.c.h.b16 %v2613
        %v3259 = vunpack.c.l.b16 %v2614
        %v3260 = vunpack.c.h.b16 %v2614
        %v3261 = vunpack.c.l.b16 %v2615
        %v3262 = vunpack.c.h.b16 %v2615
        %v3263 = vunpack.c.l.b16 %v2616
        %v3264 = vunpack.c.h.b16 %v2616
        %v3265 = vunpack.c.l.b16 %v2617
        %v3266 = vunpack.c.l.b16 %v2618
        %v3267 = vunpack.c.h.b16 %v2618
        %v3268 = vunpack.c.l.b16 %v2619
        %v3269 = vunpack.c.h.b16 %v2619
        %v3270 = vunpack.c.l.b16 %v2620
        %v3271 = vunpack.c.h.b16 %v2620
        %v3272 = vunpack.c.l.b16 %v2621
        %v3273 = vunpack.c.h.b16 %v2621
        %v3274 = vunpack.c.l.b16 %v2622
        %v3275 = vunpack.c.l.b16 %v2623
        %v3276 = vunpack.c.h.b16 %v2623
        %v3277 = vunpack.c.l.b16 %v2624
        %v3278 = vunpack.c.h.b16 %v2624
        %v3279 = vunpack.c.l.b16 %v2625
        %v3280 = vunpack.c.h.b16 %v2625
        %v3281 = vunpack.c.l.b16 %v2626
        %v3282 = vunpack.c.h.b16 %v2626
        %v3283 = vunpack.c.l.b16 %v2627
        %v3284 = vunpack.c.l.b16 %v2628
        %v3285 = vunpack.c.h.b16 %v2628
        %v3286 = vunpack.c.l.b16 %v2629
        %v3287 = vunpack.c.h.b16 %v2629
        %v3288 = vunpack.c.l.b16 %v2630
        %v3289 = vunpack.c.h.b16 %v2630
        %v3290 = vunpack.c.l.b16 %v2631
        %v3291 = vunpack.c.h.b16 %v2631
        %v3292 = vunpack.c.l.b16 %v2632
        %v3293 = vunpack.c.l.b16 %v2633
        %v3294 = vunpack.c.h.b16 %v2633
        %v3295 = vunpack.c.l.b16 %v2634
        %v3296 = vunpack.c.h.b16 %v2634
        %v3297 = vunpack.c.l.b16 %v2635
        %v3298 = vunpack.c.h.b16 %v2635
        %v3299 = vunpack.c.l.b16 %v2636
        %v3300 = vunpack.c.h.b16 %v2636
        %v3301 = vunpack.c.l.b16 %v2637
        %v3302 = vunpack.c.l.b16 %v2638
        %v3303 = vunpack.c.h.b16 %v2638
        %v3304 = vunpack.c.l.b16 %v2639
        %v3305 = vunpack.c.h.b16 %v2639
        %v3306 = vunpack.c.l.b16 %v2640
        %v3307 = vunpack.c.h.b16 %v2640
        %v3308 = vunpack.c.l.b16 %v2641
        %v3309 = vunpack.c.h.b16 %v2641
        %v3310 = vunpack.c.l.b16 %v2642
        %v3311 = vunpack.c.l.b16 %v2643
        %v3312 = vunpack.c.h.b16 %v2643
        %v3313 = vunpack.c.l.b16 %v2644
        %v3314 = vunpack.c.h.b16 %v2644
        %v3315 = vunpack.c.l.b16 %v2645
        %v3316 = vunpack.c.h.b16 %v2645
        %v3317 = vunpack.c.l.b16 %v2646
        %v3318 = vunpack.c.h.b16 %v2646
        %v3319 = vunpack.c.l.b16 %v2647
        %v3320 = vunpack.c.l.b16 %v2648
        %v3321 = vunpack.c.h.b16 %v2648
        %v3322 = vunpack.c.l.b16 %v2649
        %v3323 = vunpack.c.h.b16 %v2649
        %v3324 = vunpack.c.l.b16 %v2650
        %v3325 = vunpack.c.h.b16 %v2650
        %v3326 = vunpack.c.l.b16 %v2651
        %v3327 = vunpack.c.h.b16 %v2651
        %v3328 = vunpack.c.l.b16 %v2652
        %v3329 = vunpack.c.l.b16 %v2653
        %v3330 = vunpack.c.h.b16 %v2653
        %v3331 = vunpack.c.l.b16 %v2654
        %v3332 = vunpack.c.h.b16 %v2654
        %v3333 = vunpack.c.l.b16 %v2655
        %v3334 = vunpack.c.h.b16 %v2655
        %v3335 = vunpack.c.l.b16 %v2656
        %v3336 = vunpack.c.h.b16 %v2656
        %v3337 = vunpack.c.l.b16 %v2657
        %v3338 = vunpack.c.l.b16 %v2658
        %v3339 = vunpack.c.h.b16 %v2658
        %v3340 = vunpack.c.l.b16 %v2659
        %v3341 = vunpack.c.h.b16 %v2659
        %v3342 = vunpack.c.l.b16 %v2660
        %v3343 = vunpack.c.h.b16 %v2660
        %v3344 = vunpack.c.l.b16 %v2661
        %v3345 = vunpack.c.h.b16 %v2661
        %v3346 = vunpack.c.l.b16 %v2662
        %v3347 = vunpack.c.l.b16 %v2663
        %v3348 = vunpack.c.h.b16 %v2663
        %v3349 = vunpack.c.l.b16 %v2664
        %v3350 = vunpack.c.h.b16 %v2664
        %v3351 = vunpack.c.l.b16 %v2665
        %v3352 = vunpack.c.h.b16 %v2665
        %v3353 = vunpack.c.l.b16 %v2666
        %v3354 = vunpack.c.h.b16 %v2666
        %v3355 = vunpack.c.l.b16 %v2667
        %v3356 = vunpack.c.l.b16 %v2668
        %v3357 = vunpack.c.h.b16 %v2668
        %v3358 = vunpack.c.l.b16 %v2669
        %v3359 = vunpack.c.h.b16 %v2669
        %v3360 = vunpack.c.l.b16 %v2670
        %v3361 = vunpack.c.h.b16 %v2670
        %v3362 = vunpack.c.l.b16 %v2671
        %v3363 = vunpack.c.h.b16 %v2671
        %v3364 = vunpack.c.l.b16 %v2672
        %v3365 = vunpack.c.l.b16 %v2673
        %v3366 = vunpack.c.h.b16 %v2673
        %v3367 = vunpack.c.l.b16 %v2674
        %v3368 = vunpack.c.h.b16 %v2674
        %v3369 = vunpack.c.l.b16 %v2675
        %v3370 = vunpack.c.h.b16 %v2675
        %v3371 = vunpack.c.l.b16 %v2676
        %v3372 = vunpack.c.h.b16 %v2676
        %v3373 = vunpack.c.l.b16 %v2677
        %v3374 = vunpack.c.l.b16 %v2678
        %v3375 = vunpack.c.h.b16 %v2678
        %v3376 = vunpack.c.l.b16 %v2679
        %v3377 = vunpack.c.h.b16 %v2679
        %v3378 = vunpack.c.l.b16 %v2680
        %v3379 = vunpack.c.h.b16 %v2680
        %v3380 = vunpack.c.l.b16 %v2681
        %v3381 = vunpack.c.h.b16 %v2681
        %v3382 = vunpack.c.l.b16 %v2682
        %v3383 = vunpack.c.l.b16 %v2683
        %v3384 = vunpack.c.h.b16 %v2683
        %v3385 = vunpack.c.l.b16 %v2684
        %v3386 = vunpack.c.h.b16 %v2684
        %v3387 = vunpack.c.l.b16 %v2685
        %v3388 = vunpack.c.h.b16 %v2685
        %v3389 = vunpack.c.l.b16 %v2686
        %v3390 = vunpack.c.h.b16 %v2686
        %v3391 = vunpack.c.l.b16 %v2687
        %v3392 = vunpack.c.l.b16 %v2688
        %v3393 = vunpack.c.h.b16 %v2688
        %v3394 = vunpack.c.l.b16 %v2689
        %v3395 = vunpack.c.h.b16 %v2689
        %v3396 = vunpack.c.l.b16 %v2690
        %v3397 = vunpack.c.h.b16 %v2690
        %v3398 = vunpack.c.l.b16 %v2691
        %v3399 = vunpack.c.h.b16 %v2691
        %v3400 = vunpack.c.l.b16 %v2692
        %v3401 = vunpack.c.l.b16 %v2693
        %v3402 = vunpack.c.h.b16 %v2693
        %v3403 = vunpack.c.l.b16 %v2694
        %v3404 = vunpack.c.h.b16 %v2694
        %v3405 = vunpack.c.l.b16 %v2695
        %v3406 = vunpack.c.h.b16 %v2695
        %v3407 = vunpack.c.l.b16 %v2696
        %v3408 = vunpack.c.h.b16 %v2696
        %v3409 = vunpack.c.l.b16 %v2697
        %v3410 = vunpack.c.l.b16 %v2698
        %v3411 = vunpack.c.h.b16 %v2698
        %v3412 = vunpack.c.l.b16 %v2699
        %v3413 = vunpack.c.h.b16 %v2699
        %v3414 = vunpack.c.l.b16 %v2700
        %v3415 = vunpack.c.h.b16 %v2700
        %v3416 = vunpack.c.l.b16 %v2701
        %v3417 = vunpack.c.h.b16 %v2701
        %v3418 = vunpack.c.l.b16 %v2702
        %v3419 = vunpack.c.l.b16 %v2703
        %v3420 = vunpack.c.h.b16 %v2703
        %v3421 = vunpack.c.l.b16 %v2704
        %v3422 = vunpack.c.h.b16 %v2704
        %v3423 = vunpack.c.l.b16 %v2705
        %v3424 = vunpack.c.h.b16 %v2705
        %v3425 = vunpack.c.l.b16 %v2706
        %v3426 = vunpack.c.h.b16 %v2706
        %v3427 = vunpack.c.l.b16 %v2707
        %v3428 = vunpack.c.l.b16 %v2708
        %v3429 = vunpack.c.h.b16 %v2708
        %v3430 = vunpack.c.l.b16 %v2709
        %v3431 = vunpack.c.h.b16 %v2709
        %v3432 = vunpack.c.l.b16 %v2710
        %v3433 = vunpack.c.h.b16 %v2710
        %v3434 = vunpack.c.l.b16 %v2711
        %v3435 = vunpack.c.h.b16 %v2711
        %v3436 = vunpack.c.l.b16 %v2712
        %v3437 = vunpack.c.l.b16 %v2713
        %v3438 = vunpack.c.h.b16 %v2713
        %v3439 = vunpack.c.l.b16 %v2714
        %v3440 = vunpack.c.h.b16 %v2714
        %v3441 = vunpack.c.l.b16 %v2715
        %v3442 = vunpack.c.h.b16 %v2715
        %v3443 = vunpack.c.l.b16 %v2716
        %v3444 = vunpack.c.h.b16 %v2716
        %v3445 = vunpack.c.l.b16 %v2717
        %v3446 = vunpack.c.l.b16 %v2718
        %v3447 = vunpack.c.h.b16 %v2718
        %v3448 = vunpack.c.l.b16 %v2719
        %v3449 = vunpack.c.h.b16 %v2719
        %v3450 = vunpack.c.l.b16 %v2720
        %v3451 = vunpack.c.h.b16 %v2720
        %v3452 = vunpack.c.l.b16 %v2721
        %v3453 = vunpack.c.h.b16 %v2721
        %v3454 = vunpack.c.l.b16 %v2722
        %v3455 = vunpack.c.l.b16 %v2723
        %v3456 = vunpack.c.h.b16 %v2723
        %v3457 = vunpack.c.l.b16 %v2724
        %v3458 = vunpack.c.h.b16 %v2724
        %v3459 = vunpack.c.l.b16 %v2725
        %v3460 = vunpack.c.h.b16 %v2725
        %v3461 = vunpack.c.l.b16 %v2726
        %v3462 = vunpack.c.h.b16 %v2726
        %v3463 = vunpack.c.l.b16 %v2727
        %v3464 = vunpack.c.l.b16 %v2728
        %v3465 = vunpack.c.h.b16 %v2728
        %v3466 = vunpack.c.l.b16 %v2729
        %v3467 = vunpack.c.h.b16 %v2729
        %v3468 = vunpack.c.l.b16 %v2730
        %v3469 = vunpack.c.h.b16 %v2730
        %v3470 = vunpack.c.l.b16 %v2731
        %v3471 = vunpack.c.h.b16 %v2731
        %v3472 = vunpack.c.l.b16 %v2732
        %v3473 = vunpack.c.l.b16 %v2733
        %v3474 = vunpack.c.h.b16 %v2733
        %v3475 = vunpack.c.l.b16 %v2734
        %v3476 = vunpack.c.h.b16 %v2734
        %v3477 = vunpack.c.l.b16 %v2735
        %v3478 = vunpack.c.h.b16 %v2735
        %v3479 = vunpack.c.l.b16 %v2736
        %v3480 = vunpack.c.h.b16 %v2736
        %v3481 = vunpack.c.l.b16 %v2737
        %v3482 = vunpack.c.l.b16 %v2738
        %v3483 = vunpack.c.h.b16 %v2738
        %v3484 = vunpack.c.l.b16 %v2739
        %v3485 = vunpack.c.h.b16 %v2739
        %v3486 = vunpack.c.l.b16 %v2740
        %v3487 = vunpack.c.h.b16 %v2740
        %v3488 = vunpack.c.l.b16 %v2741
        %v3489 = vunpack.c.h.b16 %v2741
        %v3490 = vunpack.c.l.b16 %v2742
        %v3491 = vunpack.c.l.b16 %v2743
        %v3492 = vunpack.c.h.b16 %v2743
        %v3493 = vunpack.c.l.b16 %v2744
        %v3494 = vunpack.c.h.b16 %v2744
        %v3495 = vunpack.c.l.b16 %v2745
        %v3496 = vunpack.c.h.b16 %v2745
        %v3497 = vunpack.c.l.b16 %v2746
        %v3498 = vunpack.c.h.b16 %v2746
        %v3499 = vunpack.c.l.b16 %v2747
        %v3500 = vunpack.c.l.b16 %v2748
        %v3501 = vunpack.c.h.b16 %v2748
        %v3502 = vunpack.c.l.b16 %v2749
        %v3503 = vunpack.c.h.b16 %v2749
        %v3504 = vunpack.c.l.b16 %v2750
        %v3505 = vunpack.c.h.b16 %v2750
        %v3506 = vunpack.c.l.b16 %v2751
        %v3507 = vunpack.c.h.b16 %v2751
        %v3508 = vunpack.c.l.b16 %v2752
        %v3509 = vunpack.c.l.b16 %v2753
        %v3510 = vunpack.c.h.b16 %v2753
        %v3511 = vunpack.c.l.b16 %v2754
        %v3512 = vunpack.c.h.b16 %v2754
        %v3513 = vunpack.c.l.b16 %v2755
        %v3514 = vunpack.c.h.b16 %v2755
        %v3515 = vunpack.c.l.b16 %v2756
        %v3516 = vunpack.c.h.b16 %v2756
        %v3517 = vunpack.c.l.b16 %v2757
        %v3518 = vunpack.c.l.b16 %v2758
        %v3519 = vunpack.c.h.b16 %v2758
        %v3520 = vunpack.c.l.b16 %v2759
        %v3521 = vunpack.c.h.b16 %v2759
        %v3522 = vunpack.c.l.b16 %v2760
        %v3523 = vunpack.c.h.b16 %v2760
        %v3524 = vunpack.c.l.b16 %v2761
        %v3525 = vunpack.c.h.b16 %v2761
        %v3526 = vunpack.c.l.b16 %v2762
        %v3527 = vunpack.c.l.b16 %v2763
        %v3528 = vunpack.c.h.b16 %v2763
        %v3529 = vunpack.c.l.b16 %v2764
        %v3530 = vunpack.c.h.b16 %v2764
        %v3531 = vunpack.c.l.b16 %v2765
        %v3532 = vunpack.c.h.b16 %v2765
        %v3533 = vunpack.c.l.b16 %v2766
        %v3534 = vunpack.c.h.b16 %v2766
        %v3535 = vunpack.c.l.b16 %v2767
        %v3536 = vunpack.c.l.b16 %v2768
        %v3537 = vunpack.c.h.b16 %v2768
        %v3538 = vunpack.c.l.b16 %v2769
        %v3539 = vunpack.c.h.b16 %v2769
        %v3540 = vunpack.c.l.b16 %v2770
        %v3541 = vunpack.c.h.b16 %v2770
        %v3542 = vunpack.c.l.b16 %v2771
        %v3543 = vunpack.c.h.b16 %v2771
        %v3544 = vunpack.c.l.b16 %v2772
        %v3545 = vunpack.c.l.b16 %v2773
        %v3546 = vunpack.c.h.b16 %v2773
        %v3547 = vunpack.c.l.b16 %v2774
        %v3548 = vunpack.c.h.b16 %v2774
        %v3549 = vunpack.c.l.b16 %v2775
        %v3550 = vunpack.c.h.b16 %v2775
        %v3551 = vunpack.c.l.b16 %v2776
        %v3552 = vunpack.c.h.b16 %v2776
        %v3553 = vunpack.c.l.b16 %v2777
        %v3554 = vunpack.c.l.b16 %v2778
        %v3555 = vunpack.c.h.b16 %v2778
        %v3556 = vunpack.c.l.b16 %v2779
        %v3557 = vunpack.c.h.b16 %v2779
        %v3558 = vunpack.c.l.b16 %v2780
        %v3559 = vunpack.c.h.b16 %v2780
        %v3560 = vunpack.c.l.b16 %v2781
        %v3561 = vunpack.c.h.b16 %v2781
        %v3562 = vunpack.c.l.b16 %v2782
        %v3563 = vunpack.c.l.b16 %v2783
        %v3564 = vunpack.c.h.b16 %v2783
        %v3565 = vunpack.c.l.b16 %v2784
        %v3566 = vunpack.c.h.b16 %v2784
        %v3567 = vunpack.c.l.b16 %v2785
        %v3568 = vunpack.c.h.b16 %v2785
        %v3569 = vunpack.c.l.b16 %v2786
        %v3570 = vunpack.c.h.b16 %v2786
        %v3571 = vunpack.c.l.b16 %v2787
        %v3572 = vpack.c.b16 %v3077, %v3068
        %v3573 = vpack.c.b16 %v3078, %v3069
        %v3574 = vpack.c.b16 %v3079, %v3070
        %v3575 = vpack.c.b16 %v3080, %v3071
        %v3576 = vpack.c.b16 %v3081, %v3072
        %v3577 = vpack.c.b16 %v3082, %v3073
        %v3578 = vpack.c.b16 %v3083, %v3074
        %v3579 = vpack.c.b16 %v3084, %v3075
        %v3580 = vpack.c.b16 %v3085, %v3076
        %v3581 = vpack.c.b16 %v3095, %v3086
        %v3582 = vpack.c.b16 %v3096, %v3087
        %v3583 = vpack.c.b16 %v3097, %v3088
        %v3584 = vpack.c.b16 %v3098, %v3089
        %v3585 = vpack.c.b16 %v3099, %v3090
        %v3586 = vpack.c.b16 %v3100, %v3091
        %v3587 = vpack.c.b16 %v3101, %v3092
        %v3588 = vpack.c.b16 %v3102, %v3093
        %v3589 = vpack.c.b16 %v3103, %v3094
        %v3590 = vpack.c.b16 %v3113, %v3104
        %v3591 = vpack.c.b16 %v3114, %v3105
        %v3592 = vpack.c.b16 %v3115, %v3106
        %v3593 = vpack.c.b16 %v3116, %v3107
        %v3594 = vpack.c.b16 %v3117, %v3108
        %v3595 = vpack.c.b16 %v3118, %v3109
        %v3596 = vpack.c.b16 %v3119, %v3110
        %v3597 = vpack.c.b16 %v3120, %v3111
        %v3598 = vpack.c.b16 %v3121, %v3112
        %v3599 = vpack.c.b16 %v3131, %v3122
        %v3600 = vpack.c.b16 %v3132, %v3123
        %v3601 = vpack.c.b16 %v3133, %v3124
        %v3602 = vpack.c.b16 %v3134, %v3125
        %v3603 = vpack.c.b16 %v3135, %v3126
        %v3604 = vpack.c.b16 %v3136, %v3127
        %v3605 = vpack.c.b16 %v3137, %v3128
        %v3606 = vpack.c.b16 %v3138, %v3129
        %v3607 = vpack.c.b16 %v3139, %v3130
        %v3608 = vpack.c.b16 %v3149, %v3140
        %v3609 = vpack.c.b16 %v3150, %v3141
        %v3610 = vpack.c.b16 %v3151, %v3142
        %v3611 = vpack.c.b16 %v3152, %v3143
        %v3612 = vpack.c.b16 %v3153, %v3144
        %v3613 = vpack.c.b16 %v3154, %v3145
        %v3614 = vpack.c.b16 %v3155, %v3146
        %v3615 = vpack.c.b16 %v3156, %v3147
        %v3616 = vpack.c.b16 %v3157, %v3148
        %v3617 = vpack.c.b16 %v3167, %v3158
        %v3618 = vpack.c.b16 %v3168, %v3159
        %v3619 = vpack.c.b16 %v3169, %v3160
        %v3620 = vpack.c.b16 %v3170, %v3161
        %v3621 = vpack.c.b16 %v3171, %v3162
        %v3622 = vpack.c.b16 %v3172, %v3163
        %v3623 = vpack.c.b16 %v3173, %v3164
        %v3624 = vpack.c.b16 %v3174, %v3165
        %v3625 = vpack.c.b16 %v3175, %v3166
        %v3626 = vpack.c.b16 %v3185, %v3176
        %v3627 = vpack.c.b16 %v3186, %v3177
        %v3628 = vpack.c.b16 %v3187, %v3178
        %v3629 = vpack.c.b16 %v3188, %v3179
        %v3630 = vpack.c.b16 %v3189, %v3180
        %v3631 = vpack.c.b16 %v3190, %v3181
        %v3632 = vpack.c.b16 %v3191, %v3182
        %v3633 = vpack.c.b16 %v3192, %v3183
        %v3634 = vpack.c.b16 %v3193, %v3184
        %v3635 = vpack.c.b16 %v3203, %v3194
        %v3636 = vpack.c.b16 %v3204, %v3195
        %v3637 = vpack.c.b16 %v3205, %v3196
        %v3638 = vpack.c.b16 %v3206, %v3197
        %v3639 = vpack.c.b16 %v3207, %v3198
        %v3640 = vpack.c.b16 %v3208, %v3199
        %v3641 = vpack.c.b16 %v3209, %v3200
        %v3642 = vpack.c.b16 %v3210, %v3201
        %v3643 = vpack.c.b16 %v3211, %v3202
        %v3644 = vpack.c.b16 %v3221, %v3212
        %v3645 = vpack.c.b16 %v3222, %v3213
        %v3646 = vpack.c.b16 %v3223, %v3214
        %v3647 = vpack.c.b16 %v3224, %v3215
        %v3648 = vpack.c.b16 %v3225, %v3216
        %v3649 = vpack.c.b16 %v3226, %v3217
        %v3650 = vpack.c.b16 %v3227, %v3218
        %v3651 = vpack.c.b16 %v3228, %v3219
        %v3652 = vpack.c.b16 %v3229, %v3220
        %v3653 = vpack.c.b16 %v3239, %v3230
        %v3654 = vpack.c.b16 %v3240, %v3231
        %v3655 = vpack.c.b16 %v3241, %v3232
        %v3656 = vpack.c.b16 %v3242, %v3233
        %v3657 = vpack.c.b16 %v3243, %v3234
        %v3658 = vpack.c.b16 %v3244, %v3235
        %v3659 = vpack.c.b16 %v3245, %v3236
        %v3660 = vpack.c.b16 %v3246, %v3237
        %v3661 = vpack.c.b16 %v3247, %v3238
        %v3662 = vpack.c.b16 %v3257, %v3248
        %v3663 = vpack.c.b16 %v3258, %v3249
        %v3664 = vpack.c.b16 %v3259, %v3250
        %v3665 = vpack.c.b16 %v3260, %v3251
        %v3666 = vpack.c.b16 %v3261, %v3252
        %v3667 = vpack.c.b16 %v3262, %v3253
        %v3668 = vpack.c.b16 %v3263, %v3254
        %v3669 = vpack.c.b16 %v3264, %v3255
        %v3670 = vpack.c.b16 %v3265, %v3256
        %v3671 = vpack.c.b16 %v3275, %v3266
        %v3672 = vpack.c.b16 %v3276, %v3267
        %v3673 = vpack.c.b16 %v3277, %v3268
        %v3674 = vpack.c.b16 %v3278, %v3269
        %v3675 = vpack.c.b16 %v3279, %v3270
        %v3676 = vpack.c.b16 %v3280, %v3271
        %v3677 = vpack.c.b16 %v3281, %v3272
        %v3678 = vpack.c.b16 %v3282, %v3273
        %v3679 = vpack.c.b16 %v3283, %v3274
        %v3680 = vpack.c.b16 %v3293, %v3284
        %v3681 = vpack.c.b16 %v3294, %v3285
        %v3682 = vpack.c.b16 %v3295, %v3286
        %v3683 = vpack.c.b16 %v3296, %v3287
        %v3684 = vpack.c.b16 %v3297, %v3288
        %v3685 = vpack.c.b16 %v3298, %v3289
        %v3686 = vpack.c.b16 %v3299, %v3290
        %v3687 = vpack.c.b16 %v3300, %v3291
        %v3688 = vpack.c.b16 %v3301, %v3292
        %v3689 = vpack.c.b16 %v3311, %v3302
        %v3690 = vpack.c.b16 %v3312, %v3303
        %v3691 = vpack.c.b16 %v3313, %v3304
        %v3692 = vpack.c.b16 %v3314, %v3305
        %v3693 = vpack.c.b16 %v3315, %v3306
        %v3694 = vpack.c.b16 %v3316, %v3307
        %v3695 = vpack.c.b16 %v3317, %v3308
        %v3696 = vpack.c.b16 %v3318, %v3309
        %v3697 = vpack.c.b16 %v3319, %v3310
        %v3698 = vpack.c.b16 %v3329, %v3320
        %v3699 = vpack.c.b16 %v3330, %v3321
        %v3700 = vpack.c.b16 %v3331, %v3322
        %v3701 = vpack.c.b16 %v3332, %v3323
        %v3702 = vpack.c.b16 %v3333, %v3324
        %v3703 = vpack.c.b16 %v3334, %v3325
        %v3704 = vpack.c.b16 %v3335, %v3326
        %v3705 = vpack.c.b16 %v3336, %v3327
        %v3706 = vpack.c.b16 %v3337, %v3328
        %v3707 = vpack.c.b16 %v3347, %v3338
        %v3708 = vpack.c.b16 %v3348, %v3339
        %v3709 = vpack.c.b16 %v3349, %v3340
        %v3710 = vpack.c.b16 %v3350, %v3341
        %v3711 = vpack.c.b16 %v3351, %v3342
        %v3712 = vpack.c.b16 %v3352, %v3343
        %v3713 = vpack.c.b16 %v3353, %v3344
        %v3714 = vpack.c.b16 %v3354, %v3345
        %v3715 = vpack.c.b16 %v3355, %v3346
        %v3716 = vpack.c.b16 %v3365, %v3356
        %v3717 = vpack.c.b16 %v3366, %v3357
        %v3718 = vpack.c.b16 %v3367, %v3358
        %v3719 = vpack.c.b16 %v3368, %v3359
        %v3720 = vpack.c.b16 %v3369, %v3360
        %v3721 = vpack.c.b16 %v3370, %v3361
        %v3722 = vpack.c.b16 %v3371, %v3362
        %v3723 = vpack.c.b16 %v3372, %v3363
        %v3724 = vpack.c.b16 %v3373, %v3364
        %v3725 = vpack.c.b16 %v3383, %v3374
        %v3726 = vpack.c.b16 %v3384, %v3375
        %v3727 = vpack.c.b16 %v3385, %v3376
        %v3728 = vpack.c.b16 %v3386, %v3377
        %v3729 = vpack.c.b16 %v3387, %v3378
        %v3730 = vpack.c.b16 %v3388, %v3379
        %v3731 = vpack.c.b16 %v3389, %v3380
        %v3732 = vpack.c.b16 %v3390, %v3381
        %v3733 = vpack.c.b16 %v3391, %v3382
        %v3734 = vpack.c.b16 %v3401, %v3392
        %v3735 = vpack.c.b16 %v3402, %v3393
        %v3736 = vpack.c.b16 %v3403, %v3394
        %v3737 = vpack.c.b16 %v3404, %v3395
        %v3738 = vpack.c.b16 %v3405, %v3396
        %v3739 = vpack.c.b16 %v3406, %v3397
        %v3740 = vpack.c.b16 %v3407, %v3398
        %v3741 = vpack.c.b16 %v3408, %v3399
        %v3742 = vpack.c.b16 %v3409, %v3400
        %v3743 = vpack.c.b16 %v3419, %v3410
        %v3744 = vpack.c.b16 %v3420, %v3411
        %v3745 = vpack.c.b16 %v3421, %v3412
        %v3746 = vpack.c.b16 %v3422, %v3413
        %v3747 = vpack.c.b16 %v3423, %v3414
        %v3748 = vpack.c.b16 %v3424, %v3415
        %v3749 = vpack.c.b16 %v3425, %v3416
        %v3750 = vpack.c.b16 %v3426, %v3417
        %v3751 = vpack.c.b16 %v3427, %v3418
        %v3752 = vpack.c.b16 %v3437, %v3428
        %v3753 = vpack.c.b16 %v3438, %v3429
        %v3754 = vpack.c.b16 %v3439, %v3430
        %v3755 = vpack.c.b16 %v3440, %v3431
        %v3756 = vpack.c.b16 %v3441, %v3432
        %v3757 = vpack.c.b16 %v3442, %v3433
        %v3758 = vpack.c.b16 %v3443, %v3434
        %v3759 = vpack.c.b16 %v3444, %v3435
        %v3760 = vpack.c.b16 %v3445, %v3436
        %v3761 = vpack.c.b16 %v3455, %v3446
        %v3762 = vpack.c.b16 %v3456, %v3447
        %v3763 = vpack.c.b16 %v3457, %v3448
        %v3764 = vpack.c.b16 %v3458, %v3449
        %v3765 = vpack.c.b16 %v3459, %v3450
        %v3766 = vpack.c.b16 %v3460, %v3451
        %v3767 = vpack.c.b16 %v3461, %v3452
        %v3768 = vpack.c.b16 %v3462, %v3453
        %v3769 = vpack.c.b16 %v3463, %v3454
        %v3770 = vpack.c.b16 %v3473, %v3464
        %v3771 = vpack.c.b16 %v3474, %v3465
        %v3772 = vpack.c.b16 %v3475, %v3466
        %v3773 = vpack.c.b16 %v3476, %v3467
        %v3774 = vpack.c.b16 %v3477, %v3468
        %v3775 = vpack.c.b16 %v3478, %v3469
        %v3776 = vpack.c.b16 %v3479, %v3470
        %v3777 = vpack.c.b16 %v3480, %v3471
        %v3778 = vpack.c.b16 %v3481, %v3472
        %v3779 = vpack.c.b16 %v3491, %v3482
        %v3780 = vpack.c.b16 %v3492, %v3483
        %v3781 = vpack.c.b16 %v3493, %v3484
        %v3782 = vpack.c.b16 %v3494, %v3485
        %v3783 = vpack.c.b16 %v3495, %v3486
        %v3784 = vpack.c.b16 %v3496, %v3487
        %v3785 = vpack.c.b16 %v3497, %v3488
        %v3786 = vpack.c.b16 %v3498, %v3489
        %v3787 = vpack.c.b16 %v3499, %v3490
        %v3788 = vpack.c.b16 %v3509, %v3500
        %v3789 = vpack.c.b16 %v3510, %v3501
        %v3790 = vpack.c.b16 %v3511, %v3502
        %v3791 = vpack.c.b16 %v3512, %v3503
        %v3792 = vpack.c.b16 %v3513, %v3504
        %v3793 = vpack.c.b16 %v3514, %v3505
        %v3794 = vpack.c.b16 %v3515, %v3506
        %v3795 = vpack.c.b16 %v3516, %v3507
        %v3796 = vpack.c.b16 %v3517, %v3508
        %v3797 = vpack.c.b16 %v3527, %v3518
        %v3798 = vpack.c.b16 %v3528, %v3519
        %v3799 = vpack.c.b16 %v3529, %v3520
        %v3800 = vpack.c.b16 %v3530, %v3521
        %v3801 = vpack.c.b16 %v3531, %v3522
        %v3802 = vpack.c.b16 %v3532, %v3523
        %v3803 = vpack.c.b16 %v3533, %v3524
        %v3804 = vpack.c.b16 %v3534, %v3525
        %v3805 = vpack.c.b16 %v3535, %v3526
        %v3806 = vpack.c.b16 %v3545, %v3536
        %v3807 = vpack.c.b16 %v3546, %v3537
        %v3808 = vpack.c.b16 %v3547, %v3538
        %v3809 = vpack.c.b16 %v3548, %v3539
        %v3810 = vpack.c.b16 %v3549, %v3540
        %v3811 = vpack.c.b16 %v3550, %v3541
        %v3812 = vpack.c.b16 %v3551, %v3542
        %v3813 = vpack.c.b16 %v3552, %v3543
        %v3814 = vpack.c.b16 %v3553, %v3544
        %v3815 = vpack.c.b16 %v3563, %v3554
        %v3816 = vpack.c.b16 %v3564, %v3555
        %v3817 = vpack.c.b16 %v3565, %v3556
        %v3818 = vpack.c.b16 %v3566, %v3557
        %v3819 = vpack.c.b16 %v3567, %v3558
        %v3820 = vpack.c.b16 %v3568, %v3559
        %v3821 = vpack.c.b16 %v3569, %v3560
        %v3822 = vpack.c.b16 %v3570, %v3561
        %v3823 = vpack.c.b16 %v3571, %v3562
        %v4220 = vunpack.c.l.b16 %v2364
        %v4221 = vunpack.c.l.b16 %v2365
        %v4222 = vunpack.c.l.b16 %v2366
        %v4223 = vunpack.c.l.b16 %v2367
        %v4224 = vunpack.c.l.b16 %v2368
        %v4225 = vunpack.c.l.b16 %v2369
        %v4226 = vunpack.c.l.b16 %v2370
        %v4227 = vunpack.c.l.b16 %v2371
        %v4228 = vunpack.c.l.b16 %v2372
        %v4229 = vunpack.c.l.b16 %v2373
        %v4230 = vunpack.c.l.b16 %v2374
        %v4231 = vunpack.c.l.b16 %v2375
        %v4232 = vunpack.c.l.b16 %v2376
        %v4233 = vunpack.c.l.b16 %v2377
        %v4234 = vunpack.c.l.b16 %v2378
        %v4235 = vunpack.c.l.b16 %v2379
        %v4236 = vunpack.c.l.b16 %v2380
        %v4237 = vunpack.c.l.b16 %v2381
        %v4238 = vunpack.c.l.b16 %v2382
        %v4239 = vunpack.c.l.b16 %v2383
        %v4240 = vunpack.c.l.b16 %v2384
        %v4241 = vunpack.c.l.b16 %v2385
        %v4242 = vunpack.c.l.b16 %v2386
        %v4243 = vunpack.c.l.b16 %v2387
        %v4244 = vunpack.c.l.b16 %v2388
        %v4245 = vunpack.c.l.b16 %v2389
        %v4246 = vunpack.c.l.b16 %v2390
        %v4247 = vunpack.c.l.b16 %v2391
        %v4248 = vunpack.c.l.b16 %v2392
        %v4249 = vunpack.c.l.b16 %v2393
        %v4250 = vunpack.c.l.b16 %v2394
        %v4251 = vunpack.c.l.b16 %v2395
        %v4252 = vunpack.c.l.b16 %v2396
        %v4253 = vunpack.c.l.b16 %v2397
        %v4254 = vunpack.c.l.b16 %v2398
        %v4255 = vunpack.c.l.b16 %v2399
        %v4256 = vunpack.c.l.b16 %v2400
        %v4257 = vunpack.c.l.b16 %v2401
        %v4258 = vunpack.c.l.b16 %v2402
        %v4259 = vunpack.c.l.b16 %v2403
        %v4260 = vunpack.c.l.b16 %v2404
        %v4261 = vunpack.c.l.b16 %v2405
        %v4262 = vunpack.c.l.b16 %v2406
        %v4263 = vunpack.c.l.b16 %v2407
        %v4264 = vunpack.c.l.b16 %v2408
        %v4265 = vunpack.c.l.b16 %v2409
        %v4266 = vunpack.c.l.b16 %v2410
        %v4267 = vunpack.c.l.b16 %v2411
        %v4268 = vunpack.c.l.b16 %v2412
        %v4269 = vunpack.c.l.b16 %v2413
        %v4270 = vunpack.c.l.b16 %v2414
        %v4271 = vunpack.c.l.b16 %v2415
        %v4272 = vunpack.c.l.b16 %v2416
        %v4273 = vunpack.c.l.b16 %v2417
        %v4274 = vunpack.c.l.b16 %v2418
        %v4275 = vunpack.c.l.b16 %v2419
        %v4276 = vunpack.c.l.b16 %v2420
        %v4277 = vunpack.c.l.b16 %v2421
        %v4278 = vunpack.c.l.b16 %v2422
        %v4279 = vunpack.c.l.b16 %v2423
        %v4280 = vunpack.c.l.b16 %v2424
        %v4281 = vunpack.c.l.b16 %v2425
        %v4282 = vunpack.c.l.b16 %v2426
        %v4283 = vunpack.c.l.b16 %v2427
        %v4284 = vunpack.c.l.b16 %v2428
        %v4285 = vunpack.c.l.b16 %v2429
        %v4286 = vunpack.c.l.b16 %v2430
        %v4287 = vunpack.c.l.b16 %v2431
        %v4288 = vunpack.c.l.b16 %v2432
        %v4289 = vunpack.c.l.b16 %v2433
        %v4290 = vunpack.c.l.b16 %v2434
        %v4291 = vunpack.c.l.b16 %v2435
        %v4292 = vunpack.c.l.b16 %v2436
        %v4293 = vunpack.c.l.b16 %v2437
        %v4294 = vunpack.c.l.b16 %v2438
        %v4295 = vunpack.c.l.b16 %v2439
        %v4296 = vunpack.c.l.b16 %v2440
        %v4297 = vunpack.c.l.b16 %v2441
        %v4298 = vunpack.c.l.b16 %v2442
        %v4299 = vunpack.c.l.b16 %v2443
        %v4300 = vunpack.c.l.b16 %v2444
        %v4301 = vunpack.c.l.b16 %v2445
        %v4302 = vunpack.c.l.b16 %v2446
        %v4303 = vunpack.c.l.b16 %v2447
        %v4304 = vunpack.c.l.b16 %v2448
        %v4305 = vunpack.c.l.b16 %v2449
        %v4306 = vunpack.c.l.b16 %v2450
        %v4307 = vunpack.c.l.b16 %v2451
        %v4308 = vunpack.c.l.b16 %v2452
        %v4309 = vunpack.c.l.b16 %v2453
        %v4310 = vunpack.c.l.b16 %v2454
        %v4311 = vunpack.c.l.b16 %v2455
        %v4312 = vunpack.c.l.b16 %v2456
        %v4313 = vunpack.c.l.b16 %v2457
        %v4314 = vunpack.c.l.b16 %v2458
        %v4315 = vunpack.c.l.b16 %v2459
        %v4316 = vunpack.c.l.b16 %v2460
        %v4317 = vunpack.c.l.b16 %v2461
        %v4318 = vunpack.c.l.b16 %v2462
        %v4319 = vunpack.c.l.b16 %v2463
        %v4320 = vunpack.c.l.b16 %v2464
        %v4321 = vunpack.c.l.b16 %v2465
        %v4322 = vunpack.c.l.b16 %v2466
        %v4323 = vunpack.c.l.b16 %v2467
        %v4324 = vunpack.c.l.b16 %v2468
        %v4325 = vunpack.c.l.b16 %v2469
        %v4326 = vunpack.c.l.b16 %v2470
        %v4327 = vunpack.c.l.b16 %v2471
        %v4328 = vunpack.c.l.b16 %v2472
        %v4329 = vunpack.c.l.b16 %v2473
        %v4330 = vunpack.c.l.b16 %v2474
        %v4331 = vunpack.c.l.b16 %v2475
        %v4332 = vunpack.c.l.b16 %v2476
        %v4333 = vunpack.c.l.b16 %v2477
        %v4334 = vunpack.c.l.b16 %v2478
        %v4335 = vunpack.c.l.b16 %v2479
        %v4336 = vunpack.c.l.b16 %v2480
        %v4337 = vunpack.c.l.b16 %v2481
        %v4338 = vunpack.c.l.b16 %v2482
        %v4339 = vunpack.c.l.b16 %v2483
        %v4340 = vunpack.c.l.b16 %v2484
        %v4341 = vunpack.c.l.b16 %v2485
        %v4342 = vunpack.c.l.b16 %v2486
        %v4343 = vunpack.c.l.b16 %v2487
        %v4344 = vunpack.c.l.b16 %v2488
        %v4345 = vunpack.c.l.b16 %v2489
        %v4346 = vunpack.c.l.b16 %v2490
        %v4347 = vunpack.c.l.b16 %v2491
        %v4348 = vunpack.c.l.b16 %v2492
        %v4349 = vunpack.c.l.b16 %v2493
        %v4350 = vunpack.c.l.b16 %v2494
        %v4351 = vunpack.c.l.b16 %v2495
        %v4352 = vunpack.c.l.b16 %v2496
        %v4353 = vunpack.c.l.b16 %v2497
        %v4354 = vunpack.c.l.b16 %v2498
        %v4355 = vunpack.c.l.b16 %v2499
        %v4356 = vunpack.c.l.b16 %v2500
        %v4357 = vunpack.c.l.b16 %v2501
        %v4358 = vunpack.c.l.b16 %v2502
        %v4359 = vunpack.c.l.b16 %v2503
        %v4360 = vunpack.c.l.b16 %v2504
        %v4361 = vunpack.c.l.b16 %v2505
        %v4362 = vunpack.c.l.b16 %v2506
        %v4363 = vunpack.c.l.b16 %v2507
        %v4364 = vpack.c.b16 %v4221, %v4220
        %v4365 = vpack.c.b16 %v4223, %v4222
        %v4366 = vpack.c.b16 %v4225, %v4224
        %v4367 = vpack.c.b16 %v4227, %v4226
        %v4368 = vpack.c.b16 %v4229, %v4228
        %v4369 = vpack.c.b16 %v4231, %v4230
        %v4370 = vpack.c.b16 %v4233, %v4232
        %v4371 = vpack.c.b16 %v4235, %v4234
        %v4372 = vpack.c.b16 %v4237, %v4236
        %v4373 = vpack.c.b16 %v4239, %v4238
        %v4374 = vpack.c.b16 %v4241, %v4240
        %v4375 = vpack.c.b16 %v4243, %v4242
        %v4376 = vpack.c.b16 %v4245, %v4244
        %v4377 = vpack.c.b16 %v4247, %v4246
        %v4378 = vpack.c.b16 %v4249, %v4248
        %v4379 = vpack.c.b16 %v4251, %v4250
        %v4380 = vpack.c.b16 %v4253, %v4252
        %v4381 = vpack.c.b16 %v4255, %v4254
        %v4382 = vpack.c.b16 %v4257, %v4256
        %v4383 = vpack.c.b16 %v4259, %v4258
        %v4384 = vpack.c.b16 %v4261, %v4260
        %v4385 = vpack.c.b16 %v4263, %v4262
        %v4386 = vpack.c.b16 %v4265, %v4264
        %v4387 = vpack.c.b16 %v4267, %v4266
        %v4388 = vpack.c.b16 %v4269, %v4268
        %v4389 = vpack.c.b16 %v4271, %v4270
        %v4390 = vpack.c.b16 %v4273, %v4272
        %v4391 = vpack.c.b16 %v4275, %v4274
        %v4392 = vpack.c.b16 %v4277, %v4276
        %v4393 = vpack.c.b16 %v4279, %v4278
        %v4394 = vpack.c.b16 %v4281, %v4280
        %v4395 = vpack.c.b16 %v4283, %v4282
        %v4396 = vpack.c.b16 %v4285, %v4284
        %v4397 = vpack.c.b16 %v4287, %v4286
        %v4398 = vpack.c.b16 %v4289, %v4288
        %v4399 = vpack.c.b16 %v4291, %v4290
        %v4400 = vpack.c.b16 %v4293, %v4292
        %v4401 = vpack.c.b16 %v4295, %v4294
        %v4402 = vpack.c.b16 %v4297, %v4296
        %v4403 = vpack.c.b16 %v4299, %v4298
        %v4404 = vpack.c.b16 %v4301, %v4300
        %v4405 = vpack.c.b16 %v4303, %v4302
        %v4406 = vpack.c.b16 %v4305, %v4304
        %v4407 = vpack.c.b16 %v4307, %v4306
        %v4408 = vpack.c.b16 %v4309, %v4308
        %v4409 = vpack.c.b16 %v4311, %v4310
        %v4410 = vpack.c.b16 %v4313, %v4312
        %v4411 = vpack.c.b16 %v4315, %v4314
        %v4412 = vpack.c.b16 %v4317, %v4316
        %v4413 = vpack.c.b16 %v4319, %v4318
        %v4414 = vpack.c.b16 %v4321, %v4320
        %v4415 = vpack.c.b16 %v4323, %v4322
        %v4416 = vpack.c.b16 %v4325, %v4324
        %v4417 = vpack.c.b16 %v4327, %v4326
        %v4418 = vpack.c.b16 %v4329, %v4328
        %v4419 = vpack.c.b16 %v4331, %v4330
        %v4420 = vpack.c.b16 %v4333, %v4332
        %v4421 = vpack.c.b16 %v4335, %v4334
        %v4422 = vpack.c.b16 %v4337, %v4336
        %v4423 = vpack.c.b16 %v4339, %v4338
        %v4424 = vpack.c.b16 %v4341, %v4340
        %v4425 = vpack.c.b16 %v4343, %v4342
        %v4426 = vpack.c.b16 %v4345, %v4344
        %v4427 = vpack.c.b16 %v4347, %v4346
        %v4428 = vpack.c.b16 %v4349, %v4348
        %v4429 = vpack.c.b16 %v4351, %v4350
        %v4430 = vpack.c.b16 %v4353, %v4352
        %v4431 = vpack.c.b16 %v4355, %v4354
        %v4432 = vpack.c.b16 %v4357, %v4356
        %v4433 = vpack.c.b16 %v4359, %v4358
        %v4434 = vpack.c.b16 %v4361, %v4360
        %v4435 = vpack.c.b16 %v4363, %v4362
        %4508 = vmatpush.bf16.msra.mxu0 %v4371
        %4509 = vmatpush.bf16.msra.mxu0 %v4370
        %4510 = vmatpush.bf16.msra.mxu0 %v4369
        %4511 = vmatpush.bf16.msra.mxu0 %v4368
        %4512 = vmatpush.bf16.msra.mxu0 %v4367
        %4513 = vmatpush.bf16.msra.mxu0 %v4366
        %4514 = vmatpush.bf16.msra.mxu0 %v4365
        %4515 = vmatpush.bf16.msra.mxu0 %v4364
        %4516 = vmatmul.bf16.gmra.mxu0 %v3572
        %v4517 = vpop.f32.mrf.mxu0
        %v4518 = vadd.f32 0.0, %v4517
        %v4519 = vpop.f32.mrf.mxu0
        %v4520 = vadd.f32 0.0, %v4519
        %4521 = vmatmul.bf16.gmra.mxu0 %v3581
        %v4522 = vpop.f32.mrf.mxu0
        %v4523 = vadd.f32 0.0, %v4522
        %v4524 = vpop.f32.mrf.mxu0
        %v4525 = vadd.f32 0.0, %v4524
        %4526 = vmatmul.bf16.gmra.mxu0 %v3590
        %v4527 = vpop.f32.mrf.mxu0
        %v4528 = vadd.f32 0.0, %v4527
        %v4529 = vpop.f32.mrf.mxu0
        %v4530 = vadd.f32 0.0, %v4529
        %4531 = vmatmul.bf16.gmra.mxu0 %v3599
        %v4532 = vpop.f32.mrf.mxu0
        %v4533 = vadd.f32 0.0, %v4532
        %v4534 = vpop.f32.mrf.mxu0
        %v4535 = vadd.f32 0.0, %v4534
        %4536 = vmatmul.bf16.gmra.mxu0 %v3608
        %v4537 = vpop.f32.mrf.mxu0
        %v4538 = vadd.f32 0.0, %v4537
        %v4539 = vpop.f32.mrf.mxu0
        %v4540 = vadd.f32 0.0, %v4539
        %4541 = vmatmul.bf16.gmra.mxu0 %v3617
        %v4542 = vpop.f32.mrf.mxu0
        %v4543 = vadd.f32 0.0, %v4542
        %v4544 = vpop.f32.mrf.mxu0
        %v4545 = vadd.f32 0.0, %v4544
        %4546 = vmatmul.bf16.gmra.mxu0 %v3626
        %v4547 = vpop.f32.mrf.mxu0
        %v4548 = vadd.f32 0.0, %v4547
        %v4549 = vpop.f32.mrf.mxu0
        %v4550 = vadd.f32 0.0, %v4549
        %4551 = vmatmul.bf16.gmra.mxu0 %v3635
        %v4552 = vpop.f32.mrf.mxu0
        %v4553 = vadd.f32 0.0, %v4552
        %v4554 = vpop.f32.mrf.mxu0
        %v4555 = vadd.f32 0.0, %v4554
        %4556 = vmatmul.bf16.gmra.mxu0 %v3644
        %v4557 = vpop.f32.mrf.mxu0
        %v4558 = vadd.f32 0.0, %v4557
        %v4559 = vpop.f32.mrf.mxu0
        %v4560 = vadd.f32 0.0, %v4559
        %4561 = vmatmul.bf16.gmra.mxu0 %v3653
        %v4562 = vpop.f32.mrf.mxu0
        %v4563 = vadd.f32 0.0, %v4562
        %v4564 = vpop.f32.mrf.mxu0
        %v4565 = vadd.f32 0.0, %v4564
        %4566 = vmatmul.bf16.gmra.mxu0 %v3662
        %v4567 = vpop.f32.mrf.mxu0
        %v4568 = vadd.f32 0.0, %v4567
        %v4569 = vpop.f32.mrf.mxu0
        %v4570 = vadd.f32 0.0, %v4569
        %4571 = vmatmul.bf16.gmra.mxu0 %v3671
        %v4572 = vpop.f32.mrf.mxu0
        %v4573 = vadd.f32 0.0, %v4572
        %v4574 = vpop.f32.mrf.mxu0
        %v4575 = vadd.f32 0.0, %v4574
        %4576 = vmatmul.bf16.gmra.mxu0 %v3680
        %v4577 = vpop.f32.mrf.mxu0
        %v4578 = vadd.f32 0.0, %v4577
        %v4579 = vpop.f32.mrf.mxu0
        %v4580 = vadd.f32 0.0, %v4579
        %4581 = vmatmul.bf16.gmra.mxu0 %v3689
        %v4582 = vpop.f32.mrf.mxu0
        %v4583 = vadd.f32 0.0, %v4582
        %v4584 = vpop.f32.mrf.mxu0
        %v4585 = vadd.f32 0.0, %v4584
        %4586 = vmatmul.bf16.gmra.mxu0 %v3698
        %v4587 = vpop.f32.mrf.mxu0
        %v4588 = vadd.f32 0.0, %v4587
        %v4589 = vpop.f32.mrf.mxu0
        %v4590 = vadd.f32 0.0, %v4589
        %4591 = vmatmul.bf16.gmra.mxu0 %v3707
        %v4592 = vpop.f32.mrf.mxu0
        %v4593 = vadd.f32 0.0, %v4592
        %v4594 = vpop.f32.mrf.mxu0
        %v4595 = vadd.f32 0.0, %v4594
        %4596 = vmatmul.bf16.gmra.mxu0 %v3716
        %v4597 = vpop.f32.mrf.mxu0
        %v4598 = vadd.f32 0.0, %v4597
        %v4599 = vpop.f32.mrf.mxu0
        %v4600 = vadd.f32 0.0, %v4599
        %4601 = vmatmul.bf16.gmra.mxu0 %v3725
        %v4602 = vpop.f32.mrf.mxu0
        %v4603 = vadd.f32 0.0, %v4602
        %v4604 = vpop.f32.mrf.mxu0
        %v4605 = vadd.f32 0.0, %v4604
        %4606 = vmatmul.bf16.gmra.mxu0 %v3734
        %v4607 = vpop.f32.mrf.mxu0
        %v4608 = vadd.f32 0.0, %v4607
        %v4609 = vpop.f32.mrf.mxu0
        %v4610 = vadd.f32 0.0, %v4609
        %4611 = vmatmul.bf16.gmra.mxu0 %v3743
        %v4612 = vpop.f32.mrf.mxu0
        %v4613 = vadd.f32 0.0, %v4612
        %v4614 = vpop.f32.mrf.mxu0
        %v4615 = vadd.f32 0.0, %v4614
        %4616 = vmatmul.bf16.gmra.mxu0 %v3752
        %v4617 = vpop.f32.mrf.mxu0
        %v4618 = vadd.f32 0.0, %v4617
        %v4619 = vpop.f32.mrf.mxu0
        %v4620 = vadd.f32 0.0, %v4619
        %4621 = vmatmul.bf16.gmra.mxu0 %v3761
        %v4622 = vpop.f32.mrf.mxu0
        %v4623 = vadd.f32 0.0, %v4622
        %v4624 = vpop.f32.mrf.mxu0
        %v4625 = vadd.f32 0.0, %v4624
        %4626 = vmatmul.bf16.gmra.mxu0 %v3770
        %v4627 = vpop.f32.mrf.mxu0
        %v4628 = vadd.f32 0.0, %v4627
        %v4629 = vpop.f32.mrf.mxu0
        %v4630 = vadd.f32 0.0, %v4629
        %4631 = vmatmul.bf16.gmra.mxu0 %v3779
        %v4632 = vpop.f32.mrf.mxu0
        %v4633 = vadd.f32 0.0, %v4632
        %v4634 = vpop.f32.mrf.mxu0
        %v4635 = vadd.f32 0.0, %v4634
        %4636 = vmatmul.bf16.gmra.mxu0 %v3788
        %v4637 = vpop.f32.mrf.mxu0
        %v4638 = vadd.f32 0.0, %v4637
        %v4639 = vpop.f32.mrf.mxu0
        %v4640 = vadd.f32 0.0, %v4639
        %4641 = vmatmul.bf16.gmra.mxu0 %v3797
        %v4642 = vpop.f32.mrf.mxu0
        %v4643 = vadd.f32 0.0, %v4642
        %v4644 = vpop.f32.mrf.mxu0
        %v4645 = vadd.f32 0.0, %v4644
        %4646 = vmatmul.bf16.gmra.mxu0 %v3806
        %v4647 = vpop.f32.mrf.mxu0
        %v4648 = vadd.f32 0.0, %v4647
        %v4649 = vpop.f32.mrf.mxu0
        %v4650 = vadd.f32 0.0, %v4649
        %4651 = vmatmul.bf16.gmra.mxu0 %v3815
        %v4652 = vpop.f32.mrf.mxu0
        %v4653 = vadd.f32 0.0, %v4652
        %v4654 = vpop.f32.mrf.mxu0
        %v4655 = vadd.f32 0.0, %v4654
        %4656 = vdwg.mxu0
        %4657 = vmatpush.bf16.msra.mxu0 %v4379
        %4658 = vmatpush.bf16.msra.mxu0 %v4378
        %4659 = vmatpush.bf16.msra.mxu0 %v4377
        %4660 = vmatpush.bf16.msra.mxu0 %v4376
        %4661 = vmatpush.bf16.msra.mxu0 %v4375
        %4662 = vmatpush.bf16.msra.mxu0 %v4374
        %4663 = vmatpush.bf16.msra.mxu0 %v4373
        %4664 = vmatpush.bf16.msra.mxu0 %v4372
        %4665 = vmatmul.bf16.gmra.mxu0 %v3573
        %v4666 = vpop.f32.mrf.mxu0
        %v4667 = vadd.f32 %v4518, %v4666
        %v4668 = vpop.f32.mrf.mxu0
        %v4669 = vadd.f32 %v4520, %v4668
        %4670 = vmatmul.bf16.gmra.mxu0 %v3582
        %v4671 = vpop.f32.mrf.mxu0
        %v4672 = vadd.f32 %v4523, %v4671
        %v4673 = vpop.f32.mrf.mxu0
        %v4674 = vadd.f32 %v4525, %v4673
        %4675 = vmatmul.bf16.gmra.mxu0 %v3591
        %v4676 = vpop.f32.mrf.mxu0
        %v4677 = vadd.f32 %v4528, %v4676
        %v4678 = vpop.f32.mrf.mxu0
        %v4679 = vadd.f32 %v4530, %v4678
        %4680 = vmatmul.bf16.gmra.mxu0 %v3600
        %v4681 = vpop.f32.mrf.mxu0
        %v4682 = vadd.f32 %v4533, %v4681
        %v4683 = vpop.f32.mrf.mxu0
        %v4684 = vadd.f32 %v4535, %v4683
        %4685 = vmatmul.bf16.gmra.mxu0 %v3609
        %v4686 = vpop.f32.mrf.mxu0
        %v4687 = vadd.f32 %v4538, %v4686
        %v4688 = vpop.f32.mrf.mxu0
        %v4689 = vadd.f32 %v4540, %v4688
        %4690 = vmatmul.bf16.gmra.mxu0 %v3618
        %v4691 = vpop.f32.mrf.mxu0
        %v4692 = vadd.f32 %v4543, %v4691
        %v4693 = vpop.f32.mrf.mxu0
        %v4694 = vadd.f32 %v4545, %v4693
        %4695 = vmatmul.bf16.gmra.mxu0 %v3627
        %v4696 = vpop.f32.mrf.mxu0
        %v4697 = vadd.f32 %v4548, %v4696
        %v4698 = vpop.f32.mrf.mxu0
        %v4699 = vadd.f32 %v4550, %v4698
        %4700 = vmatmul.bf16.gmra.mxu0 %v3636
        %v4701 = vpop.f32.mrf.mxu0
        %v4702 = vadd.f32 %v4553, %v4701
        %v4703 = vpop.f32.mrf.mxu0
        %v4704 = vadd.f32 %v4555, %v4703
        %4705 = vmatmul.bf16.gmra.mxu0 %v3645
        %v4706 = vpop.f32.mrf.mxu0
        %v4707 = vadd.f32 %v4558, %v4706
        %v4708 = vpop.f32.mrf.mxu0
        %v4709 = vadd.f32 %v4560, %v4708
        %4710 = vmatmul.bf16.gmra.mxu0 %v3654
        %v4711 = vpop.f32.mrf.mxu0
        %v4712 = vadd.f32 %v4563, %v4711
        %v4713 = vpop.f32.mrf.mxu0
        %v4714 = vadd.f32 %v4565, %v4713
        %4715 = vmatmul.bf16.gmra.mxu0 %v3663
        %v4716 = vpop.f32.mrf.mxu0
        %v4717 = vadd.f32 %v4568, %v4716
        %v4718 = vpop.f32.mrf.mxu0
        %v4719 = vadd.f32 %v4570, %v4718
        %4720 = vmatmul.bf16.gmra.mxu0 %v3672
        %v4721 = vpop.f32.mrf.mxu0
        %v4722 = vadd.f32 %v4573, %v4721
        %v4723 = vpop.f32.mrf.mxu0
        %v4724 = vadd.f32 %v4575, %v4723
        %4725 = vmatmul.bf16.gmra.mxu0 %v3681
        %v4726 = vpop.f32.mrf.mxu0
        %v4727 = vadd.f32 %v4578, %v4726
        %v4728 = vpop.f32.mrf.mxu0
        %v4729 = vadd.f32 %v4580, %v4728
        %4730 = vmatmul.bf16.gmra.mxu0 %v3690
        %v4731 = vpop.f32.mrf.mxu0
        %v4732 = vadd.f32 %v4583, %v4731
        %v4733 = vpop.f32.mrf.mxu0
        %v4734 = vadd.f32 %v4585, %v4733
        %4735 = vmatmul.bf16.gmra.mxu0 %v3699
        %v4736 = vpop.f32.mrf.mxu0
        %v4737 = vadd.f32 %v4588, %v4736
        %v4738 = vpop.f32.mrf.mxu0
        %v4739 = vadd.f32 %v4590, %v4738
        %4740 = vmatmul.bf16.gmra.mxu0 %v3708
        %v4741 = vpop.f32.mrf.mxu0
        %v4742 = vadd.f32 %v4593, %v4741
        %v4743 = vpop.f32.mrf.mxu0
        %v4744 = vadd.f32 %v4595, %v4743
        %4745 = vmatmul.bf16.gmra.mxu0 %v3717
        %v4746 = vpop.f32.mrf.mxu0
        %v4747 = vadd.f32 %v4598, %v4746
        %v4748 = vpop.f32.mrf.mxu0
        %v4749 = vadd.f32 %v4600, %v4748
        %4750 = vmatmul.bf16.gmra.mxu0 %v3726
        %v4751 = vpop.f32.mrf.mxu0
        %v4752 = vadd.f32 %v4603, %v4751
        %v4753 = vpop.f32.mrf.mxu0
        %v4754 = vadd.f32 %v4605, %v4753
        %4755 = vmatmul.bf16.gmra.mxu0 %v3735
        %v4756 = vpop.f32.mrf.mxu0
        %v4757 = vadd.f32 %v4608, %v4756
        %v4758 = vpop.f32.mrf.mxu0
        %v4759 = vadd.f32 %v4610, %v4758
        %4760 = vmatmul.bf16.gmra.mxu0 %v3744
        %v4761 = vpop.f32.mrf.mxu0
        %v4762 = vadd.f32 %v4613, %v4761
        %v4763 = vpop.f32.mrf.mxu0
        %v4764 = vadd.f32 %v4615, %v4763
        %4765 = vmatmul.bf16.gmra.mxu0 %v3753
        %v4766 = vpop.f32.mrf.mxu0
        %v4767 = vadd.f32 %v4618, %v4766
        %v4768 = vpop.f32.mrf.mxu0
        %v4769 = vadd.f32 %v4620, %v4768
        %4770 = vmatmul.bf16.gmra.mxu0 %v3762
        %v4771 = vpop.f32.mrf.mxu0
        %v4772 = vadd.f32 %v4623, %v4771
        %v4773 = vpop.f32.mrf.mxu0
        %v4774 = vadd.f32 %v4625, %v4773
        %4775 = vmatmul.bf16.gmra.mxu0 %v3771
        %v4776 = vpop.f32.mrf.mxu0
        %v4777 = vadd.f32 %v4628, %v4776
        %v4778 = vpop.f32.mrf.mxu0
        %v4779 = vadd.f32 %v4630, %v4778
        %4780 = vmatmul.bf16.gmra.mxu0 %v3780
        %v4781 = vpop.f32.mrf.mxu0
        %v4782 = vadd.f32 %v4633, %v4781
        %v4783 = vpop.f32.mrf.mxu0
        %v4784 = vadd.f32 %v4635, %v4783
        %4785 = vmatmul.bf16.gmra.mxu0 %v3789
        %v4786 = vpop.f32.mrf.mxu0
        %v4787 = vadd.f32 %v4638, %v4786
        %v4788 = vpop.f32.mrf.mxu0
        %v4789 = vadd.f32 %v4640, %v4788
        %4790 = vmatmul.bf16.gmra.mxu0 %v3798
        %v4791 = vpop.f32.mrf.mxu0
        %v4792 = vadd.f32 %v4643, %v4791
        %v4793 = vpop.f32.mrf.mxu0
        %v4794 = vadd.f32 %v4645, %v4793
        %4795 = vmatmul.bf16.gmra.mxu0 %v3807
        %v4796 = vpop.f32.mrf.mxu0
        %v4797 = vadd.f32 %v4648, %v4796
        %v4798 = vpop.f32.mrf.mxu0
        %v4799 = vadd.f32 %v4650, %v4798
        %4800 = vmatmul.bf16.gmra.mxu0 %v3816
        %v4801 = vpop.f32.mrf.mxu0
        %v4802 = vadd.f32 %v4653, %v4801
        %v4803 = vpop.f32.mrf.mxu0
        %v4804 = vadd.f32 %v4655, %v4803
        %4805 = vdwg.mxu0
        %4806 = vmatpush.bf16.msra.mxu0 %v4387
        %4807 = vmatpush.bf16.msra.mxu0 %v4386
        %4808 = vmatpush.bf16.msra.mxu0 %v4385
        %4809 = vmatpush.bf16.msra.mxu0 %v4384
        %4810 = vmatpush.bf16.msra.mxu0 %v4383
        %4811 = vmatpush.bf16.msra.mxu0 %v4382
        %4812 = vmatpush.bf16.msra.mxu0 %v4381
        %4813 = vmatpush.bf16.msra.mxu0 %v4380
        %4814 = vmatmul.bf16.gmra.mxu0 %v3574
        %v4815 = vpop.f32.mrf.mxu0
        %v4816 = vadd.f32 %v4667, %v4815
        %v4817 = vpop.f32.mrf.mxu0
        %v4818 = vadd.f32 %v4669, %v4817
        %4819 = vmatmul.bf16.gmra.mxu0 %v3583
        %v4820 = vpop.f32.mrf.mxu0
        %v4821 = vadd.f32 %v4672, %v4820
        %v4822 = vpop.f32.mrf.mxu0
        %v4823 = vadd.f32 %v4674, %v4822
        %4824 = vmatmul.bf16.gmra.mxu0 %v3592
        %v4825 = vpop.f32.mrf.mxu0
        %v4826 = vadd.f32 %v4677, %v4825
        %v4827 = vpop.f32.mrf.mxu0
        %v4828 = vadd.f32 %v4679, %v4827
        %4829 = vmatmul.bf16.gmra.mxu0 %v3601
        %v4830 = vpop.f32.mrf.mxu0
        %v4831 = vadd.f32 %v4682, %v4830
        %v4832 = vpop.f32.mrf.mxu0
        %v4833 = vadd.f32 %v4684, %v4832
        %4834 = vmatmul.bf16.gmra.mxu0 %v3610
        %v4835 = vpop.f32.mrf.mxu0
        %v4836 = vadd.f32 %v4687, %v4835
        %v4837 = vpop.f32.mrf.mxu0
        %v4838 = vadd.f32 %v4689, %v4837
        %4839 = vmatmul.bf16.gmra.mxu0 %v3619
        %v4840 = vpop.f32.mrf.mxu0
        %v4841 = vadd.f32 %v4692, %v4840
        %v4842 = vpop.f32.mrf.mxu0
        %v4843 = vadd.f32 %v4694, %v4842
        %4844 = vmatmul.bf16.gmra.mxu0 %v3628
        %v4845 = vpop.f32.mrf.mxu0
        %v4846 = vadd.f32 %v4697, %v4845
        %v4847 = vpop.f32.mrf.mxu0
        %v4848 = vadd.f32 %v4699, %v4847
        %4849 = vmatmul.bf16.gmra.mxu0 %v3637
        %v4850 = vpop.f32.mrf.mxu0
        %v4851 = vadd.f32 %v4702, %v4850
        %v4852 = vpop.f32.mrf.mxu0
        %v4853 = vadd.f32 %v4704, %v4852
        %4854 = vmatmul.bf16.gmra.mxu0 %v3646
        %v4855 = vpop.f32.mrf.mxu0
        %v4856 = vadd.f32 %v4707, %v4855
        %v4857 = vpop.f32.mrf.mxu0
        %v4858 = vadd.f32 %v4709, %v4857
        %4859 = vmatmul.bf16.gmra.mxu0 %v3655
        %v4860 = vpop.f32.mrf.mxu0
        %v4861 = vadd.f32 %v4712, %v4860
        %v4862 = vpop.f32.mrf.mxu0
        %v4863 = vadd.f32 %v4714, %v4862
        %4864 = vmatmul.bf16.gmra.mxu0 %v3664
        %v4865 = vpop.f32.mrf.mxu0
        %v4866 = vadd.f32 %v4717, %v4865
        %v4867 = vpop.f32.mrf.mxu0
        %v4868 = vadd.f32 %v4719, %v4867
        %4869 = vmatmul.bf16.gmra.mxu0 %v3673
        %v4870 = vpop.f32.mrf.mxu0
        %v4871 = vadd.f32 %v4722, %v4870
        %v4872 = vpop.f32.mrf.mxu0
        %v4873 = vadd.f32 %v4724, %v4872
        %4874 = vmatmul.bf16.gmra.mxu0 %v3682
        %v4875 = vpop.f32.mrf.mxu0
        %v4876 = vadd.f32 %v4727, %v4875
        %v4877 = vpop.f32.mrf.mxu0
        %v4878 = vadd.f32 %v4729, %v4877
        %4879 = vmatmul.bf16.gmra.mxu0 %v3691
        %v4880 = vpop.f32.mrf.mxu0
        %v4881 = vadd.f32 %v4732, %v4880
        %v4882 = vpop.f32.mrf.mxu0
        %v4883 = vadd.f32 %v4734, %v4882
        %4884 = vmatmul.bf16.gmra.mxu0 %v3700
        %v4885 = vpop.f32.mrf.mxu0
        %v4886 = vadd.f32 %v4737, %v4885
        %v4887 = vpop.f32.mrf.mxu0
        %v4888 = vadd.f32 %v4739, %v4887
        %4889 = vmatmul.bf16.gmra.mxu0 %v3709
        %v4890 = vpop.f32.mrf.mxu0
        %v4891 = vadd.f32 %v4742, %v4890
        %v4892 = vpop.f32.mrf.mxu0
        %v4893 = vadd.f32 %v4744, %v4892
        %4894 = vmatmul.bf16.gmra.mxu0 %v3718
        %v4895 = vpop.f32.mrf.mxu0
        %v4896 = vadd.f32 %v4747, %v4895
        %v4897 = vpop.f32.mrf.mxu0
        %v4898 = vadd.f32 %v4749, %v4897
        %4899 = vmatmul.bf16.gmra.mxu0 %v3727
        %v4900 = vpop.f32.mrf.mxu0
        %v4901 = vadd.f32 %v4752, %v4900
        %v4902 = vpop.f32.mrf.mxu0
        %v4903 = vadd.f32 %v4754, %v4902
        %4904 = vmatmul.bf16.gmra.mxu0 %v3736
        %v4905 = vpop.f32.mrf.mxu0
        %v4906 = vadd.f32 %v4757, %v4905
        %v4907 = vpop.f32.mrf.mxu0
        %v4908 = vadd.f32 %v4759, %v4907
        %4909 = vmatmul.bf16.gmra.mxu0 %v3745
        %v4910 = vpop.f32.mrf.mxu0
        %v4911 = vadd.f32 %v4762, %v4910
        %v4912 = vpop.f32.mrf.mxu0
        %v4913 = vadd.f32 %v4764, %v4912
        %4914 = vmatmul.bf16.gmra.mxu0 %v3754
        %v4915 = vpop.f32.mrf.mxu0
        %v4916 = vadd.f32 %v4767, %v4915
        %v4917 = vpop.f32.mrf.mxu0
        %v4918 = vadd.f32 %v4769, %v4917
        %4919 = vmatmul.bf16.gmra.mxu0 %v3763
        %v4920 = vpop.f32.mrf.mxu0
        %v4921 = vadd.f32 %v4772, %v4920
        %v4922 = vpop.f32.mrf.mxu0
        %v4923 = vadd.f32 %v4774, %v4922
        %4924 = vmatmul.bf16.gmra.mxu0 %v3772
        %v4925 = vpop.f32.mrf.mxu0
        %v4926 = vadd.f32 %v4777, %v4925
        %v4927 = vpop.f32.mrf.mxu0
        %v4928 = vadd.f32 %v4779, %v4927
        %4929 = vmatmul.bf16.gmra.mxu0 %v3781
        %v4930 = vpop.f32.mrf.mxu0
        %v4931 = vadd.f32 %v4782, %v4930
        %v4932 = vpop.f32.mrf.mxu0
        %v4933 = vadd.f32 %v4784, %v4932
        %4934 = vmatmul.bf16.gmra.mxu0 %v3790
        %v4935 = vpop.f32.mrf.mxu0
        %v4936 = vadd.f32 %v4787, %v4935
        %v4937 = vpop.f32.mrf.mxu0
        %v4938 = vadd.f32 %v4789, %v4937
        %4939 = vmatmul.bf16.gmra.mxu0 %v3799
        %v4940 = vpop.f32.mrf.mxu0
        %v4941 = vadd.f32 %v4792, %v4940
        %v4942 = vpop.f32.mrf.mxu0
        %v4943 = vadd.f32 %v4794, %v4942
        %4944 = vmatmul.bf16.gmra.mxu0 %v3808
        %v4945 = vpop.f32.mrf.mxu0
        %v4946 = vadd.f32 %v4797, %v4945
        %v4947 = vpop.f32.mrf.mxu0
        %v4948 = vadd.f32 %v4799, %v4947
        %4949 = vmatmul.bf16.gmra.mxu0 %v3817
        %v4950 = vpop.f32.mrf.mxu0
        %v4951 = vadd.f32 %v4802, %v4950
        %v4952 = vpop.f32.mrf.mxu0
        %v4953 = vadd.f32 %v4804, %v4952
        %4954 = vdwg.mxu0
        %4955 = vmatpush.bf16.msra.mxu0 %v4395
        %4956 = vmatpush.bf16.msra.mxu0 %v4394
        %4957 = vmatpush.bf16.msra.mxu0 %v4393
        %4958 = vmatpush.bf16.msra.mxu0 %v4392
        %4959 = vmatpush.bf16.msra.mxu0 %v4391
        %4960 = vmatpush.bf16.msra.mxu0 %v4390
        %4961 = vmatpush.bf16.msra.mxu0 %v4389
        %4962 = vmatpush.bf16.msra.mxu0 %v4388
        %4963 = vmatmul.bf16.gmra.mxu0 %v3575
        %v4964 = vpop.f32.mrf.mxu0
        %v4965 = vadd.f32 %v4816, %v4964
        %v4966 = vpop.f32.mrf.mxu0
        %v4967 = vadd.f32 %v4818, %v4966
        %4968 = vmatmul.bf16.gmra.mxu0 %v3584
        %v4969 = vpop.f32.mrf.mxu0
        %v4970 = vadd.f32 %v4821, %v4969
        %v4971 = vpop.f32.mrf.mxu0
        %v4972 = vadd.f32 %v4823, %v4971
        %4973 = vmatmul.bf16.gmra.mxu0 %v3593
        %v4974 = vpop.f32.mrf.mxu0
        %v4975 = vadd.f32 %v4826, %v4974
        %v4976 = vpop.f32.mrf.mxu0
        %v4977 = vadd.f32 %v4828, %v4976
        %4978 = vmatmul.bf16.gmra.mxu0 %v3602
        %v4979 = vpop.f32.mrf.mxu0
        %v4980 = vadd.f32 %v4831, %v4979
        %v4981 = vpop.f32.mrf.mxu0
        %v4982 = vadd.f32 %v4833, %v4981
        %4983 = vmatmul.bf16.gmra.mxu0 %v3611
        %v4984 = vpop.f32.mrf.mxu0
        %v4985 = vadd.f32 %v4836, %v4984
        %v4986 = vpop.f32.mrf.mxu0
        %v4987 = vadd.f32 %v4838, %v4986
        %4988 = vmatmul.bf16.gmra.mxu0 %v3620
        %v4989 = vpop.f32.mrf.mxu0
        %v4990 = vadd.f32 %v4841, %v4989
        %v4991 = vpop.f32.mrf.mxu0
        %v4992 = vadd.f32 %v4843, %v4991
        %4993 = vmatmul.bf16.gmra.mxu0 %v3629
        %v4994 = vpop.f32.mrf.mxu0
        %v4995 = vadd.f32 %v4846, %v4994
        %v4996 = vpop.f32.mrf.mxu0
        %v4997 = vadd.f32 %v4848, %v4996
        %4998 = vmatmul.bf16.gmra.mxu0 %v3638
        %v4999 = vpop.f32.mrf.mxu0
        %v5000 = vadd.f32 %v4851, %v4999
        %v5001 = vpop.f32.mrf.mxu0
        %v5002 = vadd.f32 %v4853, %v5001
        %5003 = vmatmul.bf16.gmra.mxu0 %v3647
        %v5004 = vpop.f32.mrf.mxu0
        %v5005 = vadd.f32 %v4856, %v5004
        %v5006 = vpop.f32.mrf.mxu0
        %v5007 = vadd.f32 %v4858, %v5006
        %5008 = vmatmul.bf16.gmra.mxu0 %v3656
        %v5009 = vpop.f32.mrf.mxu0
        %v5010 = vadd.f32 %v4861, %v5009
        %v5011 = vpop.f32.mrf.mxu0
        %v5012 = vadd.f32 %v4863, %v5011
        %5013 = vmatmul.bf16.gmra.mxu0 %v3665
        %v5014 = vpop.f32.mrf.mxu0
        %v5015 = vadd.f32 %v4866, %v5014
        %v5016 = vpop.f32.mrf.mxu0
        %v5017 = vadd.f32 %v4868, %v5016
        %5018 = vmatmul.bf16.gmra.mxu0 %v3674
        %v5019 = vpop.f32.mrf.mxu0
        %v5020 = vadd.f32 %v4871, %v5019
        %v5021 = vpop.f32.mrf.mxu0
        %v5022 = vadd.f32 %v4873, %v5021
        %5023 = vmatmul.bf16.gmra.mxu0 %v3683
        %v5024 = vpop.f32.mrf.mxu0
        %v5025 = vadd.f32 %v4876, %v5024
        %v5026 = vpop.f32.mrf.mxu0
        %v5027 = vadd.f32 %v4878, %v5026
        %5028 = vmatmul.bf16.gmra.mxu0 %v3692
        %v5029 = vpop.f32.mrf.mxu0
        %v5030 = vadd.f32 %v4881, %v5029
        %v5031 = vpop.f32.mrf.mxu0
        %v5032 = vadd.f32 %v4883, %v5031
        %5033 = vmatmul.bf16.gmra.mxu0 %v3701
        %v5034 = vpop.f32.mrf.mxu0
        %v5035 = vadd.f32 %v4886, %v5034
        %v5036 = vpop.f32.mrf.mxu0
        %v5037 = vadd.f32 %v4888, %v5036
        %5038 = vmatmul.bf16.gmra.mxu0 %v3710
        %v5039 = vpop.f32.mrf.mxu0
        %v5040 = vadd.f32 %v4891, %v5039
        %v5041 = vpop.f32.mrf.mxu0
        %v5042 = vadd.f32 %v4893, %v5041
        %5043 = vmatmul.bf16.gmra.mxu0 %v3719
        %v5044 = vpop.f32.mrf.mxu0
        %v5045 = vadd.f32 %v4896, %v5044
        %v5046 = vpop.f32.mrf.mxu0
        %v5047 = vadd.f32 %v4898, %v5046
        %5048 = vmatmul.bf16.gmra.mxu0 %v3728
        %v5049 = vpop.f32.mrf.mxu0
        %v5050 = vadd.f32 %v4901, %v5049
        %v5051 = vpop.f32.mrf.mxu0
        %v5052 = vadd.f32 %v4903, %v5051
        %5053 = vmatmul.bf16.gmra.mxu0 %v3737
        %v5054 = vpop.f32.mrf.mxu0
        %v5055 = vadd.f32 %v4906, %v5054
        %v5056 = vpop.f32.mrf.mxu0
        %v5057 = vadd.f32 %v4908, %v5056
        %5058 = vmatmul.bf16.gmra.mxu0 %v3746
        %v5059 = vpop.f32.mrf.mxu0
        %v5060 = vadd.f32 %v4911, %v5059
        %v5061 = vpop.f32.mrf.mxu0
        %v5062 = vadd.f32 %v4913, %v5061
        %5063 = vmatmul.bf16.gmra.mxu0 %v3755
        %v5064 = vpop.f32.mrf.mxu0
        %v5065 = vadd.f32 %v4916, %v5064
        %v5066 = vpop.f32.mrf.mxu0
        %v5067 = vadd.f32 %v4918, %v5066
        %5068 = vmatmul.bf16.gmra.mxu0 %v3764
        %v5069 = vpop.f32.mrf.mxu0
        %v5070 = vadd.f32 %v4921, %v5069
        %v5071 = vpop.f32.mrf.mxu0
        %v5072 = vadd.f32 %v4923, %v5071
        %5073 = vmatmul.bf16.gmra.mxu0 %v3773
        %v5074 = vpop.f32.mrf.mxu0
        %v5075 = vadd.f32 %v4926, %v5074
        %v5076 = vpop.f32.mrf.mxu0
        %v5077 = vadd.f32 %v4928, %v5076
        %5078 = vmatmul.bf16.gmra.mxu0 %v3782
        %v5079 = vpop.f32.mrf.mxu0
        %v5080 = vadd.f32 %v4931, %v5079
        %v5081 = vpop.f32.mrf.mxu0
        %v5082 = vadd.f32 %v4933, %v5081
        %5083 = vmatmul.bf16.gmra.mxu0 %v3791
        %v5084 = vpop.f32.mrf.mxu0
        %v5085 = vadd.f32 %v4936, %v5084
        %v5086 = vpop.f32.mrf.mxu0
        %v5087 = vadd.f32 %v4938, %v5086
        %5088 = vmatmul.bf16.gmra.mxu0 %v3800
        %v5089 = vpop.f32.mrf.mxu0
        %v5090 = vadd.f32 %v4941, %v5089
        %v5091 = vpop.f32.mrf.mxu0
        %v5092 = vadd.f32 %v4943, %v5091
        %5093 = vmatmul.bf16.gmra.mxu0 %v3809
        %v5094 = vpop.f32.mrf.mxu0
        %v5095 = vadd.f32 %v4946, %v5094
        %v5096 = vpop.f32.mrf.mxu0
        %v5097 = vadd.f32 %v4948, %v5096
        %5098 = vmatmul.bf16.gmra.mxu0 %v3818
        %v5099 = vpop.f32.mrf.mxu0
        %v5100 = vadd.f32 %v4951, %v5099
        %v5101 = vpop.f32.mrf.mxu0
        %v5102 = vadd.f32 %v4953, %v5101
        %5103 = vdwg.mxu0
        %5104 = vmatpush.bf16.msra.mxu0 %v4403
        %5105 = vmatpush.bf16.msra.mxu0 %v4402
        %5106 = vmatpush.bf16.msra.mxu0 %v4401
        %5107 = vmatpush.bf16.msra.mxu0 %v4400
        %5108 = vmatpush.bf16.msra.mxu0 %v4399
        %5109 = vmatpush.bf16.msra.mxu0 %v4398
        %5110 = vmatpush.bf16.msra.mxu0 %v4397
        %5111 = vmatpush.bf16.msra.mxu0 %v4396
        %5112 = vmatmul.bf16.gmra.mxu0 %v3576
        %v5113 = vpop.f32.mrf.mxu0
        %v5114 = vadd.f32 %v4965, %v5113
        %v5115 = vpop.f32.mrf.mxu0
        %v5116 = vadd.f32 %v4967, %v5115
        %5117 = vmatmul.bf16.gmra.mxu0 %v3585
        %v5118 = vpop.f32.mrf.mxu0
        %v5119 = vadd.f32 %v4970, %v5118
        %v5120 = vpop.f32.mrf.mxu0
        %v5121 = vadd.f32 %v4972, %v5120
        %5122 = vmatmul.bf16.gmra.mxu0 %v3594
        %v5123 = vpop.f32.mrf.mxu0
        %v5124 = vadd.f32 %v4975, %v5123
        %v5125 = vpop.f32.mrf.mxu0
        %v5126 = vadd.f32 %v4977, %v5125
        %5127 = vmatmul.bf16.gmra.mxu0 %v3603
        %v5128 = vpop.f32.mrf.mxu0
        %v5129 = vadd.f32 %v4980, %v5128
        %v5130 = vpop.f32.mrf.mxu0
        %v5131 = vadd.f32 %v4982, %v5130
        %5132 = vmatmul.bf16.gmra.mxu0 %v3612
        %v5133 = vpop.f32.mrf.mxu0
        %v5134 = vadd.f32 %v4985, %v5133
        %v5135 = vpop.f32.mrf.mxu0
        %v5136 = vadd.f32 %v4987, %v5135
        %5137 = vmatmul.bf16.gmra.mxu0 %v3621
        %v5138 = vpop.f32.mrf.mxu0
        %v5139 = vadd.f32 %v4990, %v5138
        %v5140 = vpop.f32.mrf.mxu0
        %v5141 = vadd.f32 %v4992, %v5140
        %5142 = vmatmul.bf16.gmra.mxu0 %v3630
        %v5143 = vpop.f32.mrf.mxu0
        %v5144 = vadd.f32 %v4995, %v5143
        %v5145 = vpop.f32.mrf.mxu0
        %v5146 = vadd.f32 %v4997, %v5145
        %5147 = vmatmul.bf16.gmra.mxu0 %v3639
        %v5148 = vpop.f32.mrf.mxu0
        %v5149 = vadd.f32 %v5000, %v5148
        %v5150 = vpop.f32.mrf.mxu0
        %v5151 = vadd.f32 %v5002, %v5150
        %5152 = vmatmul.bf16.gmra.mxu0 %v3648
        %v5153 = vpop.f32.mrf.mxu0
        %v5154 = vadd.f32 %v5005, %v5153
        %v5155 = vpop.f32.mrf.mxu0
        %v5156 = vadd.f32 %v5007, %v5155
        %5157 = vmatmul.bf16.gmra.mxu0 %v3657
        %v5158 = vpop.f32.mrf.mxu0
        %v5159 = vadd.f32 %v5010, %v5158
        %v5160 = vpop.f32.mrf.mxu0
        %v5161 = vadd.f32 %v5012, %v5160
        %5162 = vmatmul.bf16.gmra.mxu0 %v3666
        %v5163 = vpop.f32.mrf.mxu0
        %v5164 = vadd.f32 %v5015, %v5163
        %v5165 = vpop.f32.mrf.mxu0
        %v5166 = vadd.f32 %v5017, %v5165
        %5167 = vmatmul.bf16.gmra.mxu0 %v3675
        %v5168 = vpop.f32.mrf.mxu0
        %v5169 = vadd.f32 %v5020, %v5168
        %v5170 = vpop.f32.mrf.mxu0
        %v5171 = vadd.f32 %v5022, %v5170
        %5172 = vmatmul.bf16.gmra.mxu0 %v3684
        %v5173 = vpop.f32.mrf.mxu0
        %v5174 = vadd.f32 %v5025, %v5173
        %v5175 = vpop.f32.mrf.mxu0
        %v5176 = vadd.f32 %v5027, %v5175
        %5177 = vmatmul.bf16.gmra.mxu0 %v3693
        %v5178 = vpop.f32.mrf.mxu0
        %v5179 = vadd.f32 %v5030, %v5178
        %v5180 = vpop.f32.mrf.mxu0
        %v5181 = vadd.f32 %v5032, %v5180
        %5182 = vmatmul.bf16.gmra.mxu0 %v3702
        %v5183 = vpop.f32.mrf.mxu0
        %v5184 = vadd.f32 %v5035, %v5183
        %v5185 = vpop.f32.mrf.mxu0
        %v5186 = vadd.f32 %v5037, %v5185
        %5187 = vmatmul.bf16.gmra.mxu0 %v3711
        %v5188 = vpop.f32.mrf.mxu0
        %v5189 = vadd.f32 %v5040, %v5188
        %v5190 = vpop.f32.mrf.mxu0
        %v5191 = vadd.f32 %v5042, %v5190
        %5192 = vmatmul.bf16.gmra.mxu0 %v3720
        %v5193 = vpop.f32.mrf.mxu0
        %v5194 = vadd.f32 %v5045, %v5193
        %v5195 = vpop.f32.mrf.mxu0
        %v5196 = vadd.f32 %v5047, %v5195
        %5197 = vmatmul.bf16.gmra.mxu0 %v3729
        %v5198 = vpop.f32.mrf.mxu0
        %v5199 = vadd.f32 %v5050, %v5198
        %v5200 = vpop.f32.mrf.mxu0
        %v5201 = vadd.f32 %v5052, %v5200
        %5202 = vmatmul.bf16.gmra.mxu0 %v3738
        %v5203 = vpop.f32.mrf.mxu0
        %v5204 = vadd.f32 %v5055, %v5203
        %v5205 = vpop.f32.mrf.mxu0
        %v5206 = vadd.f32 %v5057, %v5205
        %5207 = vmatmul.bf16.gmra.mxu0 %v3747
        %v5208 = vpop.f32.mrf.mxu0
        %v5209 = vadd.f32 %v5060, %v5208
        %v5210 = vpop.f32.mrf.mxu0
        %v5211 = vadd.f32 %v5062, %v5210
        %5212 = vmatmul.bf16.gmra.mxu0 %v3756
        %v5213 = vpop.f32.mrf.mxu0
        %v5214 = vadd.f32 %v5065, %v5213
        %v5215 = vpop.f32.mrf.mxu0
        %v5216 = vadd.f32 %v5067, %v5215
        %5217 = vmatmul.bf16.gmra.mxu0 %v3765
        %v5218 = vpop.f32.mrf.mxu0
        %v5219 = vadd.f32 %v5070, %v5218
        %v5220 = vpop.f32.mrf.mxu0
        %v5221 = vadd.f32 %v5072, %v5220
        %5222 = vmatmul.bf16.gmra.mxu0 %v3774
        %v5223 = vpop.f32.mrf.mxu0
        %v5224 = vadd.f32 %v5075, %v5223
        %v5225 = vpop.f32.mrf.mxu0
        %v5226 = vadd.f32 %v5077, %v5225
        %5227 = vmatmul.bf16.gmra.mxu0 %v3783
        %v5228 = vpop.f32.mrf.mxu0
        %v5229 = vadd.f32 %v5080, %v5228
        %v5230 = vpop.f32.mrf.mxu0
        %v5231 = vadd.f32 %v5082, %v5230
        %5232 = vmatmul.bf16.gmra.mxu0 %v3792
        %v5233 = vpop.f32.mrf.mxu0
        %v5234 = vadd.f32 %v5085, %v5233
        %v5235 = vpop.f32.mrf.mxu0
        %v5236 = vadd.f32 %v5087, %v5235
        %5237 = vmatmul.bf16.gmra.mxu0 %v3801
        %v5238 = vpop.f32.mrf.mxu0
        %v5239 = vadd.f32 %v5090, %v5238
        %v5240 = vpop.f32.mrf.mxu0
        %v5241 = vadd.f32 %v5092, %v5240
        %5242 = vmatmul.bf16.gmra.mxu0 %v3810
        %v5243 = vpop.f32.mrf.mxu0
        %v5244 = vadd.f32 %v5095, %v5243
        %v5245 = vpop.f32.mrf.mxu0
        %v5246 = vadd.f32 %v5097, %v5245
        %5247 = vmatmul.bf16.gmra.mxu0 %v3819
        %v5248 = vpop.f32.mrf.mxu0
        %v5249 = vadd.f32 %v5100, %v5248
        %v5250 = vpop.f32.mrf.mxu0
        %v5251 = vadd.f32 %v5102, %v5250
        %5252 = vdwg.mxu0
        %5253 = vmatpush.bf16.msra.mxu0 %v4411
        %5254 = vmatpush.bf16.msra.mxu0 %v4410
        %5255 = vmatpush.bf16.msra.mxu0 %v4409
        %5256 = vmatpush.bf16.msra.mxu0 %v4408
        %5257 = vmatpush.bf16.msra.mxu0 %v4407
        %5258 = vmatpush.bf16.msra.mxu0 %v4406
        %5259 = vmatpush.bf16.msra.mxu0 %v4405
        %5260 = vmatpush.bf16.msra.mxu0 %v4404
        %5261 = vmatmul.bf16.gmra.mxu0 %v3577
        %v5262 = vpop.f32.mrf.mxu0
        %v5263 = vadd.f32 %v5114, %v5262
        %v5264 = vpop.f32.mrf.mxu0
        %v5265 = vadd.f32 %v5116, %v5264
        %5266 = vmatmul.bf16.gmra.mxu0 %v3586
        %v5267 = vpop.f32.mrf.mxu0
        %v5268 = vadd.f32 %v5119, %v5267
        %v5269 = vpop.f32.mrf.mxu0
        %v5270 = vadd.f32 %v5121, %v5269
        %5271 = vmatmul.bf16.gmra.mxu0 %v3595
        %v5272 = vpop.f32.mrf.mxu0
        %v5273 = vadd.f32 %v5124, %v5272
        %v5274 = vpop.f32.mrf.mxu0
        %v5275 = vadd.f32 %v5126, %v5274
        %5276 = vmatmul.bf16.gmra.mxu0 %v3604
        %v5277 = vpop.f32.mrf.mxu0
        %v5278 = vadd.f32 %v5129, %v5277
        %v5279 = vpop.f32.mrf.mxu0
        %v5280 = vadd.f32 %v5131, %v5279
        %5281 = vmatmul.bf16.gmra.mxu0 %v3613
        %v5282 = vpop.f32.mrf.mxu0
        %v5283 = vadd.f32 %v5134, %v5282
        %v5284 = vpop.f32.mrf.mxu0
        %v5285 = vadd.f32 %v5136, %v5284
        %5286 = vmatmul.bf16.gmra.mxu0 %v3622
        %v5287 = vpop.f32.mrf.mxu0
        %v5288 = vadd.f32 %v5139, %v5287
        %v5289 = vpop.f32.mrf.mxu0
        %v5290 = vadd.f32 %v5141, %v5289
        %5291 = vmatmul.bf16.gmra.mxu0 %v3631
        %v5292 = vpop.f32.mrf.mxu0
        %v5293 = vadd.f32 %v5144, %v5292
        %v5294 = vpop.f32.mrf.mxu0
        %v5295 = vadd.f32 %v5146, %v5294
        %5296 = vmatmul.bf16.gmra.mxu0 %v3640
        %v5297 = vpop.f32.mrf.mxu0
        %v5298 = vadd.f32 %v5149, %v5297
        %v5299 = vpop.f32.mrf.mxu0
        %v5300 = vadd.f32 %v5151, %v5299
        %5301 = vmatmul.bf16.gmra.mxu0 %v3649
        %v5302 = vpop.f32.mrf.mxu0
        %v5303 = vadd.f32 %v5154, %v5302
        %v5304 = vpop.f32.mrf.mxu0
        %v5305 = vadd.f32 %v5156, %v5304
        %5306 = vmatmul.bf16.gmra.mxu0 %v3658
        %v5307 = vpop.f32.mrf.mxu0
        %v5308 = vadd.f32 %v5159, %v5307
        %v5309 = vpop.f32.mrf.mxu0
        %v5310 = vadd.f32 %v5161, %v5309
        %5311 = vmatmul.bf16.gmra.mxu0 %v3667
        %v5312 = vpop.f32.mrf.mxu0
        %v5313 = vadd.f32 %v5164, %v5312
        %v5314 = vpop.f32.mrf.mxu0
        %v5315 = vadd.f32 %v5166, %v5314
        %5316 = vmatmul.bf16.gmra.mxu0 %v3676
        %v5317 = vpop.f32.mrf.mxu0
        %v5318 = vadd.f32 %v5169, %v5317
        %v5319 = vpop.f32.mrf.mxu0
        %v5320 = vadd.f32 %v5171, %v5319
        %5321 = vmatmul.bf16.gmra.mxu0 %v3685
        %v5322 = vpop.f32.mrf.mxu0
        %v5323 = vadd.f32 %v5174, %v5322
        %v5324 = vpop.f32.mrf.mxu0
        %v5325 = vadd.f32 %v5176, %v5324
        %5326 = vmatmul.bf16.gmra.mxu0 %v3694
        %v5327 = vpop.f32.mrf.mxu0
        %v5328 = vadd.f32 %v5179, %v5327
        %v5329 = vpop.f32.mrf.mxu0
        %v5330 = vadd.f32 %v5181, %v5329
        %5331 = vmatmul.bf16.gmra.mxu0 %v3703
        %v5332 = vpop.f32.mrf.mxu0
        %v5333 = vadd.f32 %v5184, %v5332
        %v5334 = vpop.f32.mrf.mxu0
        %v5335 = vadd.f32 %v5186, %v5334
        %5336 = vmatmul.bf16.gmra.mxu0 %v3712
        %v5337 = vpop.f32.mrf.mxu0
        %v5338 = vadd.f32 %v5189, %v5337
        %v5339 = vpop.f32.mrf.mxu0
        %v5340 = vadd.f32 %v5191, %v5339
        %5341 = vmatmul.bf16.gmra.mxu0 %v3721
        %v5342 = vpop.f32.mrf.mxu0
        %v5343 = vadd.f32 %v5194, %v5342
        %v5344 = vpop.f32.mrf.mxu0
        %v5345 = vadd.f32 %v5196, %v5344
        %5346 = vmatmul.bf16.gmra.mxu0 %v3730
        %v5347 = vpop.f32.mrf.mxu0
        %v5348 = vadd.f32 %v5199, %v5347
        %v5349 = vpop.f32.mrf.mxu0
        %v5350 = vadd.f32 %v5201, %v5349
        %5351 = vmatmul.bf16.gmra.mxu0 %v3739
        %v5352 = vpop.f32.mrf.mxu0
        %v5353 = vadd.f32 %v5204, %v5352
        %v5354 = vpop.f32.mrf.mxu0
        %v5355 = vadd.f32 %v5206, %v5354
        %5356 = vmatmul.bf16.gmra.mxu0 %v3748
        %v5357 = vpop.f32.mrf.mxu0
        %v5358 = vadd.f32 %v5209, %v5357
        %v5359 = vpop.f32.mrf.mxu0
        %v5360 = vadd.f32 %v5211, %v5359
        %5361 = vmatmul.bf16.gmra.mxu0 %v3757
        %v5362 = vpop.f32.mrf.mxu0
        %v5363 = vadd.f32 %v5214, %v5362
        %v5364 = vpop.f32.mrf.mxu0
        %v5365 = vadd.f32 %v5216, %v5364
        %5366 = vmatmul.bf16.gmra.mxu0 %v3766
        %v5367 = vpop.f32.mrf.mxu0
        %v5368 = vadd.f32 %v5219, %v5367
        %v5369 = vpop.f32.mrf.mxu0
        %v5370 = vadd.f32 %v5221, %v5369
        %5371 = vmatmul.bf16.gmra.mxu0 %v3775
        %v5372 = vpop.f32.mrf.mxu0
        %v5373 = vadd.f32 %v5224, %v5372
        %v5374 = vpop.f32.mrf.mxu0
        %v5375 = vadd.f32 %v5226, %v5374
        %5376 = vmatmul.bf16.gmra.mxu0 %v3784
        %v5377 = vpop.f32.mrf.mxu0
        %v5378 = vadd.f32 %v5229, %v5377
        %v5379 = vpop.f32.mrf.mxu0
        %v5380 = vadd.f32 %v5231, %v5379
        %5381 = vmatmul.bf16.gmra.mxu0 %v3793
        %v5382 = vpop.f32.mrf.mxu0
        %v5383 = vadd.f32 %v5234, %v5382
        %v5384 = vpop.f32.mrf.mxu0
        %v5385 = vadd.f32 %v5236, %v5384
        %5386 = vmatmul.bf16.gmra.mxu0 %v3802
        %v5387 = vpop.f32.mrf.mxu0
        %v5388 = vadd.f32 %v5239, %v5387
        %v5389 = vpop.f32.mrf.mxu0
        %v5390 = vadd.f32 %v5241, %v5389
        %5391 = vmatmul.bf16.gmra.mxu0 %v3811
        %v5392 = vpop.f32.mrf.mxu0
        %v5393 = vadd.f32 %v5244, %v5392
        %v5394 = vpop.f32.mrf.mxu0
        %v5395 = vadd.f32 %v5246, %v5394
        %5396 = vmatmul.bf16.gmra.mxu0 %v3820
        %v5397 = vpop.f32.mrf.mxu0
        %v5398 = vadd.f32 %v5249, %v5397
        %v5399 = vpop.f32.mrf.mxu0
        %v5400 = vadd.f32 %v5251, %v5399
        %5401 = vdwg.mxu0
        %5402 = vmatpush.bf16.msra.mxu0 %v4419
        %5403 = vmatpush.bf16.msra.mxu0 %v4418
        %5404 = vmatpush.bf16.msra.mxu0 %v4417
        %5405 = vmatpush.bf16.msra.mxu0 %v4416
        %5406 = vmatpush.bf16.msra.mxu0 %v4415
        %5407 = vmatpush.bf16.msra.mxu0 %v4414
        %5408 = vmatpush.bf16.msra.mxu0 %v4413
        %5409 = vmatpush.bf16.msra.mxu0 %v4412
        %5410 = vmatmul.bf16.gmra.mxu0 %v3578
        %v5411 = vpop.f32.mrf.mxu0
        %v5412 = vadd.f32 %v5263, %v5411
        %v5413 = vpop.f32.mrf.mxu0
        %v5414 = vadd.f32 %v5265, %v5413
        %5415 = vmatmul.bf16.gmra.mxu0 %v3587
        %v5416 = vpop.f32.mrf.mxu0
        %v5417 = vadd.f32 %v5268, %v5416
        %v5418 = vpop.f32.mrf.mxu0
        %v5419 = vadd.f32 %v5270, %v5418
        %5420 = vmatmul.bf16.gmra.mxu0 %v3596
        %v5421 = vpop.f32.mrf.mxu0
        %v5422 = vadd.f32 %v5273, %v5421
        %v5423 = vpop.f32.mrf.mxu0
        %v5424 = vadd.f32 %v5275, %v5423
        %5425 = vmatmul.bf16.gmra.mxu0 %v3605
        %v5426 = vpop.f32.mrf.mxu0
        %v5427 = vadd.f32 %v5278, %v5426
        %v5428 = vpop.f32.mrf.mxu0
        %v5429 = vadd.f32 %v5280, %v5428
        %5430 = vmatmul.bf16.gmra.mxu0 %v3614
        %v5431 = vpop.f32.mrf.mxu0
        %v5432 = vadd.f32 %v5283, %v5431
        %v5433 = vpop.f32.mrf.mxu0
        %v5434 = vadd.f32 %v5285, %v5433
        %5435 = vmatmul.bf16.gmra.mxu0 %v3623
        %v5436 = vpop.f32.mrf.mxu0
        %v5437 = vadd.f32 %v5288, %v5436
        %v5438 = vpop.f32.mrf.mxu0
        %v5439 = vadd.f32 %v5290, %v5438
        %5440 = vmatmul.bf16.gmra.mxu0 %v3632
        %v5441 = vpop.f32.mrf.mxu0
        %v5442 = vadd.f32 %v5293, %v5441
        %v5443 = vpop.f32.mrf.mxu0
        %v5444 = vadd.f32 %v5295, %v5443
        %5445 = vmatmul.bf16.gmra.mxu0 %v3641
        %v5446 = vpop.f32.mrf.mxu0
        %v5447 = vadd.f32 %v5298, %v5446
        %v5448 = vpop.f32.mrf.mxu0
        %v5449 = vadd.f32 %v5300, %v5448
        %5450 = vmatmul.bf16.gmra.mxu0 %v3650
        %v5451 = vpop.f32.mrf.mxu0
        %v5452 = vadd.f32 %v5303, %v5451
        %v5453 = vpop.f32.mrf.mxu0
        %v5454 = vadd.f32 %v5305, %v5453
        %5455 = vmatmul.bf16.gmra.mxu0 %v3659
        %v5456 = vpop.f32.mrf.mxu0
        %v5457 = vadd.f32 %v5308, %v5456
        %v5458 = vpop.f32.mrf.mxu0
        %v5459 = vadd.f32 %v5310, %v5458
        %5460 = vmatmul.bf16.gmra.mxu0 %v3668
        %v5461 = vpop.f32.mrf.mxu0
        %v5462 = vadd.f32 %v5313, %v5461
        %v5463 = vpop.f32.mrf.mxu0
        %v5464 = vadd.f32 %v5315, %v5463
        %5465 = vmatmul.bf16.gmra.mxu0 %v3677
        %v5466 = vpop.f32.mrf.mxu0
        %v5467 = vadd.f32 %v5318, %v5466
        %v5468 = vpop.f32.mrf.mxu0
        %v5469 = vadd.f32 %v5320, %v5468
        %5470 = vmatmul.bf16.gmra.mxu0 %v3686
        %v5471 = vpop.f32.mrf.mxu0
        %v5472 = vadd.f32 %v5323, %v5471
        %v5473 = vpop.f32.mrf.mxu0
        %v5474 = vadd.f32 %v5325, %v5473
        %5475 = vmatmul.bf16.gmra.mxu0 %v3695
        %v5476 = vpop.f32.mrf.mxu0
        %v5477 = vadd.f32 %v5328, %v5476
        %v5478 = vpop.f32.mrf.mxu0
        %v5479 = vadd.f32 %v5330, %v5478
        %5480 = vmatmul.bf16.gmra.mxu0 %v3704
        %v5481 = vpop.f32.mrf.mxu0
        %v5482 = vadd.f32 %v5333, %v5481
        %v5483 = vpop.f32.mrf.mxu0
        %v5484 = vadd.f32 %v5335, %v5483
        %5485 = vmatmul.bf16.gmra.mxu0 %v3713
        %v5486 = vpop.f32.mrf.mxu0
        %v5487 = vadd.f32 %v5338, %v5486
        %v5488 = vpop.f32.mrf.mxu0
        %v5489 = vadd.f32 %v5340, %v5488
        %5490 = vmatmul.bf16.gmra.mxu0 %v3722
        %v5491 = vpop.f32.mrf.mxu0
        %v5492 = vadd.f32 %v5343, %v5491
        %v5493 = vpop.f32.mrf.mxu0
        %v5494 = vadd.f32 %v5345, %v5493
        %5495 = vmatmul.bf16.gmra.mxu0 %v3731
        %v5496 = vpop.f32.mrf.mxu0
        %v5497 = vadd.f32 %v5348, %v5496
        %v5498 = vpop.f32.mrf.mxu0
        %v5499 = vadd.f32 %v5350, %v5498
        %5500 = vmatmul.bf16.gmra.mxu0 %v3740
        %v5501 = vpop.f32.mrf.mxu0
        %v5502 = vadd.f32 %v5353, %v5501
        %v5503 = vpop.f32.mrf.mxu0
        %v5504 = vadd.f32 %v5355, %v5503
        %5505 = vmatmul.bf16.gmra.mxu0 %v3749
        %v5506 = vpop.f32.mrf.mxu0
        %v5507 = vadd.f32 %v5358, %v5506
        %v5508 = vpop.f32.mrf.mxu0
        %v5509 = vadd.f32 %v5360, %v5508
        %5510 = vmatmul.bf16.gmra.mxu0 %v3758
        %v5511 = vpop.f32.mrf.mxu0
        %v5512 = vadd.f32 %v5363, %v5511
        %v5513 = vpop.f32.mrf.mxu0
        %v5514 = vadd.f32 %v5365, %v5513
        %5515 = vmatmul.bf16.gmra.mxu0 %v3767
        %v5516 = vpop.f32.mrf.mxu0
        %v5517 = vadd.f32 %v5368, %v5516
        %v5518 = vpop.f32.mrf.mxu0
        %v5519 = vadd.f32 %v5370, %v5518
        %5520 = vmatmul.bf16.gmra.mxu0 %v3776
        %v5521 = vpop.f32.mrf.mxu0
        %v5522 = vadd.f32 %v5373, %v5521
        %v5523 = vpop.f32.mrf.mxu0
        %v5524 = vadd.f32 %v5375, %v5523
        %5525 = vmatmul.bf16.gmra.mxu0 %v3785
        %v5526 = vpop.f32.mrf.mxu0
        %v5527 = vadd.f32 %v5378, %v5526
        %v5528 = vpop.f32.mrf.mxu0
        %v5529 = vadd.f32 %v5380, %v5528
        %5530 = vmatmul.bf16.gmra.mxu0 %v3794
        %v5531 = vpop.f32.mrf.mxu0
        %v5532 = vadd.f32 %v5383, %v5531
        %v5533 = vpop.f32.mrf.mxu0
        %v5534 = vadd.f32 %v5385, %v5533
        %5535 = vmatmul.bf16.gmra.mxu0 %v3803
        %v5536 = vpop.f32.mrf.mxu0
        %v5537 = vadd.f32 %v5388, %v5536
        %v5538 = vpop.f32.mrf.mxu0
        %v5539 = vadd.f32 %v5390, %v5538
        %5540 = vmatmul.bf16.gmra.mxu0 %v3812
        %v5541 = vpop.f32.mrf.mxu0
        %v5542 = vadd.f32 %v5393, %v5541
        %v5543 = vpop.f32.mrf.mxu0
        %v5544 = vadd.f32 %v5395, %v5543
        %5545 = vmatmul.bf16.gmra.mxu0 %v3821
        %v5546 = vpop.f32.mrf.mxu0
        %v5547 = vadd.f32 %v5398, %v5546
        %v5548 = vpop.f32.mrf.mxu0
        %v5549 = vadd.f32 %v5400, %v5548
        %5550 = vdwg.mxu0
        %5551 = vmatpush.bf16.msra.mxu0 %v4427
        %5552 = vmatpush.bf16.msra.mxu0 %v4426
        %5553 = vmatpush.bf16.msra.mxu0 %v4425
        %5554 = vmatpush.bf16.msra.mxu0 %v4424
        %5555 = vmatpush.bf16.msra.mxu0 %v4423
        %5556 = vmatpush.bf16.msra.mxu0 %v4422
        %5557 = vmatpush.bf16.msra.mxu0 %v4421
        %5558 = vmatpush.bf16.msra.mxu0 %v4420
        %5559 = vmatmul.bf16.gmra.mxu0 %v3579
        %v5560 = vpop.f32.mrf.mxu0
        %v5561 = vadd.f32 %v5412, %v5560
        %v5562 = vpop.f32.mrf.mxu0
        %v5563 = vadd.f32 %v5414, %v5562
        %5564 = vmatmul.bf16.gmra.mxu0 %v3588
        %v5565 = vpop.f32.mrf.mxu0
        %v5566 = vadd.f32 %v5417, %v5565
        %v5567 = vpop.f32.mrf.mxu0
        %v5568 = vadd.f32 %v5419, %v5567
        %5569 = vmatmul.bf16.gmra.mxu0 %v3597
        %v5570 = vpop.f32.mrf.mxu0
        %v5571 = vadd.f32 %v5422, %v5570
        %v5572 = vpop.f32.mrf.mxu0
        %v5573 = vadd.f32 %v5424, %v5572
        %5574 = vmatmul.bf16.gmra.mxu0 %v3606
        %v5575 = vpop.f32.mrf.mxu0
        %v5576 = vadd.f32 %v5427, %v5575
        %v5577 = vpop.f32.mrf.mxu0
        %v5578 = vadd.f32 %v5429, %v5577
        %5579 = vmatmul.bf16.gmra.mxu0 %v3615
        %v5580 = vpop.f32.mrf.mxu0
        %v5581 = vadd.f32 %v5432, %v5580
        %v5582 = vpop.f32.mrf.mxu0
        %v5583 = vadd.f32 %v5434, %v5582
        %5584 = vmatmul.bf16.gmra.mxu0 %v3624
        %v5585 = vpop.f32.mrf.mxu0
        %v5586 = vadd.f32 %v5437, %v5585
        %v5587 = vpop.f32.mrf.mxu0
        %v5588 = vadd.f32 %v5439, %v5587
        %5589 = vmatmul.bf16.gmra.mxu0 %v3633
        %v5590 = vpop.f32.mrf.mxu0
        %v5591 = vadd.f32 %v5442, %v5590
        %v5592 = vpop.f32.mrf.mxu0
        %v5593 = vadd.f32 %v5444, %v5592
        %5594 = vmatmul.bf16.gmra.mxu0 %v3642
        %v5595 = vpop.f32.mrf.mxu0
        %v5596 = vadd.f32 %v5447, %v5595
        %v5597 = vpop.f32.mrf.mxu0
        %v5598 = vadd.f32 %v5449, %v5597
        %5599 = vmatmul.bf16.gmra.mxu0 %v3651
        %v5600 = vpop.f32.mrf.mxu0
        %v5601 = vadd.f32 %v5452, %v5600
        %v5602 = vpop.f32.mrf.mxu0
        %v5603 = vadd.f32 %v5454, %v5602
        %5604 = vmatmul.bf16.gmra.mxu0 %v3660
        %v5605 = vpop.f32.mrf.mxu0
        %v5606 = vadd.f32 %v5457, %v5605
        %v5607 = vpop.f32.mrf.mxu0
        %v5608 = vadd.f32 %v5459, %v5607
        %5609 = vmatmul.bf16.gmra.mxu0 %v3669
        %v5610 = vpop.f32.mrf.mxu0
        %v5611 = vadd.f32 %v5462, %v5610
        %v5612 = vpop.f32.mrf.mxu0
        %v5613 = vadd.f32 %v5464, %v5612
        %5614 = vmatmul.bf16.gmra.mxu0 %v3678
        %v5615 = vpop.f32.mrf.mxu0
        %v5616 = vadd.f32 %v5467, %v5615
        %v5617 = vpop.f32.mrf.mxu0
        %v5618 = vadd.f32 %v5469, %v5617
        %5619 = vmatmul.bf16.gmra.mxu0 %v3687
        %v5620 = vpop.f32.mrf.mxu0
        %v5621 = vadd.f32 %v5472, %v5620
        %v5622 = vpop.f32.mrf.mxu0
        %v5623 = vadd.f32 %v5474, %v5622
        %5624 = vmatmul.bf16.gmra.mxu0 %v3696
        %v5625 = vpop.f32.mrf.mxu0
        %v5626 = vadd.f32 %v5477, %v5625
        %v5627 = vpop.f32.mrf.mxu0
        %v5628 = vadd.f32 %v5479, %v5627
        %5629 = vmatmul.bf16.gmra.mxu0 %v3705
        %v5630 = vpop.f32.mrf.mxu0
        %v5631 = vadd.f32 %v5482, %v5630
        %v5632 = vpop.f32.mrf.mxu0
        %v5633 = vadd.f32 %v5484, %v5632
        %5634 = vmatmul.bf16.gmra.mxu0 %v3714
        %v5635 = vpop.f32.mrf.mxu0
        %v5636 = vadd.f32 %v5487, %v5635
        %v5637 = vpop.f32.mrf.mxu0
        %v5638 = vadd.f32 %v5489, %v5637
        %5639 = vmatmul.bf16.gmra.mxu0 %v3723
        %v5640 = vpop.f32.mrf.mxu0
        %v5641 = vadd.f32 %v5492, %v5640
        %v5642 = vpop.f32.mrf.mxu0
        %v5643 = vadd.f32 %v5494, %v5642
        %5644 = vmatmul.bf16.gmra.mxu0 %v3732
        %v5645 = vpop.f32.mrf.mxu0
        %v5646 = vadd.f32 %v5497, %v5645
        %v5647 = vpop.f32.mrf.mxu0
        %v5648 = vadd.f32 %v5499, %v5647
        %5649 = vmatmul.bf16.gmra.mxu0 %v3741
        %v5650 = vpop.f32.mrf.mxu0
        %v5651 = vadd.f32 %v5502, %v5650
        %v5652 = vpop.f32.mrf.mxu0
        %v5653 = vadd.f32 %v5504, %v5652
        %5654 = vmatmul.bf16.gmra.mxu0 %v3750
        %v5655 = vpop.f32.mrf.mxu0
        %v5656 = vadd.f32 %v5507, %v5655
        %v5657 = vpop.f32.mrf.mxu0
        %v5658 = vadd.f32 %v5509, %v5657
        %5659 = vmatmul.bf16.gmra.mxu0 %v3759
        %v5660 = vpop.f32.mrf.mxu0
        %v5661 = vadd.f32 %v5512, %v5660
        %v5662 = vpop.f32.mrf.mxu0
        %v5663 = vadd.f32 %v5514, %v5662
        %5664 = vmatmul.bf16.gmra.mxu0 %v3768
        %v5665 = vpop.f32.mrf.mxu0
        %v5666 = vadd.f32 %v5517, %v5665
        %v5667 = vpop.f32.mrf.mxu0
        %v5668 = vadd.f32 %v5519, %v5667
        %5669 = vmatmul.bf16.gmra.mxu0 %v3777
        %v5670 = vpop.f32.mrf.mxu0
        %v5671 = vadd.f32 %v5522, %v5670
        %v5672 = vpop.f32.mrf.mxu0
        %v5673 = vadd.f32 %v5524, %v5672
        %5674 = vmatmul.bf16.gmra.mxu0 %v3786
        %v5675 = vpop.f32.mrf.mxu0
        %v5676 = vadd.f32 %v5527, %v5675
        %v5677 = vpop.f32.mrf.mxu0
        %v5678 = vadd.f32 %v5529, %v5677
        %5679 = vmatmul.bf16.gmra.mxu0 %v3795
        %v5680 = vpop.f32.mrf.mxu0
        %v5681 = vadd.f32 %v5532, %v5680
        %v5682 = vpop.f32.mrf.mxu0
        %v5683 = vadd.f32 %v5534, %v5682
        %5684 = vmatmul.bf16.gmra.mxu0 %v3804
        %v5685 = vpop.f32.mrf.mxu0
        %v5686 = vadd.f32 %v5537, %v5685
        %v5687 = vpop.f32.mrf.mxu0
        %v5688 = vadd.f32 %v5539, %v5687
        %5689 = vmatmul.bf16.gmra.mxu0 %v3813
        %v5690 = vpop.f32.mrf.mxu0
        %v5691 = vadd.f32 %v5542, %v5690
        %v5692 = vpop.f32.mrf.mxu0
        %v5693 = vadd.f32 %v5544, %v5692
        %5694 = vmatmul.bf16.gmra.mxu0 %v3822
        %v5695 = vpop.f32.mrf.mxu0
        %v5696 = vadd.f32 %v5547, %v5695
        %v5697 = vpop.f32.mrf.mxu0
        %v5698 = vadd.f32 %v5549, %v5697
        %5699 = vdwg.mxu0
        %5700 = vmatpush.bf16.msra.mxu0 %v4435
        %5701 = vmatpush.bf16.msra.mxu0 %v4434
        %5702 = vmatpush.bf16.msra.mxu0 %v4433
        %5703 = vmatpush.bf16.msra.mxu0 %v4432
        %5704 = vmatpush.bf16.msra.mxu0 %v4431
        %5705 = vmatpush.bf16.msra.mxu0 %v4430
        %5706 = vmatpush.bf16.msra.mxu0 %v4429
        %5707 = vmatpush.bf16.msra.mxu0 %v4428
        %5708 = vmatmul.bf16.gmra.mxu0 %v3580
        %v5709 = vpop.f32.mrf.mxu0
        %v5710 = vadd.f32 %v5561, %v5709
        %v5711 = vpop.f32.mrf.mxu0
        %v5712 = vadd.f32 %v5563, %v5711
        %5713 = vmatmul.bf16.gmra.mxu0 %v3589
        %v5714 = vpop.f32.mrf.mxu0
        %v5715 = vadd.f32 %v5566, %v5714
        %v5716 = vpop.f32.mrf.mxu0
        %v5717 = vadd.f32 %v5568, %v5716
        %5718 = vmatmul.bf16.gmra.mxu0 %v3598
        %v5719 = vpop.f32.mrf.mxu0
        %v5720 = vadd.f32 %v5571, %v5719
        %v5721 = vpop.f32.mrf.mxu0
        %v5722 = vadd.f32 %v5573, %v5721
        %5723 = vmatmul.bf16.gmra.mxu0 %v3607
        %v5724 = vpop.f32.mrf.mxu0
        %v5725 = vadd.f32 %v5576, %v5724
        %v5726 = vpop.f32.mrf.mxu0
        %v5727 = vadd.f32 %v5578, %v5726
        %5728 = vmatmul.bf16.gmra.mxu0 %v3616
        %v5729 = vpop.f32.mrf.mxu0
        %v5730 = vadd.f32 %v5581, %v5729
        %v5731 = vpop.f32.mrf.mxu0
        %v5732 = vadd.f32 %v5583, %v5731
        %5733 = vmatmul.bf16.gmra.mxu0 %v3625
        %v5734 = vpop.f32.mrf.mxu0
        %v5735 = vadd.f32 %v5586, %v5734
        %v5736 = vpop.f32.mrf.mxu0
        %v5737 = vadd.f32 %v5588, %v5736
        %5738 = vmatmul.bf16.gmra.mxu0 %v3634
        %v5739 = vpop.f32.mrf.mxu0
        %v5740 = vadd.f32 %v5591, %v5739
        %v5741 = vpop.f32.mrf.mxu0
        %v5742 = vadd.f32 %v5593, %v5741
        %5743 = vmatmul.bf16.gmra.mxu0 %v3643
        %v5744 = vpop.f32.mrf.mxu0
        %v5745 = vadd.f32 %v5596, %v5744
        %v5746 = vpop.f32.mrf.mxu0
        %v5747 = vadd.f32 %v5598, %v5746
        %5748 = vmatmul.bf16.gmra.mxu0 %v3652
        %v5749 = vpop.f32.mrf.mxu0
        %v5750 = vadd.f32 %v5601, %v5749
        %v5751 = vpop.f32.mrf.mxu0
        %v5752 = vadd.f32 %v5603, %v5751
        %5753 = vmatmul.bf16.gmra.mxu0 %v3661
        %v5754 = vpop.f32.mrf.mxu0
        %v5755 = vadd.f32 %v5606, %v5754
        %v5756 = vpop.f32.mrf.mxu0
        %v5757 = vadd.f32 %v5608, %v5756
        %5758 = vmatmul.bf16.gmra.mxu0 %v3670
        %v5759 = vpop.f32.mrf.mxu0
        %v5760 = vadd.f32 %v5611, %v5759
        %v5761 = vpop.f32.mrf.mxu0
        %v5762 = vadd.f32 %v5613, %v5761
        %5763 = vmatmul.bf16.gmra.mxu0 %v3679
        %v5764 = vpop.f32.mrf.mxu0
        %v5765 = vadd.f32 %v5616, %v5764
        %v5766 = vpop.f32.mrf.mxu0
        %v5767 = vadd.f32 %v5618, %v5766
        %5768 = vmatmul.bf16.gmra.mxu0 %v3688
        %v5769 = vpop.f32.mrf.mxu0
        %v5770 = vadd.f32 %v5621, %v5769
        %v5771 = vpop.f32.mrf.mxu0
        %v5772 = vadd.f32 %v5623, %v5771
        %5773 = vmatmul.bf16.gmra.mxu0 %v3697
        %v5774 = vpop.f32.mrf.mxu0
        %v5775 = vadd.f32 %v5626, %v5774
        %v5776 = vpop.f32.mrf.mxu0
        %v5777 = vadd.f32 %v5628, %v5776
        %5778 = vmatmul.bf16.gmra.mxu0 %v3706
        %v5779 = vpop.f32.mrf.mxu0
        %v5780 = vadd.f32 %v5631, %v5779
        %v5781 = vpop.f32.mrf.mxu0
        %v5782 = vadd.f32 %v5633, %v5781
        %5783 = vmatmul.bf16.gmra.mxu0 %v3715
        %v5784 = vpop.f32.mrf.mxu0
        %v5785 = vadd.f32 %v5636, %v5784
        %v5786 = vpop.f32.mrf.mxu0
        %v5787 = vadd.f32 %v5638, %v5786
        %5788 = vmatmul.bf16.gmra.mxu0 %v3724
        %v5789 = vpop.f32.mrf.mxu0
        %v5790 = vadd.f32 %v5641, %v5789
        %v5791 = vpop.f32.mrf.mxu0
        %v5792 = vadd.f32 %v5643, %v5791
        %5793 = vmatmul.bf16.gmra.mxu0 %v3733
        %v5794 = vpop.f32.mrf.mxu0
        %v5795 = vadd.f32 %v5646, %v5794
        %v5796 = vpop.f32.mrf.mxu0
        %v5797 = vadd.f32 %v5648, %v5796
        %5798 = vmatmul.bf16.gmra.mxu0 %v3742
        %v5799 = vpop.f32.mrf.mxu0
        %v5800 = vadd.f32 %v5651, %v5799
        %v5801 = vpop.f32.mrf.mxu0
        %v5802 = vadd.f32 %v5653, %v5801
        %5803 = vmatmul.bf16.gmra.mxu0 %v3751
        %v5804 = vpop.f32.mrf.mxu0
        %v5805 = vadd.f32 %v5656, %v5804
        %v5806 = vpop.f32.mrf.mxu0
        %v5807 = vadd.f32 %v5658, %v5806
        %5808 = vmatmul.bf16.gmra.mxu0 %v3760
        %v5809 = vpop.f32.mrf.mxu0
        %v5810 = vadd.f32 %v5661, %v5809
        %v5811 = vpop.f32.mrf.mxu0
        %v5812 = vadd.f32 %v5663, %v5811
        %5813 = vmatmul.bf16.gmra.mxu0 %v3769
        %v5814 = vpop.f32.mrf.mxu0
        %v5815 = vadd.f32 %v5666, %v5814
        %v5816 = vpop.f32.mrf.mxu0
        %v5817 = vadd.f32 %v5668, %v5816
        %5818 = vmatmul.bf16.gmra.mxu0 %v3778
        %v5819 = vpop.f32.mrf.mxu0
        %v5820 = vadd.f32 %v5671, %v5819
        %v5821 = vpop.f32.mrf.mxu0
        %v5822 = vadd.f32 %v5673, %v5821
        %5823 = vmatmul.bf16.gmra.mxu0 %v3787
        %v5824 = vpop.f32.mrf.mxu0
        %v5825 = vadd.f32 %v5676, %v5824
        %v5826 = vpop.f32.mrf.mxu0
        %v5827 = vadd.f32 %v5678, %v5826
        %5828 = vmatmul.bf16.gmra.mxu0 %v3796
        %v5829 = vpop.f32.mrf.mxu0
        %v5830 = vadd.f32 %v5681, %v5829
        %v5831 = vpop.f32.mrf.mxu0
        %v5832 = vadd.f32 %v5683, %v5831
        %5833 = vmatmul.bf16.gmra.mxu0 %v3805
        %v5834 = vpop.f32.mrf.mxu0
        %v5835 = vadd.f32 %v5686, %v5834
        %v5836 = vpop.f32.mrf.mxu0
        %v5837 = vadd.f32 %v5688, %v5836
        %5838 = vmatmul.bf16.gmra.mxu0 %v3814
        %v5839 = vpop.f32.mrf.mxu0
        %v5840 = vadd.f32 %v5691, %v5839
        %v5841 = vpop.f32.mrf.mxu0
        %v5842 = vadd.f32 %v5693, %v5841
        %5843 = vmatmul.bf16.gmra.mxu0 %v3823
        %v5844 = vpop.f32.mrf.mxu0
        %v5845 = vadd.f32 %v5696, %v5844
        %v5846 = vpop.f32.mrf.mxu0
        %v5847 = vadd.f32 %v5698, %v5846
        %5848 = vdwg.mxu0
        %5849 = vst [vmem:[#allocation4] sm:$0xff] %v5710
        %5850 = vst [vmem:[#allocation4 + $0x8] sm:$0xff] %v5712
        %5851 = vst [vmem:[#allocation4 + $0x10] sm:$0xff] %v5715
        %5852 = vst [vmem:[#allocation4 + $0x18] sm:$0xff] %v5717
        %5853 = vst [vmem:[#allocation4 + $0x20] sm:$0xff] %v5720
        %5854 = vst [vmem:[#allocation4 + $0x28] sm:$0xff] %v5722
        %5855 = vst [vmem:[#allocation4 + $0x30] sm:$0xff] %v5725
        %5856 = vst [vmem:[#allocation4 + $0x38] sm:$0xff] %v5727
        %5857 = vst [vmem:[#allocation4 + $0x40] sm:$0xff] %v5730
        %5858 = vst [vmem:[#allocation4 + $0x48] sm:$0xff] %v5732
        %5859 = vst [vmem:[#allocation4 + $0x50] sm:$0xff] %v5735
        %5860 = vst [vmem:[#allocation4 + $0x58] sm:$0xff] %v5737
        %5861 = vst [vmem:[#allocation4 + $0x60] sm:$0xff] %v5740
        %5862 = vst [vmem:[#allocation4 + $0x68] sm:$0xff] %v5742
        %5863 = vst [vmem:[#allocation4 + $0x70] sm:$0xff] %v5745
        %5864 = vst [vmem:[#allocation4 + $0x78] sm:$0xff] %v5747
        %5865 = vst [vmem:[#allocation4 + $0x80] sm:$0xff] %v5750
        %5866 = vst [vmem:[#allocation4 + $0x88] sm:$0xff] %v5752
        %5867 = vst [vmem:[#allocation4 + $0x90] sm:$0xff] %v5755
        %5868 = vst [vmem:[#allocation4 + $0x98] sm:$0xff] %v5757
        %5869 = vst [vmem:[#allocation4 + $0xa0] sm:$0xff] %v5760
        %5870 = vst [vmem:[#allocation4 + $0xa8] sm:$0xff] %v5762
        %5871 = vst [vmem:[#allocation4 + $0xb0] sm:$0xff] %v5765
        %5872 = vst [vmem:[#allocation4 + $0xb8] sm:$0xff] %v5767
        %5873 = vst [vmem:[#allocation4 + $0xc0] sm:$0xff] %v5770
        %5874 = vst [vmem:[#allocation4 + $0xc8] sm:$0xff] %v5772
        %5875 = vst [vmem:[#allocation4 + $0xd0] sm:$0xff] %v5775
        %5876 = vst [vmem:[#allocation4 + $0xd8] sm:$0xff] %v5777
        %5877 = vst [vmem:[#allocation4 + $0xe0] sm:$0xff] %v5780
        %5878 = vst [vmem:[#allocation4 + $0xe8] sm:$0xff] %v5782
        %5879 = vst [vmem:[#allocation4 + $0xf0] sm:$0xff] %v5785
        %5880 = vst [vmem:[#allocation4 + $0xf8] sm:$0xff] %v5787
        %5881 = vst [vmem:[#allocation4 + $0x100] sm:$0xff] %v5790
        %5882 = vst [vmem:[#allocation4 + $0x108] sm:$0xff] %v5792
        %5883 = vst [vmem:[#allocation4 + $0x110] sm:$0xff] %v5795
        %5884 = vst [vmem:[#allocation4 + $0x118] sm:$0xff] %v5797
        %5885 = vst [vmem:[#allocation4 + $0x120] sm:$0xff] %v5800
        %5886 = vst [vmem:[#allocation4 + $0x128] sm:$0xff] %v5802
        %5887 = vst [vmem:[#allocation4 + $0x130] sm:$0xff] %v5805
        %5888 = vst [vmem:[#allocation4 + $0x138] sm:$0xff] %v5807
        %5889 = vst [vmem:[#allocation4 + $0x140] sm:$0xff] %v5810
        %5890 = vst [vmem:[#allocation4 + $0x148] sm:$0xff] %v5812
        %5891 = vst [vmem:[#allocation4 + $0x150] sm:$0xff] %v5815
        %5892 = vst [vmem:[#allocation4 + $0x158] sm:$0xff] %v5817
        %5893 = vst [vmem:[#allocation4 + $0x160] sm:$0xff] %v5820
        %5894 = vst [vmem:[#allocation4 + $0x168] sm:$0xff] %v5822
        %5895 = vst [vmem:[#allocation4 + $0x170] sm:$0xff] %v5825
        %5896 = vst [vmem:[#allocation4 + $0x178] sm:$0xff] %v5827
        %5897 = vst [vmem:[#allocation4 + $0x180] sm:$0xff] %v5830
        %5898 = vst [vmem:[#allocation4 + $0x188] sm:$0xff] %v5832
        %5899 = vst [vmem:[#allocation4 + $0x190] sm:$0xff] %v5835
        %5900 = vst [vmem:[#allocation4 + $0x198] sm:$0xff] %v5837
        %5901 = vst [vmem:[#allocation4 + $0x1a0] sm:$0xff] %v5840
        %5902 = vst [vmem:[#allocation4 + $0x1a8] sm:$0xff] %v5842
        %5903 = vst [vmem:[#allocation4 + $0x1b0] sm:$0xff] %v5845
        %5904 = vst [vmem:[#allocation4 + $0x1b8] sm:$0xff] %v5847
        %v5905 = vld [vmem:[#allocation4] sm:$0xff]
        %v5906 = vld [vmem:[#allocation4 + $0x8] sm:$0xff]
        %v5907 = vld [vmem:[#allocation4 + $0x10] sm:$0xff]
        %v5908 = vld [vmem:[#allocation4 + $0x18] sm:$0xff]
        %v5909 = vld [vmem:[#allocation4 + $0x20] sm:$0xff]
        %v5910 = vld [vmem:[#allocation4 + $0x28] sm:$0xff]
        %v5911 = vld [vmem:[#allocation4 + $0x30] sm:$0xff]
        %v5912 = vld [vmem:[#allocation4 + $0x38] sm:$0xff]
        %v5913 = vld [vmem:[#allocation4 + $0x40] sm:$0xff]
        %v5914 = vld [vmem:[#allocation4 + $0x48] sm:$0xff]
        %v5915 = vld [vmem:[#allocation4 + $0x50] sm:$0xff]
        %v5916 = vld [vmem:[#allocation4 + $0x58] sm:$0xff]
        %v5917 = vld [vmem:[#allocation4 + $0x60] sm:$0xff]
        %v5918 = vld [vmem:[#allocation4 + $0x68] sm:$0xff]
        %v5919 = vld [vmem:[#allocation4 + $0x70] sm:$0xff]
        %v5920 = vld [vmem:[#allocation4 + $0x78] sm:$0xff]
        %v5921 = vld [vmem:[#allocation4 + $0x80] sm:$0xff]
        %v5922 = vld [vmem:[#allocation4 + $0x88] sm:$0xff]
        %v5923 = vld [vmem:[#allocation4 + $0x90] sm:$0xff]
        %v5924 = vld [vmem:[#allocation4 + $0x98] sm:$0xff]
        %v5925 = vld [vmem:[#allocation4 + $0xa0] sm:$0xff]
        %v5926 = vld [vmem:[#allocation4 + $0xa8] sm:$0xff]
        %v5927 = vld [vmem:[#allocation4 + $0xb0] sm:$0xff]
        %v5928 = vld [vmem:[#allocation4 + $0xb8] sm:$0xff]
        %v5929 = vld [vmem:[#allocation4 + $0xc0] sm:$0xff]
        %v5930 = vld [vmem:[#allocation4 + $0xc8] sm:$0xff]
        %v5931 = vld [vmem:[#allocation4 + $0xd0] sm:$0xff]
        %v5932 = vld [vmem:[#allocation4 + $0xd8] sm:$0xff]
        %v5933 = vld [vmem:[#allocation4 + $0xe0] sm:$0xff]
        %v5934 = vld [vmem:[#allocation4 + $0xe8] sm:$0xff]
        %v5935 = vld [vmem:[#allocation4 + $0xf0] sm:$0xff]
        %v5936 = vld [vmem:[#allocation4 + $0xf8] sm:$0xff]
        %v5937 = vld [vmem:[#allocation4 + $0x100] sm:$0xff]
        %v5938 = vld [vmem:[#allocation4 + $0x108] sm:$0xff]
        %v5939 = vld [vmem:[#allocation4 + $0x110] sm:$0xff]
        %v5940 = vld [vmem:[#allocation4 + $0x118] sm:$0xff]
        %v5941 = vld [vmem:[#allocation4 + $0x120] sm:$0xff]
        %v5942 = vld [vmem:[#allocation4 + $0x128] sm:$0xff]
        %v5943 = vld [vmem:[#allocation4 + $0x130] sm:$0xff]
        %v5944 = vld [vmem:[#allocation4 + $0x138] sm:$0xff]
        %v5945 = vld [vmem:[#allocation4 + $0x140] sm:$0xff]
        %v5946 = vld [vmem:[#allocation4 + $0x148] sm:$0xff]
        %v5947 = vld [vmem:[#allocation4 + $0x150] sm:$0xff]
        %v5948 = vld [vmem:[#allocation4 + $0x158] sm:$0xff]
        %v5949 = vld [vmem:[#allocation4 + $0x160] sm:$0xff]
        %v5950 = vld [vmem:[#allocation4 + $0x168] sm:$0xff]
        %v5951 = vld [vmem:[#allocation4 + $0x170] sm:$0xff]
        %v5952 = vld [vmem:[#allocation4 + $0x178] sm:$0xff]
        %v5953 = vld [vmem:[#allocation4 + $0x180] sm:$0xff]
        %v5954 = vld [vmem:[#allocation4 + $0x188] sm:$0xff]
        %v5955 = vld [vmem:[#allocation4 + $0x190] sm:$0xff]
        %v5956 = vld [vmem:[#allocation4 + $0x198] sm:$0xff]
        %v5957 = vld [vmem:[#allocation4 + $0x1a0] sm:$0xff]
        %v5958 = vld [vmem:[#allocation4 + $0x1a8] sm:$0xff]
        %v5959 = vld [vmem:[#allocation4 + $0x1b0] sm:$0xff]
        %v5960 = vld [vmem:[#allocation4 + $0x1b8] sm:$0xff]
        %v5961 = vlaneseq
        %v5962 = vshrl.u32 %v5961, 7
        %v5963 = vadd.s32 %v5962, 8
        %v5964 = vadd.s32 %v5962, 16
        %v5965 = vadd.s32 %v5962, 24
        %v5966 = vadd.s32 %v5962, 32
        %v5967 = vadd.s32 %v5962, 40
        %v5968 = vadd.s32 %v5962, 48
        %v5969 = vadd.s32 %v5962, 56
        %v5970 = vadd.s32 %v5962, 64
        %v5971 = vadd.s32 %v5962, 72
        %v5972 = vadd.s32 %v5962, 80
        %v5973 = vadd.s32 %v5962, 88
        %v5974 = vadd.s32 %v5962, 96
        %v5975 = vadd.s32 %v5962, 104
        %v5976 = vadd.s32 %v5962, 112
        %v5977 = vadd.s32 %v5962, 120
        %v5978 = vadd.s32 %v5962, 128
        %v5979 = vadd.s32 %v5962, 136
        %v5980 = vadd.s32 %v5962, 144
        %v5981 = vadd.s32 %v5962, 152
        %v5982 = vadd.s32 %v5962, 160
        %v5983 = vadd.s32 %v5962, 168
        %v5984 = vadd.s32 %v5962, 176
        %v5985 = vadd.s32 %v5962, 184
        %v5986 = vadd.s32 %v5962, 192
        %v5987 = vadd.s32 %v5962, 200
        %v5988 = vadd.s32 %v5962, 208
        %v5989 = vadd.s32 %v5962, 216
        %v5990 = vadd.s32 %v5962, 224
        %v5991 = vadd.s32 %v5962, 232
        %v5992 = vadd.s32 %v5962, 240
        %v5993 = vadd.s32 %v5962, 248
        %v5994 = vadd.s32 %v5962, 256
        %v5995 = vadd.s32 %v5962, 264
        %v5996 = vadd.s32 %v5962, 272
        %v5997 = vadd.s32 %v5962, 280
        %v5998 = vadd.s32 %v5962, 288
        %v5999 = vadd.s32 %v5962, 296
        %v6000 = vadd.s32 %v5962, 304
        %v6001 = vadd.s32 %v5962, 312
        %v6002 = vadd.s32 %v5962, 320
        %v6003 = vadd.s32 %v5962, 328
        %v6004 = vadd.s32 %v5962, 336
        %v6005 = vadd.s32 %v5962, 344
        %v6006 = vadd.s32 %v5962, 352
        %v6007 = vadd.s32 %v5962, 360
        %v6008 = vadd.s32 %v5962, 368
        %v6009 = vadd.s32 %v5962, 376
        %v6010 = vadd.s32 %v5962, 384
        %v6011 = vadd.s32 %v5962, 392
        %v6012 = vadd.s32 %v5962, 400
        %v6013 = vadd.s32 %v5962, 408
        %v6014 = vadd.s32 %v5962, 416
        %v6015 = vadd.s32 %v5962, 424
        %v6016 = vadd.s32 %v5962, 432
        %v6017 = vadd.s32 %v5962, 440
        %vm6018 = vcmp.lt.s32.totalorder %v5962, 0
        %v6019 = vsub.s32 0, %v5962
        %v6020 = vsel %vm6018, %v6019, %v5962
        %v6021 = vshrl.u32 %v6020, 4
        %v6022 = vand.u32 %v6020, 15
        %v6023 = vsub.s32 0, %v6022
        %v6024 = vsel %vm6018, %v6023, %v6022
        %vm6025 = vcmp.lt.s32.totalorder %v5963, 0
        %v6026 = vsub.s32 0, %v5963
        %v6027 = vsel %vm6025, %v6026, %v5963
        %v6028 = vshrl.u32 %v6027, 4
        %v6029 = vand.u32 %v6027, 15
        %v6030 = vsub.s32 0, %v6029
        %v6031 = vsel %vm6025, %v6030, %v6029
        %vm6032 = vcmp.lt.s32.totalorder %v5964, 0
        %v6033 = vsub.s32 0, %v5964
        %v6034 = vsel %vm6032, %v6033, %v5964
        %v6035 = vshrl.u32 %v6034, 4
        %v6036 = vand.u32 %v6034, 15
        %v6037 = vsub.s32 0, %v6036
        %v6038 = vsel %vm6032, %v6037, %v6036
        %vm6039 = vcmp.lt.s32.totalorder %v5965, 0
        %v6040 = vsub.s32 0, %v5965
        %v6041 = vsel %vm6039, %v6040, %v5965
        %v6042 = vshrl.u32 %v6041, 4
        %v6043 = vand.u32 %v6041, 15
        %v6044 = vsub.s32 0, %v6043
        %v6045 = vsel %vm6039, %v6044, %v6043
        %vm6046 = vcmp.lt.s32.totalorder %v5966, 0
        %v6047 = vsub.s32 0, %v5966
        %v6048 = vsel %vm6046, %v6047, %v5966
        %v6049 = vshrl.u32 %v6048, 4
        %v6050 = vand.u32 %v6048, 15
        %v6051 = vsub.s32 0, %v6050
        %v6052 = vsel %vm6046, %v6051, %v6050
        %vm6053 = vcmp.lt.s32.totalorder %v5967, 0
        %v6054 = vsub.s32 0, %v5967
        %v6055 = vsel %vm6053, %v6054, %v5967
        %v6056 = vshrl.u32 %v6055, 4
        %v6057 = vand.u32 %v6055, 15
        %v6058 = vsub.s32 0, %v6057
        %v6059 = vsel %vm6053, %v6058, %v6057
        %vm6060 = vcmp.lt.s32.totalorder %v5968, 0
        %v6061 = vsub.s32 0, %v5968
        %v6062 = vsel %vm6060, %v6061, %v5968
        %v6063 = vshrl.u32 %v6062, 4
        %v6064 = vand.u32 %v6062, 15
        %v6065 = vsub.s32 0, %v6064
        %v6066 = vsel %vm6060, %v6065, %v6064
        %vm6067 = vcmp.lt.s32.totalorder %v5969, 0
        %v6068 = vsub.s32 0, %v5969
        %v6069 = vsel %vm6067, %v6068, %v5969
        %v6070 = vshrl.u32 %v6069, 4
        %v6071 = vand.u32 %v6069, 15
        %v6072 = vsub.s32 0, %v6071
        %v6073 = vsel %vm6067, %v6072, %v6071
        %vm6074 = vcmp.lt.s32.totalorder %v5970, 0
        %v6075 = vsub.s32 0, %v5970
        %v6076 = vsel %vm6074, %v6075, %v5970
        %v6077 = vshrl.u32 %v6076, 4
        %v6078 = vand.u32 %v6076, 15
        %v6079 = vsub.s32 0, %v6078
        %v6080 = vsel %vm6074, %v6079, %v6078
        %vm6081 = vcmp.lt.s32.totalorder %v5971, 0
        %v6082 = vsub.s32 0, %v5971
        %v6083 = vsel %vm6081, %v6082, %v5971
        %v6084 = vshrl.u32 %v6083, 4
        %v6085 = vand.u32 %v6083, 15
        %v6086 = vsub.s32 0, %v6085
        %v6087 = vsel %vm6081, %v6086, %v6085
        %vm6088 = vcmp.lt.s32.totalorder %v5972, 0
        %v6089 = vsub.s32 0, %v5972
        %v6090 = vsel %vm6088, %v6089, %v5972
        %v6091 = vshrl.u32 %v6090, 4
        %v6092 = vand.u32 %v6090, 15
        %v6093 = vsub.s32 0, %v6092
        %v6094 = vsel %vm6088, %v6093, %v6092
        %vm6095 = vcmp.lt.s32.totalorder %v5973, 0
        %v6096 = vsub.s32 0, %v5973
        %v6097 = vsel %vm6095, %v6096, %v5973
        %v6098 = vshrl.u32 %v6097, 4
        %v6099 = vand.u32 %v6097, 15
        %v6100 = vsub.s32 0, %v6099
        %v6101 = vsel %vm6095, %v6100, %v6099
        %vm6102 = vcmp.lt.s32.totalorder %v5974, 0
        %v6103 = vsub.s32 0, %v5974
        %v6104 = vsel %vm6102, %v6103, %v5974
        %v6105 = vshrl.u32 %v6104, 4
        %v6106 = vand.u32 %v6104, 15
        %v6107 = vsub.s32 0, %v6106
        %v6108 = vsel %vm6102, %v6107, %v6106
        %vm6109 = vcmp.lt.s32.totalorder %v5975, 0
        %v6110 = vsub.s32 0, %v5975
        %v6111 = vsel %vm6109, %v6110, %v5975
        %v6112 = vshrl.u32 %v6111, 4
        %v6113 = vand.u32 %v6111, 15
        %v6114 = vsub.s32 0, %v6113
        %v6115 = vsel %vm6109, %v6114, %v6113
        %vm6116 = vcmp.lt.s32.totalorder %v5976, 0
        %v6117 = vsub.s32 0, %v5976
        %v6118 = vsel %vm6116, %v6117, %v5976
        %v6119 = vshrl.u32 %v6118, 4
        %v6120 = vand.u32 %v6118, 15
        %v6121 = vsub.s32 0, %v6120
        %v6122 = vsel %vm6116, %v6121, %v6120
        %vm6123 = vcmp.lt.s32.totalorder %v5977, 0
        %v6124 = vsub.s32 0, %v5977
        %v6125 = vsel %vm6123, %v6124, %v5977
        %v6126 = vshrl.u32 %v6125, 4
        %v6127 = vand.u32 %v6125, 15
        %v6128 = vsub.s32 0, %v6127
        %v6129 = vsel %vm6123, %v6128, %v6127
        %vm6130 = vcmp.lt.s32.totalorder %v5978, 0
        %v6131 = vsub.s32 0, %v5978
        %v6132 = vsel %vm6130, %v6131, %v5978
        %v6133 = vshrl.u32 %v6132, 4
        %v6134 = vand.u32 %v6132, 15
        %v6135 = vsub.s32 0, %v6134
        %v6136 = vsel %vm6130, %v6135, %v6134
        %vm6137 = vcmp.lt.s32.totalorder %v5979, 0
        %v6138 = vsub.s32 0, %v5979
        %v6139 = vsel %vm6137, %v6138, %v5979
        %v6140 = vshrl.u32 %v6139, 4
        %v6141 = vand.u32 %v6139, 15
        %v6142 = vsub.s32 0, %v6141
        %v6143 = vsel %vm6137, %v6142, %v6141
        %vm6144 = vcmp.lt.s32.totalorder %v5980, 0
        %v6145 = vsub.s32 0, %v5980
        %v6146 = vsel %vm6144, %v6145, %v5980
        %v6147 = vshrl.u32 %v6146, 4
        %v6148 = vand.u32 %v6146, 15
        %v6149 = vsub.s32 0, %v6148
        %v6150 = vsel %vm6144, %v6149, %v6148
        %vm6151 = vcmp.lt.s32.totalorder %v5981, 0
        %v6152 = vsub.s32 0, %v5981
        %v6153 = vsel %vm6151, %v6152, %v5981
        %v6154 = vshrl.u32 %v6153, 4
        %v6155 = vand.u32 %v6153, 15
        %v6156 = vsub.s32 0, %v6155
        %v6157 = vsel %vm6151, %v6156, %v6155
        %vm6158 = vcmp.lt.s32.totalorder %v5982, 0
        %v6159 = vsub.s32 0, %v5982
        %v6160 = vsel %vm6158, %v6159, %v5982
        %v6161 = vshrl.u32 %v6160, 4
        %v6162 = vand.u32 %v6160, 15
        %v6163 = vsub.s32 0, %v6162
        %v6164 = vsel %vm6158, %v6163, %v6162
        %vm6165 = vcmp.lt.s32.totalorder %v5983, 0
        %v6166 = vsub.s32 0, %v5983
        %v6167 = vsel %vm6165, %v6166, %v5983
        %v6168 = vshrl.u32 %v6167, 4
        %v6169 = vand.u32 %v6167, 15
        %v6170 = vsub.s32 0, %v6169
        %v6171 = vsel %vm6165, %v6170, %v6169
        %vm6172 = vcmp.lt.s32.totalorder %v5984, 0
        %v6173 = vsub.s32 0, %v5984
        %v6174 = vsel %vm6172, %v6173, %v5984
        %v6175 = vshrl.u32 %v6174, 4
        %v6176 = vand.u32 %v6174, 15
        %v6177 = vsub.s32 0, %v6176
        %v6178 = vsel %vm6172, %v6177, %v6176
        %vm6179 = vcmp.lt.s32.totalorder %v5985, 0
        %v6180 = vsub.s32 0, %v5985
        %v6181 = vsel %vm6179, %v6180, %v5985
        %v6182 = vshrl.u32 %v6181, 4
        %v6183 = vand.u32 %v6181, 15
        %v6184 = vsub.s32 0, %v6183
        %v6185 = vsel %vm6179, %v6184, %v6183
        %vm6186 = vcmp.lt.s32.totalorder %v5986, 0
        %v6187 = vsub.s32 0, %v5986
        %v6188 = vsel %vm6186, %v6187, %v5986
        %v6189 = vshrl.u32 %v6188, 4
        %v6190 = vand.u32 %v6188, 15
        %v6191 = vsub.s32 0, %v6190
        %v6192 = vsel %vm6186, %v6191, %v6190
        %vm6193 = vcmp.lt.s32.totalorder %v5987, 0
        %v6194 = vsub.s32 0, %v5987
        %v6195 = vsel %vm6193, %v6194, %v5987
        %v6196 = vshrl.u32 %v6195, 4
        %v6197 = vand.u32 %v6195, 15
        %v6198 = vsub.s32 0, %v6197
        %v6199 = vsel %vm6193, %v6198, %v6197
        %vm6200 = vcmp.lt.s32.totalorder %v5988, 0
        %v6201 = vsub.s32 0, %v5988
        %v6202 = vsel %vm6200, %v6201, %v5988
        %v6203 = vshrl.u32 %v6202, 4
        %v6204 = vand.u32 %v6202, 15
        %v6205 = vsub.s32 0, %v6204
        %v6206 = vsel %vm6200, %v6205, %v6204
        %vm6207 = vcmp.lt.s32.totalorder %v5989, 0
        %v6208 = vsub.s32 0, %v5989
        %v6209 = vsel %vm6207, %v6208, %v5989
        %v6210 = vshrl.u32 %v6209, 4
        %v6211 = vand.u32 %v6209, 15
        %v6212 = vsub.s32 0, %v6211
        %v6213 = vsel %vm6207, %v6212, %v6211
        %vm6214 = vcmp.lt.s32.totalorder %v5990, 0
        %v6215 = vsub.s32 0, %v5990
        %v6216 = vsel %vm6214, %v6215, %v5990
        %v6217 = vshrl.u32 %v6216, 4
        %v6218 = vand.u32 %v6216, 15
        %v6219 = vsub.s32 0, %v6218
        %v6220 = vsel %vm6214, %v6219, %v6218
        %vm6221 = vcmp.lt.s32.totalorder %v5991, 0
        %v6222 = vsub.s32 0, %v5991
        %v6223 = vsel %vm6221, %v6222, %v5991
        %v6224 = vshrl.u32 %v6223, 4
        %v6225 = vand.u32 %v6223, 15
        %v6226 = vsub.s32 0, %v6225
        %v6227 = vsel %vm6221, %v6226, %v6225
        %vm6228 = vcmp.lt.s32.totalorder %v5992, 0
        %v6229 = vsub.s32 0, %v5992
        %v6230 = vsel %vm6228, %v6229, %v5992
        %v6231 = vshrl.u32 %v6230, 4
        %v6232 = vand.u32 %v6230, 15
        %v6233 = vsub.s32 0, %v6232
        %v6234 = vsel %vm6228, %v6233, %v6232
        %vm6235 = vcmp.lt.s32.totalorder %v5993, 0
        %v6236 = vsub.s32 0, %v5993
        %v6237 = vsel %vm6235, %v6236, %v5993
        %v6238 = vshrl.u32 %v6237, 4
        %v6239 = vand.u32 %v6237, 15
        %v6240 = vsub.s32 0, %v6239
        %v6241 = vsel %vm6235, %v6240, %v6239
        %vm6242 = vcmp.lt.s32.totalorder %v5994, 0
        %v6243 = vsub.s32 0, %v5994
        %v6244 = vsel %vm6242, %v6243, %v5994
        %v6245 = vshrl.u32 %v6244, 4
        %v6246 = vand.u32 %v6244, 15
        %v6247 = vsub.s32 0, %v6246
        %v6248 = vsel %vm6242, %v6247, %v6246
        %vm6249 = vcmp.lt.s32.totalorder %v5995, 0
        %v6250 = vsub.s32 0, %v5995
        %v6251 = vsel %vm6249, %v6250, %v5995
        %v6252 = vshrl.u32 %v6251, 4
        %v6253 = vand.u32 %v6251, 15
        %v6254 = vsub.s32 0, %v6253
        %v6255 = vsel %vm6249, %v6254, %v6253
        %vm6256 = vcmp.lt.s32.totalorder %v5996, 0
        %v6257 = vsub.s32 0, %v5996
        %v6258 = vsel %vm6256, %v6257, %v5996
        %v6259 = vshrl.u32 %v6258, 4
        %v6260 = vand.u32 %v6258, 15
        %v6261 = vsub.s32 0, %v6260
        %v6262 = vsel %vm6256, %v6261, %v6260
        %vm6263 = vcmp.lt.s32.totalorder %v5997, 0
        %v6264 = vsub.s32 0, %v5997
        %v6265 = vsel %vm6263, %v6264, %v5997
        %v6266 = vshrl.u32 %v6265, 4
        %v6267 = vand.u32 %v6265, 15
        %v6268 = vsub.s32 0, %v6267
        %v6269 = vsel %vm6263, %v6268, %v6267
        %vm6270 = vcmp.lt.s32.totalorder %v5998, 0
        %v6271 = vsub.s32 0, %v5998
        %v6272 = vsel %vm6270, %v6271, %v5998
        %v6273 = vshrl.u32 %v6272, 4
        %v6274 = vand.u32 %v6272, 15
        %v6275 = vsub.s32 0, %v6274
        %v6276 = vsel %vm6270, %v6275, %v6274
        %vm6277 = vcmp.lt.s32.totalorder %v5999, 0
        %v6278 = vsub.s32 0, %v5999
        %v6279 = vsel %vm6277, %v6278, %v5999
        %v6280 = vshrl.u32 %v6279, 4
        %v6281 = vand.u32 %v6279, 15
        %v6282 = vsub.s32 0, %v6281
        %v6283 = vsel %vm6277, %v6282, %v6281
        %vm6284 = vcmp.lt.s32.totalorder %v6000, 0
        %v6285 = vsub.s32 0, %v6000
        %v6286 = vsel %vm6284, %v6285, %v6000
        %v6287 = vshrl.u32 %v6286, 4
        %v6288 = vand.u32 %v6286, 15
        %v6289 = vsub.s32 0, %v6288
        %v6290 = vsel %vm6284, %v6289, %v6288
        %vm6291 = vcmp.lt.s32.totalorder %v6001, 0
        %v6292 = vsub.s32 0, %v6001
        %v6293 = vsel %vm6291, %v6292, %v6001
        %v6294 = vshrl.u32 %v6293, 4
        %v6295 = vand.u32 %v6293, 15
        %v6296 = vsub.s32 0, %v6295
        %v6297 = vsel %vm6291, %v6296, %v6295
        %vm6298 = vcmp.lt.s32.totalorder %v6002, 0
        %v6299 = vsub.s32 0, %v6002
        %v6300 = vsel %vm6298, %v6299, %v6002
        %v6301 = vshrl.u32 %v6300, 4
        %v6302 = vand.u32 %v6300, 15
        %v6303 = vsub.s32 0, %v6302
        %v6304 = vsel %vm6298, %v6303, %v6302
        %vm6305 = vcmp.lt.s32.totalorder %v6003, 0
        %v6306 = vsub.s32 0, %v6003
        %v6307 = vsel %vm6305, %v6306, %v6003
        %v6308 = vshrl.u32 %v6307, 4
        %v6309 = vand.u32 %v6307, 15
        %v6310 = vsub.s32 0, %v6309
        %v6311 = vsel %vm6305, %v6310, %v6309
        %vm6312 = vcmp.lt.s32.totalorder %v6004, 0
        %v6313 = vsub.s32 0, %v6004
        %v6314 = vsel %vm6312, %v6313, %v6004
        %v6315 = vshrl.u32 %v6314, 4
        %v6316 = vand.u32 %v6314, 15
        %v6317 = vsub.s32 0, %v6316
        %v6318 = vsel %vm6312, %v6317, %v6316
        %vm6319 = vcmp.lt.s32.totalorder %v6005, 0
        %v6320 = vsub.s32 0, %v6005
        %v6321 = vsel %vm6319, %v6320, %v6005
        %v6322 = vshrl.u32 %v6321, 4
        %v6323 = vand.u32 %v6321, 15
        %v6324 = vsub.s32 0, %v6323
        %v6325 = vsel %vm6319, %v6324, %v6323
        %vm6326 = vcmp.lt.s32.totalorder %v6006, 0
        %v6327 = vsub.s32 0, %v6006
        %v6328 = vsel %vm6326, %v6327, %v6006
        %v6329 = vshrl.u32 %v6328, 4
        %v6330 = vand.u32 %v6328, 15
        %v6331 = vsub.s32 0, %v6330
        %v6332 = vsel %vm6326, %v6331, %v6330
        %vm6333 = vcmp.lt.s32.totalorder %v6007, 0
        %v6334 = vsub.s32 0, %v6007
        %v6335 = vsel %vm6333, %v6334, %v6007
        %v6336 = vshrl.u32 %v6335, 4
        %v6337 = vand.u32 %v6335, 15
        %v6338 = vsub.s32 0, %v6337
        %v6339 = vsel %vm6333, %v6338, %v6337
        %vm6340 = vcmp.lt.s32.totalorder %v6008, 0
        %v6341 = vsub.s32 0, %v6008
        %v6342 = vsel %vm6340, %v6341, %v6008
        %v6343 = vshrl.u32 %v6342, 4
        %v6344 = vand.u32 %v6342, 15
        %v6345 = vsub.s32 0, %v6344
        %v6346 = vsel %vm6340, %v6345, %v6344
        %vm6347 = vcmp.lt.s32.totalorder %v6009, 0
        %v6348 = vsub.s32 0, %v6009
        %v6349 = vsel %vm6347, %v6348, %v6009
        %v6350 = vshrl.u32 %v6349, 4
        %v6351 = vand.u32 %v6349, 15
        %v6352 = vsub.s32 0, %v6351
        %v6353 = vsel %vm6347, %v6352, %v6351
        %vm6354 = vcmp.lt.s32.totalorder %v6010, 0
        %v6355 = vsub.s32 0, %v6010
        %v6356 = vsel %vm6354, %v6355, %v6010
        %v6357 = vshrl.u32 %v6356, 4
        %v6358 = vand.u32 %v6356, 15
        %v6359 = vsub.s32 0, %v6358
        %v6360 = vsel %vm6354, %v6359, %v6358
        %vm6361 = vcmp.lt.s32.totalorder %v6011, 0
        %v6362 = vsub.s32 0, %v6011
        %v6363 = vsel %vm6361, %v6362, %v6011
        %v6364 = vshrl.u32 %v6363, 4
        %v6365 = vand.u32 %v6363, 15
        %v6366 = vsub.s32 0, %v6365
        %v6367 = vsel %vm6361, %v6366, %v6365
        %vm6368 = vcmp.lt.s32.totalorder %v6012, 0
        %v6369 = vsub.s32 0, %v6012
        %v6370 = vsel %vm6368, %v6369, %v6012
        %v6371 = vshrl.u32 %v6370, 4
        %v6372 = vand.u32 %v6370, 15
        %v6373 = vsub.s32 0, %v6372
        %v6374 = vsel %vm6368, %v6373, %v6372
        %vm6375 = vcmp.lt.s32.totalorder %v6013, 0
        %v6376 = vsub.s32 0, %v6013
        %v6377 = vsel %vm6375, %v6376, %v6013
        %v6378 = vshrl.u32 %v6377, 4
        %v6379 = vand.u32 %v6377, 15
        %v6380 = vsub.s32 0, %v6379
        %v6381 = vsel %vm6375, %v6380, %v6379
        %vm6382 = vcmp.lt.s32.totalorder %v6014, 0
        %v6383 = vsub.s32 0, %v6014
        %v6384 = vsel %vm6382, %v6383, %v6014
        %v6385 = vshrl.u32 %v6384, 4
        %v6386 = vand.u32 %v6384, 15
        %v6387 = vsub.s32 0, %v6386
        %v6388 = vsel %vm6382, %v6387, %v6386
        %vm6389 = vcmp.lt.s32.totalorder %v6015, 0
        %v6390 = vsub.s32 0, %v6015
        %v6391 = vsel %vm6389, %v6390, %v6015
        %v6392 = vshrl.u32 %v6391, 4
        %v6393 = vand.u32 %v6391, 15
        %v6394 = vsub.s32 0, %v6393
        %v6395 = vsel %vm6389, %v6394, %v6393
        %vm6396 = vcmp.lt.s32.totalorder %v6016, 0
        %v6397 = vsub.s32 0, %v6016
        %v6398 = vsel %vm6396, %v6397, %v6016
        %v6399 = vshrl.u32 %v6398, 4
        %v6400 = vand.u32 %v6398, 15
        %v6401 = vsub.s32 0, %v6400
        %v6402 = vsel %vm6396, %v6401, %v6400
        %vm6403 = vcmp.lt.s32.totalorder %v6017, 0
        %v6404 = vsub.s32 0, %v6017
        %v6405 = vsel %vm6403, %v6404, %v6017
        %v6406 = vshrl.u32 %v6405, 4
        %v6407 = vand.u32 %v6405, 15
        %v6408 = vsub.s32 0, %v6407
        %v6409 = vsel %vm6403, %v6408, %v6407
        %vm6410 = vcmp.ne.s32.totalorder %v6024, 0
        %vm6411 = vcmp.ne.s32.totalorder %v6031, 0
        %vm6412 = vcmp.ne.s32.totalorder %v6038, 0
        %vm6413 = vcmp.ne.s32.totalorder %v6045, 0
        %vm6414 = vcmp.ne.s32.totalorder %v6052, 0
        %vm6415 = vcmp.ne.s32.totalorder %v6059, 0
        %vm6416 = vcmp.ne.s32.totalorder %v6066, 0
        %vm6417 = vcmp.ne.s32.totalorder %v6073, 0
        %vm6418 = vcmp.ne.s32.totalorder %v6080, 0
        %vm6419 = vcmp.ne.s32.totalorder %v6087, 0
        %vm6420 = vcmp.ne.s32.totalorder %v6094, 0
        %vm6421 = vcmp.ne.s32.totalorder %v6101, 0
        %vm6422 = vcmp.ne.s32.totalorder %v6108, 0
        %vm6423 = vcmp.ne.s32.totalorder %v6115, 0
        %vm6424 = vcmp.ne.s32.totalorder %v6122, 0
        %vm6425 = vcmp.ne.s32.totalorder %v6129, 0
        %vm6426 = vcmp.ne.s32.totalorder %v6136, 0
        %vm6427 = vcmp.ne.s32.totalorder %v6143, 0
        %vm6428 = vcmp.ne.s32.totalorder %v6150, 0
        %vm6429 = vcmp.ne.s32.totalorder %v6157, 0
        %vm6430 = vcmp.ne.s32.totalorder %v6164, 0
        %vm6431 = vcmp.ne.s32.totalorder %v6171, 0
        %vm6432 = vcmp.ne.s32.totalorder %v6178, 0
        %vm6433 = vcmp.ne.s32.totalorder %v6185, 0
        %vm6434 = vcmp.ne.s32.totalorder %v6192, 0
        %vm6435 = vcmp.ne.s32.totalorder %v6199, 0
        %vm6436 = vcmp.ne.s32.totalorder %v6206, 0
        %vm6437 = vcmp.ne.s32.totalorder %v6213, 0
        %vm6438 = vcmp.ne.s32.totalorder %v6220, 0
        %vm6439 = vcmp.ne.s32.totalorder %v6227, 0
        %vm6440 = vcmp.ne.s32.totalorder %v6234, 0
        %vm6441 = vcmp.ne.s32.totalorder %v6241, 0
        %vm6442 = vcmp.ne.s32.totalorder %v6248, 0
        %vm6443 = vcmp.ne.s32.totalorder %v6255, 0
        %vm6444 = vcmp.ne.s32.totalorder %v6262, 0
        %vm6445 = vcmp.ne.s32.totalorder %v6269, 0
        %vm6446 = vcmp.ne.s32.totalorder %v6276, 0
        %vm6447 = vcmp.ne.s32.totalorder %v6283, 0
        %vm6448 = vcmp.ne.s32.totalorder %v6290, 0
        %vm6449 = vcmp.ne.s32.totalorder %v6297, 0
        %vm6450 = vcmp.ne.s32.totalorder %v6304, 0
        %vm6451 = vcmp.ne.s32.totalorder %v6311, 0
        %vm6452 = vcmp.ne.s32.totalorder %v6318, 0
        %vm6453 = vcmp.ne.s32.totalorder %v6325, 0
        %vm6454 = vcmp.ne.s32.totalorder %v6332, 0
        %vm6455 = vcmp.ne.s32.totalorder %v6339, 0
        %vm6456 = vcmp.ne.s32.totalorder %v6346, 0
        %vm6457 = vcmp.ne.s32.totalorder %v6353, 0
        %vm6458 = vcmp.ne.s32.totalorder %v6360, 0
        %vm6459 = vcmp.ne.s32.totalorder %v6367, 0
        %vm6460 = vcmp.ne.s32.totalorder %v6374, 0
        %vm6461 = vcmp.ne.s32.totalorder %v6381, 0
        %vm6462 = vcmp.ne.s32.totalorder %v6388, 0
        %vm6463 = vcmp.ne.s32.totalorder %v6395, 0
        %vm6464 = vcmp.ne.s32.totalorder %v6402, 0
        %vm6465 = vcmp.ne.s32.totalorder %v6409, 0
        %vm6466 = vcmp.lt.s32.totalorder %v6024, 0
        %vm6467 = vcmp.lt.s32.totalorder %v6031, 0
        %vm6468 = vcmp.lt.s32.totalorder %v6038, 0
        %vm6469 = vcmp.lt.s32.totalorder %v6045, 0
        %vm6470 = vcmp.lt.s32.totalorder %v6052, 0
        %vm6471 = vcmp.lt.s32.totalorder %v6059, 0
        %vm6472 = vcmp.lt.s32.totalorder %v6066, 0
        %vm6473 = vcmp.lt.s32.totalorder %v6073, 0
        %vm6474 = vcmp.lt.s32.totalorder %v6080, 0
        %vm6475 = vcmp.lt.s32.totalorder %v6087, 0
        %vm6476 = vcmp.lt.s32.totalorder %v6094, 0
        %vm6477 = vcmp.lt.s32.totalorder %v6101, 0
        %vm6478 = vcmp.lt.s32.totalorder %v6108, 0
        %vm6479 = vcmp.lt.s32.totalorder %v6115, 0
        %vm6480 = vcmp.lt.s32.totalorder %v6122, 0
        %vm6481 = vcmp.lt.s32.totalorder %v6129, 0
        %vm6482 = vcmp.lt.s32.totalorder %v6136, 0
        %vm6483 = vcmp.lt.s32.totalorder %v6143, 0
        %vm6484 = vcmp.lt.s32.totalorder %v6150, 0
        %vm6485 = vcmp.lt.s32.totalorder %v6157, 0
        %vm6486 = vcmp.lt.s32.totalorder %v6164, 0
        %vm6487 = vcmp.lt.s32.totalorder %v6171, 0
        %vm6488 = vcmp.lt.s32.totalorder %v6178, 0
        %vm6489 = vcmp.lt.s32.totalorder %v6185, 0
        %vm6490 = vcmp.lt.s32.totalorder %v6192, 0
        %vm6491 = vcmp.lt.s32.totalorder %v6199, 0
        %vm6492 = vcmp.lt.s32.totalorder %v6206, 0
        %vm6493 = vcmp.lt.s32.totalorder %v6213, 0
        %vm6494 = vcmp.lt.s32.totalorder %v6220, 0
        %vm6495 = vcmp.lt.s32.totalorder %v6227, 0
        %vm6496 = vcmp.lt.s32.totalorder %v6234, 0
        %vm6497 = vcmp.lt.s32.totalorder %v6241, 0
        %vm6498 = vcmp.lt.s32.totalorder %v6248, 0
        %vm6499 = vcmp.lt.s32.totalorder %v6255, 0
        %vm6500 = vcmp.lt.s32.totalorder %v6262, 0
        %vm6501 = vcmp.lt.s32.totalorder %v6269, 0
        %vm6502 = vcmp.lt.s32.totalorder %v6276, 0
        %vm6503 = vcmp.lt.s32.totalorder %v6283, 0
        %vm6504 = vcmp.lt.s32.totalorder %v6290, 0
        %vm6505 = vcmp.lt.s32.totalorder %v6297, 0
        %vm6506 = vcmp.lt.s32.totalorder %v6304, 0
        %vm6507 = vcmp.lt.s32.totalorder %v6311, 0
        %vm6508 = vcmp.lt.s32.totalorder %v6318, 0
        %vm6509 = vcmp.lt.s32.totalorder %v6325, 0
        %vm6510 = vcmp.lt.s32.totalorder %v6332, 0
        %vm6511 = vcmp.lt.s32.totalorder %v6339, 0
        %vm6512 = vcmp.lt.s32.totalorder %v6346, 0
        %vm6513 = vcmp.lt.s32.totalorder %v6353, 0
        %vm6514 = vcmp.lt.s32.totalorder %v6360, 0
        %vm6515 = vcmp.lt.s32.totalorder %v6367, 0
        %vm6516 = vcmp.lt.s32.totalorder %v6374, 0
        %vm6517 = vcmp.lt.s32.totalorder %v6381, 0
        %vm6518 = vcmp.lt.s32.totalorder %v6388, 0
        %vm6519 = vcmp.lt.s32.totalorder %v6395, 0
        %vm6520 = vcmp.lt.s32.totalorder %v6402, 0
        %vm6521 = vcmp.lt.s32.totalorder %v6409, 0
        %vm6522 = vmand %vm6466, %vm6410
        %vm6523 = vmand %vm6467, %vm6411
        %vm6524 = vmand %vm6468, %vm6412
        %vm6525 = vmand %vm6469, %vm6413
        %vm6526 = vmand %vm6470, %vm6414
        %vm6527 = vmand %vm6471, %vm6415
        %vm6528 = vmand %vm6472, %vm6416
        %vm6529 = vmand %vm6473, %vm6417
        %vm6530 = vmand %vm6474, %vm6418
        %vm6531 = vmand %vm6475, %vm6419
        %vm6532 = vmand %vm6476, %vm6420
        %vm6533 = vmand %vm6477, %vm6421
        %vm6534 = vmand %vm6478, %vm6422
        %vm6535 = vmand %vm6479, %vm6423
        %vm6536 = vmand %vm6480, %vm6424
        %vm6537 = vmand %vm6481, %vm6425
        %vm6538 = vmand %vm6482, %vm6426
        %vm6539 = vmand %vm6483, %vm6427
        %vm6540 = vmand %vm6484, %vm6428
        %vm6541 = vmand %vm6485, %vm6429
        %vm6542 = vmand %vm6486, %vm6430
        %vm6543 = vmand %vm6487, %vm6431
        %vm6544 = vmand %vm6488, %vm6432
        %vm6545 = vmand %vm6489, %vm6433
        %vm6546 = vmand %vm6490, %vm6434
        %vm6547 = vmand %vm6491, %vm6435
        %vm6548 = vmand %vm6492, %vm6436
        %vm6549 = vmand %vm6493, %vm6437
        %vm6550 = vmand %vm6494, %vm6438
        %vm6551 = vmand %vm6495, %vm6439
        %vm6552 = vmand %vm6496, %vm6440
        %vm6553 = vmand %vm6497, %vm6441
        %vm6554 = vmand %vm6498, %vm6442
        %vm6555 = vmand %vm6499, %vm6443
        %vm6556 = vmand %vm6500, %vm6444
        %vm6557 = vmand %vm6501, %vm6445
        %vm6558 = vmand %vm6502, %vm6446
        %vm6559 = vmand %vm6503, %vm6447
        %vm6560 = vmand %vm6504, %vm6448
        %vm6561 = vmand %vm6505, %vm6449
        %vm6562 = vmand %vm6506, %vm6450
        %vm6563 = vmand %vm6507, %vm6451
        %vm6564 = vmand %vm6508, %vm6452
        %vm6565 = vmand %vm6509, %vm6453
        %vm6566 = vmand %vm6510, %vm6454
        %vm6567 = vmand %vm6511, %vm6455
        %vm6568 = vmand %vm6512, %vm6456
        %vm6569 = vmand %vm6513, %vm6457
        %vm6570 = vmand %vm6514, %vm6458
        %vm6571 = vmand %vm6515, %vm6459
        %vm6572 = vmand %vm6516, %vm6460
        %vm6573 = vmand %vm6517, %vm6461
        %vm6574 = vmand %vm6518, %vm6462
        %vm6575 = vmand %vm6519, %vm6463
        %vm6576 = vmand %vm6520, %vm6464
        %vm6577 = vmand %vm6521, %vm6465
        %v6578 = vadd.s32 %v6024, 16
        %v6579 = vadd.s32 %v6031, 16
        %v6580 = vadd.s32 %v6038, 16
        %v6581 = vadd.s32 %v6045, 16
        %v6582 = vadd.s32 %v6052, 16
        %v6583 = vadd.s32 %v6059, 16
        %v6584 = vadd.s32 %v6066, 16
        %v6585 = vadd.s32 %v6073, 16
        %v6586 = vadd.s32 %v6080, 16
        %v6587 = vadd.s32 %v6087, 16
        %v6588 = vadd.s32 %v6094, 16
        %v6589 = vadd.s32 %v6101, 16
        %v6590 = vadd.s32 %v6108, 16
        %v6591 = vadd.s32 %v6115, 16
        %v6592 = vadd.s32 %v6122, 16
        %v6593 = vadd.s32 %v6129, 16
        %v6594 = vadd.s32 %v6136, 16
        %v6595 = vadd.s32 %v6143, 16
        %v6596 = vadd.s32 %v6150, 16
        %v6597 = vadd.s32 %v6157, 16
        %v6598 = vadd.s32 %v6164, 16
        %v6599 = vadd.s32 %v6171, 16
        %v6600 = vadd.s32 %v6178, 16
        %v6601 = vadd.s32 %v6185, 16
        %v6602 = vadd.s32 %v6192, 16
        %v6603 = vadd.s32 %v6199, 16
        %v6604 = vadd.s32 %v6206, 16
        %v6605 = vadd.s32 %v6213, 16
        %v6606 = vadd.s32 %v6220, 16
        %v6607 = vadd.s32 %v6227, 16
        %v6608 = vadd.s32 %v6234, 16
        %v6609 = vadd.s32 %v6241, 16
        %v6610 = vadd.s32 %v6248, 16
        %v6611 = vadd.s32 %v6255, 16
        %v6612 = vadd.s32 %v6262, 16
        %v6613 = vadd.s32 %v6269, 16
        %v6614 = vadd.s32 %v6276, 16
        %v6615 = vadd.s32 %v6283, 16
        %v6616 = vadd.s32 %v6290, 16
        %v6617 = vadd.s32 %v6297, 16
        %v6618 = vadd.s32 %v6304, 16
        %v6619 = vadd.s32 %v6311, 16
        %v6620 = vadd.s32 %v6318, 16
        %v6621 = vadd.s32 %v6325, 16
        %v6622 = vadd.s32 %v6332, 16
        %v6623 = vadd.s32 %v6339, 16
        %v6624 = vadd.s32 %v6346, 16
        %v6625 = vadd.s32 %v6353, 16
        %v6626 = vadd.s32 %v6360, 16
        %v6627 = vadd.s32 %v6367, 16
        %v6628 = vadd.s32 %v6374, 16
        %v6629 = vadd.s32 %v6381, 16
        %v6630 = vadd.s32 %v6388, 16
        %v6631 = vadd.s32 %v6395, 16
        %v6632 = vadd.s32 %v6402, 16
        %v6633 = vadd.s32 %v6409, 16
        %v6634 = vsel %vm6522, %v6578, %v6024
        %v6635 = vsel %vm6523, %v6579, %v6031
        %v6636 = vsel %vm6524, %v6580, %v6038
        %v6637 = vsel %vm6525, %v6581, %v6045
        %v6638 = vsel %vm6526, %v6582, %v6052
        %v6639 = vsel %vm6527, %v6583, %v6059
        %v6640 = vsel %vm6528, %v6584, %v6066
        %v6641 = vsel %vm6529, %v6585, %v6073
        %v6642 = vsel %vm6530, %v6586, %v6080
        %v6643 = vsel %vm6531, %v6587, %v6087
        %v6644 = vsel %vm6532, %v6588, %v6094
        %v6645 = vsel %vm6533, %v6589, %v6101
        %v6646 = vsel %vm6534, %v6590, %v6108
        %v6647 = vsel %vm6535, %v6591, %v6115
        %v6648 = vsel %vm6536, %v6592, %v6122
        %v6649 = vsel %vm6537, %v6593, %v6129
        %v6650 = vsel %vm6538, %v6594, %v6136
        %v6651 = vsel %vm6539, %v6595, %v6143
        %v6652 = vsel %vm6540, %v6596, %v6150
        %v6653 = vsel %vm6541, %v6597, %v6157
        %v6654 = vsel %vm6542, %v6598, %v6164
        %v6655 = vsel %vm6543, %v6599, %v6171
        %v6656 = vsel %vm6544, %v6600, %v6178
        %v6657 = vsel %vm6545, %v6601, %v6185
        %v6658 = vsel %vm6546, %v6602, %v6192
        %v6659 = vsel %vm6547, %v6603, %v6199
        %v6660 = vsel %vm6548, %v6604, %v6206
        %v6661 = vsel %vm6549, %v6605, %v6213
        %v6662 = vsel %vm6550, %v6606, %v6220
        %v6663 = vsel %vm6551, %v6607, %v6227
        %v6664 = vsel %vm6552, %v6608, %v6234
        %v6665 = vsel %vm6553, %v6609, %v6241
        %v6666 = vsel %vm6554, %v6610, %v6248
        %v6667 = vsel %vm6555, %v6611, %v6255
        %v6668 = vsel %vm6556, %v6612, %v6262
        %v6669 = vsel %vm6557, %v6613, %v6269
        %v6670 = vsel %vm6558, %v6614, %v6276
        %v6671 = vsel %vm6559, %v6615, %v6283
        %v6672 = vsel %vm6560, %v6616, %v6290
        %v6673 = vsel %vm6561, %v6617, %v6297
        %v6674 = vsel %vm6562, %v6618, %v6304
        %v6675 = vsel %vm6563, %v6619, %v6311
        %v6676 = vsel %vm6564, %v6620, %v6318
        %v6677 = vsel %vm6565, %v6621, %v6325
        %v6678 = vsel %vm6566, %v6622, %v6332
        %v6679 = vsel %vm6567, %v6623, %v6339
        %v6680 = vsel %vm6568, %v6624, %v6346
        %v6681 = vsel %vm6569, %v6625, %v6353
        %v6682 = vsel %vm6570, %v6626, %v6360
        %v6683 = vsel %vm6571, %v6627, %v6367
        %v6684 = vsel %vm6572, %v6628, %v6374
        %v6685 = vsel %vm6573, %v6629, %v6381
        %v6686 = vsel %vm6574, %v6630, %v6388
        %v6687 = vsel %vm6575, %v6631, %v6395
        %v6688 = vsel %vm6576, %v6632, %v6402
        %v6689 = vsel %vm6577, %v6633, %v6409
        %vm6690 = vcmp.lt.s32.totalorder %v6634, 14
        %vm6691 = vcmp.lt.s32.totalorder %v6635, 14
        %vm6692 = vcmp.lt.s32.totalorder %v6636, 14
        %vm6693 = vcmp.lt.s32.totalorder %v6637, 14
        %vm6694 = vcmp.lt.s32.totalorder %v6638, 14
        %vm6695 = vcmp.lt.s32.totalorder %v6639, 14
        %vm6696 = vcmp.lt.s32.totalorder %v6640, 14
        %vm6697 = vcmp.lt.s32.totalorder %v6641, 14
        %vm6698 = vcmp.lt.s32.totalorder %v6642, 14
        %vm6699 = vcmp.lt.s32.totalorder %v6643, 14
        %vm6700 = vcmp.lt.s32.totalorder %v6644, 14
        %vm6701 = vcmp.lt.s32.totalorder %v6645, 14
        %vm6702 = vcmp.lt.s32.totalorder %v6646, 14
        %vm6703 = vcmp.lt.s32.totalorder %v6647, 14
        %vm6704 = vcmp.lt.s32.totalorder %v6648, 14
        %vm6705 = vcmp.lt.s32.totalorder %v6649, 14
        %vm6706 = vcmp.lt.s32.totalorder %v6650, 14
        %vm6707 = vcmp.lt.s32.totalorder %v6651, 14
        %vm6708 = vcmp.lt.s32.totalorder %v6652, 14
        %vm6709 = vcmp.lt.s32.totalorder %v6653, 14
        %vm6710 = vcmp.lt.s32.totalorder %v6654, 14
        %vm6711 = vcmp.lt.s32.totalorder %v6655, 14
        %vm6712 = vcmp.lt.s32.totalorder %v6656, 14
        %vm6713 = vcmp.lt.s32.totalorder %v6657, 14
        %vm6714 = vcmp.lt.s32.totalorder %v6658, 14
        %vm6715 = vcmp.lt.s32.totalorder %v6659, 14
        %vm6716 = vcmp.lt.s32.totalorder %v6660, 14
        %vm6717 = vcmp.lt.s32.totalorder %v6661, 14
        %vm6718 = vcmp.lt.s32.totalorder %v6662, 14
        %vm6719 = vcmp.lt.s32.totalorder %v6663, 14
        %vm6720 = vcmp.lt.s32.totalorder %v6664, 14
        %vm6721 = vcmp.lt.s32.totalorder %v6665, 14
        %vm6722 = vcmp.lt.s32.totalorder %v6666, 14
        %vm6723 = vcmp.lt.s32.totalorder %v6667, 14
        %vm6724 = vcmp.lt.s32.totalorder %v6668, 14
        %vm6725 = vcmp.lt.s32.totalorder %v6669, 14
        %vm6726 = vcmp.lt.s32.totalorder %v6670, 14
        %vm6727 = vcmp.lt.s32.totalorder %v6671, 14
        %vm6728 = vcmp.lt.s32.totalorder %v6672, 14
        %vm6729 = vcmp.lt.s32.totalorder %v6673, 14
        %vm6730 = vcmp.lt.s32.totalorder %v6674, 14
        %vm6731 = vcmp.lt.s32.totalorder %v6675, 14
        %vm6732 = vcmp.lt.s32.totalorder %v6676, 14
        %vm6733 = vcmp.lt.s32.totalorder %v6677, 14
        %vm6734 = vcmp.lt.s32.totalorder %v6678, 14
        %vm6735 = vcmp.lt.s32.totalorder %v6679, 14
        %vm6736 = vcmp.lt.s32.totalorder %v6680, 14
        %vm6737 = vcmp.lt.s32.totalorder %v6681, 14
        %vm6738 = vcmp.lt.s32.totalorder %v6682, 14
        %vm6739 = vcmp.lt.s32.totalorder %v6683, 14
        %vm6740 = vcmp.lt.s32.totalorder %v6684, 14
        %vm6741 = vcmp.lt.s32.totalorder %v6685, 14
        %vm6742 = vcmp.lt.s32.totalorder %v6686, 14
        %vm6743 = vcmp.lt.s32.totalorder %v6687, 14
        %vm6744 = vcmp.lt.s32.totalorder %v6688, 14
        %vm6745 = vcmp.lt.s32.totalorder %v6689, 14
        %v6746 = vsel %vm6690, 1, 0
        %v6747 = vsel %vm6691, 1, 0
        %v6748 = vsel %vm6692, 1, 0
        %v6749 = vsel %vm6693, 1, 0
        %v6750 = vsel %vm6694, 1, 0
        %v6751 = vsel %vm6695, 1, 0
        %v6752 = vsel %vm6696, 1, 0
        %v6753 = vsel %vm6697, 1, 0
        %v6754 = vsel %vm6698, 1, 0
        %v6755 = vsel %vm6699, 1, 0
        %v6756 = vsel %vm6700, 1, 0
        %v6757 = vsel %vm6701, 1, 0
        %v6758 = vsel %vm6702, 1, 0
        %v6759 = vsel %vm6703, 1, 0
        %v6760 = vsel %vm6704, 1, 0
        %v6761 = vsel %vm6705, 1, 0
        %v6762 = vsel %vm6706, 1, 0
        %v6763 = vsel %vm6707, 1, 0
        %v6764 = vsel %vm6708, 1, 0
        %v6765 = vsel %vm6709, 1, 0
        %v6766 = vsel %vm6710, 1, 0
        %v6767 = vsel %vm6711, 1, 0
        %v6768 = vsel %vm6712, 1, 0
        %v6769 = vsel %vm6713, 1, 0
        %v6770 = vsel %vm6714, 1, 0
        %v6771 = vsel %vm6715, 1, 0
        %v6772 = vsel %vm6716, 1, 0
        %v6773 = vsel %vm6717, 1, 0
        %v6774 = vsel %vm6718, 1, 0
        %v6775 = vsel %vm6719, 1, 0
        %v6776 = vsel %vm6720, 1, 0
        %v6777 = vsel %vm6721, 1, 0
        %v6778 = vsel %vm6722, 1, 0
        %v6779 = vsel %vm6723, 1, 0
        %v6780 = vsel %vm6724, 1, 0
        %v6781 = vsel %vm6725, 1, 0
        %v6782 = vsel %vm6726, 1, 0
        %v6783 = vsel %vm6727, 1, 0
        %v6784 = vsel %vm6728, 1, 0
        %v6785 = vsel %vm6729, 1, 0
        %v6786 = vsel %vm6730, 1, 0
        %v6787 = vsel %vm6731, 1, 0
        %v6788 = vsel %vm6732, 1, 0
        %v6789 = vsel %vm6733, 1, 0
        %v6790 = vsel %vm6734, 1, 0
        %v6791 = vsel %vm6735, 1, 0
        %v6792 = vsel %vm6736, 1, 0
        %v6793 = vsel %vm6737, 1, 0
        %v6794 = vsel %vm6738, 1, 0
        %v6795 = vsel %vm6739, 1, 0
        %v6796 = vsel %vm6740, 1, 0
        %v6797 = vsel %vm6741, 1, 0
        %v6798 = vsel %vm6742, 1, 0
        %v6799 = vsel %vm6743, 1, 0
        %v6800 = vsel %vm6744, 1, 0
        %v6801 = vsel %vm6745, 1, 0
        %vm6802 = vcmp.eq.s32.totalorder %v6746, 1
        %vm6803 = vcmp.eq.s32.totalorder %v6747, 1
        %vm6804 = vcmp.eq.s32.totalorder %v6748, 1
        %vm6805 = vcmp.eq.s32.totalorder %v6749, 1
        %vm6806 = vcmp.eq.s32.totalorder %v6750, 1
        %vm6807 = vcmp.eq.s32.totalorder %v6751, 1
        %vm6808 = vcmp.eq.s32.totalorder %v6752, 1
        %vm6809 = vcmp.eq.s32.totalorder %v6753, 1
        %vm6810 = vcmp.eq.s32.totalorder %v6754, 1
        %vm6811 = vcmp.eq.s32.totalorder %v6755, 1
        %vm6812 = vcmp.eq.s32.totalorder %v6756, 1
        %vm6813 = vcmp.eq.s32.totalorder %v6757, 1
        %vm6814 = vcmp.eq.s32.totalorder %v6758, 1
        %vm6815 = vcmp.eq.s32.totalorder %v6759, 1
        %vm6816 = vcmp.eq.s32.totalorder %v6760, 1
        %vm6817 = vcmp.eq.s32.totalorder %v6761, 1
        %vm6818 = vcmp.eq.s32.totalorder %v6762, 1
        %vm6819 = vcmp.eq.s32.totalorder %v6763, 1
        %vm6820 = vcmp.eq.s32.totalorder %v6764, 1
        %vm6821 = vcmp.eq.s32.totalorder %v6765, 1
        %vm6822 = vcmp.eq.s32.totalorder %v6766, 1
        %vm6823 = vcmp.eq.s32.totalorder %v6767, 1
        %vm6824 = vcmp.eq.s32.totalorder %v6768, 1
        %vm6825 = vcmp.eq.s32.totalorder %v6769, 1
        %vm6826 = vcmp.eq.s32.totalorder %v6770, 1
        %vm6827 = vcmp.eq.s32.totalorder %v6771, 1
        %vm6828 = vcmp.eq.s32.totalorder %v6772, 1
        %vm6829 = vcmp.eq.s32.totalorder %v6773, 1
        %vm6830 = vcmp.eq.s32.totalorder %v6774, 1
        %vm6831 = vcmp.eq.s32.totalorder %v6775, 1
        %vm6832 = vcmp.eq.s32.totalorder %v6776, 1
        %vm6833 = vcmp.eq.s32.totalorder %v6777, 1
        %vm6834 = vcmp.eq.s32.totalorder %v6778, 1
        %vm6835 = vcmp.eq.s32.totalorder %v6779, 1
        %vm6836 = vcmp.eq.s32.totalorder %v6780, 1
        %vm6837 = vcmp.eq.s32.totalorder %v6781, 1
        %vm6838 = vcmp.eq.s32.totalorder %v6782, 1
        %vm6839 = vcmp.eq.s32.totalorder %v6783, 1
        %vm6840 = vcmp.eq.s32.totalorder %v6784, 1
        %vm6841 = vcmp.eq.s32.totalorder %v6785, 1
        %vm6842 = vcmp.eq.s32.totalorder %v6786, 1
        %vm6843 = vcmp.eq.s32.totalorder %v6787, 1
        %vm6844 = vcmp.eq.s32.totalorder %v6788, 1
        %vm6845 = vcmp.eq.s32.totalorder %v6789, 1
        %vm6846 = vcmp.eq.s32.totalorder %v6790, 1
        %vm6847 = vcmp.eq.s32.totalorder %v6791, 1
        %vm6848 = vcmp.eq.s32.totalorder %v6792, 1
        %vm6849 = vcmp.eq.s32.totalorder %v6793, 1
        %vm6850 = vcmp.eq.s32.totalorder %v6794, 1
        %vm6851 = vcmp.eq.s32.totalorder %v6795, 1
        %vm6852 = vcmp.eq.s32.totalorder %v6796, 1
        %vm6853 = vcmp.eq.s32.totalorder %v6797, 1
        %vm6854 = vcmp.eq.s32.totalorder %v6798, 1
        %vm6855 = vcmp.eq.s32.totalorder %v6799, 1
        %vm6856 = vcmp.eq.s32.totalorder %v6800, 1
        %vm6857 = vcmp.eq.s32.totalorder %v6801, 1
        %v6858 = vsel %vm6802, %v5905, 0.0
        %v6859 = vsel %vm6803, %v5906, 0.0
        %v6860 = vsel %vm6804, %v5907, 0.0
        %v6861 = vsel %vm6805, %v5908, 0.0
        %v6862 = vsel %vm6806, %v5909, 0.0
        %v6863 = vsel %vm6807, %v5910, 0.0
        %v6864 = vsel %vm6808, %v5911, 0.0
        %v6865 = vsel %vm6809, %v5912, 0.0
        %v6866 = vsel %vm6810, %v5913, 0.0
        %v6867 = vsel %vm6811, %v5914, 0.0
        %v6868 = vsel %vm6812, %v5915, 0.0
        %v6869 = vsel %vm6813, %v5916, 0.0
        %v6870 = vsel %vm6814, %v5917, 0.0
        %v6871 = vsel %vm6815, %v5918, 0.0
        %v6872 = vsel %vm6816, %v5919, 0.0
        %v6873 = vsel %vm6817, %v5920, 0.0
        %v6874 = vsel %vm6818, %v5921, 0.0
        %v6875 = vsel %vm6819, %v5922, 0.0
        %v6876 = vsel %vm6820, %v5923, 0.0
        %v6877 = vsel %vm6821, %v5924, 0.0
        %v6878 = vsel %vm6822, %v5925, 0.0
        %v6879 = vsel %vm6823, %v5926, 0.0
        %v6880 = vsel %vm6824, %v5927, 0.0
        %v6881 = vsel %vm6825, %v5928, 0.0
        %v6882 = vsel %vm6826, %v5929, 0.0
        %v6883 = vsel %vm6827, %v5930, 0.0
        %v6884 = vsel %vm6828, %v5931, 0.0
        %v6885 = vsel %vm6829, %v5932, 0.0
        %v6886 = vsel %vm6830, %v5933, 0.0
        %v6887 = vsel %vm6831, %v5934, 0.0
        %v6888 = vsel %vm6832, %v5935, 0.0
        %v6889 = vsel %vm6833, %v5936, 0.0
        %v6890 = vsel %vm6834, %v5937, 0.0
        %v6891 = vsel %vm6835, %v5938, 0.0
        %v6892 = vsel %vm6836, %v5939, 0.0
        %v6893 = vsel %vm6837, %v5940, 0.0
        %v6894 = vsel %vm6838, %v5941, 0.0
        %v6895 = vsel %vm6839, %v5942, 0.0
        %v6896 = vsel %vm6840, %v5943, 0.0
        %v6897 = vsel %vm6841, %v5944, 0.0
        %v6898 = vsel %vm6842, %v5945, 0.0
        %v6899 = vsel %vm6843, %v5946, 0.0
        %v6900 = vsel %vm6844, %v5947, 0.0
        %v6901 = vsel %vm6845, %v5948, 0.0
        %v6902 = vsel %vm6846, %v5949, 0.0
        %v6903 = vsel %vm6847, %v5950, 0.0
        %v6904 = vsel %vm6848, %v5951, 0.0
        %v6905 = vsel %vm6849, %v5952, 0.0
        %v6906 = vsel %vm6850, %v5953, 0.0
        %v6907 = vsel %vm6851, %v5954, 0.0
        %v6908 = vsel %vm6852, %v5955, 0.0
        %v6909 = vsel %vm6853, %v5956, 0.0
        %v6910 = vsel %vm6854, %v5957, 0.0
        %v6911 = vsel %vm6855, %v5958, 0.0
        %v6912 = vsel %vm6856, %v5959, 0.0
        %v6913 = vsel %vm6857, %v5960, 0.0
        %v6914 = vadd.f32 %v6858, %v6859
        %v6915 = vadd.f32 %v6914, %v6860
        %v6916 = vadd.f32 %v6915, %v6861
        %v6917 = vadd.f32 %v6916, %v6862
        %v6918 = vadd.f32 %v6917, %v6863
        %v6919 = vadd.f32 %v6918, %v6864
        %v6920 = vadd.f32 %v6919, %v6865
        %v6921 = vadd.f32 %v6920, %v6866
        %v6922 = vadd.f32 %v6921, %v6867
        %v6923 = vadd.f32 %v6922, %v6868
        %v6924 = vadd.f32 %v6923, %v6869
        %v6925 = vadd.f32 %v6924, %v6870
        %v6926 = vadd.f32 %v6925, %v6871
        %v6927 = vadd.f32 %v6926, %v6872
        %v6928 = vadd.f32 %v6927, %v6873
        %v6929 = vadd.f32 %v6928, %v6874
        %v6930 = vadd.f32 %v6929, %v6875
        %v6931 = vadd.f32 %v6930, %v6876
        %v6932 = vadd.f32 %v6931, %v6877
        %v6933 = vadd.f32 %v6932, %v6878
        %v6934 = vadd.f32 %v6933, %v6879
        %v6935 = vadd.f32 %v6934, %v6880
        %v6936 = vadd.f32 %v6935, %v6881
        %v6937 = vadd.f32 %v6936, %v6882
        %v6938 = vadd.f32 %v6937, %v6883
        %v6939 = vadd.f32 %v6938, %v6884
        %v6940 = vadd.f32 %v6939, %v6885
        %v6941 = vadd.f32 %v6940, %v6886
        %v6942 = vadd.f32 %v6941, %v6887
        %v6943 = vadd.f32 %v6942, %v6888
        %v6944 = vadd.f32 %v6943, %v6889
        %v6945 = vadd.f32 %v6944, %v6890
        %v6946 = vadd.f32 %v6945, %v6891
        %v6947 = vadd.f32 %v6946, %v6892
        %v6948 = vadd.f32 %v6947, %v6893
        %v6949 = vadd.f32 %v6948, %v6894
        %v6950 = vadd.f32 %v6949, %v6895
        %v6951 = vadd.f32 %v6950, %v6896
        %v6952 = vadd.f32 %v6951, %v6897
        %v6953 = vadd.f32 %v6952, %v6898
        %v6954 = vadd.f32 %v6953, %v6899
        %v6955 = vadd.f32 %v6954, %v6900
        %v6956 = vadd.f32 %v6955, %v6901
        %v6957 = vadd.f32 %v6956, %v6902
        %v6958 = vadd.f32 %v6957, %v6903
        %v6959 = vadd.f32 %v6958, %v6904
        %v6960 = vadd.f32 %v6959, %v6905
        %v6961 = vadd.f32 %v6960, %v6906
        %v6962 = vadd.f32 %v6961, %v6907
        %v6963 = vadd.f32 %v6962, %v6908
        %v6964 = vadd.f32 %v6963, %v6909
        %v6965 = vadd.f32 %v6964, %v6910
        %v6966 = vadd.f32 %v6965, %v6911
        %v6967 = vadd.f32 %v6966, %v6912
        %v6968 = vadd.f32 %v6967, %v6913
        %v6969 = vrot.slane %v6968, 4
        %v6970 = vadd.f32 %v6968, %v6969
        %v6971 = vrot.slane %v6970, 2
        %v6972 = vadd.f32 %v6970, %v6971
        %v6973 = vrot.slane %v6972, 1
        %v6974 = vadd.f32 %v6972, %v6973
        %v6975 = vmul.f32 %v6858, %v6858
        %v6976 = vmul.f32 %v6859, %v6859
        %v6977 = vmul.f32 %v6860, %v6860
        %v6978 = vmul.f32 %v6861, %v6861
        %v6979 = vmul.f32 %v6862, %v6862
        %v6980 = vmul.f32 %v6863, %v6863
        %v6981 = vmul.f32 %v6864, %v6864
        %v6982 = vmul.f32 %v6865, %v6865
        %v6983 = vmul.f32 %v6866, %v6866
        %v6984 = vmul.f32 %v6867, %v6867
        %v6985 = vmul.f32 %v6868, %v6868
        %v6986 = vmul.f32 %v6869, %v6869
        %v6987 = vmul.f32 %v6870, %v6870
        %v6988 = vmul.f32 %v6871, %v6871
        %v6989 = vmul.f32 %v6872, %v6872
        %v6990 = vmul.f32 %v6873, %v6873
        %v6991 = vmul.f32 %v6874, %v6874
        %v6992 = vmul.f32 %v6875, %v6875
        %v6993 = vmul.f32 %v6876, %v6876
        %v6994 = vmul.f32 %v6877, %v6877
        %v6995 = vmul.f32 %v6878, %v6878
        %v6996 = vmul.f32 %v6879, %v6879
        %v6997 = vmul.f32 %v6880, %v6880
        %v6998 = vmul.f32 %v6881, %v6881
        %v6999 = vmul.f32 %v6882, %v6882
        %v7000 = vmul.f32 %v6883, %v6883
        %v7001 = vmul.f32 %v6884, %v6884
        %v7002 = vmul.f32 %v6885, %v6885
        %v7003 = vmul.f32 %v6886, %v6886
        %v7004 = vmul.f32 %v6887, %v6887
        %v7005 = vmul.f32 %v6888, %v6888
        %v7006 = vmul.f32 %v6889, %v6889
        %v7007 = vmul.f32 %v6890, %v6890
        %v7008 = vmul.f32 %v6891, %v6891
        %v7009 = vmul.f32 %v6892, %v6892
        %v7010 = vmul.f32 %v6893, %v6893
        %v7011 = vmul.f32 %v6894, %v6894
        %v7012 = vmul.f32 %v6895, %v6895
        %v7013 = vmul.f32 %v6896, %v6896
        %v7014 = vmul.f32 %v6897, %v6897
        %v7015 = vmul.f32 %v6898, %v6898
        %v7016 = vmul.f32 %v6899, %v6899
        %v7017 = vmul.f32 %v6900, %v6900
        %v7018 = vmul.f32 %v6901, %v6901
        %v7019 = vmul.f32 %v6902, %v6902
        %v7020 = vmul.f32 %v6903, %v6903
        %v7021 = vmul.f32 %v6904, %v6904
        %v7022 = vmul.f32 %v6905, %v6905
        %v7023 = vmul.f32 %v6906, %v6906
        %v7024 = vmul.f32 %v6907, %v6907
        %v7025 = vmul.f32 %v6908, %v6908
        %v7026 = vmul.f32 %v6909, %v6909
        %v7027 = vmul.f32 %v6910, %v6910
        %v7028 = vmul.f32 %v6911, %v6911
        %v7029 = vmul.f32 %v6912, %v6912
        %v7030 = vmul.f32 %v6913, %v6913
        %v7031 = vadd.f32 %v6975, %v6976
        %v7032 = vadd.f32 %v7031, %v6977
        %v7033 = vadd.f32 %v7032, %v6978
        %v7034 = vadd.f32 %v7033, %v6979
        %v7035 = vadd.f32 %v7034, %v6980
        %v7036 = vadd.f32 %v7035, %v6981
        %v7037 = vadd.f32 %v7036, %v6982
        %v7038 = vadd.f32 %v7037, %v6983
        %v7039 = vadd.f32 %v7038, %v6984
        %v7040 = vadd.f32 %v7039, %v6985
        %v7041 = vadd.f32 %v7040, %v6986
        %v7042 = vadd.f32 %v7041, %v6987
        %v7043 = vadd.f32 %v7042, %v6988
        %v7044 = vadd.f32 %v7043, %v6989
        %v7045 = vadd.f32 %v7044, %v6990
        %v7046 = vadd.f32 %v7045, %v6991
        %v7047 = vadd.f32 %v7046, %v6992
        %v7048 = vadd.f32 %v7047, %v6993
        %v7049 = vadd.f32 %v7048, %v6994
        %v7050 = vadd.f32 %v7049, %v6995
        %v7051 = vadd.f32 %v7050, %v6996
        %v7052 = vadd.f32 %v7051, %v6997
        %v7053 = vadd.f32 %v7052, %v6998
        %v7054 = vadd.f32 %v7053, %v6999
        %v7055 = vadd.f32 %v7054, %v7000
        %v7056 = vadd.f32 %v7055, %v7001
        %v7057 = vadd.f32 %v7056, %v7002
        %v7058 = vadd.f32 %v7057, %v7003
        %v7059 = vadd.f32 %v7058, %v7004
        %v7060 = vadd.f32 %v7059, %v7005
        %v7061 = vadd.f32 %v7060, %v7006
        %v7062 = vadd.f32 %v7061, %v7007
        %v7063 = vadd.f32 %v7062, %v7008
        %v7064 = vadd.f32 %v7063, %v7009
        %v7065 = vadd.f32 %v7064, %v7010
        %v7066 = vadd.f32 %v7065, %v7011
        %v7067 = vadd.f32 %v7066, %v7012
        %v7068 = vadd.f32 %v7067, %v7013
        %v7069 = vadd.f32 %v7068, %v7014
        %v7070 = vadd.f32 %v7069, %v7015
        %v7071 = vadd.f32 %v7070, %v7016
        %v7072 = vadd.f32 %v7071, %v7017
        %v7073 = vadd.f32 %v7072, %v7018
        %v7074 = vadd.f32 %v7073, %v7019
        %v7075 = vadd.f32 %v7074, %v7020
        %v7076 = vadd.f32 %v7075, %v7021
        %v7077 = vadd.f32 %v7076, %v7022
        %v7078 = vadd.f32 %v7077, %v7023
        %v7079 = vadd.f32 %v7078, %v7024
        %v7080 = vadd.f32 %v7079, %v7025
        %v7081 = vadd.f32 %v7080, %v7026
        %v7082 = vadd.f32 %v7081, %v7027
        %v7083 = vadd.f32 %v7082, %v7028
        %v7084 = vadd.f32 %v7083, %v7029
        %v7085 = vadd.f32 %v7084, %v7030
        %v7086 = vrot.slane %v7085, 4
        %v7087 = vadd.f32 %v7085, %v7086
        %v7088 = vrot.slane %v7087, 2
        %v7089 = vadd.f32 %v7087, %v7088
        %v7090 = vrot.slane %v7089, 1
        %v7091 = vadd.f32 %v7089, %v7090
        %v7092 = vrcp.pop 392.0
        %v7093 = vmul.f32 392.0, %v7092
        %v7094 = vsub.f32 1.0, %v7093
        %v7095 = vmul.f32 %v7092, %v7094
        %v7096 = vadd.f32 %v7092, %v7095
        %vm7097 = vweird.f32 %v7092
        %v7098 = vsel %vm7097, %v7092, %v7096
        %v7099 = vmul.f32 %v6974, %v7098
        %v7100 = vmul.f32 %v7091, %v7098
        %v7101 = vmul.f32 %v7099, %v7099
        %v7102 = vsub.f32 %v7100, %v7101
        %v7103 = vld [vmem:[%s539] sm:$0x1]
        %v7104 = vadd.f32 %v7102, 1e-05
        %v7105 = vrsqrt.pop %v7104
        %v7106 = vmul.f32 %v7105, %v7104
        %v7107 = vmul.f32 %v7106, %v7105
        %v7108 = vmul.f32 0.5, %v7107
        %v7109 = vsub.f32 1.5, %v7108
        %v7110 = vmul.f32 %v7105, %v7109
        %vm7111 = vweird.f32 %v7104
        %vm7112 = vweird.f32 %v7105
        %vm7113 = vmor %vm7111, %vm7112
        %v7114 = vsel %vm7113, %v7105, %v7110
        %v7115 = vmul.f32 %v7103, %v7114
        %v7116 = vld [vmem:[%s548] sm:$0x1]
        %v7117 = vmul.f32 %v7099, %v7115
        %v7118 = vsub.f32 %v7116, %v7117
        %v7120 = vperm.slane %v7115, 0
        %v7122 = vmul.f32 %v5905, %v7120
        %v7123 = vmul.f32 %v5906, %v7120
        %v7124 = vmul.f32 %v5907, %v7120
        %v7125 = vmul.f32 %v5908, %v7120
        %v7126 = vmul.f32 %v5909, %v7120
        %v7127 = vmul.f32 %v5910, %v7120
        %v7128 = vmul.f32 %v5911, %v7120
        %v7129 = vmul.f32 %v5912, %v7120
        %v7130 = vmul.f32 %v5913, %v7120
        %v7131 = vmul.f32 %v5914, %v7120
        %v7132 = vmul.f32 %v5915, %v7120
        %v7133 = vmul.f32 %v5916, %v7120
        %v7134 = vmul.f32 %v5917, %v7120
        %v7135 = vmul.f32 %v5918, %v7120
        %v7136 = vmul.f32 %v5919, %v7120
        %v7137 = vmul.f32 %v5920, %v7120
        %v7138 = vmul.f32 %v5921, %v7120
        %v7139 = vmul.f32 %v5922, %v7120
        %v7140 = vmul.f32 %v5923, %v7120
        %v7141 = vmul.f32 %v5924, %v7120
        %v7142 = vmul.f32 %v5925, %v7120
        %v7143 = vmul.f32 %v5926, %v7120
        %v7144 = vmul.f32 %v5927, %v7120
        %v7145 = vmul.f32 %v5928, %v7120
        %v7146 = vmul.f32 %v5929, %v7120
        %v7147 = vmul.f32 %v5930, %v7120
        %v7148 = vmul.f32 %v5931, %v7120
        %v7149 = vmul.f32 %v5932, %v7120
        %v7150 = vmul.f32 %v5933, %v7120
        %v7151 = vmul.f32 %v5934, %v7120
        %v7152 = vmul.f32 %v5935, %v7120
        %v7153 = vmul.f32 %v5936, %v7120
        %v7154 = vmul.f32 %v5937, %v7120
        %v7155 = vmul.f32 %v5938, %v7120
        %v7156 = vmul.f32 %v5939, %v7120
        %v7157 = vmul.f32 %v5940, %v7120
        %v7158 = vmul.f32 %v5941, %v7120
        %v7159 = vmul.f32 %v5942, %v7120
        %v7160 = vmul.f32 %v5943, %v7120
        %v7161 = vmul.f32 %v5944, %v7120
        %v7162 = vmul.f32 %v5945, %v7120
        %v7163 = vmul.f32 %v5946, %v7120
        %v7164 = vmul.f32 %v5947, %v7120
        %v7165 = vmul.f32 %v5948, %v7120
        %v7166 = vmul.f32 %v5949, %v7120
        %v7167 = vmul.f32 %v5950, %v7120
        %v7168 = vmul.f32 %v5951, %v7120
        %v7169 = vmul.f32 %v5952, %v7120
        %v7170 = vmul.f32 %v5953, %v7120
        %v7171 = vmul.f32 %v5954, %v7120
        %v7172 = vmul.f32 %v5955, %v7120
        %v7173 = vmul.f32 %v5956, %v7120
        %v7174 = vmul.f32 %v5957, %v7120
        %v7175 = vmul.f32 %v5958, %v7120
        %v7176 = vmul.f32 %v5959, %v7120
        %v7177 = vmul.f32 %v5960, %v7120
        %v7179 = vperm.slane %v7118, 0
        %v7181 = vadd.f32 %v7122, %v7179
        %v7182 = vadd.f32 %v7123, %v7179
        %v7183 = vadd.f32 %v7124, %v7179
        %v7184 = vadd.f32 %v7125, %v7179
        %v7185 = vadd.f32 %v7126, %v7179
        %v7186 = vadd.f32 %v7127, %v7179
        %v7187 = vadd.f32 %v7128, %v7179
        %v7188 = vadd.f32 %v7129, %v7179
        %v7189 = vadd.f32 %v7130, %v7179
        %v7190 = vadd.f32 %v7131, %v7179
        %v7191 = vadd.f32 %v7132, %v7179
        %v7192 = vadd.f32 %v7133, %v7179
        %v7193 = vadd.f32 %v7134, %v7179
        %v7194 = vadd.f32 %v7135, %v7179
        %v7195 = vadd.f32 %v7136, %v7179
        %v7196 = vadd.f32 %v7137, %v7179
        %v7197 = vadd.f32 %v7138, %v7179
        %v7198 = vadd.f32 %v7139, %v7179
        %v7199 = vadd.f32 %v7140, %v7179
        %v7200 = vadd.f32 %v7141, %v7179
        %v7201 = vadd.f32 %v7142, %v7179
        %v7202 = vadd.f32 %v7143, %v7179
        %v7203 = vadd.f32 %v7144, %v7179
        %v7204 = vadd.f32 %v7145, %v7179
        %v7205 = vadd.f32 %v7146, %v7179
        %v7206 = vadd.f32 %v7147, %v7179
        %v7207 = vadd.f32 %v7148, %v7179
        %v7208 = vadd.f32 %v7149, %v7179
        %v7209 = vadd.f32 %v7150, %v7179
        %v7210 = vadd.f32 %v7151, %v7179
        %v7211 = vadd.f32 %v7152, %v7179
        %v7212 = vadd.f32 %v7153, %v7179
        %v7213 = vadd.f32 %v7154, %v7179
        %v7214 = vadd.f32 %v7155, %v7179
        %v7215 = vadd.f32 %v7156, %v7179
        %v7216 = vadd.f32 %v7157, %v7179
        %v7217 = vadd.f32 %v7158, %v7179
        %v7218 = vadd.f32 %v7159, %v7179
        %v7219 = vadd.f32 %v7160, %v7179
        %v7220 = vadd.f32 %v7161, %v7179
        %v7221 = vadd.f32 %v7162, %v7179
        %v7222 = vadd.f32 %v7163, %v7179
        %v7223 = vadd.f32 %v7164, %v7179
        %v7224 = vadd.f32 %v7165, %v7179
        %v7225 = vadd.f32 %v7166, %v7179
        %v7226 = vadd.f32 %v7167, %v7179
        %v7227 = vadd.f32 %v7168, %v7179
        %v7228 = vadd.f32 %v7169, %v7179
        %v7229 = vadd.f32 %v7170, %v7179
        %v7230 = vadd.f32 %v7171, %v7179
        %v7231 = vadd.f32 %v7172, %v7179
        %v7232 = vadd.f32 %v7173, %v7179
        %v7233 = vadd.f32 %v7174, %v7179
        %v7234 = vadd.f32 %v7175, %v7179
        %v7235 = vadd.f32 %v7176, %v7179
        %v7236 = vadd.f32 %v7177, %v7179
        %v7237 = vmax.f32 %v7181, 0.0
        %v7238 = vmax.f32 %v7182, 0.0
        %v7239 = vmax.f32 %v7183, 0.0
        %v7240 = vmax.f32 %v7184, 0.0
        %v7241 = vmax.f32 %v7185, 0.0
        %v7242 = vmax.f32 %v7186, 0.0
        %v7243 = vmax.f32 %v7187, 0.0
        %v7244 = vmax.f32 %v7188, 0.0
        %v7245 = vmax.f32 %v7189, 0.0
        %v7246 = vmax.f32 %v7190, 0.0
        %v7247 = vmax.f32 %v7191, 0.0
        %v7248 = vmax.f32 %v7192, 0.0
        %v7249 = vmax.f32 %v7193, 0.0
        %v7250 = vmax.f32 %v7194, 0.0
        %v7251 = vmax.f32 %v7195, 0.0
        %v7252 = vmax.f32 %v7196, 0.0
        %v7253 = vmax.f32 %v7197, 0.0
        %v7254 = vmax.f32 %v7198, 0.0
        %v7255 = vmax.f32 %v7199, 0.0
        %v7256 = vmax.f32 %v7200, 0.0
        %v7257 = vmax.f32 %v7201, 0.0
        %v7258 = vmax.f32 %v7202, 0.0
        %v7259 = vmax.f32 %v7203, 0.0
        %v7260 = vmax.f32 %v7204, 0.0
        %v7261 = vmax.f32 %v7205, 0.0
        %v7262 = vmax.f32 %v7206, 0.0
        %v7263 = vmax.f32 %v7207, 0.0
        %v7264 = vmax.f32 %v7208, 0.0
        %v7265 = vmax.f32 %v7209, 0.0
        %v7266 = vmax.f32 %v7210, 0.0
        %v7267 = vmax.f32 %v7211, 0.0
        %v7268 = vmax.f32 %v7212, 0.0
        %v7269 = vmax.f32 %v7213, 0.0
        %v7270 = vmax.f32 %v7214, 0.0
        %v7271 = vmax.f32 %v7215, 0.0
        %v7272 = vmax.f32 %v7216, 0.0
        %v7273 = vmax.f32 %v7217, 0.0
        %v7274 = vmax.f32 %v7218, 0.0
        %v7275 = vmax.f32 %v7219, 0.0
        %v7276 = vmax.f32 %v7220, 0.0
        %v7277 = vmax.f32 %v7221, 0.0
        %v7278 = vmax.f32 %v7222, 0.0
        %v7279 = vmax.f32 %v7223, 0.0
        %v7280 = vmax.f32 %v7224, 0.0
        %v7281 = vmax.f32 %v7225, 0.0
        %v7282 = vmax.f32 %v7226, 0.0
        %v7283 = vmax.f32 %v7227, 0.0
        %v7284 = vmax.f32 %v7228, 0.0
        %v7285 = vmax.f32 %v7229, 0.0
        %v7286 = vmax.f32 %v7230, 0.0
        %v7287 = vmax.f32 %v7231, 0.0
        %v7288 = vmax.f32 %v7232, 0.0
        %v7289 = vmax.f32 %v7233, 0.0
        %v7290 = vmax.f32 %v7234, 0.0
        %v7291 = vmax.f32 %v7235, 0.0
        %v7292 = vmax.f32 %v7236, 0.0
        %7293 = vst [vmem:[%s584] sm:$0xff] %v7237
        %7294 = vst [vmem:[%s584 + $0x8] sm:$0x3f] %v7238
        %7295 = vst [vmem:[%s584 + $0x10] sm:$0xff] %v7239
        %7296 = vst [vmem:[%s584 + $0x18] sm:$0x3f] %v7240
        %7297 = vst [vmem:[%s584 + $0x20] sm:$0xff] %v7241
        %7298 = vst [vmem:[%s584 + $0x28] sm:$0x3f] %v7242
        %7299 = vst [vmem:[%s584 + $0x30] sm:$0xff] %v7243
        %7300 = vst [vmem:[%s584 + $0x38] sm:$0x3f] %v7244
        %7301 = vst [vmem:[%s584 + $0x40] sm:$0xff] %v7245
        %7302 = vst [vmem:[%s584 + $0x48] sm:$0x3f] %v7246
        %7303 = vst [vmem:[%s584 + $0x50] sm:$0xff] %v7247
        %7304 = vst [vmem:[%s584 + $0x58] sm:$0x3f] %v7248
        %7305 = vst [vmem:[%s584 + $0x60] sm:$0xff] %v7249
        %7306 = vst [vmem:[%s584 + $0x68] sm:$0x3f] %v7250
        %7307 = vst [vmem:[%s584 + $0x70] sm:$0xff] %v7251
        %7308 = vst [vmem:[%s584 + $0x78] sm:$0x3f] %v7252
        %7309 = vst [vmem:[%s584 + $0x80] sm:$0xff] %v7253
        %7310 = vst [vmem:[%s584 + $0x88] sm:$0x3f] %v7254
        %7311 = vst [vmem:[%s584 + $0x90] sm:$0xff] %v7255
        %7312 = vst [vmem:[%s584 + $0x98] sm:$0x3f] %v7256
        %7313 = vst [vmem:[%s584 + $0xa0] sm:$0xff] %v7257
        %7314 = vst [vmem:[%s584 + $0xa8] sm:$0x3f] %v7258
        %7315 = vst [vmem:[%s584 + $0xb0] sm:$0xff] %v7259
        %7316 = vst [vmem:[%s584 + $0xb8] sm:$0x3f] %v7260
        %7317 = vst [vmem:[%s584 + $0xc0] sm:$0xff] %v7261
        %7318 = vst [vmem:[%s584 + $0xc8] sm:$0x3f] %v7262
        %7319 = vst [vmem:[%s584 + $0xd0] sm:$0xff] %v7263
        %7320 = vst [vmem:[%s584 + $0xd8] sm:$0x3f] %v7264
        %7321 = vst [vmem:[%s584 + $0xe0] sm:$0xff] %v7265
        %7322 = vst [vmem:[%s584 + $0xe8] sm:$0x3f] %v7266
        %7323 = vst [vmem:[%s584 + $0xf0] sm:$0xff] %v7267
        %7324 = vst [vmem:[%s584 + $0xf8] sm:$0x3f] %v7268
        %7325 = vst [vmem:[%s584 + $0x100] sm:$0xff] %v7269
        %7326 = vst [vmem:[%s584 + $0x108] sm:$0x3f] %v7270
        %7327 = vst [vmem:[%s584 + $0x110] sm:$0xff] %v7271
        %7328 = vst [vmem:[%s584 + $0x118] sm:$0x3f] %v7272
        %7329 = vst [vmem:[%s584 + $0x120] sm:$0xff] %v7273
        %7330 = vst [vmem:[%s584 + $0x128] sm:$0x3f] %v7274
        %7331 = vst [vmem:[%s584 + $0x130] sm:$0xff] %v7275
        %7332 = vst [vmem:[%s584 + $0x138] sm:$0x3f] %v7276
        %7333 = vst [vmem:[%s584 + $0x140] sm:$0xff] %v7277
        %7334 = vst [vmem:[%s584 + $0x148] sm:$0x3f] %v7278
        %7335 = vst [vmem:[%s584 + $0x150] sm:$0xff] %v7279
        %7336 = vst [vmem:[%s584 + $0x158] sm:$0x3f] %v7280
        %7337 = vst [vmem:[%s584 + $0x160] sm:$0xff] %v7281
        %7338 = vst [vmem:[%s584 + $0x168] sm:$0x3f] %v7282
        %7339 = vst [vmem:[%s584 + $0x170] sm:$0xff] %v7283
        %7340 = vst [vmem:[%s584 + $0x178] sm:$0x3f] %v7284
        %7341 = vst [vmem:[%s584 + $0x180] sm:$0xff] %v7285
        %7342 = vst [vmem:[%s584 + $0x188] sm:$0x3f] %v7286
        %7343 = vst [vmem:[%s584 + $0x190] sm:$0xff] %v7287
        %7344 = vst [vmem:[%s584 + $0x198] sm:$0x3f] %v7288
        %7345 = vst [vmem:[%s584 + $0x1a0] sm:$0xff] %v7289
        %7346 = vst [vmem:[%s584 + $0x1a8] sm:$0x3f] %v7290
        %7347 = vst [vmem:[%s584 + $0x1b0] sm:$0xff] %v7291
        %7348 = vst [vmem:[%s584 + $0x1b8] sm:$0x3f] %v7292
        %s7349 = sand.u32 %s135, 1
        %s7350 = sand.u32 %s135, 1
        %s7351 = smul.addr %s7350, 448
        %s7352 = scalar_lea.vmem [#allocation11], %s7351
        // Predicated region
        $region87: #{tpu_custom_call.1} parent=69 // pred_check
          %p7353 = pneg %p145
        $region88: #{tpu_custom_call.1} parent=69 // pred_check_branch
          %7355 = sbr.rel (%p7353) target = $region90
        $region89: #{tpu_custom_call.1} parent=69 // pred_region
          %s7356 = smul.addr %s21, 8
          %s7357 = scalar_lea.vmem %s4, %s7356
          // Predicated region
          $region91: #{tpu_custom_call.1} parent=89 // pred_check
            _
          $region92: #{tpu_custom_call.1} parent=89 // pred_check_branch
            %7359 = sbr.rel (0) target = $region94
          $region93: #{tpu_custom_call.1} parent=89 // pred_region
            // Predicated region
            $region95: #{tpu_custom_call.1} parent=93 // pred_check
              _
            $region96: #{tpu_custom_call.1} parent=93 // pred_check_branch
              %7361 = sbr.rel (0) target = $region98
            $region97: #{tpu_custom_call.1} parent=93 // pred_region
              // Predicated region
              $region110: #{tpu_custom_call.1} parent=97 // pred_check
                _
              $region111: #{tpu_custom_call.1} parent=97 // pred_check_branch
                %7487 = sbr.rel (0) target = $region113
              $region112: #{tpu_custom_call.1} parent=97 // pred_region
                loop: start=0, step=1, limit=1
                $region114: #{tpu_custom_call.1} parent=112 // loop_pre_header
                  _
                $region115: #{tpu_custom_call.1} parent=112 // loop_header
                  %s7489 = sphi 0, %s7493
                  %p7490 = scmp.ge.s32.totalorder %s7489, 1
                  %s7494 = sphi %s7352, %s7352
                  %s7495 = sphi %s7357, %s7357
                $region116: #{tpu_custom_call.1} parent=112 // loop_header_branch
                  %7492 = sbr.rel (%p7490) target = $region120
                $region117: #{tpu_custom_call.1} parent=112 // loop_body
                  %v7496 = vld [vmem:[%s7494] sm:$0xff]
                  %7497 = vst [vmem:[%s7495] sm:$0xff] %v7496
                  %v7498 = vld [vmem:[%s7494 + $0x8] sm:$0xff]
                  %7499 = vst [vmem:[%s7495 + $0x10] sm:$0xff] %v7498
                  %v7500 = vld [vmem:[%s7494 + $0x10] sm:$0xff]
                  %7501 = vst [vmem:[%s7495 + $0x20] sm:$0xff] %v7500
                  %v7502 = vld [vmem:[%s7494 + $0x18] sm:$0xff]
                  %7503 = vst [vmem:[%s7495 + $0x30] sm:$0xff] %v7502
                  %v7504 = vld [vmem:[%s7494 + $0x20] sm:$0xff]
                  %7505 = vst [vmem:[%s7495 + $0x40] sm:$0xff] %v7504
                  %v7506 = vld [vmem:[%s7494 + $0x28] sm:$0xff]
                  %7507 = vst [vmem:[%s7495 + $0x50] sm:$0xff] %v7506
                  %v7508 = vld [vmem:[%s7494 + $0x30] sm:$0xff]
                  %7509 = vst [vmem:[%s7495 + $0x60] sm:$0xff] %v7508
                  %v7510 = vld [vmem:[%s7494 + $0x38] sm:$0xff]
                  %7511 = vst [vmem:[%s7495 + $0x70] sm:$0xff] %v7510
                  %v7512 = vld [vmem:[%s7494 + $0x40] sm:$0xff]
                  %7513 = vst [vmem:[%s7495 + $0x80] sm:$0xff] %v7512
                  %v7514 = vld [vmem:[%s7494 + $0x48] sm:$0xff]
                  %7515 = vst [vmem:[%s7495 + $0x90] sm:$0xff] %v7514
                  %v7516 = vld [vmem:[%s7494 + $0x50] sm:$0xff]
                  %7517 = vst [vmem:[%s7495 + $0xa0] sm:$0xff] %v7516
                  %v7518 = vld [vmem:[%s7494 + $0x58] sm:$0xff]
                  %7519 = vst [vmem:[%s7495 + $0xb0] sm:$0xff] %v7518
                  %v7520 = vld [vmem:[%s7494 + $0x60] sm:$0xff]
                  %7521 = vst [vmem:[%s7495 + $0xc0] sm:$0xff] %v7520
                  %v7522 = vld [vmem:[%s7494 + $0x68] sm:$0xff]
                  %7523 = vst [vmem:[%s7495 + $0xd0] sm:$0xff] %v7522
                  %v7524 = vld [vmem:[%s7494 + $0x70] sm:$0xff]
                  %7525 = vst [vmem:[%s7495 + $0xe0] sm:$0xff] %v7524
                  %v7526 = vld [vmem:[%s7494 + $0x78] sm:$0xff]
                  %7527 = vst [vmem:[%s7495 + $0xf0] sm:$0xff] %v7526
                  %v7528 = vld [vmem:[%s7494 + $0x80] sm:$0xff]
                  %7529 = vst [vmem:[%s7495 + $0x100] sm:$0xff] %v7528
                  %v7530 = vld [vmem:[%s7494 + $0x88] sm:$0xff]
                  %7531 = vst [vmem:[%s7495 + $0x110] sm:$0xff] %v7530
                  %v7532 = vld [vmem:[%s7494 + $0x90] sm:$0xff]
                  %7533 = vst [vmem:[%s7495 + $0x120] sm:$0xff] %v7532
                  %v7534 = vld [vmem:[%s7494 + $0x98] sm:$0xff]
                  %7535 = vst [vmem:[%s7495 + $0x130] sm:$0xff] %v7534
                  %v7536 = vld [vmem:[%s7494 + $0xa0] sm:$0xff]
                  %7537 = vst [vmem:[%s7495 + $0x140] sm:$0xff] %v7536
                  %v7538 = vld [vmem:[%s7494 + $0xa8] sm:$0xff]
                  %7539 = vst [vmem:[%s7495 + $0x150] sm:$0xff] %v7538
                  %v7540 = vld [vmem:[%s7494 + $0xb0] sm:$0xff]
                  %7541 = vst [vmem:[%s7495 + $0x160] sm:$0xff] %v7540
                  %v7542 = vld [vmem:[%s7494 + $0xb8] sm:$0xff]
                  %7543 = vst [vmem:[%s7495 + $0x170] sm:$0xff] %v7542
                  %v7544 = vld [vmem:[%s7494 + $0xc0] sm:$0xff]
                  %7545 = vst [vmem:[%s7495 + $0x180] sm:$0xff] %v7544
                  %v7546 = vld [vmem:[%s7494 + $0xc8] sm:$0xff]
                  %7547 = vst [vmem:[%s7495 + $0x190] sm:$0xff] %v7546
                  %v7548 = vld [vmem:[%s7494 + $0xd0] sm:$0xff]
                  %7549 = vst [vmem:[%s7495 + $0x1a0] sm:$0xff] %v7548
                  %v7550 = vld [vmem:[%s7494 + $0xd8] sm:$0xff]
                  %7551 = vst [vmem:[%s7495 + $0x1b0] sm:$0xff] %v7550
                  %v7552 = vld [vmem:[%s7494 + $0xe0] sm:$0xff]
                  %7553 = vst [vmem:[%s7495 + $0x1c0] sm:$0xff] %v7552
                  %v7554 = vld [vmem:[%s7494 + $0xe8] sm:$0xff]
                  %7555 = vst [vmem:[%s7495 + $0x1d0] sm:$0xff] %v7554
                  %v7556 = vld [vmem:[%s7494 + $0xf0] sm:$0xff]
                  %7557 = vst [vmem:[%s7495 + $0x1e0] sm:$0xff] %v7556
                  %v7558 = vld [vmem:[%s7494 + $0xf8] sm:$0xff]
                  %7559 = vst [vmem:[%s7495 + $0x1f0] sm:$0xff] %v7558
                  %v7560 = vld [vmem:[%s7494 + $0x100] sm:$0xff]
                  %7561 = vst [vmem:[%s7495 + $0x200] sm:$0xff] %v7560
                  %v7562 = vld [vmem:[%s7494 + $0x108] sm:$0xff]
                  %7563 = vst [vmem:[%s7495 + $0x210] sm:$0xff] %v7562
                  %v7564 = vld [vmem:[%s7494 + $0x110] sm:$0xff]
                  %7565 = vst [vmem:[%s7495 + $0x220] sm:$0xff] %v7564
                  %v7566 = vld [vmem:[%s7494 + $0x118] sm:$0xff]
                  %7567 = vst [vmem:[%s7495 + $0x230] sm:$0xff] %v7566
                  %v7568 = vld [vmem:[%s7494 + $0x120] sm:$0xff]
                  %7569 = vst [vmem:[%s7495 + $0x240] sm:$0xff] %v7568
                  %v7570 = vld [vmem:[%s7494 + $0x128] sm:$0xff]
                  %7571 = vst [vmem:[%s7495 + $0x250] sm:$0xff] %v7570
                  %v7572 = vld [vmem:[%s7494 + $0x130] sm:$0xff]
                  %7573 = vst [vmem:[%s7495 + $0x260] sm:$0xff] %v7572
                  %v7574 = vld [vmem:[%s7494 + $0x138] sm:$0xff]
                  %7575 = vst [vmem:[%s7495 + $0x270] sm:$0xff] %v7574
                  %v7576 = vld [vmem:[%s7494 + $0x140] sm:$0xff]
                  %7577 = vst [vmem:[%s7495 + $0x280] sm:$0xff] %v7576
                  %v7578 = vld [vmem:[%s7494 + $0x148] sm:$0xff]
                  %7579 = vst [vmem:[%s7495 + $0x290] sm:$0xff] %v7578
                  %v7580 = vld [vmem:[%s7494 + $0x150] sm:$0xff]
                  %7581 = vst [vmem:[%s7495 + $0x2a0] sm:$0xff] %v7580
                  %v7582 = vld [vmem:[%s7494 + $0x158] sm:$0xff]
                  %7583 = vst [vmem:[%s7495 + $0x2b0] sm:$0xff] %v7582
                  %v7584 = vld [vmem:[%s7494 + $0x160] sm:$0xff]
                  %7585 = vst [vmem:[%s7495 + $0x2c0] sm:$0xff] %v7584
                  %v7586 = vld [vmem:[%s7494 + $0x168] sm:$0xff]
                  %7587 = vst [vmem:[%s7495 + $0x2d0] sm:$0xff] %v7586
                  %v7588 = vld [vmem:[%s7494 + $0x170] sm:$0xff]
                  %7589 = vst [vmem:[%s7495 + $0x2e0] sm:$0xff] %v7588
                  %v7590 = vld [vmem:[%s7494 + $0x178] sm:$0xff]
                  %7591 = vst [vmem:[%s7495 + $0x2f0] sm:$0xff] %v7590
                  %v7592 = vld [vmem:[%s7494 + $0x180] sm:$0xff]
                  %7593 = vst [vmem:[%s7495 + $0x300] sm:$0xff] %v7592
                  %v7594 = vld [vmem:[%s7494 + $0x188] sm:$0xff]
                  %7595 = vst [vmem:[%s7495 + $0x310] sm:$0xff] %v7594
                  %v7596 = vld [vmem:[%s7494 + $0x190] sm:$0xff]
                  %7597 = vst [vmem:[%s7495 + $0x320] sm:$0xff] %v7596
                  %v7598 = vld [vmem:[%s7494 + $0x198] sm:$0xff]
                  %7599 = vst [vmem:[%s7495 + $0x330] sm:$0xff] %v7598
                  %v7600 = vld [vmem:[%s7494 + $0x1a0] sm:$0xff]
                  %7601 = vst [vmem:[%s7495 + $0x340] sm:$0xff] %v7600
                  %v7602 = vld [vmem:[%s7494 + $0x1a8] sm:$0xff]
                  %7603 = vst [vmem:[%s7495 + $0x350] sm:$0xff] %v7602
                  %v7604 = vld [vmem:[%s7494 + $0x1b0] sm:$0xff]
                  %7605 = vst [vmem:[%s7495 + $0x360] sm:$0xff] %v7604
                  %v7606 = vld [vmem:[%s7494 + $0x1b8] sm:$0xff]
                  %7607 = vst [vmem:[%s7495 + $0x370] sm:$0xff] %v7606
                $region118: #{tpu_custom_call.1} parent=112 // loop_footer
                  %s7493 = sadd.s32 1, %s7489
                $region119: #{tpu_custom_call.1} parent=112 // loop_footer_branch
                  %7488 = sbr.rel target = $region115
                $region120: #{tpu_custom_call.1} parent=112 // loop_exit
                  _
              $region113: #{tpu_custom_call.1} parent=97 // pred_fallthru
                _
              // Predicated region
              $region121: #{tpu_custom_call.1} parent=97 // pred_check
                _
              $region122: #{tpu_custom_call.1} parent=97 // pred_check_branch
                %7609 = sbr.rel target = $region124
              $region123: #{tpu_custom_call.1} parent=97 // pred_region
                _
              $region124: #{tpu_custom_call.1} parent=97 // pred_fallthru
                _
            $region98: #{tpu_custom_call.1} parent=93 // pred_fallthru
              _
            // Predicated region
            $region99: #{tpu_custom_call.1} parent=93 // pred_check
              _
            $region100: #{tpu_custom_call.1} parent=93 // pred_check_branch
              %7363 = sbr.rel target = $region102
            $region101: #{tpu_custom_call.1} parent=93 // pred_region
              %s7365 = ssub.s32 256, 1
              loop: start=0, step=1, limit=1
              $region103: #{tpu_custom_call.1} parent=101 // loop_pre_header
                _
              $region104: #{tpu_custom_call.1} parent=101 // loop_header
                %s7367 = sphi 0, %s7371
                %p7368 = scmp.ge.s32.totalorder %s7367, 1
                %s7372 = sphi %s7352, %s7352
                %s7373 = sphi %s7357, %s7357
              $region105: #{tpu_custom_call.1} parent=101 // loop_header_branch
                %7370 = sbr.rel (%p7368) target = $region109
              $region106: #{tpu_custom_call.1} parent=101 // loop_body
                %v7374 = vld [vmem:[%s7372] sm:%s7365]
                %7375 = vst [vmem:[%s7373] sm:%s7365] %v7374
                %v7376 = vld [vmem:[%s7372 + $0x8] sm:%s7365]
                %7377 = vst [vmem:[%s7373 + $0x10] sm:%s7365] %v7376
                %v7378 = vld [vmem:[%s7372 + $0x10] sm:%s7365]
                %7379 = vst [vmem:[%s7373 + $0x20] sm:%s7365] %v7378
                %v7380 = vld [vmem:[%s7372 + $0x18] sm:%s7365]
                %7381 = vst [vmem:[%s7373 + $0x30] sm:%s7365] %v7380
                %v7382 = vld [vmem:[%s7372 + $0x20] sm:%s7365]
                %7383 = vst [vmem:[%s7373 + $0x40] sm:%s7365] %v7382
                %v7384 = vld [vmem:[%s7372 + $0x28] sm:%s7365]
                %7385 = vst [vmem:[%s7373 + $0x50] sm:%s7365] %v7384
                %v7386 = vld [vmem:[%s7372 + $0x30] sm:%s7365]
                %7387 = vst [vmem:[%s7373 + $0x60] sm:%s7365] %v7386
                %v7388 = vld [vmem:[%s7372 + $0x38] sm:%s7365]
                %7389 = vst [vmem:[%s7373 + $0x70] sm:%s7365] %v7388
                %v7390 = vld [vmem:[%s7372 + $0x40] sm:%s7365]
                %7391 = vst [vmem:[%s7373 + $0x80] sm:%s7365] %v7390
                %v7392 = vld [vmem:[%s7372 + $0x48] sm:%s7365]
                %7393 = vst [vmem:[%s7373 + $0x90] sm:%s7365] %v7392
                %v7394 = vld [vmem:[%s7372 + $0x50] sm:%s7365]
                %7395 = vst [vmem:[%s7373 + $0xa0] sm:%s7365] %v7394
                %v7396 = vld [vmem:[%s7372 + $0x58] sm:%s7365]
                %7397 = vst [vmem:[%s7373 + $0xb0] sm:%s7365] %v7396
                %v7398 = vld [vmem:[%s7372 + $0x60] sm:%s7365]
                %7399 = vst [vmem:[%s7373 + $0xc0] sm:%s7365] %v7398
                %v7400 = vld [vmem:[%s7372 + $0x68] sm:%s7365]
                %7401 = vst [vmem:[%s7373 + $0xd0] sm:%s7365] %v7400
                %v7402 = vld [vmem:[%s7372 + $0x70] sm:%s7365]
                %7403 = vst [vmem:[%s7373 + $0xe0] sm:%s7365] %v7402
                %v7404 = vld [vmem:[%s7372 + $0x78] sm:%s7365]
                %7405 = vst [vmem:[%s7373 + $0xf0] sm:%s7365] %v7404
                %v7406 = vld [vmem:[%s7372 + $0x80] sm:%s7365]
                %7407 = vst [vmem:[%s7373 + $0x100] sm:%s7365] %v7406
                %v7408 = vld [vmem:[%s7372 + $0x88] sm:%s7365]
                %7409 = vst [vmem:[%s7373 + $0x110] sm:%s7365] %v7408
                %v7410 = vld [vmem:[%s7372 + $0x90] sm:%s7365]
                %7411 = vst [vmem:[%s7373 + $0x120] sm:%s7365] %v7410
                %v7412 = vld [vmem:[%s7372 + $0x98] sm:%s7365]
                %7413 = vst [vmem:[%s7373 + $0x130] sm:%s7365] %v7412
                %v7414 = vld [vmem:[%s7372 + $0xa0] sm:%s7365]
                %7415 = vst [vmem:[%s7373 + $0x140] sm:%s7365] %v7414
                %v7416 = vld [vmem:[%s7372 + $0xa8] sm:%s7365]
                %7417 = vst [vmem:[%s7373 + $0x150] sm:%s7365] %v7416
                %v7418 = vld [vmem:[%s7372 + $0xb0] sm:%s7365]
                %7419 = vst [vmem:[%s7373 + $0x160] sm:%s7365] %v7418
                %v7420 = vld [vmem:[%s7372 + $0xb8] sm:%s7365]
                %7421 = vst [vmem:[%s7373 + $0x170] sm:%s7365] %v7420
                %v7422 = vld [vmem:[%s7372 + $0xc0] sm:%s7365]
                %7423 = vst [vmem:[%s7373 + $0x180] sm:%s7365] %v7422
                %v7424 = vld [vmem:[%s7372 + $0xc8] sm:%s7365]
                %7425 = vst [vmem:[%s7373 + $0x190] sm:%s7365] %v7424
                %v7426 = vld [vmem:[%s7372 + $0xd0] sm:%s7365]
                %7427 = vst [vmem:[%s7373 + $0x1a0] sm:%s7365] %v7426
                %v7428 = vld [vmem:[%s7372 + $0xd8] sm:%s7365]
                %7429 = vst [vmem:[%s7373 + $0x1b0] sm:%s7365] %v7428
                %v7430 = vld [vmem:[%s7372 + $0xe0] sm:%s7365]
                %7431 = vst [vmem:[%s7373 + $0x1c0] sm:%s7365] %v7430
                %v7432 = vld [vmem:[%s7372 + $0xe8] sm:%s7365]
                %7433 = vst [vmem:[%s7373 + $0x1d0] sm:%s7365] %v7432
                %v7434 = vld [vmem:[%s7372 + $0xf0] sm:%s7365]
                %7435 = vst [vmem:[%s7373 + $0x1e0] sm:%s7365] %v7434
                %v7436 = vld [vmem:[%s7372 + $0xf8] sm:%s7365]
                %7437 = vst [vmem:[%s7373 + $0x1f0] sm:%s7365] %v7436
                %v7438 = vld [vmem:[%s7372 + $0x100] sm:%s7365]
                %7439 = vst [vmem:[%s7373 + $0x200] sm:%s7365] %v7438
                %v7440 = vld [vmem:[%s7372 + $0x108] sm:%s7365]
                %7441 = vst [vmem:[%s7373 + $0x210] sm:%s7365] %v7440
                %v7442 = vld [vmem:[%s7372 + $0x110] sm:%s7365]
                %7443 = vst [vmem:[%s7373 + $0x220] sm:%s7365] %v7442
                %v7444 = vld [vmem:[%s7372 + $0x118] sm:%s7365]
                %7445 = vst [vmem:[%s7373 + $0x230] sm:%s7365] %v7444
                %v7446 = vld [vmem:[%s7372 + $0x120] sm:%s7365]
                %7447 = vst [vmem:[%s7373 + $0x240] sm:%s7365] %v7446
                %v7448 = vld [vmem:[%s7372 + $0x128] sm:%s7365]
                %7449 = vst [vmem:[%s7373 + $0x250] sm:%s7365] %v7448
                %v7450 = vld [vmem:[%s7372 + $0x130] sm:%s7365]
                %7451 = vst [vmem:[%s7373 + $0x260] sm:%s7365] %v7450
                %v7452 = vld [vmem:[%s7372 + $0x138] sm:%s7365]
                %7453 = vst [vmem:[%s7373 + $0x270] sm:%s7365] %v7452
                %v7454 = vld [vmem:[%s7372 + $0x140] sm:%s7365]
                %7455 = vst [vmem:[%s7373 + $0x280] sm:%s7365] %v7454
                %v7456 = vld [vmem:[%s7372 + $0x148] sm:%s7365]
                %7457 = vst [vmem:[%s7373 + $0x290] sm:%s7365] %v7456
                %v7458 = vld [vmem:[%s7372 + $0x150] sm:%s7365]
                %7459 = vst [vmem:[%s7373 + $0x2a0] sm:%s7365] %v7458
                %v7460 = vld [vmem:[%s7372 + $0x158] sm:%s7365]
                %7461 = vst [vmem:[%s7373 + $0x2b0] sm:%s7365] %v7460
                %v7462 = vld [vmem:[%s7372 + $0x160] sm:%s7365]
                %7463 = vst [vmem:[%s7373 + $0x2c0] sm:%s7365] %v7462
                %v7464 = vld [vmem:[%s7372 + $0x168] sm:%s7365]
                %7465 = vst [vmem:[%s7373 + $0x2d0] sm:%s7365] %v7464
                %v7466 = vld [vmem:[%s7372 + $0x170] sm:%s7365]
                %7467 = vst [vmem:[%s7373 + $0x2e0] sm:%s7365] %v7466
                %v7468 = vld [vmem:[%s7372 + $0x178] sm:%s7365]
                %7469 = vst [vmem:[%s7373 + $0x2f0] sm:%s7365] %v7468
                %v7470 = vld [vmem:[%s7372 + $0x180] sm:%s7365]
                %7471 = vst [vmem:[%s7373 + $0x300] sm:%s7365] %v7470
                %v7472 = vld [vmem:[%s7372 + $0x188] sm:%s7365]
                %7473 = vst [vmem:[%s7373 + $0x310] sm:%s7365] %v7472
                %v7474 = vld [vmem:[%s7372 + $0x190] sm:%s7365]
                %7475 = vst [vmem:[%s7373 + $0x320] sm:%s7365] %v7474
                %v7476 = vld [vmem:[%s7372 + $0x198] sm:%s7365]
                %7477 = vst [vmem:[%s7373 + $0x330] sm:%s7365] %v7476
                %v7478 = vld [vmem:[%s7372 + $0x1a0] sm:%s7365]
                %7479 = vst [vmem:[%s7373 + $0x340] sm:%s7365] %v7478
                %v7480 = vld [vmem:[%s7372 + $0x1a8] sm:%s7365]
                %7481 = vst [vmem:[%s7373 + $0x350] sm:%s7365] %v7480
                %v7482 = vld [vmem:[%s7372 + $0x1b0] sm:%s7365]
                %7483 = vst [vmem:[%s7373 + $0x360] sm:%s7365] %v7482
                %v7484 = vld [vmem:[%s7372 + $0x1b8] sm:%s7365]
                %7485 = vst [vmem:[%s7373 + $0x370] sm:%s7365] %v7484
              $region107: #{tpu_custom_call.1} parent=101 // loop_footer
                %s7371 = sadd.s32 1, %s7367
              $region108: #{tpu_custom_call.1} parent=101 // loop_footer_branch
                %7366 = sbr.rel target = $region104
              $region109: #{tpu_custom_call.1} parent=101 // loop_exit
                _
            $region102: #{tpu_custom_call.1} parent=93 // pred_fallthru
              _
          $region94: #{tpu_custom_call.1} parent=89 // pred_fallthru
            _
          %7610 = vnop
        $region90: #{tpu_custom_call.1} parent=69 // pred_fallthru
          _
      $region70: #{tpu_custom_call.1} parent=5 // pred_fallthru
        _
      %p7611 = scmp.le.s32.totalorder 2, %s16
      // Predicated region
      $region125: #{tpu_custom_call.1} parent=5 // pred_check
        %p7612 = pneg %p7611
      $region126: #{tpu_custom_call.1} parent=5 // pred_check_branch
        %7614 = sbr.rel (%p7612) target = $region128
      $region127: #{tpu_custom_call.1} parent=5 // pred_region
        %s7615 = ssub.s32 %s16, 2
        // Predicated region
        $region129: #{tpu_custom_call.1} parent=127 // pred_check
          %p7616 = pneg %p151
        $region130: #{tpu_custom_call.1} parent=127 // pred_check_branch
          %7618 = sbr.rel (%p7616) target = $region132
        $region131: #{tpu_custom_call.1} parent=127 // pred_region
          %s7619 = sand.u32 %s136, 1
          %s7620 = sand.u32 %s136, 1
          %s7621 = smul.addr %s7620, 448
          %s7622 = scalar_lea.vmem [#allocation11], %s7621
        $region132: #{tpu_custom_call.1} parent=127 // pred_fallthru
          _
      $region128: #{tpu_custom_call.1} parent=5 // pred_fallthru
        _
    $region6: #{tpu_custom_call.1} parent=1 // loop_footer
      %s20 = sadd.s32 1, %s16
    $region7: #{tpu_custom_call.1} parent=1 // loop_footer_branch
      %15 = sbr.rel target = $region3
    $region8: #{tpu_custom_call.1} parent=1 // loop_exit
      _
    %7623 = vsyncpa [#allocation7], 1
    %s7624 = scalar_lea.sflag [#allocation7], 1
    %7625 = vsyncpa %s7624, 1
    %7626 = vsyncpa [#allocation9], 1
    %s7627 = scalar_lea.sflag [#allocation9], 1
    %7628 = vsyncpa %s7627, 1

</llo_original>
